<compile_context>
chip_gen: v7x
topology: tpu7x:2x2x1
jax: 0.10.0
libtpu: 0.0.40
codegen_flags: <defaults>
</compile_context>

<pallas_src>
import functools

import jax
import jax.numpy as jnp
from jax.experimental import pallas as pl
from jax.experimental.pallas import tpu as pltpu

CPAD = 128                       # lane-dense channel padding for activations
VMEM_LIMIT = 32 * 1024 * 1024    # explicit scoped-VMEM budget (fits v5e/v6e/v7x)


# ----------------------------------------------------------------------------
# Kernel 1: fused conv (valid, stride 1) + bias + ReLU + 2x2/2 max-pool
# ----------------------------------------------------------------------------
def _conv_relu_pool_kernel(x_ref, w_ref, b_ref, o_ref, row_ref, *, kh, kw, wo):
    """One (image, pooled output row) grid point.

    x_ref:   (H, W, Cin)  f32   full input image (resident across the row axis)
    w_ref:   (kh*kw, Cin, CPAD) bf16 weights, (di,dj)-major
    b_ref:   (1, CPAD)    f32   bias
    o_ref:   (wo//2, CPAD) f32  pooled output row
    row_ref: (wo, CPAD)   f32   VMEM scratch used for the horizontal pool
    """
    i = pl.program_id(1)
    r0 = 2 * i                          # first conv row of this pooling pair
    cout = o_ref.shape[-1]
    acc0 = jnp.zeros((wo, cout), jnp.float32)
    acc1 = jnp.zeros((wo, cout), jnp.float32)
    for di in range(kh):                # static loops: kh*kw <= 25 taps
        for dj in range(kw):
            w_slab = w_ref[di * kw + dj]                          # (Cin, CPAD) bf16
            p0 = x_ref[r0 + di, dj:dj + wo, :].astype(jnp.bfloat16)      # (wo, Cin)
            p1 = x_ref[r0 + 1 + di, dj:dj + wo, :].astype(jnp.bfloat16)  # (wo, Cin)
            acc0 += jnp.dot(p0, w_slab, preferred_element_type=jnp.float32)
            acc1 += jnp.dot(p1, w_slab, preferred_element_type=jnp.float32)
    b = b_ref[...]
    y0 = jnp.maximum(acc0 + b, 0.0)     # bias + ReLU in f32
    y1 = jnp.maximum(acc1 + b, 0.0)
    row_ref[...] = jnp.maximum(y0, y1)                  # vertical 2-max  (wo, CPAD)
    even = row_ref[pl.ds(0, wo // 2, stride=2), :]      # horizontal 2-max
    odd = row_ref[pl.ds(1, wo // 2, stride=2), :]
    o_ref[...] = jnp.maximum(even, odd)                 # (wo//2, CPAD)


def conv_relu_pool(x, w, b, *, kh, kw):
    """x: (N,H,W,Cin) f32, w: (kh*kw,Cin,CPAD) bf16, b: (1,CPAD) f32.

    Returns (N, (H-kh+1)//2, (W-kw+1)//2, CPAD) f32 (NHWC, channel padded)."""
    N, H, W, Cin = x.shape
    Ho, Wo = H - kh + 1, W - kw + 1
    assert Ho % 2 == 0 and Wo % 2 == 0
    assert w.shape == (kh * kw, Cin, CPAD)
    Ho2, Wo2 = Ho // 2, Wo // 2
    kernel = functools.partial(_conv_relu_pool_kernel, kh=kh, kw=kw, wo=Wo)
    return pl.pallas_call(
        kernel,
        out_shape=jax.ShapeDtypeStruct((N, Ho2, Wo2, CPAD), jnp.float32),
        grid_spec=pltpu.PrefetchScalarGridSpec(
            num_scalar_prefetch=0,
            grid=(N, Ho2),
            in_specs=[
                # Whole image per batch element; constant along the row axis so
                # it is fetched once per image and stays resident in VMEM.
                pl.BlockSpec((None, H, W, Cin), lambda n, i: (n, 0, 0, 0)),
                pl.BlockSpec((kh * kw, Cin, CPAD), lambda n, i: (0, 0, 0)),
                pl.BlockSpec((1, CPAD), lambda n, i: (0, 0)),
            ],
            out_specs=pl.BlockSpec((None, None, Wo2, CPAD),
                                   lambda n, i: (n, i, 0, 0)),
            scratch_shapes=[pltpu.VMEM((Wo, CPAD), jnp.float32)],
        ),
        compiler_params=pltpu.CompilerParams(
            dimension_semantics=("parallel", "parallel"),
            vmem_limit_bytes=VMEM_LIMIT,
        ),
    )(x, w, b)


# ----------------------------------------------------------------------------
# Kernel 2: fused fc1 + ReLU + fc2 + ReLU (intermediate stays in VMEM)
# ----------------------------------------------------------------------------
def _mlp_kernel(x_ref, w1_ref, b1_ref, w2_ref, b2_ref, o_ref):
    h = jnp.dot(x_ref[...].astype(jnp.bfloat16), w1_ref[...],
                preferred_element_type=jnp.float32)
    h = jnp.maximum(h + b1_ref[...], 0.0)
    y = jnp.dot(h.astype(jnp.bfloat16), w2_ref[...],
                preferred_element_type=jnp.float32)
    o_ref[...] = jnp.maximum(y + b2_ref[...], 0.0)


def mlp_relu_fused(x, w1, b1, w2, b2, *, tile_m=256):
    N, K1 = x.shape
    H1 = w1.shape[1]
    H2 = w2.shape[1]
    tm = min(tile_m, N)
    return pl.pallas_call(
        _mlp_kernel,
        out_shape=jax.ShapeDtypeStruct((N, H2), jnp.float32),
        grid_spec=pltpu.PrefetchScalarGridSpec(
            num_scalar_prefetch=0,
            grid=(pl.cdiv(N, tm),),
            in_specs=[
                pl.BlockSpec((tm, K1), lambda i: (i, 0)),
                pl.BlockSpec((K1, H1), lambda i: (0, 0)),
                pl.BlockSpec((1, H1), lambda i: (0, 0)),
                pl.BlockSpec((H1, H2), lambda i: (0, 0)),
                pl.BlockSpec((1, H2), lambda i: (0, 0)),
            ],
            out_specs=pl.BlockSpec((tm, H2), lambda i: (i, 0)),
        ),
        compiler_params=pltpu.CompilerParams(
            dimension_semantics=("parallel",),
            vmem_limit_bytes=VMEM_LIMIT,
        ),
    )(x, w1, b1, w2, b2)


# ----------------------------------------------------------------------------
# Parameters: PyTorch-layout init, then one-time Pallas-layout preparation
# ----------------------------------------------------------------------------
def init_params(key):
    ks = jax.random.split(key, 8)
    s = 0.05
    return {
        "conv1_w": s * jax.random.normal(ks[0], (16, 3, 5, 5), jnp.float32),
        "conv1_b": s * jax.random.normal(ks[1], (16,), jnp.float32),
        "conv2_w": s * jax.random.normal(ks[2], (36, 16, 3, 3), jnp.float32),
        "conv2_b": s * jax.random.normal(ks[3], (36,), jnp.float32),
        "fc1_w":  s * jax.random.normal(ks[4], (128, 1296), jnp.float32),
        "fc1_b":  s * jax.random.normal(ks[5], (128,), jnp.float32),
        "fc2_w":  s * jax.random.normal(ks[6], (10, 128), jnp.float32),
        "fc2_b":  s * jax.random.normal(ks[7], (10,), jnp.float32),
    }


def _pad_last(a, target):
    return jnp.pad(a, [(0, 0)] * (a.ndim - 1) + [(0, target - a.shape[-1])])


def prepare_params(p):
    """One-time reorder / zero-pad / bf16-cast into the kernel layouts."""
    # conv1: (O=16, C=3, kh, kw) -> (kh*kw, C, CPAD) bf16, (di,dj)-major taps.
    w1 = p["conv1_w"].transpose(2, 3, 1, 0)                    # (kh,kw,C,O)
    kh, kw, c1, o1 = w1.shape
    c1_w = _pad_last(w1.reshape(kh * kw, c1, o1), CPAD).astype(jnp.bfloat16)
    c1_b = _pad_last(p["conv1_b"].reshape(1, -1), CPAD)

    # conv2: (O=36, C=16, kh, kw) -> (kh*kw, CPAD, CPAD) bf16 (input channels
    # padded to match the padded conv1 activations; padded taps are zero).
    w2 = p["conv2_w"].transpose(2, 3, 1, 0)                    # (kh,kw,16,36)
    kh2, kw2, c2, o2 = w2.shape
    w2 = w2.reshape(kh2 * kw2, c2, o2)
    c2_w = jnp.pad(w2, ((0, 0), (0, CPAD - c2), (0, CPAD - o2))).astype(jnp.bfloat16)
    c2_b = _pad_last(p["conv2_b"].reshape(1, -1), CPAD)

    # fc1: PyTorch flattens NCHW as (c,h,w) over (36,6,6); our activations are
    # flattened NHWC-padded as (h,w,c) over (6,6,CPAD).  Permute + zero-pad the
    # weight columns accordingly and pre-transpose to (in, out).
    f1 = p["fc1_w"].reshape(128, 36, 6, 6).transpose(2, 3, 1, 0)   # (6,6,36,128)
    f1 = jnp.pad(f1, ((0, 0), (0, 0), (0, CPAD - 36), (0, 0)))
    f1_w = f1.reshape(6 * 6 * CPAD, 128).astype(jnp.bfloat16)
    f1_b = p["fc1_b"].reshape(1, 128)

    # fc2: (10, 128) -> (128, CPAD) with zero-padded output columns.
    f2_w = _pad_last(p["fc2_w"].T, CPAD).astype(jnp.bfloat16)
    f2_b = _pad_last(p["fc2_b"].reshape(1, -1), CPAD)

    return {"c1_w": c1_w, "c1_b": c1_b, "c2_w": c2_w, "c2_b": c2_b,
            "f1_w": f1_w, "f1_b": f1_b, "f2_w": f2_w, "f2_b": f2_b}


# ----------------------------------------------------------------------------
# CNNet forward
# ----------------------------------------------------------------------------
@jax.jit
def cnnet_forward(prep, x):
    # x: (N, 3, 32, 32) f32, NCHW like the PyTorch module.
    x = jnp.transpose(x, (0, 2, 3, 1))                               # one-time NHWC
    x = conv_relu_pool(x, prep["c1_w"], prep["c1_b"], kh=5, kw=5)    # (N,14,14,128)
    x = conv_relu_pool(x, prep["c2_w"], prep["c2_b"], kh=3, kw=3)    # (N, 6, 6,128)
    x = x.reshape(x.shape[0], -1)                                    # (N, 4608) free
    y = mlp_relu_fused(x, prep["f1_w"], prep["f1_b"],
                       prep["f2_w"], prep["f2_b"])                   # (N, 128)
    return y[:, :10]                                                 # drop padding


if __name__ == "__main__":
    key = jax.random.PRNGKey(0)
    pkey, xkey = jax.random.split(key)
    params = init_params(pkey)
    prepared = prepare_params(params)
    # fc1 expects 1296 = 36*6*6, which pins the input to 3x32x32 (CIFAR10).
    x = jax.random.normal(xkey, (2, 3, 32, 32), jnp.float32)
    out = cnnet_forward(prepared, x)
    out = jax.block_until_ready(out)
    assert out.shape == (2, 10)
    assert bool(jnp.all(out >= 0.0))  # final ReLU
    print("KERNEL_OK")
</pallas_src>

<mosaic_0001>
module attributes {stable_mosaic.version = 11 : i64} {
  func.func @_conv_relu_pool_kernel(%arg0: i32, %arg1: i32, %arg2: memref<1x14x14x128xf32, #tpu.memory_space<vmem>>, %arg3: memref<9x128x128xbf16, #tpu.memory_space<vmem>>, %arg4: memref<1x128xf32, #tpu.memory_space<vmem>>, %arg5: memref<1x1x6x128xf32, #tpu.memory_space<vmem>>, %arg6: memref<12x128xf32, #tpu.memory_space<vmem>>) attributes {dimension_semantics = [#tpu.dimension_semantics<parallel>, #tpu.dimension_semantics<parallel>], iteration_bounds = array<i64: 2, 6>, scalar_prefetch = 0 : i64, scratch_operands = 1 : i64, tpu.core_type = #tpu.core_type<tc>, window_params = [{transform_indices = @transform_0, window_bounds = array<i64: 1, 14, 14, 128>}, {pipeline_mode = #tpu.pipeline_mode<synchronous>, transform_indices = @transform_1, window_bounds = array<i64: 9, 128, 128>}, {pipeline_mode = #tpu.pipeline_mode<synchronous>, transform_indices = @transform_2, window_bounds = array<i64: 1, 128>}, {transform_indices = @transform_3, window_bounds = array<i64: 1, 1, 6, 128>}]} {
    %c2_i32 = arith.constant 2 : i32
    %0 = arith.muli %c2_i32, %arg1 : i32
    %cst = arith.constant 0.000000e+00 : f32
    %1 = vector.broadcast %cst : f32 to vector<12x128xf32>
    %cst_0 = arith.constant 0.000000e+00 : f32
    %2 = vector.broadcast %cst_0 : f32 to vector<12x128xf32>
    %c0 = arith.constant 0 : index
    %c0_1 = arith.constant 0 : index
    %c0_2 = arith.constant 0 : index
    %3 = vector.load %arg3[%c0, %c0_1, %c0_2] : memref<9x128x128xbf16, #tpu.memory_space<vmem>>, vector<1x128x128xbf16>
    %4 = vector.shape_cast %3 : vector<1x128x128xbf16> to vector<128x128xbf16>
    %c0_i32 = arith.constant 0 : i32
    %5 = arith.addi %0, %c0_i32 : i32
    %c0_3 = arith.constant 0 : index
    %6 = arith.index_cast %5 : i32 to index
    %c0_4 = arith.constant 0 : index
    %c0_5 = arith.constant 0 : index
    %7 = vector.load %arg2[%c0_3, %6, %c0_4, %c0_5] : memref<1x14x14x128xf32, #tpu.memory_space<vmem>>, vector<1x1x12x128xf32>
    %8 = vector.shape_cast %7 : vector<1x1x12x128xf32> to vector<12x128xf32>
    %9 = arith.truncf %8 : vector<12x128xf32> to vector<12x128xbf16>
    %c1_i32 = arith.constant 1 : i32
    %10 = arith.addi %0, %c1_i32 : i32
    %c0_i32_6 = arith.constant 0 : i32
    %11 = arith.addi %10, %c0_i32_6 : i32
    %c0_7 = arith.constant 0 : index
    %12 = arith.index_cast %11 : i32 to index
    %c0_8 = arith.constant 0 : index
    %c0_9 = arith.constant 0 : index
    %13 = vector.load %arg2[%c0_7, %12, %c0_8, %c0_9] : memref<1x14x14x128xf32, #tpu.memory_space<vmem>>, vector<1x1x12x128xf32>
    %14 = vector.shape_cast %13 : vector<1x1x12x128xf32> to vector<12x128xf32>
    %15 = arith.truncf %14 : vector<12x128xf32> to vector<12x128xbf16>
    %cst_10 = arith.constant dense<0.000000e+00> : vector<12x128xf32>
    %16 = tpu.matmul %9, %4, %cst_10 {dimension_numbers = #tpu.dot_dimension_numbers<[1], [0], [0], [1], [0, 0, 1, 1], [], []>} : vector<12x128xbf16>, vector<128x128xbf16>, vector<12x128xf32> -> vector<12x128xf32>
    %17 = arith.addf %1, %16 : vector<12x128xf32>
    %cst_11 = arith.constant dense<0.000000e+00> : vector<12x128xf32>
    %18 = tpu.matmul %15, %4, %cst_11 {dimension_numbers = #tpu.dot_dimension_numbers<[1], [0], [0], [1], [0, 0, 1, 1], [], []>} : vector<12x128xbf16>, vector<128x128xbf16>, vector<12x128xf32> -> vector<12x128xf32>
    %19 = arith.addf %2, %18 : vector<12x128xf32>
    %c1 = arith.constant 1 : index
    %c0_12 = arith.constant 0 : index
    %c0_13 = arith.constant 0 : index
    %20 = vector.load %arg3[%c1, %c0_12, %c0_13] : memref<9x128x128xbf16, #tpu.memory_space<vmem>>, vector<1x128x128xbf16>
    %21 = vector.shape_cast %20 : vector<1x128x128xbf16> to vector<128x128xbf16>
    %c0_i32_14 = arith.constant 0 : i32
    %22 = arith.addi %0, %c0_i32_14 : i32
    %c0_15 = arith.constant 0 : index
    %23 = arith.index_cast %22 : i32 to index
    %c1_16 = arith.constant 1 : index
    %c0_17 = arith.constant 0 : index
    %24 = vector.load %arg2[%c0_15, %23, %c1_16, %c0_17] : memref<1x14x14x128xf32, #tpu.memory_space<vmem>>, vector<1x1x12x128xf32>
    %25 = vector.shape_cast %24 : vector<1x1x12x128xf32> to vector<12x128xf32>
    %26 = arith.truncf %25 : vector<12x128xf32> to vector<12x128xbf16>
    %c1_i32_18 = arith.constant 1 : i32
    %27 = arith.addi %0, %c1_i32_18 : i32
    %c0_i32_19 = arith.constant 0 : i32
    %28 = arith.addi %27, %c0_i32_19 : i32
    %c0_20 = arith.constant 0 : index
    %29 = arith.index_cast %28 : i32 to index
    %c1_21 = arith.constant 1 : index
    %c0_22 = arith.constant 0 : index
    %30 = vector.load %arg2[%c0_20, %29, %c1_21, %c0_22] : memref<1x14x14x128xf32, #tpu.memory_space<vmem>>, vector<1x1x12x128xf32>
    %31 = vector.shape_cast %30 : vector<1x1x12x128xf32> to vector<12x128xf32>
    %32 = arith.truncf %31 : vector<12x128xf32> to vector<12x128xbf16>
    %cst_23 = arith.constant dense<0.000000e+00> : vector<12x128xf32>
    %33 = tpu.matmul %26, %21, %cst_23 {dimension_numbers = #tpu.dot_dimension_numbers<[1], [0], [0], [1], [0, 0, 1, 1], [], []>} : vector<12x128xbf16>, vector<128x128xbf16>, vector<12x128xf32> -> vector<12x128xf32>
    %34 = arith.addf %17, %33 : vector<12x128xf32>
    %cst_24 = arith.constant dense<0.000000e+00> : vector<12x128xf32>
    %35 = tpu.matmul %32, %21, %cst_24 {dimension_numbers = #tpu.dot_dimension_numbers<[1], [0], [0], [1], [0, 0, 1, 1], [], []>} : vector<12x128xbf16>, vector<128x128xbf16>, vector<12x128xf32> -> vector<12x128xf32>
    %36 = arith.addf %19, %35 : vector<12x128xf32>
    %c2 = arith.constant 2 : index
    %c0_25 = arith.constant 0 : index
    %c0_26 = arith.constant 0 : index
    %37 = vector.load %arg3[%c2, %c0_25, %c0_26] : memref<9x128x128xbf16, #tpu.memory_space<vmem>>, vector<1x128x128xbf16>
    %38 = vector.shape_cast %37 : vector<1x128x128xbf16> to vector<128x128xbf16>
    %c0_i32_27 = arith.constant 0 : i32
    %39 = arith.addi %0, %c0_i32_27 : i32
    %c0_28 = arith.constant 0 : index
    %40 = arith.index_cast %39 : i32 to index
    %c2_29 = arith.constant 2 : index
    %c0_30 = arith.constant 0 : index
    %41 = vector.load %arg2[%c0_28, %40, %c2_29, %c0_30] : memref<1x14x14x128xf32, #tpu.memory_space<vmem>>, vector<1x1x12x128xf32>
    %42 = vector.shape_cast %41 : vector<1x1x12x128xf32> to vector<12x128xf32>
    %43 = arith.truncf %42 : vector<12x128xf32> to vector<12x128xbf16>
    %c1_i32_31 = arith.constant 1 : i32
    %44 = arith.addi %0, %c1_i32_31 : i32
    %c0_i32_32 = arith.constant 0 : i32
    %45 = arith.addi %44, %c0_i32_32 : i32
    %c0_33 = arith.constant 0 : index
    %46 = arith.index_cast %45 : i32 to index
    %c2_34 = arith.constant 2 : index
    %c0_35 = arith.constant 0 : index
    %47 = vector.load %arg2[%c0_33, %46, %c2_34, %c0_35] : memref<1x14x14x128xf32, #tpu.memory_space<vmem>>, vector<1x1x12x128xf32>
    %48 = vector.shape_cast %47 : vector<1x1x12x128xf32> to vector<12x128xf32>
    %49 = arith.truncf %48 : vector<12x128xf32> to vector<12x128xbf16>
    %cst_36 = arith.constant dense<0.000000e+00> : vector<12x128xf32>
    %50 = tpu.matmul %43, %38, %cst_36 {dimension_numbers = #tpu.dot_dimension_numbers<[1], [0], [0], [1], [0, 0, 1, 1], [], []>} : vector<12x128xbf16>, vector<128x128xbf16>, vector<12x128xf32> -> vector<12x128xf32>
    %51 = arith.addf %34, %50 : vector<12x128xf32>
    %cst_37 = arith.constant dense<0.000000e+00> : vector<12x128xf32>
    %52 = tpu.matmul %49, %38, %cst_37 {dimension_numbers = #tpu.dot_dimension_numbers<[1], [0], [0], [1], [0, 0, 1, 1], [], []>} : vector<12x128xbf16>, vector<128x128xbf16>, vector<12x128xf32> -> vector<12x128xf32>
    %53 = arith.addf %36, %52 : vector<12x128xf32>
    %c3 = arith.constant 3 : index
    %c0_38 = arith.constant 0 : index
    %c0_39 = arith.constant 0 : index
    %54 = vector.load %arg3[%c3, %c0_38, %c0_39] : memref<9x128x128xbf16, #tpu.memory_space<vmem>>, vector<1x128x128xbf16>
    %55 = vector.shape_cast %54 : vector<1x128x128xbf16> to vector<128x128xbf16>
    %c1_i32_40 = arith.constant 1 : i32
    %56 = arith.addi %0, %c1_i32_40 : i32
    %c0_41 = arith.constant 0 : index
    %57 = arith.index_cast %56 : i32 to index
    %c0_42 = arith.constant 0 : index
    %c0_43 = arith.constant 0 : index
    %58 = vector.load %arg2[%c0_41, %57, %c0_42, %c0_43] : memref<1x14x14x128xf32, #tpu.memory_space<vmem>>, vector<1x1x12x128xf32>
    %59 = vector.shape_cast %58 : vector<1x1x12x128xf32> to vector<12x128xf32>
    %60 = arith.truncf %59 : vector<12x128xf32> to vector<12x128xbf16>
    %c1_i32_44 = arith.constant 1 : i32
    %61 = arith.addi %0, %c1_i32_44 : i32
    %c1_i32_45 = arith.constant 1 : i32
    %62 = arith.addi %61, %c1_i32_45 : i32
    %c0_46 = arith.constant 0 : index
    %63 = arith.index_cast %62 : i32 to index
    %c0_47 = arith.constant 0 : index
    %c0_48 = arith.constant 0 : index
    %64 = vector.load %arg2[%c0_46, %63, %c0_47, %c0_48] : memref<1x14x14x128xf32, #tpu.memory_space<vmem>>, vector<1x1x12x128xf32>
    %65 = vector.shape_cast %64 : vector<1x1x12x128xf32> to vector<12x128xf32>
    %66 = arith.truncf %65 : vector<12x128xf32> to vector<12x128xbf16>
    %cst_49 = arith.constant dense<0.000000e+00> : vector<12x128xf32>
    %67 = tpu.matmul %60, %55, %cst_49 {dimension_numbers = #tpu.dot_dimension_numbers<[1], [0], [0], [1], [0, 0, 1, 1], [], []>} : vector<12x128xbf16>, vector<128x128xbf16>, vector<12x128xf32> -> vector<12x128xf32>
    %68 = arith.addf %51, %67 : vector<12x128xf32>
    %cst_50 = arith.constant dense<0.000000e+00> : vector<12x128xf32>
    %69 = tpu.matmul %66, %55, %cst_50 {dimension_numbers = #tpu.dot_dimension_numbers<[1], [0], [0], [1], [0, 0, 1, 1], [], []>} : vector<12x128xbf16>, vector<128x128xbf16>, vector<12x128xf32> -> vector<12x128xf32>
    %70 = arith.addf %53, %69 : vector<12x128xf32>
    %c4 = arith.constant 4 : index
    %c0_51 = arith.constant 0 : index
    %c0_52 = arith.constant 0 : index
    %71 = vector.load %arg3[%c4, %c0_51, %c0_52] : memref<9x128x128xbf16, #tpu.memory_space<vmem>>, vector<1x128x128xbf16>
    %72 = vector.shape_cast %71 : vector<1x128x128xbf16> to vector<128x128xbf16>
    %c1_i32_53 = arith.constant 1 : i32
    %73 = arith.addi %0, %c1_i32_53 : i32
    %c0_54 = arith.constant 0 : index
    %74 = arith.index_cast %73 : i32 to index
    %c1_55 = arith.constant 1 : index
    %c0_56 = arith.constant 0 : index
    %75 = vector.load %arg2[%c0_54, %74, %c1_55, %c0_56] : memref<1x14x14x128xf32, #tpu.memory_space<vmem>>, vector<1x1x12x128xf32>
    %76 = vector.shape_cast %75 : vector<1x1x12x128xf32> to vector<12x128xf32>
    %77 = arith.truncf %76 : vector<12x128xf32> to vector<12x128xbf16>
    %c1_i32_57 = arith.constant 1 : i32
    %78 = arith.addi %0, %c1_i32_57 : i32
    %c1_i32_58 = arith.constant 1 : i32
    %79 = arith.addi %78, %c1_i32_58 : i32
    %c0_59 = arith.constant 0 : index
    %80 = arith.index_cast %79 : i32 to index
    %c1_60 = arith.constant 1 : index
    %c0_61 = arith.constant 0 : index
    %81 = vector.load %arg2[%c0_59, %80, %c1_60, %c0_61] : memref<1x14x14x128xf32, #tpu.memory_space<vmem>>, vector<1x1x12x128xf32>
    %82 = vector.shape_cast %81 : vector<1x1x12x128xf32> to vector<12x128xf32>
    %83 = arith.truncf %82 : vector<12x128xf32> to vector<12x128xbf16>
    %cst_62 = arith.constant dense<0.000000e+00> : vector<12x128xf32>
    %84 = tpu.matmul %77, %72, %cst_62 {dimension_numbers = #tpu.dot_dimension_numbers<[1], [0], [0], [1], [0, 0, 1, 1], [], []>} : vector<12x128xbf16>, vector<128x128xbf16>, vector<12x128xf32> -> vector<12x128xf32>
    %85 = arith.addf %68, %84 : vector<12x128xf32>
    %cst_63 = arith.constant dense<0.000000e+00> : vector<12x128xf32>
    %86 = tpu.matmul %83, %72, %cst_63 {dimension_numbers = #tpu.dot_dimension_numbers<[1], [0], [0], [1], [0, 0, 1, 1], [], []>} : vector<12x128xbf16>, vector<128x128xbf16>, vector<12x128xf32> -> vector<12x128xf32>
    %87 = arith.addf %70, %86 : vector<12x128xf32>
    %c5 = arith.constant 5 : index
    %c0_64 = arith.constant 0 : index
    %c0_65 = arith.constant 0 : index
    %88 = vector.load %arg3[%c5, %c0_64, %c0_65] : memref<9x128x128xbf16, #tpu.memory_space<vmem>>, vector<1x128x128xbf16>
    %89 = vector.shape_cast %88 : vector<1x128x128xbf16> to vector<128x128xbf16>
    %c1_i32_66 = arith.constant 1 : i32
    %90 = arith.addi %0, %c1_i32_66 : i32
    %c0_67 = arith.constant 0 : index
    %91 = arith.index_cast %90 : i32 to index
    %c2_68 = arith.constant 2 : index
    %c0_69 = arith.constant 0 : index
    %92 = vector.load %arg2[%c0_67, %91, %c2_68, %c0_69] : memref<1x14x14x128xf32, #tpu.memory_space<vmem>>, vector<1x1x12x128xf32>
    %93 = vector.shape_cast %92 : vector<1x1x12x128xf32> to vector<12x128xf32>
    %94 = arith.truncf %93 : vector<12x128xf32> to vector<12x128xbf16>
    %c1_i32_70 = arith.constant 1 : i32
    %95 = arith.addi %0, %c1_i32_70 : i32
    %c1_i32_71 = arith.constant 1 : i32
    %96 = arith.addi %95, %c1_i32_71 : i32
    %c0_72 = arith.constant 0 : index
    %97 = arith.index_cast %96 : i32 to index
    %c2_73 = arith.constant 2 : index
    %c0_74 = arith.constant 0 : index
    %98 = vector.load %arg2[%c0_72, %97, %c2_73, %c0_74] : memref<1x14x14x128xf32, #tpu.memory_space<vmem>>, vector<1x1x12x128xf32>
    %99 = vector.shape_cast %98 : vector<1x1x12x128xf32> to vector<12x128xf32>
    %100 = arith.truncf %99 : vector<12x128xf32> to vector<12x128xbf16>
    %cst_75 = arith.constant dense<0.000000e+00> : vector<12x128xf32>
    %101 = tpu.matmul %94, %89, %cst_75 {dimension_numbers = #tpu.dot_dimension_numbers<[1], [0], [0], [1], [0, 0, 1, 1], [], []>} : vector<12x128xbf16>, vector<128x128xbf16>, vector<12x128xf32> -> vector<12x128xf32>
    %102 = arith.addf %85, %101 : vector<12x128xf32>
    %cst_76 = arith.constant dense<0.000000e+00> : vector<12x128xf32>
    %103 = tpu.matmul %100, %89, %cst_76 {dimension_numbers = #tpu.dot_dimension_numbers<[1], [0], [0], [1], [0, 0, 1, 1], [], []>} : vector<12x128xbf16>, vector<128x128xbf16>, vector<12x128xf32> -> vector<12x128xf32>
    %104 = arith.addf %87, %103 : vector<12x128xf32>
    %c6 = arith.constant 6 : index
    %c0_77 = arith.constant 0 : index
    %c0_78 = arith.constant 0 : index
    %105 = vector.load %arg3[%c6, %c0_77, %c0_78] : memref<9x128x128xbf16, #tpu.memory_space<vmem>>, vector<1x128x128xbf16>
    %106 = vector.shape_cast %105 : vector<1x128x128xbf16> to vector<128x128xbf16>
    %c2_i32_79 = arith.constant 2 : i32
    %107 = arith.addi %0, %c2_i32_79 : i32
    %c0_80 = arith.constant 0 : index
    %108 = arith.index_cast %107 : i32 to index
    %c0_81 = arith.constant 0 : index
    %c0_82 = arith.constant 0 : index
    %109 = vector.load %arg2[%c0_80, %108, %c0_81, %c0_82] : memref<1x14x14x128xf32, #tpu.memory_space<vmem>>, vector<1x1x12x128xf32>
    %110 = vector.shape_cast %109 : vector<1x1x12x128xf32> to vector<12x128xf32>
    %111 = arith.truncf %110 : vector<12x128xf32> to vector<12x128xbf16>
    %c1_i32_83 = arith.constant 1 : i32
    %112 = arith.addi %0, %c1_i32_83 : i32
    %c2_i32_84 = arith.constant 2 : i32
    %113 = arith.addi %112, %c2_i32_84 : i32
    %c0_85 = arith.constant 0 : index
    %114 = arith.index_cast %113 : i32 to index
    %c0_86 = arith.constant 0 : index
    %c0_87 = arith.constant 0 : index
    %115 = vector.load %arg2[%c0_85, %114, %c0_86, %c0_87] : memref<1x14x14x128xf32, #tpu.memory_space<vmem>>, vector<1x1x12x128xf32>
    %116 = vector.shape_cast %115 : vector<1x1x12x128xf32> to vector<12x128xf32>
    %117 = arith.truncf %116 : vector<12x128xf32> to vector<12x128xbf16>
    %cst_88 = arith.constant dense<0.000000e+00> : vector<12x128xf32>
    %118 = tpu.matmul %111, %106, %cst_88 {dimension_numbers = #tpu.dot_dimension_numbers<[1], [0], [0], [1], [0, 0, 1, 1], [], []>} : vector<12x128xbf16>, vector<128x128xbf16>, vector<12x128xf32> -> vector<12x128xf32>
    %119 = arith.addf %102, %118 : vector<12x128xf32>
    %cst_89 = arith.constant dense<0.000000e+00> : vector<12x128xf32>
    %120 = tpu.matmul %117, %106, %cst_89 {dimension_numbers = #tpu.dot_dimension_numbers<[1], [0], [0], [1], [0, 0, 1, 1], [], []>} : vector<12x128xbf16>, vector<128x128xbf16>, vector<12x128xf32> -> vector<12x128xf32>
    %121 = arith.addf %104, %120 : vector<12x128xf32>
    %c7 = arith.constant 7 : index
    %c0_90 = arith.constant 0 : index
    %c0_91 = arith.constant 0 : index
    %122 = vector.load %arg3[%c7, %c0_90, %c0_91] : memref<9x128x128xbf16, #tpu.memory_space<vmem>>, vector<1x128x128xbf16>
    %123 = vector.shape_cast %122 : vector<1x128x128xbf16> to vector<128x128xbf16>
    %c2_i32_92 = arith.constant 2 : i32
    %124 = arith.addi %0, %c2_i32_92 : i32
    %c0_93 = arith.constant 0 : index
    %125 = arith.index_cast %124 : i32 to index
    %c1_94 = arith.constant 1 : index
    %c0_95 = arith.constant 0 : index
    %126 = vector.load %arg2[%c0_93, %125, %c1_94, %c0_95] : memref<1x14x14x128xf32, #tpu.memory_space<vmem>>, vector<1x1x12x128xf32>
    %127 = vector.shape_cast %126 : vector<1x1x12x128xf32> to vector<12x128xf32>
    %128 = arith.truncf %127 : vector<12x128xf32> to vector<12x128xbf16>
    %c1_i32_96 = arith.constant 1 : i32
    %129 = arith.addi %0, %c1_i32_96 : i32
    %c2_i32_97 = arith.constant 2 : i32
    %130 = arith.addi %129, %c2_i32_97 : i32
    %c0_98 = arith.constant 0 : index
    %131 = arith.index_cast %130 : i32 to index
    %c1_99 = arith.constant 1 : index
    %c0_100 = arith.constant 0 : index
    %132 = vector.load %arg2[%c0_98, %131, %c1_99, %c0_100] : memref<1x14x14x128xf32, #tpu.memory_space<vmem>>, vector<1x1x12x128xf32>
    %133 = vector.shape_cast %132 : vector<1x1x12x128xf32> to vector<12x128xf32>
    %134 = arith.truncf %133 : vector<12x128xf32> to vector<12x128xbf16>
    %cst_101 = arith.constant dense<0.000000e+00> : vector<12x128xf32>
    %135 = tpu.matmul %128, %123, %cst_101 {dimension_numbers = #tpu.dot_dimension_numbers<[1], [0], [0], [1], [0, 0, 1, 1], [], []>} : vector<12x128xbf16>, vector<128x128xbf16>, vector<12x128xf32> -> vector<12x128xf32>
    %136 = arith.addf %119, %135 : vector<12x128xf32>
    %cst_102 = arith.constant dense<0.000000e+00> : vector<12x128xf32>
    %137 = tpu.matmul %134, %123, %cst_102 {dimension_numbers = #tpu.dot_dimension_numbers<[1], [0], [0], [1], [0, 0, 1, 1], [], []>} : vector<12x128xbf16>, vector<128x128xbf16>, vector<12x128xf32> -> vector<12x128xf32>
    %138 = arith.addf %121, %137 : vector<12x128xf32>
    %c8 = arith.constant 8 : index
    %c0_103 = arith.constant 0 : index
    %c0_104 = arith.constant 0 : index
    %139 = vector.load %arg3[%c8, %c0_103, %c0_104] : memref<9x128x128xbf16, #tpu.memory_space<vmem>>, vector<1x128x128xbf16>
    %140 = vector.shape_cast %139 : vector<1x128x128xbf16> to vector<128x128xbf16>
    %c2_i32_105 = arith.constant 2 : i32
    %141 = arith.addi %0, %c2_i32_105 : i32
    %c0_106 = arith.constant 0 : index
    %142 = arith.index_cast %141 : i32 to index
    %c2_107 = arith.constant 2 : index
    %c0_108 = arith.constant 0 : index
    %143 = vector.load %arg2[%c0_106, %142, %c2_107, %c0_108] : memref<1x14x14x128xf32, #tpu.memory_space<vmem>>, vector<1x1x12x128xf32>
    %144 = vector.shape_cast %143 : vector<1x1x12x128xf32> to vector<12x128xf32>
    %145 = arith.truncf %144 : vector<12x128xf32> to vector<12x128xbf16>
    %c1_i32_109 = arith.constant 1 : i32
    %146 = arith.addi %0, %c1_i32_109 : i32
    %c2_i32_110 = arith.constant 2 : i32
    %147 = arith.addi %146, %c2_i32_110 : i32
    %c0_111 = arith.constant 0 : index
    %148 = arith.index_cast %147 : i32 to index
    %c2_112 = arith.constant 2 : index
    %c0_113 = arith.constant 0 : index
    %149 = vector.load %arg2[%c0_111, %148, %c2_112, %c0_113] : memref<1x14x14x128xf32, #tpu.memory_space<vmem>>, vector<1x1x12x128xf32>
    %150 = vector.shape_cast %149 : vector<1x1x12x128xf32> to vector<12x128xf32>
    %151 = arith.truncf %150 : vector<12x128xf32> to vector<12x128xbf16>
    %cst_114 = arith.constant dense<0.000000e+00> : vector<12x128xf32>
    %152 = tpu.matmul %145, %140, %cst_114 {dimension_numbers = #tpu.dot_dimension_numbers<[1], [0], [0], [1], [0, 0, 1, 1], [], []>} : vector<12x128xbf16>, vector<128x128xbf16>, vector<12x128xf32> -> vector<12x128xf32>
    %153 = arith.addf %136, %152 : vector<12x128xf32>
    %cst_115 = arith.constant dense<0.000000e+00> : vector<12x128xf32>
    %154 = tpu.matmul %151, %140, %cst_115 {dimension_numbers = #tpu.dot_dimension_numbers<[1], [0], [0], [1], [0, 0, 1, 1], [], []>} : vector<12x128xbf16>, vector<128x128xbf16>, vector<12x128xf32> -> vector<12x128xf32>
    %155 = arith.addf %138, %154 : vector<12x128xf32>
    %c0_116 = arith.constant 0 : index
    %c0_117 = arith.constant 0 : index
    %156 = vector.load %arg4[%c0_116, %c0_117] : memref<1x128xf32, #tpu.memory_space<vmem>>, vector<1x128xf32>
    %157 = vector.broadcast %156 : vector<1x128xf32> to vector<12x128xf32>
    %158 = arith.addf %153, %157 : vector<12x128xf32>
    %cst_118 = arith.constant 0.000000e+00 : f32
    %159 = vector.broadcast %cst_118 : f32 to vector<12x128xf32>
    %160 = arith.maximumf %158, %159 : vector<12x128xf32>
    %161 = vector.broadcast %156 : vector<1x128xf32> to vector<12x128xf32>
    %162 = arith.addf %155, %161 : vector<12x128xf32>
    %cst_119 = arith.constant 0.000000e+00 : f32
    %163 = vector.broadcast %cst_119 : f32 to vector<12x128xf32>
    %164 = arith.maximumf %162, %163 : vector<12x128xf32>
    %165 = arith.maximumf %160, %164 : vector<12x128xf32>
    %c0_120 = arith.constant 0 : index
    %c0_121 = arith.constant 0 : index
    %166 = vector.load %arg6[%c0_120, %c0_121] : memref<12x128xf32, #tpu.memory_space<vmem>>, vector<12x128xf32>
    tpu.vector_store %arg6[%c0_120, %c0_121], %165 {strides = array<i32>} : memref<12x128xf32, #tpu.memory_space<vmem>>, vector<12x128xf32>,
    %c0_122 = arith.constant 0 : index
    %c0_123 = arith.constant 0 : index
    %167 = tpu.strided_load %arg6[%c0_122, %c0_123] {strides = array<i32: 2, 1>} : memref<12x128xf32, #tpu.memory_space<vmem>>, vector<6x128xf32>
    %c1_124 = arith.constant 1 : index
    %c0_125 = arith.constant 0 : index
    %168 = tpu.strided_load %arg6[%c1_124, %c0_125] {strides = array<i32: 2, 1>} : memref<12x128xf32, #tpu.memory_space<vmem>>, vector<6x128xf32>
    %169 = arith.maximumf %167, %168 : vector<6x128xf32>
    %c0_126 = arith.constant 0 : index
    %c0_127 = arith.constant 0 : index
    %c0_128 = arith.constant 0 : index
    %c0_129 = arith.constant 0 : index
    %170 = vector.load %arg5[%c0_126, %c0_127, %c0_128, %c0_129] : memref<1x1x6x128xf32, #tpu.memory_space<vmem>>, vector<1x1x6x128xf32>
    %171 = vector.shape_cast %170 : vector<1x1x6x128xf32> to vector<6x128xf32>
    %172 = vector.shape_cast %169 : vector<6x128xf32> to vector<1x1x6x128xf32>
    tpu.vector_store %arg5[%c0_126, %c0_127, %c0_128, %c0_129], %172 {strides = array<i32>} : memref<1x1x6x128xf32, #tpu.memory_space<vmem>>, vector<1x1x6x128xf32>,
    return
  }
  func.func @transform_0(%arg0: i32, %arg1: i32) -> (i32, i32, i32, i32) {
    %c0_i32 = arith.constant 0 : i32
    %c0_i32_0 = arith.constant 0 : i32
    %c0_i32_1 = arith.constant 0 : i32
    %c0_i32_2 = arith.constant 0 : i32
    return %arg0, %c0_i32, %c0_i32_0, %c0_i32_1 : i32, i32, i32, i32
  }
  func.func @transform_1(%arg0: i32, %arg1: i32) -> (i32, i32, i32) {
    %c0_i32 = arith.constant 0 : i32
    %c0_i32_0 = arith.constant 0 : i32
    %c0_i32_1 = arith.constant 0 : i32
    %c0_i32_2 = arith.constant 0 : i32
    return %c0_i32, %c0_i32_0, %c0_i32_1 : i32, i32, i32
  }
  func.func @transform_2(%arg0: i32, %arg1: i32) -> (i32, i32) {
    %c0_i32 = arith.constant 0 : i32
    %c0_i32_0 = arith.constant 0 : i32
    %c0_i32_1 = arith.constant 0 : i32
    return %c0_i32, %c0_i32_0 : i32, i32
  }
  func.func @transform_3(%arg0: i32, %arg1: i32) -> (i32, i32, i32, i32) {
    %c0_i32 = arith.constant 0 : i32
    %c0_i32_0 = arith.constant 0 : i32
    %c0_i32_1 = arith.constant 0 : i32
    return %arg0, %arg1, %c0_i32, %c0_i32_0 : i32, i32, i32, i32
  }
}

module attributes {stable_mosaic.version = 11 : i64} {
  func.func @_conv_relu_pool_kernel(%arg0: i32, %arg1: i32, %arg2: memref<1x32x32x3xf32, #tpu.memory_space<vmem>>, %arg3: memref<25x3x128xbf16, #tpu.memory_space<vmem>>, %arg4: memref<1x128xf32, #tpu.memory_space<vmem>>, %arg5: memref<1x1x14x128xf32, #tpu.memory_space<vmem>>, %arg6: memref<28x128xf32, #tpu.memory_space<vmem>>) attributes {dimension_semantics = [#tpu.dimension_semantics<parallel>, #tpu.dimension_semantics<parallel>], iteration_bounds = array<i64: 2, 14>, scalar_prefetch = 0 : i64, scratch_operands = 1 : i64, tpu.core_type = #tpu.core_type<tc>, window_params = [{transform_indices = @transform_0, window_bounds = array<i64: 1, 32, 32, 3>}, {pipeline_mode = #tpu.pipeline_mode<synchronous>, transform_indices = @transform_1, window_bounds = array<i64: 25, 3, 128>}, {pipeline_mode = #tpu.pipeline_mode<synchronous>, transform_indices = @transform_2, window_bounds = array<i64: 1, 128>}, {transform_indices = @transform_3, window_bounds = array<i64: 1, 1, 14, 128>}]} {
    %c2_i32 = arith.constant 2 : i32
    %0 = arith.muli %c2_i32, %arg1 : i32
    %cst = arith.constant 0.000000e+00 : f32
    %1 = vector.broadcast %cst : f32 to vector<28x128xf32>
    %cst_0 = arith.constant 0.000000e+00 : f32
    %2 = vector.broadcast %cst_0 : f32 to vector<28x128xf32>
    %c0 = arith.constant 0 : index
    %c0_1 = arith.constant 0 : index
    %c0_2 = arith.constant 0 : index
    %3 = vector.load %arg3[%c0, %c0_1, %c0_2] : memref<25x3x128xbf16, #tpu.memory_space<vmem>>, vector<1x3x128xbf16>
    %4 = vector.shape_cast %3 : vector<1x3x128xbf16> to vector<3x128xbf16>
    %c0_i32 = arith.constant 0 : i32
    %5 = arith.addi %0, %c0_i32 : i32
    %c0_3 = arith.constant 0 : index
    %6 = arith.index_cast %5 : i32 to index
    %c0_4 = arith.constant 0 : index
    %c0_5 = arith.constant 0 : index
    %7 = vector.load %arg2[%c0_3, %6, %c0_4, %c0_5] : memref<1x32x32x3xf32, #tpu.memory_space<vmem>>, vector<1x1x28x3xf32>
    %8 = vector.shape_cast %7 : vector<1x1x28x3xf32> to vector<28x3xf32>
    %9 = arith.truncf %8 : vector<28x3xf32> to vector<28x3xbf16>
    %c1_i32 = arith.constant 1 : i32
    %10 = arith.addi %0, %c1_i32 : i32
    %c0_i32_6 = arith.constant 0 : i32
    %11 = arith.addi %10, %c0_i32_6 : i32
    %c0_7 = arith.constant 0 : index
    %12 = arith.index_cast %11 : i32 to index
    %c0_8 = arith.constant 0 : index
    %c0_9 = arith.constant 0 : index
    %13 = vector.load %arg2[%c0_7, %12, %c0_8, %c0_9] : memref<1x32x32x3xf32, #tpu.memory_space<vmem>>, vector<1x1x28x3xf32>
    %14 = vector.shape_cast %13 : vector<1x1x28x3xf32> to vector<28x3xf32>
    %15 = arith.truncf %14 : vector<28x3xf32> to vector<28x3xbf16>
    %cst_10 = arith.constant dense<0.000000e+00> : vector<28x128xf32>
    %16 = tpu.matmul %9, %4, %cst_10 {dimension_numbers = #tpu.dot_dimension_numbers<[1], [0], [0], [1], [0, 0, 1, 1], [], []>} : vector<28x3xbf16>, vector<3x128xbf16>, vector<28x128xf32> -> vector<28x128xf32>
    %17 = arith.addf %1, %16 : vector<28x128xf32>
    %cst_11 = arith.constant dense<0.000000e+00> : vector<28x128xf32>
    %18 = tpu.matmul %15, %4, %cst_11 {dimension_numbers = #tpu.dot_dimension_numbers<[1], [0], [0], [1], [0, 0, 1, 1], [], []>} : vector<28x3xbf16>, vector<3x128xbf16>, vector<28x128xf32> -> vector<28x128xf32>
    %19 = arith.addf %2, %18 : vector<28x128xf32>
    %c1 = arith.constant 1 : index
    %c0_12 = arith.constant 0 : index
    %c0_13 = arith.constant 0 : index
    %20 = vector.load %arg3[%c1, %c0_12, %c0_13] : memref<25x3x128xbf16, #tpu.memory_space<vmem>>, vector<1x3x128xbf16>
    %21 = vector.shape_cast %20 : vector<1x3x128xbf16> to vector<3x128xbf16>
    %c0_i32_14 = arith.constant 0 : i32
    %22 = arith.addi %0, %c0_i32_14 : i32
    %c0_15 = arith.constant 0 : index
    %23 = arith.index_cast %22 : i32 to index
    %c1_16 = arith.constant 1 : index
    %c0_17 = arith.constant 0 : index
    %24 = vector.load %arg2[%c0_15, %23, %c1_16, %c0_17] : memref<1x32x32x3xf32, #tpu.memory_space<vmem>>, vector<1x1x28x3xf32>
    %25 = vector.shape_cast %24 : vector<1x1x28x3xf32> to vector<28x3xf32>
    %26 = arith.truncf %25 : vector<28x3xf32> to vector<28x3xbf16>
    %c1_i32_18 = arith.constant 1 : i32
    %27 = arith.addi %0, %c1_i32_18 : i32
    %c0_i32_19 = arith.constant 0 : i32
    %28 = arith.addi %27, %c0_i32_19 : i32
    %c0_20 = arith.constant 0 : index
    %29 = arith.index_cast %28 : i32 to index
    %c1_21 = arith.constant 1 : index
    %c0_22 = arith.constant 0 : index
    %30 = vector.load %arg2[%c0_20, %29, %c1_21, %c0_22] : memref<1x32x32x3xf32, #tpu.memory_space<vmem>>, vector<1x1x28x3xf32>
    %31 = vector.shape_cast %30 : vector<1x1x28x3xf32> to vector<28x3xf32>
    %32 = arith.truncf %31 : vector<28x3xf32> to vector<28x3xbf16>
    %cst_23 = arith.constant dense<0.000000e+00> : vector<28x128xf32>
    %33 = tpu.matmul %26, %21, %cst_23 {dimension_numbers = #tpu.dot_dimension_numbers<[1], [0], [0], [1], [0, 0, 1, 1], [], []>} : vector<28x3xbf16>, vector<3x128xbf16>, vector<28x128xf32> -> vector<28x128xf32>
    %34 = arith.addf %17, %33 : vector<28x128xf32>
    %cst_24 = arith.constant dense<0.000000e+00> : vector<28x128xf32>
    %35 = tpu.matmul %32, %21, %cst_24 {dimension_numbers = #tpu.dot_dimension_numbers<[1], [0], [0], [1], [0, 0, 1, 1], [], []>} : vector<28x3xbf16>, vector<3x128xbf16>, vector<28x128xf32> -> vector<28x128xf32>
    %36 = arith.addf %19, %35 : vector<28x128xf32>
    %c2 = arith.constant 2 : index
    %c0_25 = arith.constant 0 : index
    %c0_26 = arith.constant 0 : index
    %37 = vector.load %arg3[%c2, %c0_25, %c0_26] : memref<25x3x128xbf16, #tpu.memory_space<vmem>>, vector<1x3x128xbf16>
    %38 = vector.shape_cast %37 : vector<1x3x128xbf16> to vector<3x128xbf16>
    %c0_i32_27 = arith.constant 0 : i32
    %39 = arith.addi %0, %c0_i32_27 : i32
    %c0_28 = arith.constant 0 : index
    %40 = arith.index_cast %39 : i32 to index
    %c2_29 = arith.constant 2 : index
    %c0_30 = arith.constant 0 : index
    %41 = vector.load %arg2[%c0_28, %40, %c2_29, %c0_30] : memref<1x32x32x3xf32, #tpu.memory_space<vmem>>, vector<1x1x28x3xf32>
    %42 = vector.shape_cast %41 : vector<1x1x28x3xf32> to vector<28x3xf32>
    %43 = arith.truncf %42 : vector<28x3xf32> to vector<28x3xbf16>
    %c1_i32_31 = arith.constant 1 : i32
    %44 = arith.addi %0, %c1_i32_31 : i32
    %c0_i32_32 = arith.constant 0 : i32
    %45 = arith.addi %44, %c0_i32_32 : i32
    %c0_33 = arith.constant 0 : index
    %46 = arith.index_cast %45 : i32 to index
    %c2_34 = arith.constant 2 : index
    %c0_35 = arith.constant 0 : index
    %47 = vector.load %arg2[%c0_33, %46, %c2_34, %c0_35] : memref<1x32x32x3xf32, #tpu.memory_space<vmem>>, vector<1x1x28x3xf32>
    %48 = vector.shape_cast %47 : vector<1x1x28x3xf32> to vector<28x3xf32>
    %49 = arith.truncf %48 : vector<28x3xf32> to vector<28x3xbf16>
    %cst_36 = arith.constant dense<0.000000e+00> : vector<28x128xf32>
    %50 = tpu.matmul %43, %38, %cst_36 {dimension_numbers = #tpu.dot_dimension_numbers<[1], [0], [0], [1], [0, 0, 1, 1], [], []>} : vector<28x3xbf16>, vector<3x128xbf16>, vector<28x128xf32> -> vector<28x128xf32>
    %51 = arith.addf %34, %50 : vector<28x128xf32>
    %cst_37 = arith.constant dense<0.000000e+00> : vector<28x128xf32>
    %52 = tpu.matmul %49, %38, %cst_37 {dimension_numbers = #tpu.dot_dimension_numbers<[1], [0], [0], [1], [0, 0, 1, 1], [], []>} : vector<28x3xbf16>, vector<3x128xbf16>, vector<28x128xf32> -> vector<28x128xf32>
    %53 = arith.addf %36, %52 : vector<28x128xf32>
    %c3 = arith.constant 3 : index
    %c0_38 = arith.constant 0 : index
    %c0_39 = arith.constant 0 : index
    %54 = vector.load %arg3[%c3, %c0_38, %c0_39] : memref<25x3x128xbf16, #tpu.memory_space<vmem>>, vector<1x3x128xbf16>
    %55 = vector.shape_cast %54 : vector<1x3x128xbf16> to vector<3x128xbf16>
    %c0_i32_40 = arith.constant 0 : i32
    %56 = arith.addi %0, %c0_i32_40 : i32
    %c0_41 = arith.constant 0 : index
    %57 = arith.index_cast %56 : i32 to index
    %c3_42 = arith.constant 3 : index
    %c0_43 = arith.constant 0 : index
    %58 = vector.load %arg2[%c0_41, %57, %c3_42, %c0_43] : memref<1x32x32x3xf32, #tpu.memory_space<vmem>>, vector<1x1x28x3xf32>
    %59 = vector.shape_cast %58 : vector<1x1x28x3xf32> to vector<28x3xf32>
    %60 = arith.truncf %59 : vector<28x3xf32> to vector<28x3xbf16>
    %c1_i32_44 = arith.constant 1 : i32
    %61 = arith.addi %0, %c1_i32_44 : i32
    %c0_i32_45 = arith.constant 0 : i32
    %62 = arith.addi %61, %c0_i32_45 : i32
    %c0_46 = arith.constant 0 : index
    %63 = arith.index_cast %62 : i32 to index
    %c3_47 = arith.constant 3 : index
    %c0_48 = arith.constant 0 : index
    %64 = vector.load %arg2[%c0_46, %63, %c3_47, %c0_48] : memref<1x32x32x3xf32, #tpu.memory_space<vmem>>, vector<1x1x28x3xf32>
    %65 = vector.shape_cast %64 : vector<1x1x28x3xf32> to vector<28x3xf32>
    %66 = arith.truncf %65 : vector<28x3xf32> to vector<28x3xbf16>
    %cst_49 = arith.constant dense<0.000000e+00> : vector<28x128xf32>
    %67 = tpu.matmul %60, %55, %cst_49 {dimension_numbers = #tpu.dot_dimension_numbers<[1], [0], [0], [1], [0, 0, 1, 1], [], []>} : vector<28x3xbf16>, vector<3x128xbf16>, vector<28x128xf32> -> vector<28x128xf32>
    %68 = arith.addf %51, %67 : vector<28x128xf32>
    %cst_50 = arith.constant dense<0.000000e+00> : vector<28x128xf32>
    %69 = tpu.matmul %66, %55, %cst_50 {dimension_numbers = #tpu.dot_dimension_numbers<[1], [0], [0], [1], [0, 0, 1, 1], [], []>} : vector<28x3xbf16>, vector<3x128xbf16>, vector<28x128xf32> -> vector<28x128xf32>
    %70 = arith.addf %53, %69 : vector<28x128xf32>
    %c4 = arith.constant 4 : index
    %c0_51 = arith.constant 0 : index
    %c0_52 = arith.constant 0 : index
    %71 = vector.load %arg3[%c4, %c0_51, %c0_52] : memref<25x3x128xbf16, #tpu.memory_space<vmem>>, vector<1x3x128xbf16>
    %72 = vector.shape_cast %71 : vector<1x3x128xbf16> to vector<3x128xbf16>
    %c0_i32_53 = arith.constant 0 : i32
    %73 = arith.addi %0, %c0_i32_53 : i32
    %c0_54 = arith.constant 0 : index
    %74 = arith.index_cast %73 : i32 to index
    %c4_55 = arith.constant 4 : index
    %c0_56 = arith.constant 0 : index
    %75 = vector.load %arg2[%c0_54, %74, %c4_55, %c0_56] : memref<1x32x32x3xf32, #tpu.memory_space<vmem>>, vector<1x1x28x3xf32>
    %76 = vector.shape_cast %75 : vector<1x1x28x3xf32> to vector<28x3xf32>
    %77 = arith.truncf %76 : vector<28x3xf32> to vector<28x3xbf16>
    %c1_i32_57 = arith.constant 1 : i32
    %78 = arith.addi %0, %c1_i32_57 : i32
    %c0_i32_58 = arith.constant 0 : i32
    %79 = arith.addi %78, %c0_i32_58 : i32
    %c0_59 = arith.constant 0 : index
    %80 = arith.index_cast %79 : i32 to index
    %c4_60 = arith.constant 4 : index
    %c0_61 = arith.constant 0 : index
    %81 = vector.load %arg2[%c0_59, %80, %c4_60, %c0_61] : memref<1x32x32x3xf32, #tpu.memory_space<vmem>>, vector<1x1x28x3xf32>
    %82 = vector.shape_cast %81 : vector<1x1x28x3xf32> to vector<28x3xf32>
    %83 = arith.truncf %82 : vector<28x3xf32> to vector<28x3xbf16>
    %cst_62 = arith.constant dense<0.000000e+00> : vector<28x128xf32>
    %84 = tpu.matmul %77, %72, %cst_62 {dimension_numbers = #tpu.dot_dimension_numbers<[1], [0], [0], [1], [0, 0, 1, 1], [], []>} : vector<28x3xbf16>, vector<3x128xbf16>, vector<28x128xf32> -> vector<28x128xf32>
    %85 = arith.addf %68, %84 : vector<28x128xf32>
    %cst_63 = arith.constant dense<0.000000e+00> : vector<28x128xf32>
    %86 = tpu.matmul %83, %72, %cst_63 {dimension_numbers = #tpu.dot_dimension_numbers<[1], [0], [0], [1], [0, 0, 1, 1], [], []>} : vector<28x3xbf16>, vector<3x128xbf16>, vector<28x128xf32> -> vector<28x128xf32>
    %87 = arith.addf %70, %86 : vector<28x128xf32>
    %c5 = arith.constant 5 : index
    %c0_64 = arith.constant 0 : index
    %c0_65 = arith.constant 0 : index
    %88 = vector.load %arg3[%c5, %c0_64, %c0_65] : memref<25x3x128xbf16, #tpu.memory_space<vmem>>, vector<1x3x128xbf16>
    %89 = vector.shape_cast %88 : vector<1x3x128xbf16> to vector<3x128xbf16>
    %c1_i32_66 = arith.constant 1 : i32
    %90 = arith.addi %0, %c1_i32_66 : i32
    %c0_67 = arith.constant 0 : index
    %91 = arith.index_cast %90 : i32 to index
    %c0_68 = arith.constant 0 : index
    %c0_69 = arith.constant 0 : index
    %92 = vector.load %arg2[%c0_67, %91, %c0_68, %c0_69] : memref<1x32x32x3xf32, #tpu.memory_space<vmem>>, vector<1x1x28x3xf32>
    %93 = vector.shape_cast %92 : vector<1x1x28x3xf32> to vector<28x3xf32>
    %94 = arith.truncf %93 : vector<28x3xf32> to vector<28x3xbf16>
    %c1_i32_70 = arith.constant 1 : i32
    %95 = arith.addi %0, %c1_i32_70 : i32
    %c1_i32_71 = arith.constant 1 : i32
    %96 = arith.addi %95, %c1_i32_71 : i32
    %c0_72 = arith.constant 0 : index
    %97 = arith.index_cast %96 : i32 to index
    %c0_73 = arith.constant 0 : index
    %c0_74 = arith.constant 0 : index
    %98 = vector.load %arg2[%c0_72, %97, %c0_73, %c0_74] : memref<1x32x32x3xf32, #tpu.memory_space<vmem>>, vector<1x1x28x3xf32>
    %99 = vector.shape_cast %98 : vector<1x1x28x3xf32> to vector<28x3xf32>
    %100 = arith.truncf %99 : vector<28x3xf32> to vector<28x3xbf16>
    %cst_75 = arith.constant dense<0.000000e+00> : vector<28x128xf32>
    %101 = tpu.matmul %94, %89, %cst_75 {dimension_numbers = #tpu.dot_dimension_numbers<[1], [0], [0], [1], [0, 0, 1, 1], [], []>} : vector<28x3xbf16>, vector<3x128xbf16>, vector<28x128xf32> -> vector<28x128xf32>
    %102 = arith.addf %85, %101 : vector<28x128xf32>
    %cst_76 = arith.constant dense<0.000000e+00> : vector<28x128xf32>
    %103 = tpu.matmul %100, %89, %cst_76 {dimension_numbers = #tpu.dot_dimension_numbers<[1], [0], [0], [1], [0, 0, 1, 1], [], []>} : vector<28x3xbf16>, vector<3x128xbf16>, vector<28x128xf32> -> vector<28x128xf32>
    %104 = arith.addf %87, %103 : vector<28x128xf32>
    %c6 = arith.constant 6 : index
    %c0_77 = arith.constant 0 : index
    %c0_78 = arith.constant 0 : index
    %105 = vector.load %arg3[%c6, %c0_77, %c0_78] : memref<25x3x128xbf16, #tpu.memory_space<vmem>>, vector<1x3x128xbf16>
    %106 = vector.shape_cast %105 : vector<1x3x128xbf16> to vector<3x128xbf16>
    %c1_i32_79 = arith.constant 1 : i32
    %107 = arith.addi %0, %c1_i32_79 : i32
    %c0_80 = arith.constant 0 : index
    %108 = arith.index_cast %107 : i32 to index
    %c1_81 = arith.constant 1 : index
    %c0_82 = arith.constant 0 : index
    %109 = vector.load %arg2[%c0_80, %108, %c1_81, %c0_82] : memref<1x32x32x3xf32, #tpu.memory_space<vmem>>, vector<1x1x28x3xf32>
    %110 = vector.shape_cast %109 : vector<1x1x28x3xf32> to vector<28x3xf32>
    %111 = arith.truncf %110 : vector<28x3xf32> to vector<28x3xbf16>
    %c1_i32_83 = arith.constant 1 : i32
    %112 = arith.addi %0, %c1_i32_83 : i32
    %c1_i32_84 = arith.constant 1 : i32
    %113 = arith.addi %112, %c1_i32_84 : i32
    %c0_85 = arith.constant 0 : index
    %114 = arith.index_cast %113 : i32 to index
    %c1_86 = arith.constant 1 : index
    %c0_87 = arith.constant 0 : index
    %115 = vector.load %arg2[%c0_85, %114, %c1_86, %c0_87] : memref<1x32x32x3xf32, #tpu.memory_space<vmem>>, vector<1x1x28x3xf32>
    %116 = vector.shape_cast %115 : vector<1x1x28x3xf32> to vector<28x3xf32>
    %117 = arith.truncf %116 : vector<28x3xf32> to vector<28x3xbf16>
    %cst_88 = arith.constant dense<0.000000e+00> : vector<28x128xf32>
    %118 = tpu.matmul %111, %106, %cst_88 {dimension_numbers = #tpu.dot_dimension_numbers<[1], [0], [0], [1], [0, 0, 1, 1], [], []>} : vector<28x3xbf16>, vector<3x128xbf16>, vector<28x128xf32> -> vector<28x128xf32>
    %119 = arith.addf %102, %118 : vector<28x128xf32>
    %cst_89 = arith.constant dense<0.000000e+00> : vector<28x128xf32>
    %120 = tpu.matmul %117, %106, %cst_89 {dimension_numbers = #tpu.dot_dimension_numbers<[1], [0], [0], [1], [0, 0, 1, 1], [], []>} : vector<28x3xbf16>, vector<3x128xbf16>, vector<28x128xf32> -> vector<28x128xf32>
    %121 = arith.addf %104, %120 : vector<28x128xf32>
    %c7 = arith.constant 7 : index
    %c0_90 = arith.constant 0 : index
    %c0_91 = arith.constant 0 : index
    %122 = vector.load %arg3[%c7, %c0_90, %c0_91] : memref<25x3x128xbf16, #tpu.memory_space<vmem>>, vector<1x3x128xbf16>
    %123 = vector.shape_cast %122 : vector<1x3x128xbf16> to vector<3x128xbf16>
    %c1_i32_92 = arith.constant 1 : i32
    %124 = arith.addi %0, %c1_i32_92 : i32
    %c0_93 = arith.constant 0 : index
    %125 = arith.index_cast %124 : i32 to index
    %c2_94 = arith.constant 2 : index
    %c0_95 = arith.constant 0 : index
    %126 = vector.load %arg2[%c0_93, %125, %c2_94, %c0_95] : memref<1x32x32x3xf32, #tpu.memory_space<vmem>>, vector<1x1x28x3xf32>
    %127 = vector.shape_cast %126 : vector<1x1x28x3xf32> to vector<28x3xf32>
    %128 = arith.truncf %127 : vector<28x3xf32> to vector<28x3xbf16>
    %c1_i32_96 = arith.constant 1 : i32
    %129 = arith.addi %0, %c1_i32_96 : i32
    %c1_i32_97 = arith.constant 1 : i32
    %130 = arith.addi %129, %c1_i32_97 : i32
    %c0_98 = arith.constant 0 : index
    %131 = arith.index_cast %130 : i32 to index
    %c2_99 = arith.constant 2 : index
    %c0_100 = arith.constant 0 : index
    %132 = vector.load %arg2[%c0_98, %131, %c2_99, %c0_100] : memref<1x32x32x3xf32, #tpu.memory_space<vmem>>, vector<1x1x28x3xf32>
    %133 = vector.shape_cast %132 : vector<1x1x28x3xf32> to vector<28x3xf32>
    %134 = arith.truncf %133 : vector<28x3xf32> to vector<28x3xbf16>
    %cst_101 = arith.constant dense<0.000000e+00> : vector<28x128xf32>
    %135 = tpu.matmul %128, %123, %cst_101 {dimension_numbers = #tpu.dot_dimension_numbers<[1], [0], [0], [1], [0, 0, 1, 1], [], []>} : vector<28x3xbf16>, vector<3x128xbf16>, vector<28x128xf32> -> vector<28x128xf32>
    %136 = arith.addf %119, %135 : vector<28x128xf32>
    %cst_102 = arith.constant dense<0.000000e+00> : vector<28x128xf32>
    %137 = tpu.matmul %134, %123, %cst_102 {dimension_numbers = #tpu.dot_dimension_numbers<[1], [0], [0], [1], [0, 0, 1, 1], [], []>} : vector<28x3xbf16>, vector<3x128xbf16>, vector<28x128xf32> -> vector<28x128xf32>
    %138 = arith.addf %121, %137 : vector<28x128xf32>
    %c8 = arith.constant 8 : index
    %c0_103 = arith.constant 0 : index
    %c0_104 = arith.constant 0 : index
    %139 = vector.load %arg3[%c8, %c0_103, %c0_104] : memref<25x3x128xbf16, #tpu.memory_space<vmem>>, vector<1x3x128xbf16>
    %140 = vector.shape_cast %139 : vector<1x3x128xbf16> to vector<3x128xbf16>
    %c1_i32_105 = arith.constant 1 : i32
    %141 = arith.addi %0, %c1_i32_105 : i32
    %c0_106 = arith.constant 0 : index
    %142 = arith.index_cast %141 : i32 to index
    %c3_107 = arith.constant 3 : index
    %c0_108 = arith.constant 0 : index
    %143 = vector.load %arg2[%c0_106, %142, %c3_107, %c0_108] : memref<1x32x32x3xf32, #tpu.memory_space<vmem>>, vector<1x1x28x3xf32>
    %144 = vector.shape_cast %143 : vector<1x1x28x3xf32> to vector<28x3xf32>
    %145 = arith.truncf %144 : vector<28x3xf32> to vector<28x3xbf16>
    %c1_i32_109 = arith.constant 1 : i32
    %146 = arith.addi %0, %c1_i32_109 : i32
    %c1_i32_110 = arith.constant 1 : i32
    %147 = arith.addi %146, %c1_i32_110 : i32
    %c0_111 = arith.constant 0 : index
    %148 = arith.index_cast %147 : i32 to index
    %c3_112 = arith.constant 3 : index
    %c0_113 = arith.constant 0 : index
    %149 = vector.load %arg2[%c0_111, %148, %c3_112, %c0_113] : memref<1x32x32x3xf32, #tpu.memory_space<vmem>>, vector<1x1x28x3xf32>
    %150 = vector.shape_cast %149 : vector<1x1x28x3xf32> to vector<28x3xf32>
    %151 = arith.truncf %150 : vector<28x3xf32> to vector<28x3xbf16>
    %cst_114 = arith.constant dense<0.000000e+00> : vector<28x128xf32>
    %152 = tpu.matmul %145, %140, %cst_114 {dimension_numbers = #tpu.dot_dimension_numbers<[1], [0], [0], [1], [0, 0, 1, 1], [], []>} : vector<28x3xbf16>, vector<3x128xbf16>, vector<28x128xf32> -> vector<28x128xf32>
    %153 = arith.addf %136, %152 : vector<28x128xf32>
    %cst_115 = arith.constant dense<0.000000e+00> : vector<28x128xf32>
    %154 = tpu.matmul %151, %140, %cst_115 {dimension_numbers = #tpu.dot_dimension_numbers<[1], [0], [0], [1], [0, 0, 1, 1], [], []>} : vector<28x3xbf16>, vector<3x128xbf16>, vector<28x128xf32> -> vector<28x128xf32>
    %155 = arith.addf %138, %154 : vector<28x128xf32>
    %c9 = arith.constant 9 : index
    %c0_116 = arith.constant 0 : index
    %c0_117 = arith.constant 0 : index
    %156 = vector.load %arg3[%c9, %c0_116, %c0_117] : memref<25x3x128xbf16, #tpu.memory_space<vmem>>, vector<1x3x128xbf16>
    %157 = vector.shape_cast %156 : vector<1x3x128xbf16> to vector<3x128xbf16>
    %c1_i32_118 = arith.constant 1 : i32
    %158 = arith.addi %0, %c1_i32_118 : i32
    %c0_119 = arith.constant 0 : index
    %159 = arith.index_cast %158 : i32 to index
    %c4_120 = arith.constant 4 : index
    %c0_121 = arith.constant 0 : index
    %160 = vector.load %arg2[%c0_119, %159, %c4_120, %c0_121] : memref<1x32x32x3xf32, #tpu.memory_space<vmem>>, vector<1x1x28x3xf32>
    %161 = vector.shape_cast %160 : vector<1x1x28x3xf32> to vector<28x3xf32>
    %162 = arith.truncf %161 : vector<28x3xf32> to vector<28x3xbf16>
    %c1_i32_122 = arith.constant 1 : i32
    %163 = arith.addi %0, %c1_i32_122 : i32
    %c1_i32_123 = arith.constant 1 : i32
    %164 = arith.addi %163, %c1_i32_123 : i32
    %c0_124 = arith.constant 0 : index
    %165 = arith.index_cast %164 : i32 to index
    %c4_125 = arith.constant 4 : index
    %c0_126 = arith.constant 0 : index
    %166 = vector.load %arg2[%c0_124, %165, %c4_125, %c0_126] : memref<1x32x32x3xf32, #tpu.memory_space<vmem>>, vector<1x1x28x3xf32>
    %167 = vector.shape_cast %166 : vector<1x1x28x3xf32> to vector<28x3xf32>
    %168 = arith.truncf %167 : vector<28x3xf32> to vector<28x3xbf16>
    %cst_127 = arith.constant dense<0.000000e+00> : vector<28x128xf32>
    %169 = tpu.matmul %162, %157, %cst_127 {dimension_numbers = #tpu.dot_dimension_numbers<[1], [0], [0], [1], [0, 0, 1, 1], [], []>} : vector<28x3xbf16>, vector<3x128xbf16>, vector<28x128xf32> -> vector<28x128xf32>
    %170 = arith.addf %153, %169 : vector<28x128xf32>
    %cst_128 = arith.constant dense<0.000000e+00> : vector<28x128xf32>
    %171 = tpu.matmul %168, %157, %cst_128 {dimension_numbers = #tpu.dot_dimension_numbers<[1], [0], [0], [1], [0, 0, 1, 1], [], []>} : vector<28x3xbf16>, vector<3x128xbf16>, vector<28x128xf32> -> vector<28x128xf32>
    %172 = arith.addf %155, %171 : vector<28x128xf32>
    %c10 = arith.constant 10 : index
    %c0_129 = arith.constant 0 : index
    %c0_130 = arith.constant 0 : index
    %173 = vector.load %arg3[%c10, %c0_129, %c0_130] : memref<25x3x128xbf16, #tpu.memory_space<vmem>>, vector<1x3x128xbf16>
    %174 = vector.shape_cast %173 : vector<1x3x128xbf16> to vector<3x128xbf16>
    %c2_i32_131 = arith.constant 2 : i32
    %175 = arith.addi %0, %c2_i32_131 : i32
    %c0_132 = arith.constant 0 : index
    %176 = arith.index_cast %175 : i32 to index
    %c0_133 = arith.constant 0 : index
    %c0_134 = arith.constant 0 : index
    %177 = vector.load %arg2[%c0_132, %176, %c0_133, %c0_134] : memref<1x32x32x3xf32, #tpu.memory_space<vmem>>, vector<1x1x28x3xf32>
    %178 = vector.shape_cast %177 : vector<1x1x28x3xf32> to vector<28x3xf32>
    %179 = arith.truncf %178 : vector<28x3xf32> to vector<28x3xbf16>
    %c1_i32_135 = arith.constant 1 : i32
    %180 = arith.addi %0, %c1_i32_135 : i32
    %c2_i32_136 = arith.constant 2 : i32
    %181 = arith.addi %180, %c2_i32_136 : i32
    %c0_137 = arith.constant 0 : index
    %182 = arith.index_cast %181 : i32 to index
    %c0_138 = arith.constant 0 : index
    %c0_139 = arith.constant 0 : index
    %183 = vector.load %arg2[%c0_137, %182, %c0_138, %c0_139] : memref<1x32x32x3xf32, #tpu.memory_space<vmem>>, vector<1x1x28x3xf32>
    %184 = vector.shape_cast %183 : vector<1x1x28x3xf32> to vector<28x3xf32>
    %185 = arith.truncf %184 : vector<28x3xf32> to vector<28x3xbf16>
    %cst_140 = arith.constant dense<0.000000e+00> : vector<28x128xf32>
    %186 = tpu.matmul %179, %174, %cst_140 {dimension_numbers = #tpu.dot_dimension_numbers<[1], [0], [0], [1], [0, 0, 1, 1], [], []>} : vector<28x3xbf16>, vector<3x128xbf16>, vector<28x128xf32> -> vector<28x128xf32>
    %187 = arith.addf %170, %186 : vector<28x128xf32>
    %cst_141 = arith.constant dense<0.000000e+00> : vector<28x128xf32>
    %188 = tpu.matmul %185, %174, %cst_141 {dimension_numbers = #tpu.dot_dimension_numbers<[1], [0], [0], [1], [0, 0, 1, 1], [], []>} : vector<28x3xbf16>, vector<3x128xbf16>, vector<28x128xf32> -> vector<28x128xf32>
    %189 = arith.addf %172, %188 : vector<28x128xf32>
    %c11 = arith.constant 11 : index
    %c0_142 = arith.constant 0 : index
    %c0_143 = arith.constant 0 : index
    %190 = vector.load %arg3[%c11, %c0_142, %c0_143] : memref<25x3x128xbf16, #tpu.memory_space<vmem>>, vector<1x3x128xbf16>
    %191 = vector.shape_cast %190 : vector<1x3x128xbf16> to vector<3x128xbf16>
    %c2_i32_144 = arith.constant 2 : i32
    %192 = arith.addi %0, %c2_i32_144 : i32
    %c0_145 = arith.constant 0 : index
    %193 = arith.index_cast %192 : i32 to index
    %c1_146 = arith.constant 1 : index
    %c0_147 = arith.constant 0 : index
    %194 = vector.load %arg2[%c0_145, %193, %c1_146, %c0_147] : memref<1x32x32x3xf32, #tpu.memory_space<vmem>>, vector<1x1x28x3xf32>
    %195 = vector.shape_cast %194 : vector<1x1x28x3xf32> to vector<28x3xf32>
    %196 = arith.truncf %195 : vector<28x3xf32> to vector<28x3xbf16>
    %c1_i32_148 = arith.constant 1 : i32
    %197 = arith.addi %0, %c1_i32_148 : i32
    %c2_i32_149 = arith.constant 2 : i32
    %198 = arith.addi %197, %c2_i32_149 : i32
    %c0_150 = arith.constant 0 : index
    %199 = arith.index_cast %198 : i32 to index
    %c1_151 = arith.constant 1 : index
    %c0_152 = arith.constant 0 : index
    %200 = vector.load %arg2[%c0_150, %199, %c1_151, %c0_152] : memref<1x32x32x3xf32, #tpu.memory_space<vmem>>, vector<1x1x28x3xf32>
    %201 = vector.shape_cast %200 : vector<1x1x28x3xf32> to vector<28x3xf32>
    %202 = arith.truncf %201 : vector<28x3xf32> to vector<28x3xbf16>
    %cst_153 = arith.constant dense<0.000000e+00> : vector<28x128xf32>
    %203 = tpu.matmul %196, %191, %cst_153 {dimension_numbers = #tpu.dot_dimension_numbers<[1], [0], [0], [1], [0, 0, 1, 1], [], []>} : vector<28x3xbf16>, vector<3x128xbf16>, vector<28x128xf32> -> vector<28x128xf32>
    %204 = arith.addf %187, %203 : vector<28x128xf32>
    %cst_154 = arith.constant dense<0.000000e+00> : vector<28x128xf32>
    %205 = tpu.matmul %202, %191, %cst_154 {dimension_numbers = #tpu.dot_dimension_numbers<[1], [0], [0], [1], [0, 0, 1, 1], [], []>} : vector<28x3xbf16>, vector<3x128xbf16>, vector<28x128xf32> -> vector<28x128xf32>
    %206 = arith.addf %189, %205 : vector<28x128xf32>
    %c12 = arith.constant 12 : index
    %c0_155 = arith.constant 0 : index
    %c0_156 = arith.constant 0 : index
    %207 = vector.load %arg3[%c12, %c0_155, %c0_156] : memref<25x3x128xbf16, #tpu.memory_space<vmem>>, vector<1x3x128xbf16>
    %208 = vector.shape_cast %207 : vector<1x3x128xbf16> to vector<3x128xbf16>
    %c2_i32_157 = arith.constant 2 : i32
    %209 = arith.addi %0, %c2_i32_157 : i32
    %c0_158 = arith.constant 0 : index
    %210 = arith.index_cast %209 : i32 to index
    %c2_159 = arith.constant 2 : index
    %c0_160 = arith.constant 0 : index
    %211 = vector.load %arg2[%c0_158, %210, %c2_159, %c0_160] : memref<1x32x32x3xf32, #tpu.memory_space<vmem>>, vector<1x1x28x3xf32>
    %212 = vector.shape_cast %211 : vector<1x1x28x3xf32> to vector<28x3xf32>
    %213 = arith.truncf %212 : vector<28x3xf32> to vector<28x3xbf16>
    %c1_i32_161 = arith.constant 1 : i32
    %214 = arith.addi %0, %c1_i32_161 : i32
    %c2_i32_162 = arith.constant 2 : i32
    %215 = arith.addi %214, %c2_i32_162 : i32
    %c0_163 = arith.constant 0 : index
    %216 = arith.index_cast %215 : i32 to index
    %c2_164 = arith.constant 2 : index
    %c0_165 = arith.constant 0 : index
    %217 = vector.load %arg2[%c0_163, %216, %c2_164, %c0_165] : memref<1x32x32x3xf32, #tpu.memory_space<vmem>>, vector<1x1x28x3xf32>
    %218 = vector.shape_cast %217 : vector<1x1x28x3xf32> to vector<28x3xf32>
    %219 = arith.truncf %218 : vector<28x3xf32> to vector<28x3xbf16>
    %cst_166 = arith.constant dense<0.000000e+00> : vector<28x128xf32>
    %220 = tpu.matmul %213, %208, %cst_166 {dimension_numbers = #tpu.dot_dimension_numbers<[1], [0], [0], [1], [0, 0, 1, 1], [], []>} : vector<28x3xbf16>, vector<3x128xbf16>, vector<28x128xf32> -> vector<28x128xf32>
    %221 = arith.addf %204, %220 : vector<28x128xf32>
    %cst_167 = arith.constant dense<0.000000e+00> : vector<28x128xf32>
    %222 = tpu.matmul %219, %208, %cst_167 {dimension_numbers = #tpu.dot_dimension_numbers<[1], [0], [0], [1], [0, 0, 1, 1], [], []>} : vector<28x3xbf16>, vector<3x128xbf16>, vector<28x128xf32> -> vector<28x128xf32>
    %223 = arith.addf %206, %222 : vector<28x128xf32>
    %c13 = arith.constant 13 : index
    %c0_168 = arith.constant 0 : index
    %c0_169 = arith.constant 0 : index
    %224 = vector.load %arg3[%c13, %c0_168, %c0_169] : memref<25x3x128xbf16, #tpu.memory_space<vmem>>, vector<1x3x128xbf16>
    %225 = vector.shape_cast %224 : vector<1x3x128xbf16> to vector<3x128xbf16>
    %c2_i32_170 = arith.constant 2 : i32
    %226 = arith.addi %0, %c2_i32_170 : i32
    %c0_171 = arith.constant 0 : index
    %227 = arith.index_cast %226 : i32 to index
    %c3_172 = arith.constant 3 : index
    %c0_173 = arith.constant 0 : index
    %228 = vector.load %arg2[%c0_171, %227, %c3_172, %c0_173] : memref<1x32x32x3xf32, #tpu.memory_space<vmem>>, vector<1x1x28x3xf32>
    %229 = vector.shape_cast %228 : vector<1x1x28x3xf32> to vector<28x3xf32>
    %230 = arith.truncf %229 : vector<28x3xf32> to vector<28x3xbf16>
    %c1_i32_174 = arith.constant 1 : i32
    %231 = arith.addi %0, %c1_i32_174 : i32
    %c2_i32_175 = arith.constant 2 : i32
    %232 = arith.addi %231, %c2_i32_175 : i32
    %c0_176 = arith.constant 0 : index
    %233 = arith.index_cast %232 : i32 to index
    %c3_177 = arith.constant 3 : index
    %c0_178 = arith.constant 0 : index
    %234 = vector.load %arg2[%c0_176, %233, %c3_177, %c0_178] : memref<1x32x32x3xf32, #tpu.memory_space<vmem>>, vector<1x1x28x3xf32>
    %235 = vector.shape_cast %234 : vector<1x1x28x3xf32> to vector<28x3xf32>
    %236 = arith.truncf %235 : vector<28x3xf32> to vector<28x3xbf16>
    %cst_179 = arith.constant dense<0.000000e+00> : vector<28x128xf32>
    %237 = tpu.matmul %230, %225, %cst_179 {dimension_numbers = #tpu.dot_dimension_numbers<[1], [0], [0], [1], [0, 0, 1, 1], [], []>} : vector<28x3xbf16>, vector<3x128xbf16>, vector<28x128xf32> -> vector<28x128xf32>
    %238 = arith.addf %221, %237 : vector<28x128xf32>
    %cst_180 = arith.constant dense<0.000000e+00> : vector<28x128xf32>
    %239 = tpu.matmul %236, %225, %cst_180 {dimension_numbers = #tpu.dot_dimension_numbers<[1], [0], [0], [1], [0, 0, 1, 1], [], []>} : vector<28x3xbf16>, vector<3x128xbf16>, vector<28x128xf32> -> vector<28x128xf32>
    %240 = arith.addf %223, %239 : vector<28x128xf32>
    %c14 = arith.constant 14 : index
    %c0_181 = arith.constant 0 : index
    %c0_182 = arith.constant 0 : index
    %241 = vector.load %arg3[%c14, %c0_181, %c0_182] : memref<25x3x128xbf16, #tpu.memory_space<vmem>>, vector<1x3x128xbf16>
    %242 = vector.shape_cast %241 : vector<1x3x128xbf16> to vector<3x128xbf16>
    %c2_i32_183 = arith.constant 2 : i32
    %243 = arith.addi %0, %c2_i32_183 : i32
    %c0_184 = arith.constant 0 : index
    %244 = arith.index_cast %243 : i32 to index
    %c4_185 = arith.constant 4 : index
    %c0_186 = arith.constant 0 : index
    %245 = vector.load %arg2[%c0_184, %244, %c4_185, %c0_186] : memref<1x32x32x3xf32, #tpu.memory_space<vmem>>, vector<1x1x28x3xf32>
    %246 = vector.shape_cast %245 : vector<1x1x28x3xf32> to vector<28x3xf32>
    %247 = arith.truncf %246 : vector<28x3xf32> to vector<28x3xbf16>
    %c1_i32_187 = arith.constant 1 : i32
    %248 = arith.addi %0, %c1_i32_187 : i32
    %c2_i32_188 = arith.constant 2 : i32
    %249 = arith.addi %248, %c2_i32_188 : i32
    %c0_189 = arith.constant 0 : index
    %250 = arith.index_cast %249 : i32 to index
    %c4_190 = arith.constant 4 : index
    %c0_191 = arith.constant 0 : index
    %251 = vector.load %arg2[%c0_189, %250, %c4_190, %c0_191] : memref<1x32x32x3xf32, #tpu.memory_space<vmem>>, vector<1x1x28x3xf32>
    %252 = vector.shape_cast %251 : vector<1x1x28x3xf32> to vector<28x3xf32>
    %253 = arith.truncf %252 : vector<28x3xf32> to vector<28x3xbf16>
    %cst_192 = arith.constant dense<0.000000e+00> : vector<28x128xf32>
    %254 = tpu.matmul %247, %242, %cst_192 {dimension_numbers = #tpu.dot_dimension_numbers<[1], [0], [0], [1], [0, 0, 1, 1], [], []>} : vector<28x3xbf16>, vector<3x128xbf16>, vector<28x128xf32> -> vector<28x128xf32>
    %255 = arith.addf %238, %254 : vector<28x128xf32>
    %cst_193 = arith.constant dense<0.000000e+00> : vector<28x128xf32>
    %256 = tpu.matmul %253, %242, %cst_193 {dimension_numbers = #tpu.dot_dimension_numbers<[1], [0], [0], [1], [0, 0, 1, 1], [], []>} : vector<28x3xbf16>, vector<3x128xbf16>, vector<28x128xf32> -> vector<28x128xf32>
    %257 = arith.addf %240, %256 : vector<28x128xf32>
    %c15 = arith.constant 15 : index
    %c0_194 = arith.constant 0 : index
    %c0_195 = arith.constant 0 : index
    %258 = vector.load %arg3[%c15, %c0_194, %c0_195] : memref<25x3x128xbf16, #tpu.memory_space<vmem>>, vector<1x3x128xbf16>
    %259 = vector.shape_cast %258 : vector<1x3x128xbf16> to vector<3x128xbf16>
    %c3_i32 = arith.constant 3 : i32
    %260 = arith.addi %0, %c3_i32 : i32
    %c0_196 = arith.constant 0 : index
    %261 = arith.index_cast %260 : i32 to index
    %c0_197 = arith.constant 0 : index
    %c0_198 = arith.constant 0 : index
    %262 = vector.load %arg2[%c0_196, %261, %c0_197, %c0_198] : memref<1x32x32x3xf32, #tpu.memory_space<vmem>>, vector<1x1x28x3xf32>
    %263 = vector.shape_cast %262 : vector<1x1x28x3xf32> to vector<28x3xf32>
    %264 = arith.truncf %263 : vector<28x3xf32> to vector<28x3xbf16>
    %c1_i32_199 = arith.constant 1 : i32
    %265 = arith.addi %0, %c1_i32_199 : i32
    %c3_i32_200 = arith.constant 3 : i32
    %266 = arith.addi %265, %c3_i32_200 : i32
    %c0_201 = arith.constant 0 : index
    %267 = arith.index_cast %266 : i32 to index
    %c0_202 = arith.constant 0 : index
    %c0_203 = arith.constant 0 : index
    %268 = vector.load %arg2[%c0_201, %267, %c0_202, %c0_203] : memref<1x32x32x3xf32, #tpu.memory_space<vmem>>, vector<1x1x28x3xf32>
    %269 = vector.shape_cast %268 : vector<1x1x28x3xf32> to vector<28x3xf32>
    %270 = arith.truncf %269 : vector<28x3xf32> to vector<28x3xbf16>
    %cst_204 = arith.constant dense<0.000000e+00> : vector<28x128xf32>
    %271 = tpu.matmul %264, %259, %cst_204 {dimension_numbers = #tpu.dot_dimension_numbers<[1], [0], [0], [1], [0, 0, 1, 1], [], []>} : vector<28x3xbf16>, vector<3x128xbf16>, vector<28x128xf32> -> vector<28x128xf32>
    %272 = arith.addf %255, %271 : vector<28x128xf32>
    %cst_205 = arith.constant dense<0.000000e+00> : vector<28x128xf32>
    %273 = tpu.matmul %270, %259, %cst_205 {dimension_numbers = #tpu.dot_dimension_numbers<[1], [0], [0], [1], [0, 0, 1, 1], [], []>} : vector<28x3xbf16>, vector<3x128xbf16>, vector<28x128xf32> -> vector<28x128xf32>
    %274 = arith.addf %257, %273 : vector<28x128xf32>
    %c16 = arith.constant 16 : index
    %c0_206 = arith.constant 0 : index
    %c0_207 = arith.constant 0 : index
    %275 = vector.load %arg3[%c16, %c0_206, %c0_207] : memref<25x3x128xbf16, #tpu.memory_space<vmem>>, vector<1x3x128xbf16>
    %276 = vector.shape_cast %275 : vector<1x3x128xbf16> to vector<3x128xbf16>
    %c3_i32_208 = arith.constant 3 : i32
    %277 = arith.addi %0, %c3_i32_208 : i32
    %c0_209 = arith.constant 0 : index
    %278 = arith.index_cast %277 : i32 to index
    %c1_210 = arith.constant 1 : index
    %c0_211 = arith.constant 0 : index
    %279 = vector.load %arg2[%c0_209, %278, %c1_210, %c0_211] : memref<1x32x32x3xf32, #tpu.memory_space<vmem>>, vector<1x1x28x3xf32>
    %280 = vector.shape_cast %279 : vector<1x1x28x3xf32> to vector<28x3xf32>
    %281 = arith.truncf %280 : vector<28x3xf32> to vector<28x3xbf16>
    %c1_i32_212 = arith.constant 1 : i32
    %282 = arith.addi %0, %c1_i32_212 : i32
    %c3_i32_213 = arith.constant 3 : i32
    %283 = arith.addi %282, %c3_i32_213 : i32
    %c0_214 = arith.constant 0 : index
    %284 = arith.index_cast %283 : i32 to index
    %c1_215 = arith.constant 1 : index
    %c0_216 = arith.constant 0 : index
    %285 = vector.load %arg2[%c0_214, %284, %c1_215, %c0_216] : memref<1x32x32x3xf32, #tpu.memory_space<vmem>>, vector<1x1x28x3xf32>
    %286 = vector.shape_cast %285 : vector<1x1x28x3xf32> to vector<28x3xf32>
    %287 = arith.truncf %286 : vector<28x3xf32> to vector<28x3xbf16>
    %cst_217 = arith.constant dense<0.000000e+00> : vector<28x128xf32>
    %288 = tpu.matmul %281, %276, %cst_217 {dimension_numbers = #tpu.dot_dimension_numbers<[1], [0], [0], [1], [0, 0, 1, 1], [], []>} : vector<28x3xbf16>, vector<3x128xbf16>, vector<28x128xf32> -> vector<28x128xf32>
    %289 = arith.addf %272, %288 : vector<28x128xf32>
    %cst_218 = arith.constant dense<0.000000e+00> : vector<28x128xf32>
    %290 = tpu.matmul %287, %276, %cst_218 {dimension_numbers = #tpu.dot_dimension_numbers<[1], [0], [0], [1], [0, 0, 1, 1], [], []>} : vector<28x3xbf16>, vector<3x128xbf16>, vector<28x128xf32> -> vector<28x128xf32>
    %291 = arith.addf %274, %290 : vector<28x128xf32>
    %c17 = arith.constant 17 : index
    %c0_219 = arith.constant 0 : index
    %c0_220 = arith.constant 0 : index
    %292 = vector.load %arg3[%c17, %c0_219, %c0_220] : memref<25x3x128xbf16, #tpu.memory_space<vmem>>, vector<1x3x128xbf16>
    %293 = vector.shape_cast %292 : vector<1x3x128xbf16> to vector<3x128xbf16>
    %c3_i32_221 = arith.constant 3 : i32
    %294 = arith.addi %0, %c3_i32_221 : i32
    %c0_222 = arith.constant 0 : index
    %295 = arith.index_cast %294 : i32 to index
    %c2_223 = arith.constant 2 : index
    %c0_224 = arith.constant 0 : index
    %296 = vector.load %arg2[%c0_222, %295, %c2_223, %c0_224] : memref<1x32x32x3xf32, #tpu.memory_space<vmem>>, vector<1x1x28x3xf32>
    %297 = vector.shape_cast %296 : vector<1x1x28x3xf32> to vector<28x3xf32>
    %298 = arith.truncf %297 : vector<28x3xf32> to vector<28x3xbf16>
    %c1_i32_225 = arith.constant 1 : i32
    %299 = arith.addi %0, %c1_i32_225 : i32
    %c3_i32_226 = arith.constant 3 : i32
    %300 = arith.addi %299, %c3_i32_226 : i32
    %c0_227 = arith.constant 0 : index
    %301 = arith.index_cast %300 : i32 to index
    %c2_228 = arith.constant 2 : index
    %c0_229 = arith.constant 0 : index
    %302 = vector.load %arg2[%c0_227, %301, %c2_228, %c0_229] : memref<1x32x32x3xf32, #tpu.memory_space<vmem>>, vector<1x1x28x3xf32>
    %303 = vector.shape_cast %302 : vector<1x1x28x3xf32> to vector<28x3xf32>
    %304 = arith.truncf %303 : vector<28x3xf32> to vector<28x3xbf16>
    %cst_230 = arith.constant dense<0.000000e+00> : vector<28x128xf32>
    %305 = tpu.matmul %298, %293, %cst_230 {dimension_numbers = #tpu.dot_dimension_numbers<[1], [0], [0], [1], [0, 0, 1, 1], [], []>} : vector<28x3xbf16>, vector<3x128xbf16>, vector<28x128xf32> -> vector<28x128xf32>
    %306 = arith.addf %289, %305 : vector<28x128xf32>
    %cst_231 = arith.constant dense<0.000000e+00> : vector<28x128xf32>
    %307 = tpu.matmul %304, %293, %cst_231 {dimension_numbers = #tpu.dot_dimension_numbers<[1], [0], [0], [1], [0, 0, 1, 1], [], []>} : vector<28x3xbf16>, vector<3x128xbf16>, vector<28x128xf32> -> vector<28x128xf32>
    %308 = arith.addf %291, %307 : vector<28x128xf32>
    %c18 = arith.constant 18 : index
    %c0_232 = arith.constant 0 : index
    %c0_233 = arith.constant 0 : index
    %309 = vector.load %arg3[%c18, %c0_232, %c0_233] : memref<25x3x128xbf16, #tpu.memory_space<vmem>>, vector<1x3x128xbf16>
    %310 = vector.shape_cast %309 : vector<1x3x128xbf16> to vector<3x128xbf16>
    %c3_i32_234 = arith.constant 3 : i32
    %311 = arith.addi %0, %c3_i32_234 : i32
    %c0_235 = arith.constant 0 : index
    %312 = arith.index_cast %311 : i32 to index
    %c3_236 = arith.constant 3 : index
    %c0_237 = arith.constant 0 : index
    %313 = vector.load %arg2[%c0_235, %312, %c3_236, %c0_237] : memref<1x32x32x3xf32, #tpu.memory_space<vmem>>, vector<1x1x28x3xf32>
    %314 = vector.shape_cast %313 : vector<1x1x28x3xf32> to vector<28x3xf32>
    %315 = arith.truncf %314 : vector<28x3xf32> to vector<28x3xbf16>
    %c1_i32_238 = arith.constant 1 : i32
    %316 = arith.addi %0, %c1_i32_238 : i32
    %c3_i32_239 = arith.constant 3 : i32
    %317 = arith.addi %316, %c3_i32_239 : i32
    %c0_240 = arith.constant 0 : index
    %318 = arith.index_cast %317 : i32 to index
    %c3_241 = arith.constant 3 : index
    %c0_242 = arith.constant 0 : index
    %319 = vector.load %arg2[%c0_240, %318, %c3_241, %c0_242] : memref<1x32x32x3xf32, #tpu.memory_space<vmem>>, vector<1x1x28x3xf32>
    %320 = vector.shape_cast %319 : vector<1x1x28x3xf32> to vector<28x3xf32>
    %321 = arith.truncf %320 : vector<28x3xf32> to vector<28x3xbf16>
    %cst_243 = arith.constant dense<0.000000e+00> : vector<28x128xf32>
    %322 = tpu.matmul %315, %310, %cst_243 {dimension_numbers = #tpu.dot_dimension_numbers<[1], [0], [0], [1], [0, 0, 1, 1], [], []>} : vector<28x3xbf16>, vector<3x128xbf16>, vector<28x128xf32> -> vector<28x128xf32>
    %323 = arith.addf %306, %322 : vector<28x128xf32>
    %cst_244 = arith.constant dense<0.000000e+00> : vector<28x128xf32>
    %324 = tpu.matmul %321, %310, %cst_244 {dimension_numbers = #tpu.dot_dimension_numbers<[1], [0], [0], [1], [0, 0, 1, 1], [], []>} : vector<28x3xbf16>, vector<3x128xbf16>, vector<28x128xf32> -> vector<28x128xf32>
    %325 = arith.addf %308, %324 : vector<28x128xf32>
    %c19 = arith.constant 19 : index
    %c0_245 = arith.constant 0 : index
    %c0_246 = arith.constant 0 : index
    %326 = vector.load %arg3[%c19, %c0_245, %c0_246] : memref<25x3x128xbf16, #tpu.memory_space<vmem>>, vector<1x3x128xbf16>
    %327 = vector.shape_cast %326 : vector<1x3x128xbf16> to vector<3x128xbf16>
    %c3_i32_247 = arith.constant 3 : i32
    %328 = arith.addi %0, %c3_i32_247 : i32
    %c0_248 = arith.constant 0 : index
    %329 = arith.index_cast %328 : i32 to index
    %c4_249 = arith.constant 4 : index
    %c0_250 = arith.constant 0 : index
    %330 = vector.load %arg2[%c0_248, %329, %c4_249, %c0_250] : memref<1x32x32x3xf32, #tpu.memory_space<vmem>>, vector<1x1x28x3xf32>
    %331 = vector.shape_cast %330 : vector<1x1x28x3xf32> to vector<28x3xf32>
    %332 = arith.truncf %331 : vector<28x3xf32> to vector<28x3xbf16>
    %c1_i32_251 = arith.constant 1 : i32
    %333 = arith.addi %0, %c1_i32_251 : i32
    %c3_i32_252 = arith.constant 3 : i32
    %334 = arith.addi %333, %c3_i32_252 : i32
    %c0_253 = arith.constant 0 : index
    %335 = arith.index_cast %334 : i32 to index
    %c4_254 = arith.constant 4 : index
    %c0_255 = arith.constant 0 : index
    %336 = vector.load %arg2[%c0_253, %335, %c4_254, %c0_255] : memref<1x32x32x3xf32, #tpu.memory_space<vmem>>, vector<1x1x28x3xf32>
    %337 = vector.shape_cast %336 : vector<1x1x28x3xf32> to vector<28x3xf32>
    %338 = arith.truncf %337 : vector<28x3xf32> to vector<28x3xbf16>
    %cst_256 = arith.constant dense<0.000000e+00> : vector<28x128xf32>
    %339 = tpu.matmul %332, %327, %cst_256 {dimension_numbers = #tpu.dot_dimension_numbers<[1], [0], [0], [1], [0, 0, 1, 1], [], []>} : vector<28x3xbf16>, vector<3x128xbf16>, vector<28x128xf32> -> vector<28x128xf32>
    %340 = arith.addf %323, %339 : vector<28x128xf32>
    %cst_257 = arith.constant dense<0.000000e+00> : vector<28x128xf32>
    %341 = tpu.matmul %338, %327, %cst_257 {dimension_numbers = #tpu.dot_dimension_numbers<[1], [0], [0], [1], [0, 0, 1, 1], [], []>} : vector<28x3xbf16>, vector<3x128xbf16>, vector<28x128xf32> -> vector<28x128xf32>
    %342 = arith.addf %325, %341 : vector<28x128xf32>
    %c20 = arith.constant 20 : index
    %c0_258 = arith.constant 0 : index
    %c0_259 = arith.constant 0 : index
    %343 = vector.load %arg3[%c20, %c0_258, %c0_259] : memref<25x3x128xbf16, #tpu.memory_space<vmem>>, vector<1x3x128xbf16>
    %344 = vector.shape_cast %343 : vector<1x3x128xbf16> to vector<3x128xbf16>
    %c4_i32 = arith.constant 4 : i32
    %345 = arith.addi %0, %c4_i32 : i32
    %c0_260 = arith.constant 0 : index
    %346 = arith.index_cast %345 : i32 to index
    %c0_261 = arith.constant 0 : index
    %c0_262 = arith.constant 0 : index
    %347 = vector.load %arg2[%c0_260, %346, %c0_261, %c0_262] : memref<1x32x32x3xf32, #tpu.memory_space<vmem>>, vector<1x1x28x3xf32>
    %348 = vector.shape_cast %347 : vector<1x1x28x3xf32> to vector<28x3xf32>
    %349 = arith.truncf %348 : vector<28x3xf32> to vector<28x3xbf16>
    %c1_i32_263 = arith.constant 1 : i32
    %350 = arith.addi %0, %c1_i32_263 : i32
    %c4_i32_264 = arith.constant 4 : i32
    %351 = arith.addi %350, %c4_i32_264 : i32
    %c0_265 = arith.constant 0 : index
    %352 = arith.index_cast %351 : i32 to index
    %c0_266 = arith.constant 0 : index
    %c0_267 = arith.constant 0 : index
    %353 = vector.load %arg2[%c0_265, %352, %c0_266, %c0_267] : memref<1x32x32x3xf32, #tpu.memory_space<vmem>>, vector<1x1x28x3xf32>
    %354 = vector.shape_cast %353 : vector<1x1x28x3xf32> to vector<28x3xf32>
    %355 = arith.truncf %354 : vector<28x3xf32> to vector<28x3xbf16>
    %cst_268 = arith.constant dense<0.000000e+00> : vector<28x128xf32>
    %356 = tpu.matmul %349, %344, %cst_268 {dimension_numbers = #tpu.dot_dimension_numbers<[1], [0], [0], [1], [0, 0, 1, 1], [], []>} : vector<28x3xbf16>, vector<3x128xbf16>, vector<28x128xf32> -> vector<28x128xf32>
    %357 = arith.addf %340, %356 : vector<28x128xf32>
    %cst_269 = arith.constant dense<0.000000e+00> : vector<28x128xf32>
    %358 = tpu.matmul %355, %344, %cst_269 {dimension_numbers = #tpu.dot_dimension_numbers<[1], [0], [0], [1], [0, 0, 1, 1], [], []>} : vector<28x3xbf16>, vector<3x128xbf16>, vector<28x128xf32> -> vector<28x128xf32>
    %359 = arith.addf %342, %358 : vector<28x128xf32>
    %c21 = arith.constant 21 : index
    %c0_270 = arith.constant 0 : index
    %c0_271 = arith.constant 0 : index
    %360 = vector.load %arg3[%c21, %c0_270, %c0_271] : memref<25x3x128xbf16, #tpu.memory_space<vmem>>, vector<1x3x128xbf16>
    %361 = vector.shape_cast %360 : vector<1x3x128xbf16> to vector<3x128xbf16>
    %c4_i32_272 = arith.constant 4 : i32
    %362 = arith.addi %0, %c4_i32_272 : i32
    %c0_273 = arith.constant 0 : index
    %363 = arith.index_cast %362 : i32 to index
    %c1_274 = arith.constant 1 : index
    %c0_275 = arith.constant 0 : index
    %364 = vector.load %arg2[%c0_273, %363, %c1_274, %c0_275] : memref<1x32x32x3xf32, #tpu.memory_space<vmem>>, vector<1x1x28x3xf32>
    %365 = vector.shape_cast %364 : vector<1x1x28x3xf32> to vector<28x3xf32>
    %366 = arith.truncf %365 : vector<28x3xf32> to vector<28x3xbf16>
    %c1_i32_276 = arith.constant 1 : i32
    %367 = arith.addi %0, %c1_i32_276 : i32
    %c4_i32_277 = arith.constant 4 : i32
    %368 = arith.addi %367, %c4_i32_277 : i32
    %c0_278 = arith.constant 0 : index
    %369 = arith.index_cast %368 : i32 to index
    %c1_279 = arith.constant 1 : index
    %c0_280 = arith.constant 0 : index
    %370 = vector.load %arg2[%c0_278, %369, %c1_279, %c0_280] : memref<1x32x32x3xf32, #tpu.memory_space<vmem>>, vector<1x1x28x3xf32>
    %371 = vector.shape_cast %370 : vector<1x1x28x3xf32> to vector<28x3xf32>
    %372 = arith.truncf %371 : vector<28x3xf32> to vector<28x3xbf16>
    %cst_281 = arith.constant dense<0.000000e+00> : vector<28x128xf32>
    %373 = tpu.matmul %366, %361, %cst_281 {dimension_numbers = #tpu.dot_dimension_numbers<[1], [0], [0], [1], [0, 0, 1, 1], [], []>} : vector<28x3xbf16>, vector<3x128xbf16>, vector<28x128xf32> -> vector<28x128xf32>
    %374 = arith.addf %357, %373 : vector<28x128xf32>
    %cst_282 = arith.constant dense<0.000000e+00> : vector<28x128xf32>
    %375 = tpu.matmul %372, %361, %cst_282 {dimension_numbers = #tpu.dot_dimension_numbers<[1], [0], [0], [1], [0, 0, 1, 1], [], []>} : vector<28x3xbf16>, vector<3x128xbf16>, vector<28x128xf32> -> vector<28x128xf32>
    %376 = arith.addf %359, %375 : vector<28x128xf32>
    %c22 = arith.constant 22 : index
    %c0_283 = arith.constant 0 : index
    %c0_284 = arith.constant 0 : index
    %377 = vector.load %arg3[%c22, %c0_283, %c0_284] : memref<25x3x128xbf16, #tpu.memory_space<vmem>>, vector<1x3x128xbf16>
    %378 = vector.shape_cast %377 : vector<1x3x128xbf16> to vector<3x128xbf16>
    %c4_i32_285 = arith.constant 4 : i32
    %379 = arith.addi %0, %c4_i32_285 : i32
    %c0_286 = arith.constant 0 : index
    %380 = arith.index_cast %379 : i32 to index
    %c2_287 = arith.constant 2 : index
    %c0_288 = arith.constant 0 : index
    %381 = vector.load %arg2[%c0_286, %380, %c2_287, %c0_288] : memref<1x32x32x3xf32, #tpu.memory_space<vmem>>, vector<1x1x28x3xf32>
    %382 = vector.shape_cast %381 : vector<1x1x28x3xf32> to vector<28x3xf32>
    %383 = arith.truncf %382 : vector<28x3xf32> to vector<28x3xbf16>
    %c1_i32_289 = arith.constant 1 : i32
    %384 = arith.addi %0, %c1_i32_289 : i32
    %c4_i32_290 = arith.constant 4 : i32
    %385 = arith.addi %384, %c4_i32_290 : i32
    %c0_291 = arith.constant 0 : index
    %386 = arith.index_cast %385 : i32 to index
    %c2_292 = arith.constant 2 : index
    %c0_293 = arith.constant 0 : index
    %387 = vector.load %arg2[%c0_291, %386, %c2_292, %c0_293] : memref<1x32x32x3xf32, #tpu.memory_space<vmem>>, vector<1x1x28x3xf32>
    %388 = vector.shape_cast %387 : vector<1x1x28x3xf32> to vector<28x3xf32>
    %389 = arith.truncf %388 : vector<28x3xf32> to vector<28x3xbf16>
    %cst_294 = arith.constant dense<0.000000e+00> : vector<28x128xf32>
    %390 = tpu.matmul %383, %378, %cst_294 {dimension_numbers = #tpu.dot_dimension_numbers<[1], [0], [0], [1], [0, 0, 1, 1], [], []>} : vector<28x3xbf16>, vector<3x128xbf16>, vector<28x128xf32> -> vector<28x128xf32>
    %391 = arith.addf %374, %390 : vector<28x128xf32>
    %cst_295 = arith.constant dense<0.000000e+00> : vector<28x128xf32>
    %392 = tpu.matmul %389, %378, %cst_295 {dimension_numbers = #tpu.dot_dimension_numbers<[1], [0], [0], [1], [0, 0, 1, 1], [], []>} : vector<28x3xbf16>, vector<3x128xbf16>, vector<28x128xf32> -> vector<28x128xf32>
    %393 = arith.addf %376, %392 : vector<28x128xf32>
    %c23 = arith.constant 23 : index
    %c0_296 = arith.constant 0 : index
    %c0_297 = arith.constant 0 : index
    %394 = vector.load %arg3[%c23, %c0_296, %c0_297] : memref<25x3x128xbf16, #tpu.memory_space<vmem>>, vector<1x3x128xbf16>
    %395 = vector.shape_cast %394 : vector<1x3x128xbf16> to vector<3x128xbf16>
    %c4_i32_298 = arith.constant 4 : i32
    %396 = arith.addi %0, %c4_i32_298 : i32
    %c0_299 = arith.constant 0 : index
    %397 = arith.index_cast %396 : i32 to index
    %c3_300 = arith.constant 3 : index
    %c0_301 = arith.constant 0 : index
    %398 = vector.load %arg2[%c0_299, %397, %c3_300, %c0_301] : memref<1x32x32x3xf32, #tpu.memory_space<vmem>>, vector<1x1x28x3xf32>
    %399 = vector.shape_cast %398 : vector<1x1x28x3xf32> to vector<28x3xf32>
    %400 = arith.truncf %399 : vector<28x3xf32> to vector<28x3xbf16>
    %c1_i32_302 = arith.constant 1 : i32
    %401 = arith.addi %0, %c1_i32_302 : i32
    %c4_i32_303 = arith.constant 4 : i32
    %402 = arith.addi %401, %c4_i32_303 : i32
    %c0_304 = arith.constant 0 : index
    %403 = arith.index_cast %402 : i32 to index
    %c3_305 = arith.constant 3 : index
    %c0_306 = arith.constant 0 : index
    %404 = vector.load %arg2[%c0_304, %403, %c3_305, %c0_306] : memref<1x32x32x3xf32, #tpu.memory_space<vmem>>, vector<1x1x28x3xf32>
    %405 = vector.shape_cast %404 : vector<1x1x28x3xf32> to vector<28x3xf32>
    %406 = arith.truncf %405 : vector<28x3xf32> to vector<28x3xbf16>
    %cst_307 = arith.constant dense<0.000000e+00> : vector<28x128xf32>
    %407 = tpu.matmul %400, %395, %cst_307 {dimension_numbers = #tpu.dot_dimension_numbers<[1], [0], [0], [1], [0, 0, 1, 1], [], []>} : vector<28x3xbf16>, vector<3x128xbf16>, vector<28x128xf32> -> vector<28x128xf32>
    %408 = arith.addf %391, %407 : vector<28x128xf32>
    %cst_308 = arith.constant dense<0.000000e+00> : vector<28x128xf32>
    %409 = tpu.matmul %406, %395, %cst_308 {dimension_numbers = #tpu.dot_dimension_numbers<[1], [0], [0], [1], [0, 0, 1, 1], [], []>} : vector<28x3xbf16>, vector<3x128xbf16>, vector<28x128xf32> -> vector<28x128xf32>
    %410 = arith.addf %393, %409 : vector<28x128xf32>
    %c24 = arith.constant 24 : index
    %c0_309 = arith.constant 0 : index
    %c0_310 = arith.constant 0 : index
    %411 = vector.load %arg3[%c24, %c0_309, %c0_310] : memref<25x3x128xbf16, #tpu.memory_space<vmem>>, vector<1x3x128xbf16>
    %412 = vector.shape_cast %411 : vector<1x3x128xbf16> to vector<3x128xbf16>
    %c4_i32_311 = arith.constant 4 : i32
    %413 = arith.addi %0, %c4_i32_311 : i32
    %c0_312 = arith.constant 0 : index
    %414 = arith.index_cast %413 : i32 to index
    %c4_313 = arith.constant 4 : index
    %c0_314 = arith.constant 0 : index
    %415 = vector.load %arg2[%c0_312, %414, %c4_313, %c0_314] : memref<1x32x32x3xf32, #tpu.memory_space<vmem>>, vector<1x1x28x3xf32>
    %416 = vector.shape_cast %415 : vector<1x1x28x3xf32> to vector<28x3xf32>
    %417 = arith.truncf %416 : vector<28x3xf32> to vector<28x3xbf16>
    %c1_i32_315 = arith.constant 1 : i32
    %418 = arith.addi %0, %c1_i32_315 : i32
    %c4_i32_316 = arith.constant 4 : i32
    %419 = arith.addi %418, %c4_i32_316 : i32
    %c0_317 = arith.constant 0 : index
    %420 = arith.index_cast %419 : i32 to index
    %c4_318 = arith.constant 4 : index
    %c0_319 = arith.constant 0 : index
    %421 = vector.load %arg2[%c0_317, %420, %c4_318, %c0_319] : memref<1x32x32x3xf32, #tpu.memory_space<vmem>>, vector<1x1x28x3xf32>
    %422 = vector.shape_cast %421 : vector<1x1x28x3xf32> to vector<28x3xf32>
    %423 = arith.truncf %422 : vector<28x3xf32> to vector<28x3xbf16>
    %cst_320 = arith.constant dense<0.000000e+00> : vector<28x128xf32>
    %424 = tpu.matmul %417, %412, %cst_320 {dimension_numbers = #tpu.dot_dimension_numbers<[1], [0], [0], [1], [0, 0, 1, 1], [], []>} : vector<28x3xbf16>, vector<3x128xbf16>, vector<28x128xf32> -> vector<28x128xf32>
    %425 = arith.addf %408, %424 : vector<28x128xf32>
    %cst_321 = arith.constant dense<0.000000e+00> : vector<28x128xf32>
    %426 = tpu.matmul %423, %412, %cst_321 {dimension_numbers = #tpu.dot_dimension_numbers<[1], [0], [0], [1], [0, 0, 1, 1], [], []>} : vector<28x3xbf16>, vector<3x128xbf16>, vector<28x128xf32> -> vector<28x128xf32>
    %427 = arith.addf %410, %426 : vector<28x128xf32>
    %c0_322 = arith.constant 0 : index
    %c0_323 = arith.constant 0 : index
    %428 = vector.load %arg4[%c0_322, %c0_323] : memref<1x128xf32, #tpu.memory_space<vmem>>, vector<1x128xf32>
    %429 = vector.broadcast %428 : vector<1x128xf32> to vector<28x128xf32>
    %430 = arith.addf %425, %429 : vector<28x128xf32>
    %cst_324 = arith.constant 0.000000e+00 : f32
    %431 = vector.broadcast %cst_324 : f32 to vector<28x128xf32>
    %432 = arith.maximumf %430, %431 : vector<28x128xf32>
    %433 = vector.broadcast %428 : vector<1x128xf32> to vector<28x128xf32>
    %434 = arith.addf %427, %433 : vector<28x128xf32>
    %cst_325 = arith.constant 0.000000e+00 : f32
    %435 = vector.broadcast %cst_325 : f32 to vector<28x128xf32>
    %436 = arith.maximumf %434, %435 : vector<28x128xf32>
    %437 = arith.maximumf %432, %436 : vector<28x128xf32>
    %c0_326 = arith.constant 0 : index
    %c0_327 = arith.constant 0 : index
    %438 = vector.load %arg6[%c0_326, %c0_327] : memref<28x128xf32, #tpu.memory_space<vmem>>, vector<28x128xf32>
    tpu.vector_store %arg6[%c0_326, %c0_327], %437 {strides = array<i32>} : memref<28x128xf32, #tpu.memory_space<vmem>>, vector<28x128xf32>,
    %c0_328 = arith.constant 0 : index
    %c0_329 = arith.constant 0 : index
    %439 = tpu.strided_load %arg6[%c0_328, %c0_329] {strides = array<i32: 2, 1>} : memref<28x128xf32, #tpu.memory_space<vmem>>, vector<14x128xf32>
    %c1_330 = arith.constant 1 : index
    %c0_331 = arith.constant 0 : index
    %440 = tpu.strided_load %arg6[%c1_330, %c0_331] {strides = array<i32: 2, 1>} : memref<28x128xf32, #tpu.memory_space<vmem>>, vector<14x128xf32>
    %441 = arith.maximumf %439, %440 : vector<14x128xf32>
    %c0_332 = arith.constant 0 : index
    %c0_333 = arith.constant 0 : index
    %c0_334 = arith.constant 0 : index
    %c0_335 = arith.constant 0 : index
    %442 = vector.load %arg5[%c0_332, %c0_333, %c0_334, %c0_335] : memref<1x1x14x128xf32, #tpu.memory_space<vmem>>, vector<1x1x14x128xf32>
    %443 = vector.shape_cast %442 : vector<1x1x14x128xf32> to vector<14x128xf32>
    %444 = vector.shape_cast %441 : vector<14x128xf32> to vector<1x1x14x128xf32>
    tpu.vector_store %arg5[%c0_332, %c0_333, %c0_334, %c0_335], %444 {strides = array<i32>} : memref<1x1x14x128xf32, #tpu.memory_space<vmem>>, vector<1x1x14x128xf32>,
    return
  }
  func.func @transform_0(%arg0: i32, %arg1: i32) -> (i32, i32, i32, i32) {
    %c0_i32 = arith.constant 0 : i32
    %c0_i32_0 = arith.constant 0 : i32
    %c0_i32_1 = arith.constant 0 : i32
    %c0_i32_2 = arith.constant 0 : i32
    return %arg0, %c0_i32, %c0_i32_0, %c0_i32_1 : i32, i32, i32, i32
  }
  func.func @transform_1(%arg0: i32, %arg1: i32) -> (i32, i32, i32) {
    %c0_i32 = arith.constant 0 : i32
    %c0_i32_0 = arith.constant 0 : i32
    %c0_i32_1 = arith.constant 0 : i32
    %c0_i32_2 = arith.constant 0 : i32
    return %c0_i32, %c0_i32_0, %c0_i32_1 : i32, i32, i32
  }
  func.func @transform_2(%arg0: i32, %arg1: i32) -> (i32, i32) {
    %c0_i32 = arith.constant 0 : i32
    %c0_i32_0 = arith.constant 0 : i32
    %c0_i32_1 = arith.constant 0 : i32
    return %c0_i32, %c0_i32_0 : i32, i32
  }
  func.func @transform_3(%arg0: i32, %arg1: i32) -> (i32, i32, i32, i32) {
    %c0_i32 = arith.constant 0 : i32
    %c0_i32_0 = arith.constant 0 : i32
    %c0_i32_1 = arith.constant 0 : i32
    return %arg0, %arg1, %c0_i32, %c0_i32_0 : i32, i32, i32, i32
  }
}

module attributes {stable_mosaic.version = 11 : i64} {
  func.func @_mlp_kernel(%arg0: i32, %arg1: memref<2x4608xf32, #tpu.memory_space<vmem>>, %arg2: memref<4608x128xbf16, #tpu.memory_space<vmem>>, %arg3: memref<1x128xf32, #tpu.memory_space<vmem>>, %arg4: memref<128x128xbf16, #tpu.memory_space<vmem>>, %arg5: memref<1x128xf32, #tpu.memory_space<vmem>>, %arg6: memref<2x128xf32, #tpu.memory_space<vmem>>) attributes {dimension_semantics = [#tpu.dimension_semantics<parallel>], iteration_bounds = array<i64: 1>, scalar_prefetch = 0 : i64, scratch_operands = 0 : i64, tpu.core_type = #tpu.core_type<tc>, window_params = [{transform_indices = @transform_0, window_bounds = array<i64: 2, 4608>}, {pipeline_mode = #tpu.pipeline_mode<synchronous>, transform_indices = @transform_1, window_bounds = array<i64: 4608, 128>}, {pipeline_mode = #tpu.pipeline_mode<synchronous>, transform_indices = @transform_2, window_bounds = array<i64: 1, 128>}, {pipeline_mode = #tpu.pipeline_mode<synchronous>, transform_indices = @transform_3, window_bounds = array<i64: 128, 128>}, {pipeline_mode = #tpu.pipeline_mode<synchronous>, transform_indices = @transform_4, window_bounds = array<i64: 1, 128>}, {transform_indices = @transform_5, window_bounds = array<i64: 2, 128>}]} {
    %c0 = arith.constant 0 : index
    %c0_0 = arith.constant 0 : index
    %0 = vector.load %arg1[%c0, %c0_0] : memref<2x4608xf32, #tpu.memory_space<vmem>>, vector<2x4608xf32>
    %1 = arith.truncf %0 : vector<2x4608xf32> to vector<2x4608xbf16>
    %c0_1 = arith.constant 0 : index
    %c0_2 = arith.constant 0 : index
    %2 = vector.load %arg2[%c0_1, %c0_2] : memref<4608x128xbf16, #tpu.memory_space<vmem>>, vector<4608x128xbf16>
    %cst = arith.constant dense<0.000000e+00> : vector<2x128xf32>
    %3 = tpu.matmul %1, %2, %cst {dimension_numbers = #tpu.dot_dimension_numbers<[1], [0], [0], [1], [0, 0, 1, 1], [], []>} : vector<2x4608xbf16>, vector<4608x128xbf16>, vector<2x128xf32> -> vector<2x128xf32>
    %c0_3 = arith.constant 0 : index
    %c0_4 = arith.constant 0 : index
    %4 = vector.load %arg3[%c0_3, %c0_4] : memref<1x128xf32, #tpu.memory_space<vmem>>, vector<1x128xf32>
    %5 = vector.broadcast %4 : vector<1x128xf32> to vector<2x128xf32>
    %6 = arith.addf %3, %5 : vector<2x128xf32>
    %cst_5 = arith.constant 0.000000e+00 : f32
    %7 = vector.broadcast %cst_5 : f32 to vector<2x128xf32>
    %8 = arith.maximumf %6, %7 : vector<2x128xf32>
    %9 = arith.truncf %8 : vector<2x128xf32> to vector<2x128xbf16>
    %c0_6 = arith.constant 0 : index
    %c0_7 = arith.constant 0 : index
    %10 = vector.load %arg4[%c0_6, %c0_7] : memref<128x128xbf16, #tpu.memory_space<vmem>>, vector<128x128xbf16>
    %cst_8 = arith.constant dense<0.000000e+00> : vector<2x128xf32>
    %11 = tpu.matmul %9, %10, %cst_8 {dimension_numbers = #tpu.dot_dimension_numbers<[1], [0], [0], [1], [0, 0, 1, 1], [], []>} : vector<2x128xbf16>, vector<128x128xbf16>, vector<2x128xf32> -> vector<2x128xf32>
    %c0_9 = arith.constant 0 : index
    %c0_10 = arith.constant 0 : index
    %12 = vector.load %arg5[%c0_9, %c0_10] : memref<1x128xf32, #tpu.memory_space<vmem>>, vector<1x128xf32>
    %13 = vector.broadcast %12 : vector<1x128xf32> to vector<2x128xf32>
    %14 = arith.addf %11, %13 : vector<2x128xf32>
    %cst_11 = arith.constant 0.000000e+00 : f32
    %15 = vector.broadcast %cst_11 : f32 to vector<2x128xf32>
    %16 = arith.maximumf %14, %15 : vector<2x128xf32>
    %c0_12 = arith.constant 0 : index
    %c0_13 = arith.constant 0 : index
    %17 = vector.load %arg6[%c0_12, %c0_13] : memref<2x128xf32, #tpu.memory_space<vmem>>, vector<2x128xf32>
    tpu.vector_store %arg6[%c0_12, %c0_13], %16 {strides = array<i32>} : memref<2x128xf32, #tpu.memory_space<vmem>>, vector<2x128xf32>,
    return
  }
  func.func @transform_0(%arg0: i32) -> (i32, i32) {
    %c0_i32 = arith.constant 0 : i32
    %c0_i32_0 = arith.constant 0 : i32
    return %arg0, %c0_i32 : i32, i32
  }
  func.func @transform_1(%arg0: i32) -> (i32, i32) {
    %c0_i32 = arith.constant 0 : i32
    %c0_i32_0 = arith.constant 0 : i32
    %c0_i32_1 = arith.constant 0 : i32
    return %c0_i32, %c0_i32_0 : i32, i32
  }
  func.func @transform_2(%arg0: i32) -> (i32, i32) {
    %c0_i32 = arith.constant 0 : i32
    %c0_i32_0 = arith.constant 0 : i32
    %c0_i32_1 = arith.constant 0 : i32
    return %c0_i32, %c0_i32_0 : i32, i32
  }
  func.func @transform_3(%arg0: i32) -> (i32, i32) {
    %c0_i32 = arith.constant 0 : i32
    %c0_i32_0 = arith.constant 0 : i32
    %c0_i32_1 = arith.constant 0 : i32
    return %c0_i32, %c0_i32_0 : i32, i32
  }
  func.func @transform_4(%arg0: i32) -> (i32, i32) {
    %c0_i32 = arith.constant 0 : i32
    %c0_i32_0 = arith.constant 0 : i32
    %c0_i32_1 = arith.constant 0 : i32
    return %c0_i32, %c0_i32_0 : i32, i32
  }
  func.func @transform_5(%arg0: i32) -> (i32, i32) {
    %c0_i32 = arith.constant 0 : i32
    %c0_i32_0 = arith.constant 0 : i32
    return %arg0, %c0_i32 : i32, i32
  }
}

</mosaic_0001>

<llo_original>
// kernel: cnnet_forward.4
$region0: #{cnnet_forward.4}
  #allocation0 [shape = 'u32[]', space=smem, size = 0x4, offset = 0x4, fixed_abs, tag = 'smem constant byte address 0x4 - core index']
  #allocation1 [shape = 'u32[144,128]{1,0:T(1,128)}', space=vmem, size = 0x12000, scoped, tag = 'internal scratch']
  #allocation2 [shape = 'f32[12,128]{1,0:T(8,128)}', space=vmem, size = 0x2000, scoped, tag = 'scratch operand']
  %s0 = inlined_call_operand.vmem [shape: f32[2,14,14,128], index: 0, kind: input, shape index: {}]
  %s1 = inlined_call_operand.vmem [shape: bf16[9,128,128], index: 1, kind: input, shape index: {}]
  %s2 = inlined_call_operand.vmem [shape: f32[1,128], index: 2, kind: input, shape index: {}]
  %s3 = inlined_call_operand.vmem [shape: f32[2,6,6,128], index: 3, kind: output, shape index: {}]
  %s4 = sld [smem:[#allocation0]]
  $region45: #{cnnet_forward.4} parent=0
    _
  %s6 = ssub.s32 1, %s4
  %s7 = scalar_select 0, %s6, %s4
  loop: start=0, step=1, limit=14
  $region2: #{cnnet_forward.4} parent=0 // loop_pre_header
    _
  $region3: #{cnnet_forward.4} parent=0 // loop_header
    %s9 = sphi 0, %s13
    %p10 = scmp.ge.s32.totalorder %s9, 14
    %s16 = sphi 0, %s28
    %s17 = sphi 0, %s24
    %s18 = sphi 0, %s16
    %s19 = sphi 0, %s17
    %s20 = sphi 0, %s18
    %s21 = sphi 0, %s19
    %s31 = sphi 0, %s33
    %s34 = sphi 0, %s31
    %s35 = sphi 0, %s34
    %s51 = sphi 0, %s35
    %s55 = sphi 0, %s55
    %s57 = sphi 0, %s55
    %s58 = sphi 0, %s57
    %s72 = sphi 0, %s58
    %s76 = sphi 0, %s76
    %s78 = sphi 0, %s76
    %s79 = sphi 0, %s78
    %s93 = sphi 0, %s79
    %s101 = sphi 0, %s103
    %s104 = sphi 0, %s101
    %s105 = sphi 0, %s104
    %s121 = sphi 0, %s105
  $region4: #{cnnet_forward.4} parent=0 // loop_header_branch
    %12 = sbr.rel (%p10) target = $region8
  $region5: #{cnnet_forward.4} parent=0 // loop_body
    %s14 = ssub.s32 %s9, 1
    %s15 = ssub.s32 %s9, 2
    %s22 = sadd.s32 1, %s17
    %p23 = scmp.ge.s32.totalorder %s22, 6
    %s24 = scalar_select %p23, 0, %s22
    %s25 = sadd.s32 1, %s16
    %s26 = scalar_select %p23, %s25, %s16
    %p27 = scmp.ge.s32.totalorder %s26, 2
    %s28 = scalar_select %p27, 0, %s26
    %s29 = ssub.s32 %s16, %s28
    %p30 = scmp.eq.s32.totalorder %s29, 0
    %s32 = sadd.s32 %s31, 1
    %s33 = scalar_select %p30, %s31, %s32
    %p36 = pneg %p30
    %p37 = scmp.eq.s32.totalorder %s9, 11
    %p38 = por %p36, %p37
    %p39 = scmp.ne.s32.totalorder %s31, %s34
    %p40 = scmp.eq.s32.totalorder %s9, 0
    %p41 = por %p39, %p40
    %p42 = scmp.ne.s32.totalorder %s31, %s34
    %p43 = scmp.eq.s32.totalorder %s14, 11
    %p44 = por %p42, %p43
    %p45 = scmp.ne.s32.totalorder %s34, %s35
    %p46 = scmp.eq.s32.totalorder %s14, 0
    %p47 = por %p45, %p46
    %p48 = scmp.ne.s32.totalorder %s34, %s35
    %p49 = scmp.eq.s32.totalorder %s15, 11
    %p50 = por %p48, %p49
    %p52 = scmp.ne.s32.totalorder %s35, %s51
    %p53 = scmp.eq.s32.totalorder %s15, 0
    %p54 = por %p52, %p53
    %s56 = sadd.s32 %s55, 1
    %p59 = scmp.eq.s32.totalorder %s9, 11
    %p60 = scmp.ne.s32.totalorder %s55, %s57
    %p61 = scmp.eq.s32.totalorder %s9, 0
    %p62 = por %p60, %p61
    %p63 = scmp.ne.s32.totalorder %s55, %s57
    %p64 = scmp.eq.s32.totalorder %s14, 11
    %p65 = por %p63, %p64
    %p66 = scmp.ne.s32.totalorder %s57, %s58
    %p67 = scmp.eq.s32.totalorder %s14, 0
    %p68 = por %p66, %p67
    %p69 = scmp.ne.s32.totalorder %s57, %s58
    %p70 = scmp.eq.s32.totalorder %s15, 11
    %p71 = por %p69, %p70
    %p73 = scmp.ne.s32.totalorder %s58, %s72
    %p74 = scmp.eq.s32.totalorder %s15, 0
    %p75 = por %p73, %p74
    %s77 = sadd.s32 %s76, 1
    %p80 = scmp.eq.s32.totalorder %s9, 11
    %p81 = scmp.ne.s32.totalorder %s76, %s78
    %p82 = scmp.eq.s32.totalorder %s9, 0
    %p83 = por %p81, %p82
    %p84 = scmp.ne.s32.totalorder %s76, %s78
    %p85 = scmp.eq.s32.totalorder %s14, 11
    %p86 = por %p84, %p85
    %p87 = scmp.ne.s32.totalorder %s78, %s79
    %p88 = scmp.eq.s32.totalorder %s14, 0
    %p89 = por %p87, %p88
    %p90 = scmp.ne.s32.totalorder %s78, %s79
    %p91 = scmp.eq.s32.totalorder %s15, 11
    %p92 = por %p90, %p91
    %p94 = scmp.ne.s32.totalorder %s79, %s93
    %p95 = scmp.eq.s32.totalorder %s15, 0
    %p96 = por %p94, %p95
    %s97 = ssub.s32 %s16, %s28
    %s98 = ssub.s32 %s17, %s24
    %s99 = sor.u32 %s97, %s98
    %p100 = scmp.eq.s32.totalorder %s99, 0
    %s102 = sadd.s32 %s101, 1
    %s103 = scalar_select %p100, %s101, %s102
    %p106 = pneg %p100
    %p107 = scmp.eq.s32.totalorder %s9, 11
    %p108 = por %p106, %p107
    %p109 = scmp.ne.s32.totalorder %s101, %s104
    %p110 = scmp.eq.s32.totalorder %s9, 0
    %p111 = por %p109, %p110
    %p112 = scmp.ne.s32.totalorder %s101, %s104
    %p113 = scmp.eq.s32.totalorder %s14, 11
    %p114 = por %p112, %p113
    %p115 = scmp.ne.s32.totalorder %s104, %s105
    %p116 = scmp.eq.s32.totalorder %s14, 0
    %p117 = por %p115, %p116
    %p118 = scmp.ne.s32.totalorder %s104, %s105
    %p119 = scmp.eq.s32.totalorder %s15, 11
    %p120 = por %p118, %p119
    %p122 = scmp.ne.s32.totalorder %s105, %s121
    %p123 = scmp.eq.s32.totalorder %s15, 0
    %p124 = por %p122, %p123
    %p125 = scmp.le.s32.totalorder 1, %s9
    %p126 = scmp.lt.s32.totalorder %s9, 13
    %p127 = pnand %p125, %p126
    %p128 = pneg %p127
    // Predicated region
    $region9: #{cnnet_forward.4} parent=5 // pred_check
      _
    $region10: #{cnnet_forward.4} parent=5 // pred_check_branch
      %130 = sbr.rel (%p127) target = $region12
    $region11: #{cnnet_forward.4} parent=5 // pred_region
      %s131 = ssub.s32 %s9, 1
      // Predicated region
      $region13: #{cnnet_forward.4} parent=11 // pred_check
        %p132 = pneg %p68
      $region14: #{cnnet_forward.4} parent=11 // pred_check_branch
        %134 = sbr.rel (%p132) target = $region16
      $region15: #{cnnet_forward.4} parent=11 // pred_region
        _
      $region16: #{cnnet_forward.4} parent=11 // pred_fallthru
        _
      // Predicated region
      $region17: #{cnnet_forward.4} parent=11 // pred_check
        %p135 = pneg %p89
      $region18: #{cnnet_forward.4} parent=11 // pred_check_branch
        %137 = sbr.rel (%p135) target = $region20
      $region19: #{cnnet_forward.4} parent=11 // pred_region
        _
      $region20: #{cnnet_forward.4} parent=11 // pred_fallthru
        _
    $region12: #{cnnet_forward.4} parent=5 // pred_fallthru
      _
    %p138 = scmp.lt.s32.totalorder %s9, 12
    // Predicated region
    $region21: #{cnnet_forward.4} parent=5 // pred_check
      %p139 = pneg %p138
    $region22: #{cnnet_forward.4} parent=5 // pred_check_branch
      %141 = sbr.rel (%p139) target = $region24
    $region23: #{cnnet_forward.4} parent=5 // pred_region
      // Predicated region
      $region25: #{cnnet_forward.4} parent=23 // pred_check
        %p142 = pneg %p41
      $region26: #{cnnet_forward.4} parent=23 // pred_check_branch
        %144 = sbr.rel (%p142) target = $region28
      $region27: #{cnnet_forward.4} parent=23 // pred_region
        %p145 = scmp.lt.s32.totalorder %s16, 1
        %s146 = scalar_select %p145, %s16, 1
        %s147 = smul.addr %s146, 28
        %s148 = smul.addr %s147, 8
        %s149 = scalar_lea.vmem %s0, %s148
      $region28: #{cnnet_forward.4} parent=23 // pred_fallthru
        _
    $region24: #{cnnet_forward.4} parent=5 // pred_fallthru
      _
    %p150 = scmp.le.s32.totalorder 1, %s9
    %p151 = scmp.lt.s32.totalorder %s9, 13
    %p152 = pnand %p150, %p151
    %p153 = pneg %p152
    // Predicated region
    $region29: #{cnnet_forward.4} parent=5 // pred_check
      _
    $region30: #{cnnet_forward.4} parent=5 // pred_check_branch
      %155 = sbr.rel (%p152) target = $region32
    $region31: #{cnnet_forward.4} parent=5 // pred_region
      %s156 = ssub.s32 %s9, 1
      %p157 = scmp.lt.s32.totalorder %s18, 1
      %s158 = scalar_select %p157, %s18, 1
      %s159 = smul.addr %s158, 28
      %s160 = smul.addr %s159, 8
      %s161 = scalar_lea.vmem %s0, %s160
      %p162 = pneg %p47
      %p163 = pneg %p44
      %p164 = pneg %p68
      %p165 = pneg %p65
      %p166 = pneg %p89
      %p167 = pneg %p86
      %p168 = pneg %p117
      %p169 = pneg %p114
      %p170 = scmp.lt.s32.totalorder %s18, 1
      %s171 = scalar_select %p170, %s18, 1
      %p172 = scmp.lt.s32.totalorder %s19, 5
      %s173 = scalar_select %p172, %s19, 5
      %s174 = smul.addr %s171, 6
      %s175 = sadd.s32 %s173, %s174
      %s176 = smul.addr %s175, 8
      %s177 = scalar_lea.vmem %s3, %s176
      %p178 = scmp.lt.s32.totalorder %s18, 1
      %s179 = scalar_select %p178, %s18, 1
      %s180 = smul.addr %s179, 28
      %s181 = smul.addr %s180, 8
      %s182 = scalar_lea.vmem %s0, %s181
      %p183 = scmp.lt.s32.totalorder %s18, 1
      %s184 = scalar_select %p183, %s18, 1
      %p185 = scmp.lt.s32.totalorder %s19, 5
      %s186 = scalar_select %p185, %s19, 5
      %s187 = smul.addr %s184, 6
      %s188 = sadd.s32 %s186, %s187
      %s189 = smul.addr %s188, 8
      %s190 = scalar_lea.vmem %s3, %s189
      %s192 = smul.u32 %s19, 2
      %v193 = vld [vmem:[%s1] sm:$0xf]
      %v194 = vld [vmem:[%s1 + $0x4] sm:$0xf]
      %v195 = vld [vmem:[%s1 + $0x8] sm:$0xf]
      %v196 = vld [vmem:[%s1 + $0xc] sm:$0xf]
      %v197 = vld [vmem:[%s1 + $0x10] sm:$0xf]
      %v198 = vld [vmem:[%s1 + $0x14] sm:$0xf]
      %v199 = vld [vmem:[%s1 + $0x18] sm:$0xf]
      %v200 = vld [vmem:[%s1 + $0x1c] sm:$0xf]
      %v201 = vld [vmem:[%s1 + $0x20] sm:$0xf]
      %v202 = vld [vmem:[%s1 + $0x24] sm:$0xf]
      %v203 = vld [vmem:[%s1 + $0x28] sm:$0xf]
      %v204 = vld [vmem:[%s1 + $0x2c] sm:$0xf]
      %v205 = vld [vmem:[%s1 + $0x30] sm:$0xf]
      %v206 = vld [vmem:[%s1 + $0x34] sm:$0xf]
      %v207 = vld [vmem:[%s1 + $0x38] sm:$0xf]
      %v208 = vld [vmem:[%s1 + $0x3c] sm:$0xf]
      %s209 = smul.u32 %s192, 16
      %s210 = scalar_lea.vmem %s182, %s209
      %v211 = vld [vmem:[%s210] sm:$0xff]
      %v212 = vld [vmem:[%s210 + $0x8] sm:$0xf]
      %v213 = vpack.c.bf16 %v212, %v211
      %s214 = sadd.s32 %s192, 1
      %s215 = smul.u32 %s214, 16
      %s216 = scalar_lea.vmem %s182, %s215
      %v217 = vld [vmem:[%s216] sm:$0xff]
      %v218 = vld [vmem:[%s216 + $0x8] sm:$0xf]
      %v219 = vpack.c.bf16 %v218, %v217
      %s220 = scalar_lea.vmem %s1, 64
      %v221 = vld [vmem:[%s220] sm:$0xf]
      %v222 = vld [vmem:[%s220 + $0x4] sm:$0xf]
      %v223 = vld [vmem:[%s220 + $0x8] sm:$0xf]
      %v224 = vld [vmem:[%s220 + $0xc] sm:$0xf]
      %v225 = vld [vmem:[%s220 + $0x10] sm:$0xf]
      %v226 = vld [vmem:[%s220 + $0x14] sm:$0xf]
      %v227 = vld [vmem:[%s220 + $0x18] sm:$0xf]
      %v228 = vld [vmem:[%s220 + $0x1c] sm:$0xf]
      %v229 = vld [vmem:[%s220 + $0x20] sm:$0xf]
      %v230 = vld [vmem:[%s220 + $0x24] sm:$0xf]
      %v231 = vld [vmem:[%s220 + $0x28] sm:$0xf]
      %v232 = vld [vmem:[%s220 + $0x2c] sm:$0xf]
      %v233 = vld [vmem:[%s220 + $0x30] sm:$0xf]
      %v234 = vld [vmem:[%s220 + $0x34] sm:$0xf]
      %v235 = vld [vmem:[%s220 + $0x38] sm:$0xf]
      %v236 = vld [vmem:[%s220 + $0x3c] sm:$0xf]
      %v237 = vld [vmem:[%s210 + $0x1] sm:$0xff]
      %v238 = vld [vmem:[%s210 + $0x9] sm:$0xf]
      %v239 = vpack.c.bf16 %v238, %v237
      %v240 = vld [vmem:[%s216 + $0x1] sm:$0xff]
      %v241 = vld [vmem:[%s216 + $0x9] sm:$0xf]
      %v242 = vpack.c.bf16 %v241, %v240
      %v259 = vunpack.c.l.b16 %v221
      %v260 = vunpack.c.l.b16 %v222
      %v261 = vunpack.c.l.b16 %v223
      %v262 = vunpack.c.l.b16 %v224
      %v263 = vunpack.c.l.b16 %v225
      %v264 = vunpack.c.l.b16 %v226
      %v265 = vunpack.c.l.b16 %v227
      %v266 = vunpack.c.l.b16 %v228
      %v267 = vunpack.c.l.b16 %v229
      %v268 = vunpack.c.l.b16 %v230
      %v269 = vunpack.c.l.b16 %v231
      %v270 = vunpack.c.l.b16 %v232
      %v271 = vunpack.c.l.b16 %v233
      %v272 = vunpack.c.l.b16 %v234
      %v273 = vunpack.c.l.b16 %v235
      %v274 = vunpack.c.l.b16 %v236
      %v275 = vpack.c.b16 %v260, %v259
      %v276 = vpack.c.b16 %v262, %v261
      %v277 = vpack.c.b16 %v264, %v263
      %v278 = vpack.c.b16 %v266, %v265
      %v279 = vpack.c.b16 %v268, %v267
      %v280 = vpack.c.b16 %v270, %v269
      %v281 = vpack.c.b16 %v272, %v271
      %v282 = vpack.c.b16 %v274, %v273
      %291 = vmatprep.subr.bf16.mxu0 0
      %292 = vmatpush1.bf16.msra.mxu0 %v275
      %293 = vmatprep.subr.bf16.mxu0 0
      %294 = vmatpush1.bf16.msra.mxu0 %v276
      %295 = vmatprep.subr.bf16.mxu0 0
      %296 = vmatpush1.bf16.msra.mxu0 %v277
      %297 = vmatprep.subr.bf16.mxu0 0
      %298 = vmatpush1.bf16.msra.mxu0 %v278
      %299 = vmatprep.subr.bf16.mxu0 0
      %300 = vmatpush1.bf16.msra.mxu0 %v279
      %301 = vmatprep.subr.bf16.mxu0 0
      %302 = vmatpush1.bf16.msra.mxu0 %v280
      %303 = vmatprep.subr.bf16.mxu0 0
      %304 = vmatpush1.bf16.msra.mxu0 %v281
      %305 = vmatprep.subr.bf16.mxu0 0
      %306 = vmatpush1.bf16.msra.mxu0 %v282
      %307 = vmatprep.subr.bf16.mxu0 0
      %308 = vmatpush1.bf16.msra.mxu0 0
      %309 = vmatprep.subr.bf16.mxu0 0
      %310 = vmatpush1.bf16.msra.mxu0 0
      %311 = vmatprep.subr.bf16.mxu0 0
      %312 = vmatpush1.bf16.msra.mxu0 0
      %313 = vmatprep.subr.bf16.mxu0 0
      %314 = vmatpush1.bf16.msra.mxu0 0
      %315 = vmatprep.subr.bf16.mxu0 0
      %316 = vmatpush1.bf16.msra.mxu0 0
      %317 = vmatprep.subr.bf16.mxu0 0
      %318 = vmatpush1.bf16.msra.mxu0 0
      %319 = vmatprep.subr.bf16.mxu0 0
      %320 = vmatpush1.bf16.msra.mxu0 0
      %321 = vmatprep.subr.bf16.mxu0 0
      %322 = vmatpush1.bf16.msra.mxu0 0
      %323 = vmatprep.mubr.bf16.mxu0 0
      %324 = vmatmul.mubr.bf16.gmra.mrb[0].mxu0 %v239
      %v325 = vpop.f32.mrb[0].mxu0
      %v326 = vadd.f32 0.0, %v325
      %v327 = vpop.f32.mrb[0].mxu0
      %v328 = vpop.f32.mrb[0].mxu0
      %v329 = vadd.f32 0.0, %v328
      %v330 = vpop.f32.mrb[0].mxu0
      %331 = vdwg.mxu0
      %v348 = vunpack.c.l.b16 %v193
      %v349 = vunpack.c.l.b16 %v194
      %v350 = vunpack.c.l.b16 %v195
      %v351 = vunpack.c.l.b16 %v196
      %v352 = vunpack.c.l.b16 %v197
      %v353 = vunpack.c.l.b16 %v198
      %v354 = vunpack.c.l.b16 %v199
      %v355 = vunpack.c.l.b16 %v200
      %v356 = vunpack.c.l.b16 %v201
      %v357 = vunpack.c.l.b16 %v202
      %v358 = vunpack.c.l.b16 %v203
      %v359 = vunpack.c.l.b16 %v204
      %v360 = vunpack.c.l.b16 %v205
      %v361 = vunpack.c.l.b16 %v206
      %v362 = vunpack.c.l.b16 %v207
      %v363 = vunpack.c.l.b16 %v208
      %v364 = vpack.c.b16 %v349, %v348
      %v365 = vpack.c.b16 %v351, %v350
      %v366 = vpack.c.b16 %v353, %v352
      %v367 = vpack.c.b16 %v355, %v354
      %v368 = vpack.c.b16 %v357, %v356
      %v369 = vpack.c.b16 %v359, %v358
      %v370 = vpack.c.b16 %v361, %v360
      %v371 = vpack.c.b16 %v363, %v362
      %380 = vmatprep.subr.bf16.mxu0 0
      %381 = vmatpush1.bf16.msra.mxu0 %v364
      %382 = vmatprep.subr.bf16.mxu0 0
      %383 = vmatpush1.bf16.msra.mxu0 %v365
      %384 = vmatprep.subr.bf16.mxu0 0
      %385 = vmatpush1.bf16.msra.mxu0 %v366
      %386 = vmatprep.subr.bf16.mxu0 0
      %387 = vmatpush1.bf16.msra.mxu0 %v367
      %388 = vmatprep.subr.bf16.mxu0 0
      %389 = vmatpush1.bf16.msra.mxu0 %v368
      %390 = vmatprep.subr.bf16.mxu0 0
      %391 = vmatpush1.bf16.msra.mxu0 %v369
      %392 = vmatprep.subr.bf16.mxu0 0
      %393 = vmatpush1.bf16.msra.mxu0 %v370
      %394 = vmatprep.subr.bf16.mxu0 0
      %395 = vmatpush1.bf16.msra.mxu0 %v371
      %396 = vmatprep.subr.bf16.mxu0 0
      %397 = vmatpush1.bf16.msra.mxu0 0
      %398 = vmatprep.subr.bf16.mxu0 0
      %399 = vmatpush1.bf16.msra.mxu0 0
      %400 = vmatprep.subr.bf16.mxu0 0
      %401 = vmatpush1.bf16.msra.mxu0 0
      %402 = vmatprep.subr.bf16.mxu0 0
      %403 = vmatpush1.bf16.msra.mxu0 0
      %404 = vmatprep.subr.bf16.mxu0 0
      %405 = vmatpush1.bf16.msra.mxu0 0
      %406 = vmatprep.subr.bf16.mxu0 0
      %407 = vmatpush1.bf16.msra.mxu0 0
      %408 = vmatprep.subr.bf16.mxu0 0
      %409 = vmatpush1.bf16.msra.mxu0 0
      %410 = vmatprep.subr.bf16.mxu0 0
      %411 = vmatpush1.bf16.msra.mxu0 0
      %412 = vmatprep.mubr.bf16.mxu0 0
      %413 = vmatmul.mubr.bf16.gmra.mrb[0].mxu0 %v213
      %v414 = vpop.f32.mrb[0].mxu0
      %v415 = vadd.f32 %v326, %v414
      %v416 = vpop.f32.mrb[0].mxu0
      %v417 = vpop.f32.mrb[0].mxu0
      %v418 = vadd.f32 %v329, %v417
      %v419 = vpop.f32.mrb[0].mxu0
      %420 = vdwg.mxu0
      %421 = vmatprep.subr.bf16.mxu0 0
      %422 = vmatpush1.bf16.msra.mxu0 %v275
      %423 = vmatprep.subr.bf16.mxu0 0
      %424 = vmatpush1.bf16.msra.mxu0 %v276
      %425 = vmatprep.subr.bf16.mxu0 0
      %426 = vmatpush1.bf16.msra.mxu0 %v277
      %427 = vmatprep.subr.bf16.mxu0 0
      %428 = vmatpush1.bf16.msra.mxu0 %v278
      %429 = vmatprep.subr.bf16.mxu0 0
      %430 = vmatpush1.bf16.msra.mxu0 %v279
      %431 = vmatprep.subr.bf16.mxu0 0
      %432 = vmatpush1.bf16.msra.mxu0 %v280
      %433 = vmatprep.subr.bf16.mxu0 0
      %434 = vmatpush1.bf16.msra.mxu0 %v281
      %435 = vmatprep.subr.bf16.mxu0 0
      %436 = vmatpush1.bf16.msra.mxu0 %v282
      %437 = vmatprep.subr.bf16.mxu0 0
      %438 = vmatpush1.bf16.msra.mxu0 0
      %439 = vmatprep.subr.bf16.mxu0 0
      %440 = vmatpush1.bf16.msra.mxu0 0
      %441 = vmatprep.subr.bf16.mxu0 0
      %442 = vmatpush1.bf16.msra.mxu0 0
      %443 = vmatprep.subr.bf16.mxu0 0
      %444 = vmatpush1.bf16.msra.mxu0 0
      %445 = vmatprep.subr.bf16.mxu0 0
      %446 = vmatpush1.bf16.msra.mxu0 0
      %447 = vmatprep.subr.bf16.mxu0 0
      %448 = vmatpush1.bf16.msra.mxu0 0
      %449 = vmatprep.subr.bf16.mxu0 0
      %450 = vmatpush1.bf16.msra.mxu0 0
      %451 = vmatprep.subr.bf16.mxu0 0
      %452 = vmatpush1.bf16.msra.mxu0 0
      %453 = vmatprep.mubr.bf16.mxu0 0
      %454 = vmatmul.mubr.bf16.gmra.mrb[0].mxu0 %v242
      %v455 = vpop.f32.mrb[0].mxu0
      %v456 = vadd.f32 0.0, %v455
      %v457 = vpop.f32.mrb[0].mxu0
      %v458 = vpop.f32.mrb[0].mxu0
      %v459 = vadd.f32 0.0, %v458
      %v460 = vpop.f32.mrb[0].mxu0
      %461 = vdwg.mxu0
      %462 = vmatprep.subr.bf16.mxu0 0
      %463 = vmatpush1.bf16.msra.mxu0 %v364
      %464 = vmatprep.subr.bf16.mxu0 0
      %465 = vmatpush1.bf16.msra.mxu0 %v365
      %466 = vmatprep.subr.bf16.mxu0 0
      %467 = vmatpush1.bf16.msra.mxu0 %v366
      %468 = vmatprep.subr.bf16.mxu0 0
      %469 = vmatpush1.bf16.msra.mxu0 %v367
      %470 = vmatprep.subr.bf16.mxu0 0
      %471 = vmatpush1.bf16.msra.mxu0 %v368
      %472 = vmatprep.subr.bf16.mxu0 0
      %473 = vmatpush1.bf16.msra.mxu0 %v369
      %474 = vmatprep.subr.bf16.mxu0 0
      %475 = vmatpush1.bf16.msra.mxu0 %v370
      %476 = vmatprep.subr.bf16.mxu0 0
      %477 = vmatpush1.bf16.msra.mxu0 %v371
      %478 = vmatprep.subr.bf16.mxu0 0
      %479 = vmatpush1.bf16.msra.mxu0 0
      %480 = vmatprep.subr.bf16.mxu0 0
      %481 = vmatpush1.bf16.msra.mxu0 0
      %482 = vmatprep.subr.bf16.mxu0 0
      %483 = vmatpush1.bf16.msra.mxu0 0
      %484 = vmatprep.subr.bf16.mxu0 0
      %485 = vmatpush1.bf16.msra.mxu0 0
      %486 = vmatprep.subr.bf16.mxu0 0
      %487 = vmatpush1.bf16.msra.mxu0 0
      %488 = vmatprep.subr.bf16.mxu0 0
      %489 = vmatpush1.bf16.msra.mxu0 0
      %490 = vmatprep.subr.bf16.mxu0 0
      %491 = vmatpush1.bf16.msra.mxu0 0
      %492 = vmatprep.subr.bf16.mxu0 0
      %493 = vmatpush1.bf16.msra.mxu0 0
      %494 = vmatprep.mubr.bf16.mxu0 0
      %495 = vmatmul.mubr.bf16.gmra.mrb[0].mxu0 %v219
      %v496 = vpop.f32.mrb[0].mxu0
      %v497 = vadd.f32 %v456, %v496
      %v498 = vpop.f32.mrb[0].mxu0
      %v499 = vpop.f32.mrb[0].mxu0
      %v500 = vadd.f32 %v459, %v499
      %v501 = vpop.f32.mrb[0].mxu0
      %502 = vdwg.mxu0
      %s503 = scalar_lea.vmem %s1, 128
      %v504 = vld [vmem:[%s503] sm:$0xf]
      %v505 = vld [vmem:[%s503 + $0x4] sm:$0xf]
      %v506 = vld [vmem:[%s503 + $0x8] sm:$0xf]
      %v507 = vld [vmem:[%s503 + $0xc] sm:$0xf]
      %v508 = vld [vmem:[%s503 + $0x10] sm:$0xf]
      %v509 = vld [vmem:[%s503 + $0x14] sm:$0xf]
      %v510 = vld [vmem:[%s503 + $0x18] sm:$0xf]
      %v511 = vld [vmem:[%s503 + $0x1c] sm:$0xf]
      %v512 = vld [vmem:[%s503 + $0x20] sm:$0xf]
      %v513 = vld [vmem:[%s503 + $0x24] sm:$0xf]
      %v514 = vld [vmem:[%s503 + $0x28] sm:$0xf]
      %v515 = vld [vmem:[%s503 + $0x2c] sm:$0xf]
      %v516 = vld [vmem:[%s503 + $0x30] sm:$0xf]
      %v517 = vld [vmem:[%s503 + $0x34] sm:$0xf]
      %v518 = vld [vmem:[%s503 + $0x38] sm:$0xf]
      %v519 = vld [vmem:[%s503 + $0x3c] sm:$0xf]
      %v520 = vld [vmem:[%s210 + $0x2] sm:$0xff]
      %v521 = vld [vmem:[%s210 + $0xa] sm:$0xf]
      %v522 = vpack.c.bf16 %v521, %v520
      %v523 = vld [vmem:[%s216 + $0x2] sm:$0xff]
      %v524 = vld [vmem:[%s216 + $0xa] sm:$0xf]
      %v525 = vpack.c.bf16 %v524, %v523
      %v542 = vunpack.c.l.b16 %v504
      %v543 = vunpack.c.l.b16 %v505
      %v544 = vunpack.c.l.b16 %v506
      %v545 = vunpack.c.l.b16 %v507
      %v546 = vunpack.c.l.b16 %v508
      %v547 = vunpack.c.l.b16 %v509
      %v548 = vunpack.c.l.b16 %v510
      %v549 = vunpack.c.l.b16 %v511
      %v550 = vunpack.c.l.b16 %v512
      %v551 = vunpack.c.l.b16 %v513
      %v552 = vunpack.c.l.b16 %v514
      %v553 = vunpack.c.l.b16 %v515
      %v554 = vunpack.c.l.b16 %v516
      %v555 = vunpack.c.l.b16 %v517
      %v556 = vunpack.c.l.b16 %v518
      %v557 = vunpack.c.l.b16 %v519
      %v558 = vpack.c.b16 %v543, %v542
      %v559 = vpack.c.b16 %v545, %v544
      %v560 = vpack.c.b16 %v547, %v546
      %v561 = vpack.c.b16 %v549, %v548
      %v562 = vpack.c.b16 %v551, %v550
      %v563 = vpack.c.b16 %v553, %v552
      %v564 = vpack.c.b16 %v555, %v554
      %v565 = vpack.c.b16 %v557, %v556
      %574 = vmatprep.subr.bf16.mxu0 0
      %575 = vmatpush1.bf16.msra.mxu0 %v558
      %576 = vmatprep.subr.bf16.mxu0 0
      %577 = vmatpush1.bf16.msra.mxu0 %v559
      %578 = vmatprep.subr.bf16.mxu0 0
      %579 = vmatpush1.bf16.msra.mxu0 %v560
      %580 = vmatprep.subr.bf16.mxu0 0
      %581 = vmatpush1.bf16.msra.mxu0 %v561
      %582 = vmatprep.subr.bf16.mxu0 0
      %583 = vmatpush1.bf16.msra.mxu0 %v562
      %584 = vmatprep.subr.bf16.mxu0 0
      %585 = vmatpush1.bf16.msra.mxu0 %v563
      %586 = vmatprep.subr.bf16.mxu0 0
      %587 = vmatpush1.bf16.msra.mxu0 %v564
      %588 = vmatprep.subr.bf16.mxu0 0
      %589 = vmatpush1.bf16.msra.mxu0 %v565
      %590 = vmatprep.subr.bf16.mxu0 0
      %591 = vmatpush1.bf16.msra.mxu0 0
      %592 = vmatprep.subr.bf16.mxu0 0
      %593 = vmatpush1.bf16.msra.mxu0 0
      %594 = vmatprep.subr.bf16.mxu0 0
      %595 = vmatpush1.bf16.msra.mxu0 0
      %596 = vmatprep.subr.bf16.mxu0 0
      %597 = vmatpush1.bf16.msra.mxu0 0
      %598 = vmatprep.subr.bf16.mxu0 0
      %599 = vmatpush1.bf16.msra.mxu0 0
      %600 = vmatprep.subr.bf16.mxu0 0
      %601 = vmatpush1.bf16.msra.mxu0 0
      %602 = vmatprep.subr.bf16.mxu0 0
      %603 = vmatpush1.bf16.msra.mxu0 0
      %604 = vmatprep.subr.bf16.mxu0 0
      %605 = vmatpush1.bf16.msra.mxu0 0
      %606 = vmatprep.mubr.bf16.mxu0 0
      %607 = vmatmul.mubr.bf16.gmra.mrb[0].mxu0 %v522
      %v608 = vpop.f32.mrb[0].mxu0
      %v609 = vadd.f32 0.0, %v608
      %v610 = vpop.f32.mrb[0].mxu0
      %v611 = vpop.f32.mrb[0].mxu0
      %v612 = vadd.f32 0.0, %v611
      %v613 = vpop.f32.mrb[0].mxu0
      %614 = vdwg.mxu0
      %v615 = vadd.f32 %v415, %v609
      %v616 = vadd.f32 %v418, %v612
      %617 = vmatprep.subr.bf16.mxu0 0
      %618 = vmatpush1.bf16.msra.mxu0 %v558
      %619 = vmatprep.subr.bf16.mxu0 0
      %620 = vmatpush1.bf16.msra.mxu0 %v559
      %621 = vmatprep.subr.bf16.mxu0 0
      %622 = vmatpush1.bf16.msra.mxu0 %v560
      %623 = vmatprep.subr.bf16.mxu0 0
      %624 = vmatpush1.bf16.msra.mxu0 %v561
      %625 = vmatprep.subr.bf16.mxu0 0
      %626 = vmatpush1.bf16.msra.mxu0 %v562
      %627 = vmatprep.subr.bf16.mxu0 0
      %628 = vmatpush1.bf16.msra.mxu0 %v563
      %629 = vmatprep.subr.bf16.mxu0 0
      %630 = vmatpush1.bf16.msra.mxu0 %v564
      %631 = vmatprep.subr.bf16.mxu0 0
      %632 = vmatpush1.bf16.msra.mxu0 %v565
      %633 = vmatprep.subr.bf16.mxu0 0
      %634 = vmatpush1.bf16.msra.mxu0 0
      %635 = vmatprep.subr.bf16.mxu0 0
      %636 = vmatpush1.bf16.msra.mxu0 0
      %637 = vmatprep.subr.bf16.mxu0 0
      %638 = vmatpush1.bf16.msra.mxu0 0
      %639 = vmatprep.subr.bf16.mxu0 0
      %640 = vmatpush1.bf16.msra.mxu0 0
      %641 = vmatprep.subr.bf16.mxu0 0
      %642 = vmatpush1.bf16.msra.mxu0 0
      %643 = vmatprep.subr.bf16.mxu0 0
      %644 = vmatpush1.bf16.msra.mxu0 0
      %645 = vmatprep.subr.bf16.mxu0 0
      %646 = vmatpush1.bf16.msra.mxu0 0
      %647 = vmatprep.subr.bf16.mxu0 0
      %648 = vmatpush1.bf16.msra.mxu0 0
      %649 = vmatprep.mubr.bf16.mxu0 0
      %650 = vmatmul.mubr.bf16.gmra.mrb[0].mxu0 %v525
      %v651 = vpop.f32.mrb[0].mxu0
      %v652 = vadd.f32 0.0, %v651
      %v653 = vpop.f32.mrb[0].mxu0
      %v654 = vpop.f32.mrb[0].mxu0
      %v655 = vadd.f32 0.0, %v654
      %v656 = vpop.f32.mrb[0].mxu0
      %657 = vdwg.mxu0
      %v658 = vadd.f32 %v497, %v652
      %v659 = vadd.f32 %v500, %v655
      %s660 = scalar_lea.vmem %s1, 192
      %v661 = vld [vmem:[%s660] sm:$0xf]
      %v662 = vld [vmem:[%s660 + $0x4] sm:$0xf]
      %v663 = vld [vmem:[%s660 + $0x8] sm:$0xf]
      %v664 = vld [vmem:[%s660 + $0xc] sm:$0xf]
      %v665 = vld [vmem:[%s660 + $0x10] sm:$0xf]
      %v666 = vld [vmem:[%s660 + $0x14] sm:$0xf]
      %v667 = vld [vmem:[%s660 + $0x18] sm:$0xf]
      %v668 = vld [vmem:[%s660 + $0x1c] sm:$0xf]
      %v669 = vld [vmem:[%s660 + $0x20] sm:$0xf]
      %v670 = vld [vmem:[%s660 + $0x24] sm:$0xf]
      %v671 = vld [vmem:[%s660 + $0x28] sm:$0xf]
      %v672 = vld [vmem:[%s660 + $0x2c] sm:$0xf]
      %v673 = vld [vmem:[%s660 + $0x30] sm:$0xf]
      %v674 = vld [vmem:[%s660 + $0x34] sm:$0xf]
      %v675 = vld [vmem:[%s660 + $0x38] sm:$0xf]
      %v676 = vld [vmem:[%s660 + $0x3c] sm:$0xf]
      %s677 = sadd.s32 %s192, 2
      %s678 = smul.u32 %s677, 16
      %s679 = scalar_lea.vmem %s182, %s678
      %v680 = vld [vmem:[%s679] sm:$0xff]
      %v681 = vld [vmem:[%s679 + $0x8] sm:$0xf]
      %v682 = vpack.c.bf16 %v681, %v680
      %v699 = vunpack.c.l.b16 %v661
      %v700 = vunpack.c.l.b16 %v662
      %v701 = vunpack.c.l.b16 %v663
      %v702 = vunpack.c.l.b16 %v664
      %v703 = vunpack.c.l.b16 %v665
      %v704 = vunpack.c.l.b16 %v666
      %v705 = vunpack.c.l.b16 %v667
      %v706 = vunpack.c.l.b16 %v668
      %v707 = vunpack.c.l.b16 %v669
      %v708 = vunpack.c.l.b16 %v670
      %v709 = vunpack.c.l.b16 %v671
      %v710 = vunpack.c.l.b16 %v672
      %v711 = vunpack.c.l.b16 %v673
      %v712 = vunpack.c.l.b16 %v674
      %v713 = vunpack.c.l.b16 %v675
      %v714 = vunpack.c.l.b16 %v676
      %v715 = vpack.c.b16 %v700, %v699
      %v716 = vpack.c.b16 %v702, %v701
      %v717 = vpack.c.b16 %v704, %v703
      %v718 = vpack.c.b16 %v706, %v705
      %v719 = vpack.c.b16 %v708, %v707
      %v720 = vpack.c.b16 %v710, %v709
      %v721 = vpack.c.b16 %v712, %v711
      %v722 = vpack.c.b16 %v714, %v713
      %731 = vmatprep.subr.bf16.mxu0 0
      %732 = vmatpush1.bf16.msra.mxu0 %v715
      %733 = vmatprep.subr.bf16.mxu0 0
      %734 = vmatpush1.bf16.msra.mxu0 %v716
      %735 = vmatprep.subr.bf16.mxu0 0
      %736 = vmatpush1.bf16.msra.mxu0 %v717
      %737 = vmatprep.subr.bf16.mxu0 0
      %738 = vmatpush1.bf16.msra.mxu0 %v718
      %739 = vmatprep.subr.bf16.mxu0 0
      %740 = vmatpush1.bf16.msra.mxu0 %v719
      %741 = vmatprep.subr.bf16.mxu0 0
      %742 = vmatpush1.bf16.msra.mxu0 %v720
      %743 = vmatprep.subr.bf16.mxu0 0
      %744 = vmatpush1.bf16.msra.mxu0 %v721
      %745 = vmatprep.subr.bf16.mxu0 0
      %746 = vmatpush1.bf16.msra.mxu0 %v722
      %747 = vmatprep.subr.bf16.mxu0 0
      %748 = vmatpush1.bf16.msra.mxu0 0
      %749 = vmatprep.subr.bf16.mxu0 0
      %750 = vmatpush1.bf16.msra.mxu0 0
      %751 = vmatprep.subr.bf16.mxu0 0
      %752 = vmatpush1.bf16.msra.mxu0 0
      %753 = vmatprep.subr.bf16.mxu0 0
      %754 = vmatpush1.bf16.msra.mxu0 0
      %755 = vmatprep.subr.bf16.mxu0 0
      %756 = vmatpush1.bf16.msra.mxu0 0
      %757 = vmatprep.subr.bf16.mxu0 0
      %758 = vmatpush1.bf16.msra.mxu0 0
      %759 = vmatprep.subr.bf16.mxu0 0
      %760 = vmatpush1.bf16.msra.mxu0 0
      %761 = vmatprep.subr.bf16.mxu0 0
      %762 = vmatpush1.bf16.msra.mxu0 0
      %763 = vmatprep.mubr.bf16.mxu0 0
      %764 = vmatmul.mubr.bf16.gmra.mrb[0].mxu0 %v219
      %v765 = vpop.f32.mrb[0].mxu0
      %v766 = vadd.f32 0.0, %v765
      %v767 = vpop.f32.mrb[0].mxu0
      %v768 = vpop.f32.mrb[0].mxu0
      %v769 = vadd.f32 0.0, %v768
      %v770 = vpop.f32.mrb[0].mxu0
      %771 = vdwg.mxu0
      %v772 = vadd.f32 %v615, %v766
      %v773 = vadd.f32 %v616, %v769
      %774 = vmatprep.subr.bf16.mxu0 0
      %775 = vmatpush1.bf16.msra.mxu0 %v715
      %776 = vmatprep.subr.bf16.mxu0 0
      %777 = vmatpush1.bf16.msra.mxu0 %v716
      %778 = vmatprep.subr.bf16.mxu0 0
      %779 = vmatpush1.bf16.msra.mxu0 %v717
      %780 = vmatprep.subr.bf16.mxu0 0
      %781 = vmatpush1.bf16.msra.mxu0 %v718
      %782 = vmatprep.subr.bf16.mxu0 0
      %783 = vmatpush1.bf16.msra.mxu0 %v719
      %784 = vmatprep.subr.bf16.mxu0 0
      %785 = vmatpush1.bf16.msra.mxu0 %v720
      %786 = vmatprep.subr.bf16.mxu0 0
      %787 = vmatpush1.bf16.msra.mxu0 %v721
      %788 = vmatprep.subr.bf16.mxu0 0
      %789 = vmatpush1.bf16.msra.mxu0 %v722
      %790 = vmatprep.subr.bf16.mxu0 0
      %791 = vmatpush1.bf16.msra.mxu0 0
      %792 = vmatprep.subr.bf16.mxu0 0
      %793 = vmatpush1.bf16.msra.mxu0 0
      %794 = vmatprep.subr.bf16.mxu0 0
      %795 = vmatpush1.bf16.msra.mxu0 0
      %796 = vmatprep.subr.bf16.mxu0 0
      %797 = vmatpush1.bf16.msra.mxu0 0
      %798 = vmatprep.subr.bf16.mxu0 0
      %799 = vmatpush1.bf16.msra.mxu0 0
      %800 = vmatprep.subr.bf16.mxu0 0
      %801 = vmatpush1.bf16.msra.mxu0 0
      %802 = vmatprep.subr.bf16.mxu0 0
      %803 = vmatpush1.bf16.msra.mxu0 0
      %804 = vmatprep.subr.bf16.mxu0 0
      %805 = vmatpush1.bf16.msra.mxu0 0
      %806 = vmatprep.mubr.bf16.mxu0 0
      %807 = vmatmul.mubr.bf16.gmra.mrb[0].mxu0 %v682
      %v808 = vpop.f32.mrb[0].mxu0
      %v809 = vadd.f32 0.0, %v808
      %v810 = vpop.f32.mrb[0].mxu0
      %v811 = vpop.f32.mrb[0].mxu0
      %v812 = vadd.f32 0.0, %v811
      %v813 = vpop.f32.mrb[0].mxu0
      %814 = vdwg.mxu0
      %v815 = vadd.f32 %v658, %v809
      %v816 = vadd.f32 %v659, %v812
      %s817 = scalar_lea.vmem %s1, 256
      %v818 = vld [vmem:[%s817] sm:$0xf]
      %v819 = vld [vmem:[%s817 + $0x4] sm:$0xf]
      %v820 = vld [vmem:[%s817 + $0x8] sm:$0xf]
      %v821 = vld [vmem:[%s817 + $0xc] sm:$0xf]
      %v822 = vld [vmem:[%s817 + $0x10] sm:$0xf]
      %v823 = vld [vmem:[%s817 + $0x14] sm:$0xf]
      %v824 = vld [vmem:[%s817 + $0x18] sm:$0xf]
      %v825 = vld [vmem:[%s817 + $0x1c] sm:$0xf]
      %v826 = vld [vmem:[%s817 + $0x20] sm:$0xf]
      %v827 = vld [vmem:[%s817 + $0x24] sm:$0xf]
      %v828 = vld [vmem:[%s817 + $0x28] sm:$0xf]
      %v829 = vld [vmem:[%s817 + $0x2c] sm:$0xf]
      %v830 = vld [vmem:[%s817 + $0x30] sm:$0xf]
      %v831 = vld [vmem:[%s817 + $0x34] sm:$0xf]
      %v832 = vld [vmem:[%s817 + $0x38] sm:$0xf]
      %v833 = vld [vmem:[%s817 + $0x3c] sm:$0xf]
      %v834 = vld [vmem:[%s679 + $0x1] sm:$0xff]
      %v835 = vld [vmem:[%s679 + $0x9] sm:$0xf]
      %v836 = vpack.c.bf16 %v835, %v834
      %v853 = vunpack.c.l.b16 %v818
      %v854 = vunpack.c.l.b16 %v819
      %v855 = vunpack.c.l.b16 %v820
      %v856 = vunpack.c.l.b16 %v821
      %v857 = vunpack.c.l.b16 %v822
      %v858 = vunpack.c.l.b16 %v823
      %v859 = vunpack.c.l.b16 %v824
      %v860 = vunpack.c.l.b16 %v825
      %v861 = vunpack.c.l.b16 %v826
      %v862 = vunpack.c.l.b16 %v827
      %v863 = vunpack.c.l.b16 %v828
      %v864 = vunpack.c.l.b16 %v829
      %v865 = vunpack.c.l.b16 %v830
      %v866 = vunpack.c.l.b16 %v831
      %v867 = vunpack.c.l.b16 %v832
      %v868 = vunpack.c.l.b16 %v833
      %v869 = vpack.c.b16 %v854, %v853
      %v870 = vpack.c.b16 %v856, %v855
      %v871 = vpack.c.b16 %v858, %v857
      %v872 = vpack.c.b16 %v860, %v859
      %v873 = vpack.c.b16 %v862, %v861
      %v874 = vpack.c.b16 %v864, %v863
      %v875 = vpack.c.b16 %v866, %v865
      %v876 = vpack.c.b16 %v868, %v867
      %885 = vmatprep.subr.bf16.mxu0 0
      %886 = vmatpush1.bf16.msra.mxu0 %v869
      %887 = vmatprep.subr.bf16.mxu0 0
      %888 = vmatpush1.bf16.msra.mxu0 %v870
      %889 = vmatprep.subr.bf16.mxu0 0
      %890 = vmatpush1.bf16.msra.mxu0 %v871
      %891 = vmatprep.subr.bf16.mxu0 0
      %892 = vmatpush1.bf16.msra.mxu0 %v872
      %893 = vmatprep.subr.bf16.mxu0 0
      %894 = vmatpush1.bf16.msra.mxu0 %v873
      %895 = vmatprep.subr.bf16.mxu0 0
      %896 = vmatpush1.bf16.msra.mxu0 %v874
      %897 = vmatprep.subr.bf16.mxu0 0
      %898 = vmatpush1.bf16.msra.mxu0 %v875
      %899 = vmatprep.subr.bf16.mxu0 0
      %900 = vmatpush1.bf16.msra.mxu0 %v876
      %901 = vmatprep.subr.bf16.mxu0 0
      %902 = vmatpush1.bf16.msra.mxu0 0
      %903 = vmatprep.subr.bf16.mxu0 0
      %904 = vmatpush1.bf16.msra.mxu0 0
      %905 = vmatprep.subr.bf16.mxu0 0
      %906 = vmatpush1.bf16.msra.mxu0 0
      %907 = vmatprep.subr.bf16.mxu0 0
      %908 = vmatpush1.bf16.msra.mxu0 0
      %909 = vmatprep.subr.bf16.mxu0 0
      %910 = vmatpush1.bf16.msra.mxu0 0
      %911 = vmatprep.subr.bf16.mxu0 0
      %912 = vmatpush1.bf16.msra.mxu0 0
      %913 = vmatprep.subr.bf16.mxu0 0
      %914 = vmatpush1.bf16.msra.mxu0 0
      %915 = vmatprep.subr.bf16.mxu0 0
      %916 = vmatpush1.bf16.msra.mxu0 0
      %917 = vmatprep.mubr.bf16.mxu0 0
      %918 = vmatmul.mubr.bf16.gmra.mrb[0].mxu0 %v242
      %v919 = vpop.f32.mrb[0].mxu0
      %v920 = vadd.f32 0.0, %v919
      %v921 = vpop.f32.mrb[0].mxu0
      %v922 = vpop.f32.mrb[0].mxu0
      %v923 = vadd.f32 0.0, %v922
      %v924 = vpop.f32.mrb[0].mxu0
      %925 = vdwg.mxu0
      %v926 = vadd.f32 %v772, %v920
      %v927 = vadd.f32 %v773, %v923
      %928 = vmatprep.subr.bf16.mxu0 0
      %929 = vmatpush1.bf16.msra.mxu0 %v869
      %930 = vmatprep.subr.bf16.mxu0 0
      %931 = vmatpush1.bf16.msra.mxu0 %v870
      %932 = vmatprep.subr.bf16.mxu0 0
      %933 = vmatpush1.bf16.msra.mxu0 %v871
      %934 = vmatprep.subr.bf16.mxu0 0
      %935 = vmatpush1.bf16.msra.mxu0 %v872
      %936 = vmatprep.subr.bf16.mxu0 0
      %937 = vmatpush1.bf16.msra.mxu0 %v873
      %938 = vmatprep.subr.bf16.mxu0 0
      %939 = vmatpush1.bf16.msra.mxu0 %v874
      %940 = vmatprep.subr.bf16.mxu0 0
      %941 = vmatpush1.bf16.msra.mxu0 %v875
      %942 = vmatprep.subr.bf16.mxu0 0
      %943 = vmatpush1.bf16.msra.mxu0 %v876
      %944 = vmatprep.subr.bf16.mxu0 0
      %945 = vmatpush1.bf16.msra.mxu0 0
      %946 = vmatprep.subr.bf16.mxu0 0
      %947 = vmatpush1.bf16.msra.mxu0 0
      %948 = vmatprep.subr.bf16.mxu0 0
      %949 = vmatpush1.bf16.msra.mxu0 0
      %950 = vmatprep.subr.bf16.mxu0 0
      %951 = vmatpush1.bf16.msra.mxu0 0
      %952 = vmatprep.subr.bf16.mxu0 0
      %953 = vmatpush1.bf16.msra.mxu0 0
      %954 = vmatprep.subr.bf16.mxu0 0
      %955 = vmatpush1.bf16.msra.mxu0 0
      %956 = vmatprep.subr.bf16.mxu0 0
      %957 = vmatpush1.bf16.msra.mxu0 0
      %958 = vmatprep.subr.bf16.mxu0 0
      %959 = vmatpush1.bf16.msra.mxu0 0
      %960 = vmatprep.mubr.bf16.mxu0 0
      %961 = vmatmul.mubr.bf16.gmra.mrb[0].mxu0 %v836
      %v962 = vpop.f32.mrb[0].mxu0
      %v963 = vadd.f32 0.0, %v962
      %v964 = vpop.f32.mrb[0].mxu0
      %v965 = vpop.f32.mrb[0].mxu0
      %v966 = vadd.f32 0.0, %v965
      %v967 = vpop.f32.mrb[0].mxu0
      %968 = vdwg.mxu0
      %v969 = vadd.f32 %v815, %v963
      %v970 = vadd.f32 %v816, %v966
      %s971 = scalar_lea.vmem %s1, 320
      %v972 = vld [vmem:[%s971] sm:$0xf]
      %v973 = vld [vmem:[%s971 + $0x4] sm:$0xf]
      %v974 = vld [vmem:[%s971 + $0x8] sm:$0xf]
      %v975 = vld [vmem:[%s971 + $0xc] sm:$0xf]
      %v976 = vld [vmem:[%s971 + $0x10] sm:$0xf]
      %v977 = vld [vmem:[%s971 + $0x14] sm:$0xf]
      %v978 = vld [vmem:[%s971 + $0x18] sm:$0xf]
      %v979 = vld [vmem:[%s971 + $0x1c] sm:$0xf]
      %v980 = vld [vmem:[%s971 + $0x20] sm:$0xf]
      %v981 = vld [vmem:[%s971 + $0x24] sm:$0xf]
      %v982 = vld [vmem:[%s971 + $0x28] sm:$0xf]
      %v983 = vld [vmem:[%s971 + $0x2c] sm:$0xf]
      %v984 = vld [vmem:[%s971 + $0x30] sm:$0xf]
      %v985 = vld [vmem:[%s971 + $0x34] sm:$0xf]
      %v986 = vld [vmem:[%s971 + $0x38] sm:$0xf]
      %v987 = vld [vmem:[%s971 + $0x3c] sm:$0xf]
      %v988 = vld [vmem:[%s679 + $0x2] sm:$0xff]
      %v989 = vld [vmem:[%s679 + $0xa] sm:$0xf]
      %v990 = vpack.c.bf16 %v989, %v988
      %v1007 = vunpack.c.l.b16 %v972
      %v1008 = vunpack.c.l.b16 %v973
      %v1009 = vunpack.c.l.b16 %v974
      %v1010 = vunpack.c.l.b16 %v975
      %v1011 = vunpack.c.l.b16 %v976
      %v1012 = vunpack.c.l.b16 %v977
      %v1013 = vunpack.c.l.b16 %v978
      %v1014 = vunpack.c.l.b16 %v979
      %v1015 = vunpack.c.l.b16 %v980
      %v1016 = vunpack.c.l.b16 %v981
      %v1017 = vunpack.c.l.b16 %v982
      %v1018 = vunpack.c.l.b16 %v983
      %v1019 = vunpack.c.l.b16 %v984
      %v1020 = vunpack.c.l.b16 %v985
      %v1021 = vunpack.c.l.b16 %v986
      %v1022 = vunpack.c.l.b16 %v987
      %v1023 = vpack.c.b16 %v1008, %v1007
      %v1024 = vpack.c.b16 %v1010, %v1009
      %v1025 = vpack.c.b16 %v1012, %v1011
      %v1026 = vpack.c.b16 %v1014, %v1013
      %v1027 = vpack.c.b16 %v1016, %v1015
      %v1028 = vpack.c.b16 %v1018, %v1017
      %v1029 = vpack.c.b16 %v1020, %v1019
      %v1030 = vpack.c.b16 %v1022, %v1021
      %1039 = vmatprep.subr.bf16.mxu0 0
      %1040 = vmatpush1.bf16.msra.mxu0 %v1023
      %1041 = vmatprep.subr.bf16.mxu0 0
      %1042 = vmatpush1.bf16.msra.mxu0 %v1024
      %1043 = vmatprep.subr.bf16.mxu0 0
      %1044 = vmatpush1.bf16.msra.mxu0 %v1025
      %1045 = vmatprep.subr.bf16.mxu0 0
      %1046 = vmatpush1.bf16.msra.mxu0 %v1026
      %1047 = vmatprep.subr.bf16.mxu0 0
      %1048 = vmatpush1.bf16.msra.mxu0 %v1027
      %1049 = vmatprep.subr.bf16.mxu0 0
      %1050 = vmatpush1.bf16.msra.mxu0 %v1028
      %1051 = vmatprep.subr.bf16.mxu0 0
      %1052 = vmatpush1.bf16.msra.mxu0 %v1029
      %1053 = vmatprep.subr.bf16.mxu0 0
      %1054 = vmatpush1.bf16.msra.mxu0 %v1030
      %1055 = vmatprep.subr.bf16.mxu0 0
      %1056 = vmatpush1.bf16.msra.mxu0 0
      %1057 = vmatprep.subr.bf16.mxu0 0
      %1058 = vmatpush1.bf16.msra.mxu0 0
      %1059 = vmatprep.subr.bf16.mxu0 0
      %1060 = vmatpush1.bf16.msra.mxu0 0
      %1061 = vmatprep.subr.bf16.mxu0 0
      %1062 = vmatpush1.bf16.msra.mxu0 0
      %1063 = vmatprep.subr.bf16.mxu0 0
      %1064 = vmatpush1.bf16.msra.mxu0 0
      %1065 = vmatprep.subr.bf16.mxu0 0
      %1066 = vmatpush1.bf16.msra.mxu0 0
      %1067 = vmatprep.subr.bf16.mxu0 0
      %1068 = vmatpush1.bf16.msra.mxu0 0
      %1069 = vmatprep.subr.bf16.mxu0 0
      %1070 = vmatpush1.bf16.msra.mxu0 0
      %1071 = vmatprep.mubr.bf16.mxu0 0
      %1072 = vmatmul.mubr.bf16.gmra.mrb[0].mxu0 %v525
      %v1073 = vpop.f32.mrb[0].mxu0
      %v1074 = vadd.f32 0.0, %v1073
      %v1075 = vpop.f32.mrb[0].mxu0
      %v1076 = vpop.f32.mrb[0].mxu0
      %v1077 = vadd.f32 0.0, %v1076
      %v1078 = vpop.f32.mrb[0].mxu0
      %1079 = vdwg.mxu0
      %v1080 = vadd.f32 %v926, %v1074
      %v1081 = vadd.f32 %v927, %v1077
      %1082 = vmatprep.subr.bf16.mxu0 0
      %1083 = vmatpush1.bf16.msra.mxu0 %v1023
      %1084 = vmatprep.subr.bf16.mxu0 0
      %1085 = vmatpush1.bf16.msra.mxu0 %v1024
      %1086 = vmatprep.subr.bf16.mxu0 0
      %1087 = vmatpush1.bf16.msra.mxu0 %v1025
      %1088 = vmatprep.subr.bf16.mxu0 0
      %1089 = vmatpush1.bf16.msra.mxu0 %v1026
      %1090 = vmatprep.subr.bf16.mxu0 0
      %1091 = vmatpush1.bf16.msra.mxu0 %v1027
      %1092 = vmatprep.subr.bf16.mxu0 0
      %1093 = vmatpush1.bf16.msra.mxu0 %v1028
      %1094 = vmatprep.subr.bf16.mxu0 0
      %1095 = vmatpush1.bf16.msra.mxu0 %v1029
      %1096 = vmatprep.subr.bf16.mxu0 0
      %1097 = vmatpush1.bf16.msra.mxu0 %v1030
      %1098 = vmatprep.subr.bf16.mxu0 0
      %1099 = vmatpush1.bf16.msra.mxu0 0
      %1100 = vmatprep.subr.bf16.mxu0 0
      %1101 = vmatpush1.bf16.msra.mxu0 0
      %1102 = vmatprep.subr.bf16.mxu0 0
      %1103 = vmatpush1.bf16.msra.mxu0 0
      %1104 = vmatprep.subr.bf16.mxu0 0
      %1105 = vmatpush1.bf16.msra.mxu0 0
      %1106 = vmatprep.subr.bf16.mxu0 0
      %1107 = vmatpush1.bf16.msra.mxu0 0
      %1108 = vmatprep.subr.bf16.mxu0 0
      %1109 = vmatpush1.bf16.msra.mxu0 0
      %1110 = vmatprep.subr.bf16.mxu0 0
      %1111 = vmatpush1.bf16.msra.mxu0 0
      %1112 = vmatprep.subr.bf16.mxu0 0
      %1113 = vmatpush1.bf16.msra.mxu0 0
      %1114 = vmatprep.mubr.bf16.mxu0 0
      %1115 = vmatmul.mubr.bf16.gmra.mrb[0].mxu0 %v990
      %v1116 = vpop.f32.mrb[0].mxu0
      %v1117 = vadd.f32 0.0, %v1116
      %v1118 = vpop.f32.mrb[0].mxu0
      %v1119 = vpop.f32.mrb[0].mxu0
      %v1120 = vadd.f32 0.0, %v1119
      %v1121 = vpop.f32.mrb[0].mxu0
      %1122 = vdwg.mxu0
      %v1123 = vadd.f32 %v969, %v1117
      %v1124 = vadd.f32 %v970, %v1120
      %s1125 = scalar_lea.vmem %s1, 384
      %v1126 = vld [vmem:[%s1125] sm:$0xf]
      %v1127 = vld [vmem:[%s1125 + $0x4] sm:$0xf]
      %v1128 = vld [vmem:[%s1125 + $0x8] sm:$0xf]
      %v1129 = vld [vmem:[%s1125 + $0xc] sm:$0xf]
      %v1130 = vld [vmem:[%s1125 + $0x10] sm:$0xf]
      %v1131 = vld [vmem:[%s1125 + $0x14] sm:$0xf]
      %v1132 = vld [vmem:[%s1125 + $0x18] sm:$0xf]
      %v1133 = vld [vmem:[%s1125 + $0x1c] sm:$0xf]
      %v1134 = vld [vmem:[%s1125 + $0x20] sm:$0xf]
      %v1135 = vld [vmem:[%s1125 + $0x24] sm:$0xf]
      %v1136 = vld [vmem:[%s1125 + $0x28] sm:$0xf]
      %v1137 = vld [vmem:[%s1125 + $0x2c] sm:$0xf]
      %v1138 = vld [vmem:[%s1125 + $0x30] sm:$0xf]
      %v1139 = vld [vmem:[%s1125 + $0x34] sm:$0xf]
      %v1140 = vld [vmem:[%s1125 + $0x38] sm:$0xf]
      %v1141 = vld [vmem:[%s1125 + $0x3c] sm:$0xf]
      %s1142 = sadd.s32 %s192, 3
      %s1143 = smul.u32 %s1142, 16
      %s1144 = scalar_lea.vmem %s182, %s1143
      %v1145 = vld [vmem:[%s1144] sm:$0xff]
      %v1146 = vld [vmem:[%s1144 + $0x8] sm:$0xf]
      %v1147 = vpack.c.bf16 %v1146, %v1145
      %v1164 = vunpack.c.l.b16 %v1126
      %v1165 = vunpack.c.l.b16 %v1127
      %v1166 = vunpack.c.l.b16 %v1128
      %v1167 = vunpack.c.l.b16 %v1129
      %v1168 = vunpack.c.l.b16 %v1130
      %v1169 = vunpack.c.l.b16 %v1131
      %v1170 = vunpack.c.l.b16 %v1132
      %v1171 = vunpack.c.l.b16 %v1133
      %v1172 = vunpack.c.l.b16 %v1134
      %v1173 = vunpack.c.l.b16 %v1135
      %v1174 = vunpack.c.l.b16 %v1136
      %v1175 = vunpack.c.l.b16 %v1137
      %v1176 = vunpack.c.l.b16 %v1138
      %v1177 = vunpack.c.l.b16 %v1139
      %v1178 = vunpack.c.l.b16 %v1140
      %v1179 = vunpack.c.l.b16 %v1141
      %v1180 = vpack.c.b16 %v1165, %v1164
      %v1181 = vpack.c.b16 %v1167, %v1166
      %v1182 = vpack.c.b16 %v1169, %v1168
      %v1183 = vpack.c.b16 %v1171, %v1170
      %v1184 = vpack.c.b16 %v1173, %v1172
      %v1185 = vpack.c.b16 %v1175, %v1174
      %v1186 = vpack.c.b16 %v1177, %v1176
      %v1187 = vpack.c.b16 %v1179, %v1178
      %1196 = vmatprep.subr.bf16.mxu0 0
      %1197 = vmatpush1.bf16.msra.mxu0 %v1180
      %1198 = vmatprep.subr.bf16.mxu0 0
      %1199 = vmatpush1.bf16.msra.mxu0 %v1181
      %1200 = vmatprep.subr.bf16.mxu0 0
      %1201 = vmatpush1.bf16.msra.mxu0 %v1182
      %1202 = vmatprep.subr.bf16.mxu0 0
      %1203 = vmatpush1.bf16.msra.mxu0 %v1183
      %1204 = vmatprep.subr.bf16.mxu0 0
      %1205 = vmatpush1.bf16.msra.mxu0 %v1184
      %1206 = vmatprep.subr.bf16.mxu0 0
      %1207 = vmatpush1.bf16.msra.mxu0 %v1185
      %1208 = vmatprep.subr.bf16.mxu0 0
      %1209 = vmatpush1.bf16.msra.mxu0 %v1186
      %1210 = vmatprep.subr.bf16.mxu0 0
      %1211 = vmatpush1.bf16.msra.mxu0 %v1187
      %1212 = vmatprep.subr.bf16.mxu0 0
      %1213 = vmatpush1.bf16.msra.mxu0 0
      %1214 = vmatprep.subr.bf16.mxu0 0
      %1215 = vmatpush1.bf16.msra.mxu0 0
      %1216 = vmatprep.subr.bf16.mxu0 0
      %1217 = vmatpush1.bf16.msra.mxu0 0
      %1218 = vmatprep.subr.bf16.mxu0 0
      %1219 = vmatpush1.bf16.msra.mxu0 0
      %1220 = vmatprep.subr.bf16.mxu0 0
      %1221 = vmatpush1.bf16.msra.mxu0 0
      %1222 = vmatprep.subr.bf16.mxu0 0
      %1223 = vmatpush1.bf16.msra.mxu0 0
      %1224 = vmatprep.subr.bf16.mxu0 0
      %1225 = vmatpush1.bf16.msra.mxu0 0
      %1226 = vmatprep.subr.bf16.mxu0 0
      %1227 = vmatpush1.bf16.msra.mxu0 0
      %1228 = vmatprep.mubr.bf16.mxu0 0
      %1229 = vmatmul.mubr.bf16.gmra.mrb[0].mxu0 %v682
      %v1230 = vpop.f32.mrb[0].mxu0
      %v1231 = vadd.f32 0.0, %v1230
      %v1232 = vpop.f32.mrb[0].mxu0
      %v1233 = vpop.f32.mrb[0].mxu0
      %v1234 = vadd.f32 0.0, %v1233
      %v1235 = vpop.f32.mrb[0].mxu0
      %1236 = vdwg.mxu0
      %v1237 = vadd.f32 %v1080, %v1231
      %v1238 = vadd.f32 %v1081, %v1234
      %1239 = vmatprep.subr.bf16.mxu0 0
      %1240 = vmatpush1.bf16.msra.mxu0 %v1180
      %1241 = vmatprep.subr.bf16.mxu0 0
      %1242 = vmatpush1.bf16.msra.mxu0 %v1181
      %1243 = vmatprep.subr.bf16.mxu0 0
      %1244 = vmatpush1.bf16.msra.mxu0 %v1182
      %1245 = vmatprep.subr.bf16.mxu0 0
      %1246 = vmatpush1.bf16.msra.mxu0 %v1183
      %1247 = vmatprep.subr.bf16.mxu0 0
      %1248 = vmatpush1.bf16.msra.mxu0 %v1184
      %1249 = vmatprep.subr.bf16.mxu0 0
      %1250 = vmatpush1.bf16.msra.mxu0 %v1185
      %1251 = vmatprep.subr.bf16.mxu0 0
      %1252 = vmatpush1.bf16.msra.mxu0 %v1186
      %1253 = vmatprep.subr.bf16.mxu0 0
      %1254 = vmatpush1.bf16.msra.mxu0 %v1187
      %1255 = vmatprep.subr.bf16.mxu0 0
      %1256 = vmatpush1.bf16.msra.mxu0 0
      %1257 = vmatprep.subr.bf16.mxu0 0
      %1258 = vmatpush1.bf16.msra.mxu0 0
      %1259 = vmatprep.subr.bf16.mxu0 0
      %1260 = vmatpush1.bf16.msra.mxu0 0
      %1261 = vmatprep.subr.bf16.mxu0 0
      %1262 = vmatpush1.bf16.msra.mxu0 0
      %1263 = vmatprep.subr.bf16.mxu0 0
      %1264 = vmatpush1.bf16.msra.mxu0 0
      %1265 = vmatprep.subr.bf16.mxu0 0
      %1266 = vmatpush1.bf16.msra.mxu0 0
      %1267 = vmatprep.subr.bf16.mxu0 0
      %1268 = vmatpush1.bf16.msra.mxu0 0
      %1269 = vmatprep.subr.bf16.mxu0 0
      %1270 = vmatpush1.bf16.msra.mxu0 0
      %1271 = vmatprep.mubr.bf16.mxu0 0
      %1272 = vmatmul.mubr.bf16.gmra.mrb[0].mxu0 %v1147
      %v1273 = vpop.f32.mrb[0].mxu0
      %v1274 = vadd.f32 0.0, %v1273
      %v1275 = vpop.f32.mrb[0].mxu0
      %v1276 = vpop.f32.mrb[0].mxu0
      %v1277 = vadd.f32 0.0, %v1276
      %v1278 = vpop.f32.mrb[0].mxu0
      %1279 = vdwg.mxu0
      %v1280 = vadd.f32 %v1123, %v1274
      %v1281 = vadd.f32 %v1124, %v1277
      %s1282 = scalar_lea.vmem %s1, 448
      %v1283 = vld [vmem:[%s1282] sm:$0xf]
      %v1284 = vld [vmem:[%s1282 + $0x4] sm:$0xf]
      %v1285 = vld [vmem:[%s1282 + $0x8] sm:$0xf]
      %v1286 = vld [vmem:[%s1282 + $0xc] sm:$0xf]
      %v1287 = vld [vmem:[%s1282 + $0x10] sm:$0xf]
      %v1288 = vld [vmem:[%s1282 + $0x14] sm:$0xf]
      %v1289 = vld [vmem:[%s1282 + $0x18] sm:$0xf]
      %v1290 = vld [vmem:[%s1282 + $0x1c] sm:$0xf]
      %v1291 = vld [vmem:[%s1282 + $0x20] sm:$0xf]
      %v1292 = vld [vmem:[%s1282 + $0x24] sm:$0xf]
      %v1293 = vld [vmem:[%s1282 + $0x28] sm:$0xf]
      %v1294 = vld [vmem:[%s1282 + $0x2c] sm:$0xf]
      %v1295 = vld [vmem:[%s1282 + $0x30] sm:$0xf]
      %v1296 = vld [vmem:[%s1282 + $0x34] sm:$0xf]
      %v1297 = vld [vmem:[%s1282 + $0x38] sm:$0xf]
      %v1298 = vld [vmem:[%s1282 + $0x3c] sm:$0xf]
      %v1299 = vld [vmem:[%s1144 + $0x1] sm:$0xff]
      %v1300 = vld [vmem:[%s1144 + $0x9] sm:$0xf]
      %v1301 = vpack.c.bf16 %v1300, %v1299
      %v1318 = vunpack.c.l.b16 %v1283
      %v1319 = vunpack.c.l.b16 %v1284
      %v1320 = vunpack.c.l.b16 %v1285
      %v1321 = vunpack.c.l.b16 %v1286
      %v1322 = vunpack.c.l.b16 %v1287
      %v1323 = vunpack.c.l.b16 %v1288
      %v1324 = vunpack.c.l.b16 %v1289
      %v1325 = vunpack.c.l.b16 %v1290
      %v1326 = vunpack.c.l.b16 %v1291
      %v1327 = vunpack.c.l.b16 %v1292
      %v1328 = vunpack.c.l.b16 %v1293
      %v1329 = vunpack.c.l.b16 %v1294
      %v1330 = vunpack.c.l.b16 %v1295
      %v1331 = vunpack.c.l.b16 %v1296
      %v1332 = vunpack.c.l.b16 %v1297
      %v1333 = vunpack.c.l.b16 %v1298
      %v1334 = vpack.c.b16 %v1319, %v1318
      %v1335 = vpack.c.b16 %v1321, %v1320
      %v1336 = vpack.c.b16 %v1323, %v1322
      %v1337 = vpack.c.b16 %v1325, %v1324
      %v1338 = vpack.c.b16 %v1327, %v1326
      %v1339 = vpack.c.b16 %v1329, %v1328
      %v1340 = vpack.c.b16 %v1331, %v1330
      %v1341 = vpack.c.b16 %v1333, %v1332
      %1350 = vmatprep.subr.bf16.mxu0 0
      %1351 = vmatpush1.bf16.msra.mxu0 %v1334
      %1352 = vmatprep.subr.bf16.mxu0 0
      %1353 = vmatpush1.bf16.msra.mxu0 %v1335
      %1354 = vmatprep.subr.bf16.mxu0 0
      %1355 = vmatpush1.bf16.msra.mxu0 %v1336
      %1356 = vmatprep.subr.bf16.mxu0 0
      %1357 = vmatpush1.bf16.msra.mxu0 %v1337
      %1358 = vmatprep.subr.bf16.mxu0 0
      %1359 = vmatpush1.bf16.msra.mxu0 %v1338
      %1360 = vmatprep.subr.bf16.mxu0 0
      %1361 = vmatpush1.bf16.msra.mxu0 %v1339
      %1362 = vmatprep.subr.bf16.mxu0 0
      %1363 = vmatpush1.bf16.msra.mxu0 %v1340
      %1364 = vmatprep.subr.bf16.mxu0 0
      %1365 = vmatpush1.bf16.msra.mxu0 %v1341
      %1366 = vmatprep.subr.bf16.mxu0 0
      %1367 = vmatpush1.bf16.msra.mxu0 0
      %1368 = vmatprep.subr.bf16.mxu0 0
      %1369 = vmatpush1.bf16.msra.mxu0 0
      %1370 = vmatprep.subr.bf16.mxu0 0
      %1371 = vmatpush1.bf16.msra.mxu0 0
      %1372 = vmatprep.subr.bf16.mxu0 0
      %1373 = vmatpush1.bf16.msra.mxu0 0
      %1374 = vmatprep.subr.bf16.mxu0 0
      %1375 = vmatpush1.bf16.msra.mxu0 0
      %1376 = vmatprep.subr.bf16.mxu0 0
      %1377 = vmatpush1.bf16.msra.mxu0 0
      %1378 = vmatprep.subr.bf16.mxu0 0
      %1379 = vmatpush1.bf16.msra.mxu0 0
      %1380 = vmatprep.subr.bf16.mxu0 0
      %1381 = vmatpush1.bf16.msra.mxu0 0
      %1382 = vmatprep.mubr.bf16.mxu0 0
      %1383 = vmatmul.mubr.bf16.gmra.mrb[0].mxu0 %v836
      %v1384 = vpop.f32.mrb[0].mxu0
      %v1385 = vadd.f32 0.0, %v1384
      %v1386 = vpop.f32.mrb[0].mxu0
      %v1387 = vpop.f32.mrb[0].mxu0
      %v1388 = vadd.f32 0.0, %v1387
      %v1389 = vpop.f32.mrb[0].mxu0
      %1390 = vdwg.mxu0
      %v1391 = vadd.f32 %v1237, %v1385
      %v1392 = vadd.f32 %v1238, %v1388
      %1393 = vmatprep.subr.bf16.mxu0 0
      %1394 = vmatpush1.bf16.msra.mxu0 %v1334
      %1395 = vmatprep.subr.bf16.mxu0 0
      %1396 = vmatpush1.bf16.msra.mxu0 %v1335
      %1397 = vmatprep.subr.bf16.mxu0 0
      %1398 = vmatpush1.bf16.msra.mxu0 %v1336
      %1399 = vmatprep.subr.bf16.mxu0 0
      %1400 = vmatpush1.bf16.msra.mxu0 %v1337
      %1401 = vmatprep.subr.bf16.mxu0 0
      %1402 = vmatpush1.bf16.msra.mxu0 %v1338
      %1403 = vmatprep.subr.bf16.mxu0 0
      %1404 = vmatpush1.bf16.msra.mxu0 %v1339
      %1405 = vmatprep.subr.bf16.mxu0 0
      %1406 = vmatpush1.bf16.msra.mxu0 %v1340
      %1407 = vmatprep.subr.bf16.mxu0 0
      %1408 = vmatpush1.bf16.msra.mxu0 %v1341
      %1409 = vmatprep.subr.bf16.mxu0 0
      %1410 = vmatpush1.bf16.msra.mxu0 0
      %1411 = vmatprep.subr.bf16.mxu0 0
      %1412 = vmatpush1.bf16.msra.mxu0 0
      %1413 = vmatprep.subr.bf16.mxu0 0
      %1414 = vmatpush1.bf16.msra.mxu0 0
      %1415 = vmatprep.subr.bf16.mxu0 0
      %1416 = vmatpush1.bf16.msra.mxu0 0
      %1417 = vmatprep.subr.bf16.mxu0 0
      %1418 = vmatpush1.bf16.msra.mxu0 0
      %1419 = vmatprep.subr.bf16.mxu0 0
      %1420 = vmatpush1.bf16.msra.mxu0 0
      %1421 = vmatprep.subr.bf16.mxu0 0
      %1422 = vmatpush1.bf16.msra.mxu0 0
      %1423 = vmatprep.subr.bf16.mxu0 0
      %1424 = vmatpush1.bf16.msra.mxu0 0
      %1425 = vmatprep.mubr.bf16.mxu0 0
      %1426 = vmatmul.mubr.bf16.gmra.mrb[0].mxu0 %v1301
      %v1427 = vpop.f32.mrb[0].mxu0
      %v1428 = vadd.f32 0.0, %v1427
      %v1429 = vpop.f32.mrb[0].mxu0
      %v1430 = vpop.f32.mrb[0].mxu0
      %v1431 = vadd.f32 0.0, %v1430
      %v1432 = vpop.f32.mrb[0].mxu0
      %1433 = vdwg.mxu0
      %v1434 = vadd.f32 %v1280, %v1428
      %v1435 = vadd.f32 %v1281, %v1431
      %s1436 = scalar_lea.vmem %s1, 512
      %v1437 = vld [vmem:[%s1436] sm:$0xf]
      %v1438 = vld [vmem:[%s1436 + $0x4] sm:$0xf]
      %v1439 = vld [vmem:[%s1436 + $0x8] sm:$0xf]
      %v1440 = vld [vmem:[%s1436 + $0xc] sm:$0xf]
      %v1441 = vld [vmem:[%s1436 + $0x10] sm:$0xf]
      %v1442 = vld [vmem:[%s1436 + $0x14] sm:$0xf]
      %v1443 = vld [vmem:[%s1436 + $0x18] sm:$0xf]
      %v1444 = vld [vmem:[%s1436 + $0x1c] sm:$0xf]
      %v1445 = vld [vmem:[%s1436 + $0x20] sm:$0xf]
      %v1446 = vld [vmem:[%s1436 + $0x24] sm:$0xf]
      %v1447 = vld [vmem:[%s1436 + $0x28] sm:$0xf]
      %v1448 = vld [vmem:[%s1436 + $0x2c] sm:$0xf]
      %v1449 = vld [vmem:[%s1436 + $0x30] sm:$0xf]
      %v1450 = vld [vmem:[%s1436 + $0x34] sm:$0xf]
      %v1451 = vld [vmem:[%s1436 + $0x38] sm:$0xf]
      %v1452 = vld [vmem:[%s1436 + $0x3c] sm:$0xf]
      %v1453 = vld [vmem:[%s1144 + $0x2] sm:$0xff]
      %v1454 = vld [vmem:[%s1144 + $0xa] sm:$0xf]
      %v1455 = vpack.c.bf16 %v1454, %v1453
      %v1472 = vunpack.c.l.b16 %v1437
      %v1473 = vunpack.c.l.b16 %v1438
      %v1474 = vunpack.c.l.b16 %v1439
      %v1475 = vunpack.c.l.b16 %v1440
      %v1476 = vunpack.c.l.b16 %v1441
      %v1477 = vunpack.c.l.b16 %v1442
      %v1478 = vunpack.c.l.b16 %v1443
      %v1479 = vunpack.c.l.b16 %v1444
      %v1480 = vunpack.c.l.b16 %v1445
      %v1481 = vunpack.c.l.b16 %v1446
      %v1482 = vunpack.c.l.b16 %v1447
      %v1483 = vunpack.c.l.b16 %v1448
      %v1484 = vunpack.c.l.b16 %v1449
      %v1485 = vunpack.c.l.b16 %v1450
      %v1486 = vunpack.c.l.b16 %v1451
      %v1487 = vunpack.c.l.b16 %v1452
      %v1488 = vpack.c.b16 %v1473, %v1472
      %v1489 = vpack.c.b16 %v1475, %v1474
      %v1490 = vpack.c.b16 %v1477, %v1476
      %v1491 = vpack.c.b16 %v1479, %v1478
      %v1492 = vpack.c.b16 %v1481, %v1480
      %v1493 = vpack.c.b16 %v1483, %v1482
      %v1494 = vpack.c.b16 %v1485, %v1484
      %v1495 = vpack.c.b16 %v1487, %v1486
      %1504 = vmatprep.subr.bf16.mxu0 0
      %1505 = vmatpush1.bf16.msra.mxu0 %v1488
      %1506 = vmatprep.subr.bf16.mxu0 0
      %1507 = vmatpush1.bf16.msra.mxu0 %v1489
      %1508 = vmatprep.subr.bf16.mxu0 0
      %1509 = vmatpush1.bf16.msra.mxu0 %v1490
      %1510 = vmatprep.subr.bf16.mxu0 0
      %1511 = vmatpush1.bf16.msra.mxu0 %v1491
      %1512 = vmatprep.subr.bf16.mxu0 0
      %1513 = vmatpush1.bf16.msra.mxu0 %v1492
      %1514 = vmatprep.subr.bf16.mxu0 0
      %1515 = vmatpush1.bf16.msra.mxu0 %v1493
      %1516 = vmatprep.subr.bf16.mxu0 0
      %1517 = vmatpush1.bf16.msra.mxu0 %v1494
      %1518 = vmatprep.subr.bf16.mxu0 0
      %1519 = vmatpush1.bf16.msra.mxu0 %v1495
      %1520 = vmatprep.subr.bf16.mxu0 0
      %1521 = vmatpush1.bf16.msra.mxu0 0
      %1522 = vmatprep.subr.bf16.mxu0 0
      %1523 = vmatpush1.bf16.msra.mxu0 0
      %1524 = vmatprep.subr.bf16.mxu0 0
      %1525 = vmatpush1.bf16.msra.mxu0 0
      %1526 = vmatprep.subr.bf16.mxu0 0
      %1527 = vmatpush1.bf16.msra.mxu0 0
      %1528 = vmatprep.subr.bf16.mxu0 0
      %1529 = vmatpush1.bf16.msra.mxu0 0
      %1530 = vmatprep.subr.bf16.mxu0 0
      %1531 = vmatpush1.bf16.msra.mxu0 0
      %1532 = vmatprep.subr.bf16.mxu0 0
      %1533 = vmatpush1.bf16.msra.mxu0 0
      %1534 = vmatprep.subr.bf16.mxu0 0
      %1535 = vmatpush1.bf16.msra.mxu0 0
      %1536 = vmatprep.mubr.bf16.mxu0 0
      %1537 = vmatmul.mubr.bf16.gmra.mrb[0].mxu0 %v990
      %v1538 = vpop.f32.mrb[0].mxu0
      %v1539 = vadd.f32 0.0, %v1538
      %v1540 = vpop.f32.mrb[0].mxu0
      %v1541 = vpop.f32.mrb[0].mxu0
      %v1542 = vadd.f32 0.0, %v1541
      %v1543 = vpop.f32.mrb[0].mxu0
      %1544 = vdwg.mxu0
      %v1545 = vadd.f32 %v1391, %v1539
      %v1546 = vadd.f32 %v1392, %v1542
      %1547 = vmatprep.subr.bf16.mxu0 0
      %1548 = vmatpush1.bf16.msra.mxu0 %v1488
      %1549 = vmatprep.subr.bf16.mxu0 0
      %1550 = vmatpush1.bf16.msra.mxu0 %v1489
      %1551 = vmatprep.subr.bf16.mxu0 0
      %1552 = vmatpush1.bf16.msra.mxu0 %v1490
      %1553 = vmatprep.subr.bf16.mxu0 0
      %1554 = vmatpush1.bf16.msra.mxu0 %v1491
      %1555 = vmatprep.subr.bf16.mxu0 0
      %1556 = vmatpush1.bf16.msra.mxu0 %v1492
      %1557 = vmatprep.subr.bf16.mxu0 0
      %1558 = vmatpush1.bf16.msra.mxu0 %v1493
      %1559 = vmatprep.subr.bf16.mxu0 0
      %1560 = vmatpush1.bf16.msra.mxu0 %v1494
      %1561 = vmatprep.subr.bf16.mxu0 0
      %1562 = vmatpush1.bf16.msra.mxu0 %v1495
      %1563 = vmatprep.subr.bf16.mxu0 0
      %1564 = vmatpush1.bf16.msra.mxu0 0
      %1565 = vmatprep.subr.bf16.mxu0 0
      %1566 = vmatpush1.bf16.msra.mxu0 0
      %1567 = vmatprep.subr.bf16.mxu0 0
      %1568 = vmatpush1.bf16.msra.mxu0 0
      %1569 = vmatprep.subr.bf16.mxu0 0
      %1570 = vmatpush1.bf16.msra.mxu0 0
      %1571 = vmatprep.subr.bf16.mxu0 0
      %1572 = vmatpush1.bf16.msra.mxu0 0
      %1573 = vmatprep.subr.bf16.mxu0 0
      %1574 = vmatpush1.bf16.msra.mxu0 0
      %1575 = vmatprep.subr.bf16.mxu0 0
      %1576 = vmatpush1.bf16.msra.mxu0 0
      %1577 = vmatprep.subr.bf16.mxu0 0
      %1578 = vmatpush1.bf16.msra.mxu0 0
      %1579 = vmatprep.mubr.bf16.mxu0 0
      %1580 = vmatmul.mubr.bf16.gmra.mrb[0].mxu0 %v1455
      %v1581 = vpop.f32.mrb[0].mxu0
      %v1582 = vadd.f32 0.0, %v1581
      %v1583 = vpop.f32.mrb[0].mxu0
      %v1584 = vpop.f32.mrb[0].mxu0
      %v1585 = vadd.f32 0.0, %v1584
      %v1586 = vpop.f32.mrb[0].mxu0
      %1587 = vdwg.mxu0
      %v1588 = vadd.f32 %v1434, %v1582
      %v1589 = vadd.f32 %v1435, %v1585
      %v1590 = vld [vmem:[%s2] sm:$0x1]
      %v1592 = vlaneseq
      %v1593 = vshrl.u32 %v1592, 7
      %v1594 = vsub.s32 0, %v1593
      %v1595 = vrot.slane %v1590, %v1594
      %v1597 = vadd.f32 %v1545, %v1595
      %v1598 = vadd.f32 %v1546, %v1595
      %v1599 = vmax.f32 %v1597, 0.0
      %v1600 = vmax.f32 %v1598, 0.0
      %v1601 = vadd.f32 %v1588, %v1595
      %v1602 = vadd.f32 %v1589, %v1595
      %v1603 = vmax.f32 %v1601, 0.0
      %v1604 = vmax.f32 %v1602, 0.0
      %v1605 = vmax.f32 %v1599, %v1603
      %v1606 = vmax.f32 %v1600, %v1604
      %1607 = vst [vmem:[#allocation2] sm:$0xff] %v1605
      %1608 = vst [vmem:[#allocation2 + $0x8] sm:$0xf] %v1606
      %v1609 = vld [vmem:[#allocation2] ss:$2 sm:$0x3f]
      %s1610 = scalar_lea.vmem [#allocation2], 1
      %v1611 = vld [vmem:[%s1610] ss:$2 sm:$0x3f]
      %v1612 = vmax.f32 %v1609, %v1611
      %1613 = vst [vmem:[%s190] sm:$0x3f] %v1612
      %p1614 = scmp.lt.s32.totalorder %s18, 1
      %s1615 = scalar_select %p1614, %s18, 1
      %p1616 = scmp.lt.s32.totalorder %s19, 5
      %s1617 = scalar_select %p1616, %s19, 5
      %s1618 = smul.addr %s1615, 6
      %s1619 = sadd.s32 %s1617, %s1618
      %s1620 = smul.addr %s1619, 8
      %s1621 = scalar_lea.vmem %s3, %s1620
      // Predicated region
      $region33: #{cnnet_forward.4} parent=31 // pred_check
        %p1622 = pneg %p114
      $region34: #{cnnet_forward.4} parent=31 // pred_check_branch
        %1624 = sbr.rel (%p1622) target = $region36
      $region35: #{cnnet_forward.4} parent=31 // pred_region
        _
      $region36: #{cnnet_forward.4} parent=31 // pred_fallthru
        _
    $region32: #{cnnet_forward.4} parent=5 // pred_fallthru
      _
    %p1625 = scmp.le.s32.totalorder 2, %s9
    // Predicated region
    $region37: #{cnnet_forward.4} parent=5 // pred_check
      %p1626 = pneg %p1625
    $region38: #{cnnet_forward.4} parent=5 // pred_check_branch
      %1628 = sbr.rel (%p1626) target = $region40
    $region39: #{cnnet_forward.4} parent=5 // pred_region
      %s1629 = ssub.s32 %s9, 2
      // Predicated region
      $region41: #{cnnet_forward.4} parent=39 // pred_check
        %p1630 = pneg %p120
      $region42: #{cnnet_forward.4} parent=39 // pred_check_branch
        %1632 = sbr.rel (%p1630) target = $region44
      $region43: #{cnnet_forward.4} parent=39 // pred_region
        %p1633 = scmp.lt.s32.totalorder %s20, 1
        %s1634 = scalar_select %p1633, %s20, 1
        %p1635 = scmp.lt.s32.totalorder %s21, 5
        %s1636 = scalar_select %p1635, %s21, 5
        %s1637 = smul.addr %s1634, 6
        %s1638 = sadd.s32 %s1636, %s1637
        %s1639 = smul.addr %s1638, 8
        %s1640 = scalar_lea.vmem %s3, %s1639
      $region44: #{cnnet_forward.4} parent=39 // pred_fallthru
        _
    $region40: #{cnnet_forward.4} parent=5 // pred_fallthru
      _
  $region6: #{cnnet_forward.4} parent=0 // loop_footer
    %s13 = sadd.s32 1, %s9
  $region7: #{cnnet_forward.4} parent=0 // loop_footer_branch
    %8 = sbr.rel target = $region3
  $region8: #{cnnet_forward.4} parent=0 // loop_exit
    _

// kernel: cnnet_forward.3
$region0: #{cnnet_forward.3}
  #allocation0 [shape = 'u32[]', space=smem, size = 0x4, offset = 0x4, fixed_abs, tag = 'smem constant byte address 0x4 - core index']
  #allocation1 [shape = 'u32[144,128]{1,0:T(1,128)}', space=vmem, size = 0x12000, scoped, tag = 'internal scratch']
  #allocation2 [shape = 'f32[28,128]{1,0:T(8,128)}', space=vmem, size = 0x4000, scoped, tag = 'scratch operand']
  %s0 = inlined_call_operand.vmem [shape: f32[2,32,32,3], index: 0, kind: input, shape index: {}]
  %s1 = inlined_call_operand.vmem [shape: bf16[25,3,128], index: 1, kind: input, shape index: {}]
  %s2 = inlined_call_operand.vmem [shape: f32[1,128], index: 2, kind: input, shape index: {}]
  %s3 = inlined_call_operand.vmem [shape: f32[2,14,14,128], index: 3, kind: output, shape index: {}]
  %s4 = sld [smem:[#allocation0]]
  $region45: #{cnnet_forward.3} parent=0
    _
  %s6 = ssub.s32 1, %s4
  %s7 = scalar_select 0, %s6, %s4
  loop: start=0, step=1, limit=30
  $region2: #{cnnet_forward.3} parent=0 // loop_pre_header
    _
  $region3: #{cnnet_forward.3} parent=0 // loop_header
    %s9 = sphi 0, %s13
    %p10 = scmp.ge.s32.totalorder %s9, 30
    %s16 = sphi 0, %s28
    %s17 = sphi 0, %s24
    %s18 = sphi 0, %s16
    %s19 = sphi 0, %s17
    %s20 = sphi 0, %s18
    %s21 = sphi 0, %s19
    %s31 = sphi 0, %s33
    %s34 = sphi 0, %s31
    %s35 = sphi 0, %s34
    %s51 = sphi 0, %s35
    %s55 = sphi 0, %s55
    %s57 = sphi 0, %s55
    %s58 = sphi 0, %s57
    %s72 = sphi 0, %s58
    %s76 = sphi 0, %s76
    %s78 = sphi 0, %s76
    %s79 = sphi 0, %s78
    %s93 = sphi 0, %s79
    %s101 = sphi 0, %s103
    %s104 = sphi 0, %s101
    %s105 = sphi 0, %s104
    %s121 = sphi 0, %s105
  $region4: #{cnnet_forward.3} parent=0 // loop_header_branch
    %12 = sbr.rel (%p10) target = $region8
  $region5: #{cnnet_forward.3} parent=0 // loop_body
    %s14 = ssub.s32 %s9, 1
    %s15 = ssub.s32 %s9, 2
    %s22 = sadd.s32 1, %s17
    %p23 = scmp.ge.s32.totalorder %s22, 14
    %s24 = scalar_select %p23, 0, %s22
    %s25 = sadd.s32 1, %s16
    %s26 = scalar_select %p23, %s25, %s16
    %p27 = scmp.ge.s32.totalorder %s26, 2
    %s28 = scalar_select %p27, 0, %s26
    %s29 = ssub.s32 %s16, %s28
    %p30 = scmp.eq.s32.totalorder %s29, 0
    %s32 = sadd.s32 %s31, 1
    %s33 = scalar_select %p30, %s31, %s32
    %p36 = pneg %p30
    %p37 = scmp.eq.s32.totalorder %s9, 27
    %p38 = por %p36, %p37
    %p39 = scmp.ne.s32.totalorder %s31, %s34
    %p40 = scmp.eq.s32.totalorder %s9, 0
    %p41 = por %p39, %p40
    %p42 = scmp.ne.s32.totalorder %s31, %s34
    %p43 = scmp.eq.s32.totalorder %s14, 27
    %p44 = por %p42, %p43
    %p45 = scmp.ne.s32.totalorder %s34, %s35
    %p46 = scmp.eq.s32.totalorder %s14, 0
    %p47 = por %p45, %p46
    %p48 = scmp.ne.s32.totalorder %s34, %s35
    %p49 = scmp.eq.s32.totalorder %s15, 27
    %p50 = por %p48, %p49
    %p52 = scmp.ne.s32.totalorder %s35, %s51
    %p53 = scmp.eq.s32.totalorder %s15, 0
    %p54 = por %p52, %p53
    %s56 = sadd.s32 %s55, 1
    %p59 = scmp.eq.s32.totalorder %s9, 27
    %p60 = scmp.ne.s32.totalorder %s55, %s57
    %p61 = scmp.eq.s32.totalorder %s9, 0
    %p62 = por %p60, %p61
    %p63 = scmp.ne.s32.totalorder %s55, %s57
    %p64 = scmp.eq.s32.totalorder %s14, 27
    %p65 = por %p63, %p64
    %p66 = scmp.ne.s32.totalorder %s57, %s58
    %p67 = scmp.eq.s32.totalorder %s14, 0
    %p68 = por %p66, %p67
    %p69 = scmp.ne.s32.totalorder %s57, %s58
    %p70 = scmp.eq.s32.totalorder %s15, 27
    %p71 = por %p69, %p70
    %p73 = scmp.ne.s32.totalorder %s58, %s72
    %p74 = scmp.eq.s32.totalorder %s15, 0
    %p75 = por %p73, %p74
    %s77 = sadd.s32 %s76, 1
    %p80 = scmp.eq.s32.totalorder %s9, 27
    %p81 = scmp.ne.s32.totalorder %s76, %s78
    %p82 = scmp.eq.s32.totalorder %s9, 0
    %p83 = por %p81, %p82
    %p84 = scmp.ne.s32.totalorder %s76, %s78
    %p85 = scmp.eq.s32.totalorder %s14, 27
    %p86 = por %p84, %p85
    %p87 = scmp.ne.s32.totalorder %s78, %s79
    %p88 = scmp.eq.s32.totalorder %s14, 0
    %p89 = por %p87, %p88
    %p90 = scmp.ne.s32.totalorder %s78, %s79
    %p91 = scmp.eq.s32.totalorder %s15, 27
    %p92 = por %p90, %p91
    %p94 = scmp.ne.s32.totalorder %s79, %s93
    %p95 = scmp.eq.s32.totalorder %s15, 0
    %p96 = por %p94, %p95
    %s97 = ssub.s32 %s16, %s28
    %s98 = ssub.s32 %s17, %s24
    %s99 = sor.u32 %s97, %s98
    %p100 = scmp.eq.s32.totalorder %s99, 0
    %s102 = sadd.s32 %s101, 1
    %s103 = scalar_select %p100, %s101, %s102
    %p106 = pneg %p100
    %p107 = scmp.eq.s32.totalorder %s9, 27
    %p108 = por %p106, %p107
    %p109 = scmp.ne.s32.totalorder %s101, %s104
    %p110 = scmp.eq.s32.totalorder %s9, 0
    %p111 = por %p109, %p110
    %p112 = scmp.ne.s32.totalorder %s101, %s104
    %p113 = scmp.eq.s32.totalorder %s14, 27
    %p114 = por %p112, %p113
    %p115 = scmp.ne.s32.totalorder %s104, %s105
    %p116 = scmp.eq.s32.totalorder %s14, 0
    %p117 = por %p115, %p116
    %p118 = scmp.ne.s32.totalorder %s104, %s105
    %p119 = scmp.eq.s32.totalorder %s15, 27
    %p120 = por %p118, %p119
    %p122 = scmp.ne.s32.totalorder %s105, %s121
    %p123 = scmp.eq.s32.totalorder %s15, 0
    %p124 = por %p122, %p123
    %p125 = scmp.le.s32.totalorder 1, %s9
    %p126 = scmp.lt.s32.totalorder %s9, 29
    %p127 = pnand %p125, %p126
    %p128 = pneg %p127
    // Predicated region
    $region9: #{cnnet_forward.3} parent=5 // pred_check
      _
    $region10: #{cnnet_forward.3} parent=5 // pred_check_branch
      %130 = sbr.rel (%p127) target = $region12
    $region11: #{cnnet_forward.3} parent=5 // pred_region
      %s131 = ssub.s32 %s9, 1
      // Predicated region
      $region13: #{cnnet_forward.3} parent=11 // pred_check
        %p132 = pneg %p68
      $region14: #{cnnet_forward.3} parent=11 // pred_check_branch
        %134 = sbr.rel (%p132) target = $region16
      $region15: #{cnnet_forward.3} parent=11 // pred_region
        _
      $region16: #{cnnet_forward.3} parent=11 // pred_fallthru
        _
      // Predicated region
      $region17: #{cnnet_forward.3} parent=11 // pred_check
        %p135 = pneg %p89
      $region18: #{cnnet_forward.3} parent=11 // pred_check_branch
        %137 = sbr.rel (%p135) target = $region20
      $region19: #{cnnet_forward.3} parent=11 // pred_region
        _
      $region20: #{cnnet_forward.3} parent=11 // pred_fallthru
        _
    $region12: #{cnnet_forward.3} parent=5 // pred_fallthru
      _
    %p138 = scmp.lt.s32.totalorder %s9, 28
    // Predicated region
    $region21: #{cnnet_forward.3} parent=5 // pred_check
      %p139 = pneg %p138
    $region22: #{cnnet_forward.3} parent=5 // pred_check_branch
      %141 = sbr.rel (%p139) target = $region24
    $region23: #{cnnet_forward.3} parent=5 // pred_region
      // Predicated region
      $region25: #{cnnet_forward.3} parent=23 // pred_check
        %p142 = pneg %p41
      $region26: #{cnnet_forward.3} parent=23 // pred_check_branch
        %144 = sbr.rel (%p142) target = $region28
      $region27: #{cnnet_forward.3} parent=23 // pred_region
        %p145 = scmp.lt.s32.totalorder %s16, 1
        %s146 = scalar_select %p145, %s16, 1
        %s147 = smul.addr %s146, 128
        %s148 = smul.addr %s147, 8
        %s149 = scalar_lea.vmem %s0, %s148
      $region28: #{cnnet_forward.3} parent=23 // pred_fallthru
        _
    $region24: #{cnnet_forward.3} parent=5 // pred_fallthru
      _
    %p150 = scmp.le.s32.totalorder 1, %s9
    %p151 = scmp.lt.s32.totalorder %s9, 29
    %p152 = pnand %p150, %p151
    %p153 = pneg %p152
    // Predicated region
    $region29: #{cnnet_forward.3} parent=5 // pred_check
      _
    $region30: #{cnnet_forward.3} parent=5 // pred_check_branch
      %155 = sbr.rel (%p152) target = $region32
    $region31: #{cnnet_forward.3} parent=5 // pred_region
      %s156 = ssub.s32 %s9, 1
      %p157 = scmp.lt.s32.totalorder %s18, 1
      %s158 = scalar_select %p157, %s18, 1
      %s159 = smul.addr %s158, 128
      %s160 = smul.addr %s159, 8
      %s161 = scalar_lea.vmem %s0, %s160
      %p162 = pneg %p47
      %p163 = pneg %p44
      %p164 = pneg %p68
      %p165 = pneg %p65
      %p166 = pneg %p89
      %p167 = pneg %p86
      %p168 = pneg %p117
      %p169 = pneg %p114
      %p170 = scmp.lt.s32.totalorder %s18, 1
      %s171 = scalar_select %p170, %s18, 1
      %p172 = scmp.lt.s32.totalorder %s19, 13
      %s173 = scalar_select %p172, %s19, 13
      %s174 = smul.addr %s173, 2
      %s175 = smul.addr %s171, 28
      %s176 = sadd.s32 %s174, %s175
      %s177 = smul.addr %s176, 8
      %s178 = scalar_lea.vmem %s3, %s177
      %p179 = scmp.lt.s32.totalorder %s18, 1
      %s180 = scalar_select %p179, %s18, 1
      %s181 = smul.addr %s180, 128
      %s182 = smul.addr %s181, 8
      %s183 = scalar_lea.vmem %s0, %s182
      %p184 = scmp.lt.s32.totalorder %s18, 1
      %s185 = scalar_select %p184, %s18, 1
      %p186 = scmp.lt.s32.totalorder %s19, 13
      %s187 = scalar_select %p186, %s19, 13
      %s188 = smul.addr %s187, 2
      %s189 = smul.addr %s185, 28
      %s190 = sadd.s32 %s188, %s189
      %s191 = smul.addr %s190, 8
      %s192 = scalar_lea.vmem %s3, %s191
      %s194 = smul.u32 %s19, 2
      %v195 = vld [vmem:[%s1] sm:$0x3]
      %s196 = smul.u32 %s194, 32
      %s197 = scalar_lea.vmem %s183, %s196
      %v198 = vld [vmem:[%s197] sm:$0xff]
      %v199 = vld [vmem:[%s197 + $0x8] sm:$0xff]
      %v200 = vld [vmem:[%s197 + $0x10] sm:$0xff]
      %v201 = vld [vmem:[%s197 + $0x18] sm:$0xf]
      %v202 = vpack.c.bf16 %v199, %v198
      %v203 = vpack.c.bf16 %v201, %v200
      %s204 = sadd.s32 %s194, 1
      %s205 = smul.u32 %s204, 32
      %s206 = scalar_lea.vmem %s183, %s205
      %v207 = vld [vmem:[%s206] sm:$0xff]
      %v208 = vld [vmem:[%s206 + $0x8] sm:$0xff]
      %v209 = vld [vmem:[%s206 + $0x10] sm:$0xff]
      %v210 = vld [vmem:[%s206 + $0x18] sm:$0xf]
      %v211 = vpack.c.bf16 %v208, %v207
      %v212 = vpack.c.bf16 %v210, %v209
      %s213 = scalar_lea.vmem %s1, 2
      %v214 = vld [vmem:[%s213] sm:$0x3]
      %v215 = vld [vmem:[%s197 + $0x1] sm:$0xff]
      %v216 = vld [vmem:[%s197 + $0x9] sm:$0xff]
      %v217 = vld [vmem:[%s197 + $0x11] sm:$0xff]
      %v218 = vld [vmem:[%s197 + $0x19] sm:$0xf]
      %v219 = vpack.c.bf16 %v216, %v215
      %v220 = vpack.c.bf16 %v218, %v217
      %v221 = vld [vmem:[%s206 + $0x1] sm:$0xff]
      %v222 = vld [vmem:[%s206 + $0x9] sm:$0xff]
      %v223 = vld [vmem:[%s206 + $0x11] sm:$0xff]
      %v224 = vld [vmem:[%s206 + $0x19] sm:$0xf]
      %v225 = vpack.c.bf16 %v222, %v221
      %v226 = vpack.c.bf16 %v224, %v223
      %vm227 = vcmask 23552
      %v229 = vsel %vm227, %v219, 0
      %v232 = vsel %vm227, %v220, 0
      %vm234 = vcmask 1040384
      %vm235 = vcmask 1041408
      %v236 = vsel %vm234, 4294967295, 65535
      %v237 = vsel %vm235, %v236, 0
      %v239 = vand.u32 %v214, %v237
      %241 = vmatprep.subr.bf16.mxu0 0
      %242 = vmatpush1.bf16.msra.mxu0 %v239
      %243 = vmatprep.subr.bf16.mxu0 0
      %244 = vmatpush1.bf16.msra.mxu0 0
      %245 = vmatprep.subr.bf16.mxu0 0
      %246 = vmatpush1.bf16.msra.mxu0 0
      %247 = vmatprep.subr.bf16.mxu0 0
      %248 = vmatpush1.bf16.msra.mxu0 0
      %249 = vmatprep.subr.bf16.mxu0 0
      %250 = vmatpush1.bf16.msra.mxu0 0
      %251 = vmatprep.subr.bf16.mxu0 0
      %252 = vmatpush1.bf16.msra.mxu0 0
      %253 = vmatprep.subr.bf16.mxu0 0
      %254 = vmatpush1.bf16.msra.mxu0 0
      %255 = vmatprep.subr.bf16.mxu0 0
      %256 = vmatpush1.bf16.msra.mxu0 0
      %257 = vmatprep.subr.bf16.mxu0 0
      %258 = vmatpush1.bf16.msra.mxu0 0
      %259 = vmatprep.subr.bf16.mxu0 0
      %260 = vmatpush1.bf16.msra.mxu0 0
      %261 = vmatprep.subr.bf16.mxu0 0
      %262 = vmatpush1.bf16.msra.mxu0 0
      %263 = vmatprep.subr.bf16.mxu0 0
      %264 = vmatpush1.bf16.msra.mxu0 0
      %265 = vmatprep.subr.bf16.mxu0 0
      %266 = vmatpush1.bf16.msra.mxu0 0
      %267 = vmatprep.subr.bf16.mxu0 0
      %268 = vmatpush1.bf16.msra.mxu0 0
      %269 = vmatprep.subr.bf16.mxu0 0
      %270 = vmatpush1.bf16.msra.mxu0 0
      %271 = vmatprep.subr.bf16.mxu0 0
      %272 = vmatpush1.bf16.msra.mxu0 0
      %273 = vmatprep.mubr.bf16.mxu0 0
      %274 = vmatmul.mubr.bf16.gmra.mrb[0].mxu0 %v229
      %v275 = vpop.f32.mrb[0].mxu0
      %v276 = vadd.f32 0.0, %v275
      %v277 = vpop.f32.mrb[0].mxu0
      %v278 = vpop.f32.mrb[0].mxu0
      %v279 = vadd.f32 0.0, %v278
      %v280 = vpop.f32.mrb[0].mxu0
      %281 = vmatprep.mubr.bf16.mxu0 0
      %282 = vmatmul.mubr.bf16.gmra.mrb[0].mxu0 %v232
      %v283 = vpop.f32.mrb[0].mxu0
      %v284 = vadd.f32 0.0, %v283
      %v285 = vpop.f32.mrb[0].mxu0
      %v286 = vpop.f32.mrb[0].mxu0
      %v287 = vadd.f32 0.0, %v286
      %v288 = vpop.f32.mrb[0].mxu0
      %289 = vdwg.mxu0
      %v291 = vsel %vm227, %v202, 0
      %v294 = vsel %vm227, %v203, 0
      %v297 = vand.u32 %v195, %v237
      %299 = vmatprep.subr.bf16.mxu0 0
      %300 = vmatpush1.bf16.msra.mxu0 %v297
      %301 = vmatprep.subr.bf16.mxu0 0
      %302 = vmatpush1.bf16.msra.mxu0 0
      %303 = vmatprep.subr.bf16.mxu0 0
      %304 = vmatpush1.bf16.msra.mxu0 0
      %305 = vmatprep.subr.bf16.mxu0 0
      %306 = vmatpush1.bf16.msra.mxu0 0
      %307 = vmatprep.subr.bf16.mxu0 0
      %308 = vmatpush1.bf16.msra.mxu0 0
      %309 = vmatprep.subr.bf16.mxu0 0
      %310 = vmatpush1.bf16.msra.mxu0 0
      %311 = vmatprep.subr.bf16.mxu0 0
      %312 = vmatpush1.bf16.msra.mxu0 0
      %313 = vmatprep.subr.bf16.mxu0 0
      %314 = vmatpush1.bf16.msra.mxu0 0
      %315 = vmatprep.subr.bf16.mxu0 0
      %316 = vmatpush1.bf16.msra.mxu0 0
      %317 = vmatprep.subr.bf16.mxu0 0
      %318 = vmatpush1.bf16.msra.mxu0 0
      %319 = vmatprep.subr.bf16.mxu0 0
      %320 = vmatpush1.bf16.msra.mxu0 0
      %321 = vmatprep.subr.bf16.mxu0 0
      %322 = vmatpush1.bf16.msra.mxu0 0
      %323 = vmatprep.subr.bf16.mxu0 0
      %324 = vmatpush1.bf16.msra.mxu0 0
      %325 = vmatprep.subr.bf16.mxu0 0
      %326 = vmatpush1.bf16.msra.mxu0 0
      %327 = vmatprep.subr.bf16.mxu0 0
      %328 = vmatpush1.bf16.msra.mxu0 0
      %329 = vmatprep.subr.bf16.mxu0 0
      %330 = vmatpush1.bf16.msra.mxu0 0
      %331 = vmatprep.mubr.bf16.mxu0 0
      %332 = vmatmul.mubr.bf16.gmra.mrb[0].mxu0 %v291
      %v333 = vpop.f32.mrb[0].mxu0
      %v334 = vadd.f32 %v276, %v333
      %v335 = vpop.f32.mrb[0].mxu0
      %v336 = vpop.f32.mrb[0].mxu0
      %v337 = vadd.f32 %v279, %v336
      %v338 = vpop.f32.mrb[0].mxu0
      %339 = vmatprep.mubr.bf16.mxu0 0
      %340 = vmatmul.mubr.bf16.gmra.mrb[0].mxu0 %v294
      %v341 = vpop.f32.mrb[0].mxu0
      %v342 = vadd.f32 %v284, %v341
      %v343 = vpop.f32.mrb[0].mxu0
      %v344 = vpop.f32.mrb[0].mxu0
      %v345 = vadd.f32 %v287, %v344
      %v346 = vpop.f32.mrb[0].mxu0
      %347 = vdwg.mxu0
      %v349 = vsel %vm227, %v225, 0
      %v352 = vsel %vm227, %v226, 0
      %354 = vmatprep.subr.bf16.mxu0 0
      %355 = vmatpush1.bf16.msra.mxu0 %v239
      %356 = vmatprep.subr.bf16.mxu0 0
      %357 = vmatpush1.bf16.msra.mxu0 0
      %358 = vmatprep.subr.bf16.mxu0 0
      %359 = vmatpush1.bf16.msra.mxu0 0
      %360 = vmatprep.subr.bf16.mxu0 0
      %361 = vmatpush1.bf16.msra.mxu0 0
      %362 = vmatprep.subr.bf16.mxu0 0
      %363 = vmatpush1.bf16.msra.mxu0 0
      %364 = vmatprep.subr.bf16.mxu0 0
      %365 = vmatpush1.bf16.msra.mxu0 0
      %366 = vmatprep.subr.bf16.mxu0 0
      %367 = vmatpush1.bf16.msra.mxu0 0
      %368 = vmatprep.subr.bf16.mxu0 0
      %369 = vmatpush1.bf16.msra.mxu0 0
      %370 = vmatprep.subr.bf16.mxu0 0
      %371 = vmatpush1.bf16.msra.mxu0 0
      %372 = vmatprep.subr.bf16.mxu0 0
      %373 = vmatpush1.bf16.msra.mxu0 0
      %374 = vmatprep.subr.bf16.mxu0 0
      %375 = vmatpush1.bf16.msra.mxu0 0
      %376 = vmatprep.subr.bf16.mxu0 0
      %377 = vmatpush1.bf16.msra.mxu0 0
      %378 = vmatprep.subr.bf16.mxu0 0
      %379 = vmatpush1.bf16.msra.mxu0 0
      %380 = vmatprep.subr.bf16.mxu0 0
      %381 = vmatpush1.bf16.msra.mxu0 0
      %382 = vmatprep.subr.bf16.mxu0 0
      %383 = vmatpush1.bf16.msra.mxu0 0
      %384 = vmatprep.subr.bf16.mxu0 0
      %385 = vmatpush1.bf16.msra.mxu0 0
      %386 = vmatprep.mubr.bf16.mxu0 0
      %387 = vmatmul.mubr.bf16.gmra.mrb[0].mxu0 %v349
      %v388 = vpop.f32.mrb[0].mxu0
      %v389 = vadd.f32 0.0, %v388
      %v390 = vpop.f32.mrb[0].mxu0
      %v391 = vpop.f32.mrb[0].mxu0
      %v392 = vadd.f32 0.0, %v391
      %v393 = vpop.f32.mrb[0].mxu0
      %394 = vmatprep.mubr.bf16.mxu0 0
      %395 = vmatmul.mubr.bf16.gmra.mrb[0].mxu0 %v352
      %v396 = vpop.f32.mrb[0].mxu0
      %v397 = vadd.f32 0.0, %v396
      %v398 = vpop.f32.mrb[0].mxu0
      %v399 = vpop.f32.mrb[0].mxu0
      %v400 = vadd.f32 0.0, %v399
      %v401 = vpop.f32.mrb[0].mxu0
      %402 = vdwg.mxu0
      %v404 = vsel %vm227, %v211, 0
      %v407 = vsel %vm227, %v212, 0
      %409 = vmatprep.subr.bf16.mxu0 0
      %410 = vmatpush1.bf16.msra.mxu0 %v297
      %411 = vmatprep.subr.bf16.mxu0 0
      %412 = vmatpush1.bf16.msra.mxu0 0
      %413 = vmatprep.subr.bf16.mxu0 0
      %414 = vmatpush1.bf16.msra.mxu0 0
      %415 = vmatprep.subr.bf16.mxu0 0
      %416 = vmatpush1.bf16.msra.mxu0 0
      %417 = vmatprep.subr.bf16.mxu0 0
      %418 = vmatpush1.bf16.msra.mxu0 0
      %419 = vmatprep.subr.bf16.mxu0 0
      %420 = vmatpush1.bf16.msra.mxu0 0
      %421 = vmatprep.subr.bf16.mxu0 0
      %422 = vmatpush1.bf16.msra.mxu0 0
      %423 = vmatprep.subr.bf16.mxu0 0
      %424 = vmatpush1.bf16.msra.mxu0 0
      %425 = vmatprep.subr.bf16.mxu0 0
      %426 = vmatpush1.bf16.msra.mxu0 0
      %427 = vmatprep.subr.bf16.mxu0 0
      %428 = vmatpush1.bf16.msra.mxu0 0
      %429 = vmatprep.subr.bf16.mxu0 0
      %430 = vmatpush1.bf16.msra.mxu0 0
      %431 = vmatprep.subr.bf16.mxu0 0
      %432 = vmatpush1.bf16.msra.mxu0 0
      %433 = vmatprep.subr.bf16.mxu0 0
      %434 = vmatpush1.bf16.msra.mxu0 0
      %435 = vmatprep.subr.bf16.mxu0 0
      %436 = vmatpush1.bf16.msra.mxu0 0
      %437 = vmatprep.subr.bf16.mxu0 0
      %438 = vmatpush1.bf16.msra.mxu0 0
      %439 = vmatprep.subr.bf16.mxu0 0
      %440 = vmatpush1.bf16.msra.mxu0 0
      %441 = vmatprep.mubr.bf16.mxu0 0
      %442 = vmatmul.mubr.bf16.gmra.mrb[0].mxu0 %v404
      %v443 = vpop.f32.mrb[0].mxu0
      %v444 = vadd.f32 %v389, %v443
      %v445 = vpop.f32.mrb[0].mxu0
      %v446 = vpop.f32.mrb[0].mxu0
      %v447 = vadd.f32 %v392, %v446
      %v448 = vpop.f32.mrb[0].mxu0
      %449 = vmatprep.mubr.bf16.mxu0 0
      %450 = vmatmul.mubr.bf16.gmra.mrb[0].mxu0 %v407
      %v451 = vpop.f32.mrb[0].mxu0
      %v452 = vadd.f32 %v397, %v451
      %v453 = vpop.f32.mrb[0].mxu0
      %v454 = vpop.f32.mrb[0].mxu0
      %v455 = vadd.f32 %v400, %v454
      %v456 = vpop.f32.mrb[0].mxu0
      %457 = vdwg.mxu0
      %s458 = scalar_lea.vmem %s1, 4
      %v459 = vld [vmem:[%s458] sm:$0x3]
      %v460 = vld [vmem:[%s197 + $0x2] sm:$0xff]
      %v461 = vld [vmem:[%s197 + $0xa] sm:$0xff]
      %v462 = vld [vmem:[%s197 + $0x12] sm:$0xff]
      %v463 = vld [vmem:[%s197 + $0x1a] sm:$0xf]
      %v464 = vpack.c.bf16 %v461, %v460
      %v465 = vpack.c.bf16 %v463, %v462
      %v466 = vld [vmem:[%s206 + $0x2] sm:$0xff]
      %v467 = vld [vmem:[%s206 + $0xa] sm:$0xff]
      %v468 = vld [vmem:[%s206 + $0x12] sm:$0xff]
      %v469 = vld [vmem:[%s206 + $0x1a] sm:$0xf]
      %v470 = vpack.c.bf16 %v467, %v466
      %v471 = vpack.c.bf16 %v469, %v468
      %v473 = vsel %vm227, %v464, 0
      %v476 = vsel %vm227, %v465, 0
      %v479 = vand.u32 %v459, %v237
      %481 = vmatprep.subr.bf16.mxu0 0
      %482 = vmatpush1.bf16.msra.mxu0 %v479
      %483 = vmatprep.subr.bf16.mxu0 0
      %484 = vmatpush1.bf16.msra.mxu0 0
      %485 = vmatprep.subr.bf16.mxu0 0
      %486 = vmatpush1.bf16.msra.mxu0 0
      %487 = vmatprep.subr.bf16.mxu0 0
      %488 = vmatpush1.bf16.msra.mxu0 0
      %489 = vmatprep.subr.bf16.mxu0 0
      %490 = vmatpush1.bf16.msra.mxu0 0
      %491 = vmatprep.subr.bf16.mxu0 0
      %492 = vmatpush1.bf16.msra.mxu0 0
      %493 = vmatprep.subr.bf16.mxu0 0
      %494 = vmatpush1.bf16.msra.mxu0 0
      %495 = vmatprep.subr.bf16.mxu0 0
      %496 = vmatpush1.bf16.msra.mxu0 0
      %497 = vmatprep.subr.bf16.mxu0 0
      %498 = vmatpush1.bf16.msra.mxu0 0
      %499 = vmatprep.subr.bf16.mxu0 0
      %500 = vmatpush1.bf16.msra.mxu0 0
      %501 = vmatprep.subr.bf16.mxu0 0
      %502 = vmatpush1.bf16.msra.mxu0 0
      %503 = vmatprep.subr.bf16.mxu0 0
      %504 = vmatpush1.bf16.msra.mxu0 0
      %505 = vmatprep.subr.bf16.mxu0 0
      %506 = vmatpush1.bf16.msra.mxu0 0
      %507 = vmatprep.subr.bf16.mxu0 0
      %508 = vmatpush1.bf16.msra.mxu0 0
      %509 = vmatprep.subr.bf16.mxu0 0
      %510 = vmatpush1.bf16.msra.mxu0 0
      %511 = vmatprep.subr.bf16.mxu0 0
      %512 = vmatpush1.bf16.msra.mxu0 0
      %513 = vmatprep.mubr.bf16.mxu0 0
      %514 = vmatmul.mubr.bf16.gmra.mrb[0].mxu0 %v473
      %v515 = vpop.f32.mrb[0].mxu0
      %v516 = vadd.f32 0.0, %v515
      %v517 = vpop.f32.mrb[0].mxu0
      %v518 = vpop.f32.mrb[0].mxu0
      %v519 = vadd.f32 0.0, %v518
      %v520 = vpop.f32.mrb[0].mxu0
      %521 = vmatprep.mubr.bf16.mxu0 0
      %522 = vmatmul.mubr.bf16.gmra.mrb[0].mxu0 %v476
      %v523 = vpop.f32.mrb[0].mxu0
      %v524 = vadd.f32 0.0, %v523
      %v525 = vpop.f32.mrb[0].mxu0
      %v526 = vpop.f32.mrb[0].mxu0
      %v527 = vadd.f32 0.0, %v526
      %v528 = vpop.f32.mrb[0].mxu0
      %529 = vdwg.mxu0
      %v530 = vadd.f32 %v334, %v516
      %v531 = vadd.f32 %v337, %v519
      %v532 = vadd.f32 %v342, %v524
      %v533 = vadd.f32 %v345, %v527
      %v535 = vsel %vm227, %v470, 0
      %v538 = vsel %vm227, %v471, 0
      %540 = vmatprep.subr.bf16.mxu0 0
      %541 = vmatpush1.bf16.msra.mxu0 %v479
      %542 = vmatprep.subr.bf16.mxu0 0
      %543 = vmatpush1.bf16.msra.mxu0 0
      %544 = vmatprep.subr.bf16.mxu0 0
      %545 = vmatpush1.bf16.msra.mxu0 0
      %546 = vmatprep.subr.bf16.mxu0 0
      %547 = vmatpush1.bf16.msra.mxu0 0
      %548 = vmatprep.subr.bf16.mxu0 0
      %549 = vmatpush1.bf16.msra.mxu0 0
      %550 = vmatprep.subr.bf16.mxu0 0
      %551 = vmatpush1.bf16.msra.mxu0 0
      %552 = vmatprep.subr.bf16.mxu0 0
      %553 = vmatpush1.bf16.msra.mxu0 0
      %554 = vmatprep.subr.bf16.mxu0 0
      %555 = vmatpush1.bf16.msra.mxu0 0
      %556 = vmatprep.subr.bf16.mxu0 0
      %557 = vmatpush1.bf16.msra.mxu0 0
      %558 = vmatprep.subr.bf16.mxu0 0
      %559 = vmatpush1.bf16.msra.mxu0 0
      %560 = vmatprep.subr.bf16.mxu0 0
      %561 = vmatpush1.bf16.msra.mxu0 0
      %562 = vmatprep.subr.bf16.mxu0 0
      %563 = vmatpush1.bf16.msra.mxu0 0
      %564 = vmatprep.subr.bf16.mxu0 0
      %565 = vmatpush1.bf16.msra.mxu0 0
      %566 = vmatprep.subr.bf16.mxu0 0
      %567 = vmatpush1.bf16.msra.mxu0 0
      %568 = vmatprep.subr.bf16.mxu0 0
      %569 = vmatpush1.bf16.msra.mxu0 0
      %570 = vmatprep.subr.bf16.mxu0 0
      %571 = vmatpush1.bf16.msra.mxu0 0
      %572 = vmatprep.mubr.bf16.mxu0 0
      %573 = vmatmul.mubr.bf16.gmra.mrb[0].mxu0 %v535
      %v574 = vpop.f32.mrb[0].mxu0
      %v575 = vadd.f32 0.0, %v574
      %v576 = vpop.f32.mrb[0].mxu0
      %v577 = vpop.f32.mrb[0].mxu0
      %v578 = vadd.f32 0.0, %v577
      %v579 = vpop.f32.mrb[0].mxu0
      %580 = vmatprep.mubr.bf16.mxu0 0
      %581 = vmatmul.mubr.bf16.gmra.mrb[0].mxu0 %v538
      %v582 = vpop.f32.mrb[0].mxu0
      %v583 = vadd.f32 0.0, %v582
      %v584 = vpop.f32.mrb[0].mxu0
      %v585 = vpop.f32.mrb[0].mxu0
      %v586 = vadd.f32 0.0, %v585
      %v587 = vpop.f32.mrb[0].mxu0
      %588 = vdwg.mxu0
      %v589 = vadd.f32 %v444, %v575
      %v590 = vadd.f32 %v447, %v578
      %v591 = vadd.f32 %v452, %v583
      %v592 = vadd.f32 %v455, %v586
      %s593 = scalar_lea.vmem %s1, 6
      %v594 = vld [vmem:[%s593] sm:$0x3]
      %v595 = vld [vmem:[%s197 + $0x3] sm:$0xff]
      %v596 = vld [vmem:[%s197 + $0xb] sm:$0xff]
      %v597 = vld [vmem:[%s197 + $0x13] sm:$0xff]
      %v598 = vld [vmem:[%s197 + $0x1b] sm:$0xf]
      %v599 = vpack.c.bf16 %v596, %v595
      %v600 = vpack.c.bf16 %v598, %v597
      %v601 = vld [vmem:[%s206 + $0x3] sm:$0xff]
      %v602 = vld [vmem:[%s206 + $0xb] sm:$0xff]
      %v603 = vld [vmem:[%s206 + $0x13] sm:$0xff]
      %v604 = vld [vmem:[%s206 + $0x1b] sm:$0xf]
      %v605 = vpack.c.bf16 %v602, %v601
      %v606 = vpack.c.bf16 %v604, %v603
      %v608 = vsel %vm227, %v599, 0
      %v611 = vsel %vm227, %v600, 0
      %v614 = vand.u32 %v594, %v237
      %616 = vmatprep.subr.bf16.mxu0 0
      %617 = vmatpush1.bf16.msra.mxu0 %v614
      %618 = vmatprep.subr.bf16.mxu0 0
      %619 = vmatpush1.bf16.msra.mxu0 0
      %620 = vmatprep.subr.bf16.mxu0 0
      %621 = vmatpush1.bf16.msra.mxu0 0
      %622 = vmatprep.subr.bf16.mxu0 0
      %623 = vmatpush1.bf16.msra.mxu0 0
      %624 = vmatprep.subr.bf16.mxu0 0
      %625 = vmatpush1.bf16.msra.mxu0 0
      %626 = vmatprep.subr.bf16.mxu0 0
      %627 = vmatpush1.bf16.msra.mxu0 0
      %628 = vmatprep.subr.bf16.mxu0 0
      %629 = vmatpush1.bf16.msra.mxu0 0
      %630 = vmatprep.subr.bf16.mxu0 0
      %631 = vmatpush1.bf16.msra.mxu0 0
      %632 = vmatprep.subr.bf16.mxu0 0
      %633 = vmatpush1.bf16.msra.mxu0 0
      %634 = vmatprep.subr.bf16.mxu0 0
      %635 = vmatpush1.bf16.msra.mxu0 0
      %636 = vmatprep.subr.bf16.mxu0 0
      %637 = vmatpush1.bf16.msra.mxu0 0
      %638 = vmatprep.subr.bf16.mxu0 0
      %639 = vmatpush1.bf16.msra.mxu0 0
      %640 = vmatprep.subr.bf16.mxu0 0
      %641 = vmatpush1.bf16.msra.mxu0 0
      %642 = vmatprep.subr.bf16.mxu0 0
      %643 = vmatpush1.bf16.msra.mxu0 0
      %644 = vmatprep.subr.bf16.mxu0 0
      %645 = vmatpush1.bf16.msra.mxu0 0
      %646 = vmatprep.subr.bf16.mxu0 0
      %647 = vmatpush1.bf16.msra.mxu0 0
      %648 = vmatprep.mubr.bf16.mxu0 0
      %649 = vmatmul.mubr.bf16.gmra.mrb[0].mxu0 %v608
      %v650 = vpop.f32.mrb[0].mxu0
      %v651 = vadd.f32 0.0, %v650
      %v652 = vpop.f32.mrb[0].mxu0
      %v653 = vpop.f32.mrb[0].mxu0
      %v654 = vadd.f32 0.0, %v653
      %v655 = vpop.f32.mrb[0].mxu0
      %656 = vmatprep.mubr.bf16.mxu0 0
      %657 = vmatmul.mubr.bf16.gmra.mrb[0].mxu0 %v611
      %v658 = vpop.f32.mrb[0].mxu0
      %v659 = vadd.f32 0.0, %v658
      %v660 = vpop.f32.mrb[0].mxu0
      %v661 = vpop.f32.mrb[0].mxu0
      %v662 = vadd.f32 0.0, %v661
      %v663 = vpop.f32.mrb[0].mxu0
      %664 = vdwg.mxu0
      %v665 = vadd.f32 %v530, %v651
      %v666 = vadd.f32 %v531, %v654
      %v667 = vadd.f32 %v532, %v659
      %v668 = vadd.f32 %v533, %v662
      %v670 = vsel %vm227, %v605, 0
      %v673 = vsel %vm227, %v606, 0
      %675 = vmatprep.subr.bf16.mxu0 0
      %676 = vmatpush1.bf16.msra.mxu0 %v614
      %677 = vmatprep.subr.bf16.mxu0 0
      %678 = vmatpush1.bf16.msra.mxu0 0
      %679 = vmatprep.subr.bf16.mxu0 0
      %680 = vmatpush1.bf16.msra.mxu0 0
      %681 = vmatprep.subr.bf16.mxu0 0
      %682 = vmatpush1.bf16.msra.mxu0 0
      %683 = vmatprep.subr.bf16.mxu0 0
      %684 = vmatpush1.bf16.msra.mxu0 0
      %685 = vmatprep.subr.bf16.mxu0 0
      %686 = vmatpush1.bf16.msra.mxu0 0
      %687 = vmatprep.subr.bf16.mxu0 0
      %688 = vmatpush1.bf16.msra.mxu0 0
      %689 = vmatprep.subr.bf16.mxu0 0
      %690 = vmatpush1.bf16.msra.mxu0 0
      %691 = vmatprep.subr.bf16.mxu0 0
      %692 = vmatpush1.bf16.msra.mxu0 0
      %693 = vmatprep.subr.bf16.mxu0 0
      %694 = vmatpush1.bf16.msra.mxu0 0
      %695 = vmatprep.subr.bf16.mxu0 0
      %696 = vmatpush1.bf16.msra.mxu0 0
      %697 = vmatprep.subr.bf16.mxu0 0
      %698 = vmatpush1.bf16.msra.mxu0 0
      %699 = vmatprep.subr.bf16.mxu0 0
      %700 = vmatpush1.bf16.msra.mxu0 0
      %701 = vmatprep.subr.bf16.mxu0 0
      %702 = vmatpush1.bf16.msra.mxu0 0
      %703 = vmatprep.subr.bf16.mxu0 0
      %704 = vmatpush1.bf16.msra.mxu0 0
      %705 = vmatprep.subr.bf16.mxu0 0
      %706 = vmatpush1.bf16.msra.mxu0 0
      %707 = vmatprep.mubr.bf16.mxu0 0
      %708 = vmatmul.mubr.bf16.gmra.mrb[0].mxu0 %v670
      %v709 = vpop.f32.mrb[0].mxu0
      %v710 = vadd.f32 0.0, %v709
      %v711 = vpop.f32.mrb[0].mxu0
      %v712 = vpop.f32.mrb[0].mxu0
      %v713 = vadd.f32 0.0, %v712
      %v714 = vpop.f32.mrb[0].mxu0
      %715 = vmatprep.mubr.bf16.mxu0 0
      %716 = vmatmul.mubr.bf16.gmra.mrb[0].mxu0 %v673
      %v717 = vpop.f32.mrb[0].mxu0
      %v718 = vadd.f32 0.0, %v717
      %v719 = vpop.f32.mrb[0].mxu0
      %v720 = vpop.f32.mrb[0].mxu0
      %v721 = vadd.f32 0.0, %v720
      %v722 = vpop.f32.mrb[0].mxu0
      %723 = vdwg.mxu0
      %v724 = vadd.f32 %v589, %v710
      %v725 = vadd.f32 %v590, %v713
      %v726 = vadd.f32 %v591, %v718
      %v727 = vadd.f32 %v592, %v721
      %s728 = scalar_lea.vmem %s1, 8
      %v729 = vld [vmem:[%s728] sm:$0x3]
      %v730 = vld [vmem:[%s197 + $0x4] sm:$0xff]
      %v731 = vld [vmem:[%s197 + $0xc] sm:$0xff]
      %v732 = vld [vmem:[%s197 + $0x14] sm:$0xff]
      %v733 = vld [vmem:[%s197 + $0x1c] sm:$0xf]
      %v734 = vpack.c.bf16 %v731, %v730
      %v735 = vpack.c.bf16 %v733, %v732
      %v736 = vld [vmem:[%s206 + $0x4] sm:$0xff]
      %v737 = vld [vmem:[%s206 + $0xc] sm:$0xff]
      %v738 = vld [vmem:[%s206 + $0x14] sm:$0xff]
      %v739 = vld [vmem:[%s206 + $0x1c] sm:$0xf]
      %v740 = vpack.c.bf16 %v737, %v736
      %v741 = vpack.c.bf16 %v739, %v738
      %v743 = vsel %vm227, %v734, 0
      %v746 = vsel %vm227, %v735, 0
      %v749 = vand.u32 %v729, %v237
      %751 = vmatprep.subr.bf16.mxu0 0
      %752 = vmatpush1.bf16.msra.mxu0 %v749
      %753 = vmatprep.subr.bf16.mxu0 0
      %754 = vmatpush1.bf16.msra.mxu0 0
      %755 = vmatprep.subr.bf16.mxu0 0
      %756 = vmatpush1.bf16.msra.mxu0 0
      %757 = vmatprep.subr.bf16.mxu0 0
      %758 = vmatpush1.bf16.msra.mxu0 0
      %759 = vmatprep.subr.bf16.mxu0 0
      %760 = vmatpush1.bf16.msra.mxu0 0
      %761 = vmatprep.subr.bf16.mxu0 0
      %762 = vmatpush1.bf16.msra.mxu0 0
      %763 = vmatprep.subr.bf16.mxu0 0
      %764 = vmatpush1.bf16.msra.mxu0 0
      %765 = vmatprep.subr.bf16.mxu0 0
      %766 = vmatpush1.bf16.msra.mxu0 0
      %767 = vmatprep.subr.bf16.mxu0 0
      %768 = vmatpush1.bf16.msra.mxu0 0
      %769 = vmatprep.subr.bf16.mxu0 0
      %770 = vmatpush1.bf16.msra.mxu0 0
      %771 = vmatprep.subr.bf16.mxu0 0
      %772 = vmatpush1.bf16.msra.mxu0 0
      %773 = vmatprep.subr.bf16.mxu0 0
      %774 = vmatpush1.bf16.msra.mxu0 0
      %775 = vmatprep.subr.bf16.mxu0 0
      %776 = vmatpush1.bf16.msra.mxu0 0
      %777 = vmatprep.subr.bf16.mxu0 0
      %778 = vmatpush1.bf16.msra.mxu0 0
      %779 = vmatprep.subr.bf16.mxu0 0
      %780 = vmatpush1.bf16.msra.mxu0 0
      %781 = vmatprep.subr.bf16.mxu0 0
      %782 = vmatpush1.bf16.msra.mxu0 0
      %783 = vmatprep.mubr.bf16.mxu0 0
      %784 = vmatmul.mubr.bf16.gmra.mrb[0].mxu0 %v743
      %v785 = vpop.f32.mrb[0].mxu0
      %v786 = vadd.f32 0.0, %v785
      %v787 = vpop.f32.mrb[0].mxu0
      %v788 = vpop.f32.mrb[0].mxu0
      %v789 = vadd.f32 0.0, %v788
      %v790 = vpop.f32.mrb[0].mxu0
      %791 = vmatprep.mubr.bf16.mxu0 0
      %792 = vmatmul.mubr.bf16.gmra.mrb[0].mxu0 %v746
      %v793 = vpop.f32.mrb[0].mxu0
      %v794 = vadd.f32 0.0, %v793
      %v795 = vpop.f32.mrb[0].mxu0
      %v796 = vpop.f32.mrb[0].mxu0
      %v797 = vadd.f32 0.0, %v796
      %v798 = vpop.f32.mrb[0].mxu0
      %799 = vdwg.mxu0
      %v800 = vadd.f32 %v665, %v786
      %v801 = vadd.f32 %v666, %v789
      %v802 = vadd.f32 %v667, %v794
      %v803 = vadd.f32 %v668, %v797
      %v805 = vsel %vm227, %v740, 0
      %v808 = vsel %vm227, %v741, 0
      %810 = vmatprep.subr.bf16.mxu0 0
      %811 = vmatpush1.bf16.msra.mxu0 %v749
      %812 = vmatprep.subr.bf16.mxu0 0
      %813 = vmatpush1.bf16.msra.mxu0 0
      %814 = vmatprep.subr.bf16.mxu0 0
      %815 = vmatpush1.bf16.msra.mxu0 0
      %816 = vmatprep.subr.bf16.mxu0 0
      %817 = vmatpush1.bf16.msra.mxu0 0
      %818 = vmatprep.subr.bf16.mxu0 0
      %819 = vmatpush1.bf16.msra.mxu0 0
      %820 = vmatprep.subr.bf16.mxu0 0
      %821 = vmatpush1.bf16.msra.mxu0 0
      %822 = vmatprep.subr.bf16.mxu0 0
      %823 = vmatpush1.bf16.msra.mxu0 0
      %824 = vmatprep.subr.bf16.mxu0 0
      %825 = vmatpush1.bf16.msra.mxu0 0
      %826 = vmatprep.subr.bf16.mxu0 0
      %827 = vmatpush1.bf16.msra.mxu0 0
      %828 = vmatprep.subr.bf16.mxu0 0
      %829 = vmatpush1.bf16.msra.mxu0 0
      %830 = vmatprep.subr.bf16.mxu0 0
      %831 = vmatpush1.bf16.msra.mxu0 0
      %832 = vmatprep.subr.bf16.mxu0 0
      %833 = vmatpush1.bf16.msra.mxu0 0
      %834 = vmatprep.subr.bf16.mxu0 0
      %835 = vmatpush1.bf16.msra.mxu0 0
      %836 = vmatprep.subr.bf16.mxu0 0
      %837 = vmatpush1.bf16.msra.mxu0 0
      %838 = vmatprep.subr.bf16.mxu0 0
      %839 = vmatpush1.bf16.msra.mxu0 0
      %840 = vmatprep.subr.bf16.mxu0 0
      %841 = vmatpush1.bf16.msra.mxu0 0
      %842 = vmatprep.mubr.bf16.mxu0 0
      %843 = vmatmul.mubr.bf16.gmra.mrb[0].mxu0 %v805
      %v844 = vpop.f32.mrb[0].mxu0
      %v845 = vadd.f32 0.0, %v844
      %v846 = vpop.f32.mrb[0].mxu0
      %v847 = vpop.f32.mrb[0].mxu0
      %v848 = vadd.f32 0.0, %v847
      %v849 = vpop.f32.mrb[0].mxu0
      %850 = vmatprep.mubr.bf16.mxu0 0
      %851 = vmatmul.mubr.bf16.gmra.mrb[0].mxu0 %v808
      %v852 = vpop.f32.mrb[0].mxu0
      %v853 = vadd.f32 0.0, %v852
      %v854 = vpop.f32.mrb[0].mxu0
      %v855 = vpop.f32.mrb[0].mxu0
      %v856 = vadd.f32 0.0, %v855
      %v857 = vpop.f32.mrb[0].mxu0
      %858 = vdwg.mxu0
      %v859 = vadd.f32 %v724, %v845
      %v860 = vadd.f32 %v725, %v848
      %v861 = vadd.f32 %v726, %v853
      %v862 = vadd.f32 %v727, %v856
      %s863 = scalar_lea.vmem %s1, 10
      %v864 = vld [vmem:[%s863] sm:$0x3]
      %s865 = sadd.s32 %s194, 2
      %s866 = smul.u32 %s865, 32
      %s867 = scalar_lea.vmem %s183, %s866
      %v868 = vld [vmem:[%s867] sm:$0xff]
      %v869 = vld [vmem:[%s867 + $0x8] sm:$0xff]
      %v870 = vld [vmem:[%s867 + $0x10] sm:$0xff]
      %v871 = vld [vmem:[%s867 + $0x18] sm:$0xf]
      %v872 = vpack.c.bf16 %v869, %v868
      %v873 = vpack.c.bf16 %v871, %v870
      %v875 = vand.u32 %v864, %v237
      %877 = vmatprep.subr.bf16.mxu0 0
      %878 = vmatpush1.bf16.msra.mxu0 %v875
      %879 = vmatprep.subr.bf16.mxu0 0
      %880 = vmatpush1.bf16.msra.mxu0 0
      %881 = vmatprep.subr.bf16.mxu0 0
      %882 = vmatpush1.bf16.msra.mxu0 0
      %883 = vmatprep.subr.bf16.mxu0 0
      %884 = vmatpush1.bf16.msra.mxu0 0
      %885 = vmatprep.subr.bf16.mxu0 0
      %886 = vmatpush1.bf16.msra.mxu0 0
      %887 = vmatprep.subr.bf16.mxu0 0
      %888 = vmatpush1.bf16.msra.mxu0 0
      %889 = vmatprep.subr.bf16.mxu0 0
      %890 = vmatpush1.bf16.msra.mxu0 0
      %891 = vmatprep.subr.bf16.mxu0 0
      %892 = vmatpush1.bf16.msra.mxu0 0
      %893 = vmatprep.subr.bf16.mxu0 0
      %894 = vmatpush1.bf16.msra.mxu0 0
      %895 = vmatprep.subr.bf16.mxu0 0
      %896 = vmatpush1.bf16.msra.mxu0 0
      %897 = vmatprep.subr.bf16.mxu0 0
      %898 = vmatpush1.bf16.msra.mxu0 0
      %899 = vmatprep.subr.bf16.mxu0 0
      %900 = vmatpush1.bf16.msra.mxu0 0
      %901 = vmatprep.subr.bf16.mxu0 0
      %902 = vmatpush1.bf16.msra.mxu0 0
      %903 = vmatprep.subr.bf16.mxu0 0
      %904 = vmatpush1.bf16.msra.mxu0 0
      %905 = vmatprep.subr.bf16.mxu0 0
      %906 = vmatpush1.bf16.msra.mxu0 0
      %907 = vmatprep.subr.bf16.mxu0 0
      %908 = vmatpush1.bf16.msra.mxu0 0
      %909 = vmatprep.mubr.bf16.mxu0 0
      %910 = vmatmul.mubr.bf16.gmra.mrb[0].mxu0 %v404
      %v911 = vpop.f32.mrb[0].mxu0
      %v912 = vadd.f32 0.0, %v911
      %v913 = vpop.f32.mrb[0].mxu0
      %v914 = vpop.f32.mrb[0].mxu0
      %v915 = vadd.f32 0.0, %v914
      %v916 = vpop.f32.mrb[0].mxu0
      %917 = vmatprep.mubr.bf16.mxu0 0
      %918 = vmatmul.mubr.bf16.gmra.mrb[0].mxu0 %v407
      %v919 = vpop.f32.mrb[0].mxu0
      %v920 = vadd.f32 0.0, %v919
      %v921 = vpop.f32.mrb[0].mxu0
      %v922 = vpop.f32.mrb[0].mxu0
      %v923 = vadd.f32 0.0, %v922
      %v924 = vpop.f32.mrb[0].mxu0
      %925 = vdwg.mxu0
      %v926 = vadd.f32 %v800, %v912
      %v927 = vadd.f32 %v801, %v915
      %v928 = vadd.f32 %v802, %v920
      %v929 = vadd.f32 %v803, %v923
      %v931 = vsel %vm227, %v872, 0
      %v934 = vsel %vm227, %v873, 0
      %936 = vmatprep.subr.bf16.mxu0 0
      %937 = vmatpush1.bf16.msra.mxu0 %v875
      %938 = vmatprep.subr.bf16.mxu0 0
      %939 = vmatpush1.bf16.msra.mxu0 0
      %940 = vmatprep.subr.bf16.mxu0 0
      %941 = vmatpush1.bf16.msra.mxu0 0
      %942 = vmatprep.subr.bf16.mxu0 0
      %943 = vmatpush1.bf16.msra.mxu0 0
      %944 = vmatprep.subr.bf16.mxu0 0
      %945 = vmatpush1.bf16.msra.mxu0 0
      %946 = vmatprep.subr.bf16.mxu0 0
      %947 = vmatpush1.bf16.msra.mxu0 0
      %948 = vmatprep.subr.bf16.mxu0 0
      %949 = vmatpush1.bf16.msra.mxu0 0
      %950 = vmatprep.subr.bf16.mxu0 0
      %951 = vmatpush1.bf16.msra.mxu0 0
      %952 = vmatprep.subr.bf16.mxu0 0
      %953 = vmatpush1.bf16.msra.mxu0 0
      %954 = vmatprep.subr.bf16.mxu0 0
      %955 = vmatpush1.bf16.msra.mxu0 0
      %956 = vmatprep.subr.bf16.mxu0 0
      %957 = vmatpush1.bf16.msra.mxu0 0
      %958 = vmatprep.subr.bf16.mxu0 0
      %959 = vmatpush1.bf16.msra.mxu0 0
      %960 = vmatprep.subr.bf16.mxu0 0
      %961 = vmatpush1.bf16.msra.mxu0 0
      %962 = vmatprep.subr.bf16.mxu0 0
      %963 = vmatpush1.bf16.msra.mxu0 0
      %964 = vmatprep.subr.bf16.mxu0 0
      %965 = vmatpush1.bf16.msra.mxu0 0
      %966 = vmatprep.subr.bf16.mxu0 0
      %967 = vmatpush1.bf16.msra.mxu0 0
      %968 = vmatprep.mubr.bf16.mxu0 0
      %969 = vmatmul.mubr.bf16.gmra.mrb[0].mxu0 %v931
      %v970 = vpop.f32.mrb[0].mxu0
      %v971 = vadd.f32 0.0, %v970
      %v972 = vpop.f32.mrb[0].mxu0
      %v973 = vpop.f32.mrb[0].mxu0
      %v974 = vadd.f32 0.0, %v973
      %v975 = vpop.f32.mrb[0].mxu0
      %976 = vmatprep.mubr.bf16.mxu0 0
      %977 = vmatmul.mubr.bf16.gmra.mrb[0].mxu0 %v934
      %v978 = vpop.f32.mrb[0].mxu0
      %v979 = vadd.f32 0.0, %v978
      %v980 = vpop.f32.mrb[0].mxu0
      %v981 = vpop.f32.mrb[0].mxu0
      %v982 = vadd.f32 0.0, %v981
      %v983 = vpop.f32.mrb[0].mxu0
      %984 = vdwg.mxu0
      %v985 = vadd.f32 %v859, %v971
      %v986 = vadd.f32 %v860, %v974
      %v987 = vadd.f32 %v861, %v979
      %v988 = vadd.f32 %v862, %v982
      %s989 = scalar_lea.vmem %s1, 12
      %v990 = vld [vmem:[%s989] sm:$0x3]
      %v991 = vld [vmem:[%s867 + $0x1] sm:$0xff]
      %v992 = vld [vmem:[%s867 + $0x9] sm:$0xff]
      %v993 = vld [vmem:[%s867 + $0x11] sm:$0xff]
      %v994 = vld [vmem:[%s867 + $0x19] sm:$0xf]
      %v995 = vpack.c.bf16 %v992, %v991
      %v996 = vpack.c.bf16 %v994, %v993
      %v998 = vand.u32 %v990, %v237
      %1000 = vmatprep.subr.bf16.mxu0 0
      %1001 = vmatpush1.bf16.msra.mxu0 %v998
      %1002 = vmatprep.subr.bf16.mxu0 0
      %1003 = vmatpush1.bf16.msra.mxu0 0
      %1004 = vmatprep.subr.bf16.mxu0 0
      %1005 = vmatpush1.bf16.msra.mxu0 0
      %1006 = vmatprep.subr.bf16.mxu0 0
      %1007 = vmatpush1.bf16.msra.mxu0 0
      %1008 = vmatprep.subr.bf16.mxu0 0
      %1009 = vmatpush1.bf16.msra.mxu0 0
      %1010 = vmatprep.subr.bf16.mxu0 0
      %1011 = vmatpush1.bf16.msra.mxu0 0
      %1012 = vmatprep.subr.bf16.mxu0 0
      %1013 = vmatpush1.bf16.msra.mxu0 0
      %1014 = vmatprep.subr.bf16.mxu0 0
      %1015 = vmatpush1.bf16.msra.mxu0 0
      %1016 = vmatprep.subr.bf16.mxu0 0
      %1017 = vmatpush1.bf16.msra.mxu0 0
      %1018 = vmatprep.subr.bf16.mxu0 0
      %1019 = vmatpush1.bf16.msra.mxu0 0
      %1020 = vmatprep.subr.bf16.mxu0 0
      %1021 = vmatpush1.bf16.msra.mxu0 0
      %1022 = vmatprep.subr.bf16.mxu0 0
      %1023 = vmatpush1.bf16.msra.mxu0 0
      %1024 = vmatprep.subr.bf16.mxu0 0
      %1025 = vmatpush1.bf16.msra.mxu0 0
      %1026 = vmatprep.subr.bf16.mxu0 0
      %1027 = vmatpush1.bf16.msra.mxu0 0
      %1028 = vmatprep.subr.bf16.mxu0 0
      %1029 = vmatpush1.bf16.msra.mxu0 0
      %1030 = vmatprep.subr.bf16.mxu0 0
      %1031 = vmatpush1.bf16.msra.mxu0 0
      %1032 = vmatprep.mubr.bf16.mxu0 0
      %1033 = vmatmul.mubr.bf16.gmra.mrb[0].mxu0 %v349
      %v1034 = vpop.f32.mrb[0].mxu0
      %v1035 = vadd.f32 0.0, %v1034
      %v1036 = vpop.f32.mrb[0].mxu0
      %v1037 = vpop.f32.mrb[0].mxu0
      %v1038 = vadd.f32 0.0, %v1037
      %v1039 = vpop.f32.mrb[0].mxu0
      %1040 = vmatprep.mubr.bf16.mxu0 0
      %1041 = vmatmul.mubr.bf16.gmra.mrb[0].mxu0 %v352
      %v1042 = vpop.f32.mrb[0].mxu0
      %v1043 = vadd.f32 0.0, %v1042
      %v1044 = vpop.f32.mrb[0].mxu0
      %v1045 = vpop.f32.mrb[0].mxu0
      %v1046 = vadd.f32 0.0, %v1045
      %v1047 = vpop.f32.mrb[0].mxu0
      %1048 = vdwg.mxu0
      %v1049 = vadd.f32 %v926, %v1035
      %v1050 = vadd.f32 %v927, %v1038
      %v1051 = vadd.f32 %v928, %v1043
      %v1052 = vadd.f32 %v929, %v1046
      %v1054 = vsel %vm227, %v995, 0
      %v1057 = vsel %vm227, %v996, 0
      %1059 = vmatprep.subr.bf16.mxu0 0
      %1060 = vmatpush1.bf16.msra.mxu0 %v998
      %1061 = vmatprep.subr.bf16.mxu0 0
      %1062 = vmatpush1.bf16.msra.mxu0 0
      %1063 = vmatprep.subr.bf16.mxu0 0
      %1064 = vmatpush1.bf16.msra.mxu0 0
      %1065 = vmatprep.subr.bf16.mxu0 0
      %1066 = vmatpush1.bf16.msra.mxu0 0
      %1067 = vmatprep.subr.bf16.mxu0 0
      %1068 = vmatpush1.bf16.msra.mxu0 0
      %1069 = vmatprep.subr.bf16.mxu0 0
      %1070 = vmatpush1.bf16.msra.mxu0 0
      %1071 = vmatprep.subr.bf16.mxu0 0
      %1072 = vmatpush1.bf16.msra.mxu0 0
      %1073 = vmatprep.subr.bf16.mxu0 0
      %1074 = vmatpush1.bf16.msra.mxu0 0
      %1075 = vmatprep.subr.bf16.mxu0 0
      %1076 = vmatpush1.bf16.msra.mxu0 0
      %1077 = vmatprep.subr.bf16.mxu0 0
      %1078 = vmatpush1.bf16.msra.mxu0 0
      %1079 = vmatprep.subr.bf16.mxu0 0
      %1080 = vmatpush1.bf16.msra.mxu0 0
      %1081 = vmatprep.subr.bf16.mxu0 0
      %1082 = vmatpush1.bf16.msra.mxu0 0
      %1083 = vmatprep.subr.bf16.mxu0 0
      %1084 = vmatpush1.bf16.msra.mxu0 0
      %1085 = vmatprep.subr.bf16.mxu0 0
      %1086 = vmatpush1.bf16.msra.mxu0 0
      %1087 = vmatprep.subr.bf16.mxu0 0
      %1088 = vmatpush1.bf16.msra.mxu0 0
      %1089 = vmatprep.subr.bf16.mxu0 0
      %1090 = vmatpush1.bf16.msra.mxu0 0
      %1091 = vmatprep.mubr.bf16.mxu0 0
      %1092 = vmatmul.mubr.bf16.gmra.mrb[0].mxu0 %v1054
      %v1093 = vpop.f32.mrb[0].mxu0
      %v1094 = vadd.f32 0.0, %v1093
      %v1095 = vpop.f32.mrb[0].mxu0
      %v1096 = vpop.f32.mrb[0].mxu0
      %v1097 = vadd.f32 0.0, %v1096
      %v1098 = vpop.f32.mrb[0].mxu0
      %1099 = vmatprep.mubr.bf16.mxu0 0
      %1100 = vmatmul.mubr.bf16.gmra.mrb[0].mxu0 %v1057
      %v1101 = vpop.f32.mrb[0].mxu0
      %v1102 = vadd.f32 0.0, %v1101
      %v1103 = vpop.f32.mrb[0].mxu0
      %v1104 = vpop.f32.mrb[0].mxu0
      %v1105 = vadd.f32 0.0, %v1104
      %v1106 = vpop.f32.mrb[0].mxu0
      %1107 = vdwg.mxu0
      %v1108 = vadd.f32 %v985, %v1094
      %v1109 = vadd.f32 %v986, %v1097
      %v1110 = vadd.f32 %v987, %v1102
      %v1111 = vadd.f32 %v988, %v1105
      %s1112 = scalar_lea.vmem %s1, 14
      %v1113 = vld [vmem:[%s1112] sm:$0x3]
      %v1114 = vld [vmem:[%s867 + $0x2] sm:$0xff]
      %v1115 = vld [vmem:[%s867 + $0xa] sm:$0xff]
      %v1116 = vld [vmem:[%s867 + $0x12] sm:$0xff]
      %v1117 = vld [vmem:[%s867 + $0x1a] sm:$0xf]
      %v1118 = vpack.c.bf16 %v1115, %v1114
      %v1119 = vpack.c.bf16 %v1117, %v1116
      %v1121 = vand.u32 %v1113, %v237
      %1123 = vmatprep.subr.bf16.mxu0 0
      %1124 = vmatpush1.bf16.msra.mxu0 %v1121
      %1125 = vmatprep.subr.bf16.mxu0 0
      %1126 = vmatpush1.bf16.msra.mxu0 0
      %1127 = vmatprep.subr.bf16.mxu0 0
      %1128 = vmatpush1.bf16.msra.mxu0 0
      %1129 = vmatprep.subr.bf16.mxu0 0
      %1130 = vmatpush1.bf16.msra.mxu0 0
      %1131 = vmatprep.subr.bf16.mxu0 0
      %1132 = vmatpush1.bf16.msra.mxu0 0
      %1133 = vmatprep.subr.bf16.mxu0 0
      %1134 = vmatpush1.bf16.msra.mxu0 0
      %1135 = vmatprep.subr.bf16.mxu0 0
      %1136 = vmatpush1.bf16.msra.mxu0 0
      %1137 = vmatprep.subr.bf16.mxu0 0
      %1138 = vmatpush1.bf16.msra.mxu0 0
      %1139 = vmatprep.subr.bf16.mxu0 0
      %1140 = vmatpush1.bf16.msra.mxu0 0
      %1141 = vmatprep.subr.bf16.mxu0 0
      %1142 = vmatpush1.bf16.msra.mxu0 0
      %1143 = vmatprep.subr.bf16.mxu0 0
      %1144 = vmatpush1.bf16.msra.mxu0 0
      %1145 = vmatprep.subr.bf16.mxu0 0
      %1146 = vmatpush1.bf16.msra.mxu0 0
      %1147 = vmatprep.subr.bf16.mxu0 0
      %1148 = vmatpush1.bf16.msra.mxu0 0
      %1149 = vmatprep.subr.bf16.mxu0 0
      %1150 = vmatpush1.bf16.msra.mxu0 0
      %1151 = vmatprep.subr.bf16.mxu0 0
      %1152 = vmatpush1.bf16.msra.mxu0 0
      %1153 = vmatprep.subr.bf16.mxu0 0
      %1154 = vmatpush1.bf16.msra.mxu0 0
      %1155 = vmatprep.mubr.bf16.mxu0 0
      %1156 = vmatmul.mubr.bf16.gmra.mrb[0].mxu0 %v535
      %v1157 = vpop.f32.mrb[0].mxu0
      %v1158 = vadd.f32 0.0, %v1157
      %v1159 = vpop.f32.mrb[0].mxu0
      %v1160 = vpop.f32.mrb[0].mxu0
      %v1161 = vadd.f32 0.0, %v1160
      %v1162 = vpop.f32.mrb[0].mxu0
      %1163 = vmatprep.mubr.bf16.mxu0 0
      %1164 = vmatmul.mubr.bf16.gmra.mrb[0].mxu0 %v538
      %v1165 = vpop.f32.mrb[0].mxu0
      %v1166 = vadd.f32 0.0, %v1165
      %v1167 = vpop.f32.mrb[0].mxu0
      %v1168 = vpop.f32.mrb[0].mxu0
      %v1169 = vadd.f32 0.0, %v1168
      %v1170 = vpop.f32.mrb[0].mxu0
      %1171 = vdwg.mxu0
      %v1172 = vadd.f32 %v1049, %v1158
      %v1173 = vadd.f32 %v1050, %v1161
      %v1174 = vadd.f32 %v1051, %v1166
      %v1175 = vadd.f32 %v1052, %v1169
      %v1177 = vsel %vm227, %v1118, 0
      %v1180 = vsel %vm227, %v1119, 0
      %1182 = vmatprep.subr.bf16.mxu0 0
      %1183 = vmatpush1.bf16.msra.mxu0 %v1121
      %1184 = vmatprep.subr.bf16.mxu0 0
      %1185 = vmatpush1.bf16.msra.mxu0 0
      %1186 = vmatprep.subr.bf16.mxu0 0
      %1187 = vmatpush1.bf16.msra.mxu0 0
      %1188 = vmatprep.subr.bf16.mxu0 0
      %1189 = vmatpush1.bf16.msra.mxu0 0
      %1190 = vmatprep.subr.bf16.mxu0 0
      %1191 = vmatpush1.bf16.msra.mxu0 0
      %1192 = vmatprep.subr.bf16.mxu0 0
      %1193 = vmatpush1.bf16.msra.mxu0 0
      %1194 = vmatprep.subr.bf16.mxu0 0
      %1195 = vmatpush1.bf16.msra.mxu0 0
      %1196 = vmatprep.subr.bf16.mxu0 0
      %1197 = vmatpush1.bf16.msra.mxu0 0
      %1198 = vmatprep.subr.bf16.mxu0 0
      %1199 = vmatpush1.bf16.msra.mxu0 0
      %1200 = vmatprep.subr.bf16.mxu0 0
      %1201 = vmatpush1.bf16.msra.mxu0 0
      %1202 = vmatprep.subr.bf16.mxu0 0
      %1203 = vmatpush1.bf16.msra.mxu0 0
      %1204 = vmatprep.subr.bf16.mxu0 0
      %1205 = vmatpush1.bf16.msra.mxu0 0
      %1206 = vmatprep.subr.bf16.mxu0 0
      %1207 = vmatpush1.bf16.msra.mxu0 0
      %1208 = vmatprep.subr.bf16.mxu0 0
      %1209 = vmatpush1.bf16.msra.mxu0 0
      %1210 = vmatprep.subr.bf16.mxu0 0
      %1211 = vmatpush1.bf16.msra.mxu0 0
      %1212 = vmatprep.subr.bf16.mxu0 0
      %1213 = vmatpush1.bf16.msra.mxu0 0
      %1214 = vmatprep.mubr.bf16.mxu0 0
      %1215 = vmatmul.mubr.bf16.gmra.mrb[0].mxu0 %v1177
      %v1216 = vpop.f32.mrb[0].mxu0
      %v1217 = vadd.f32 0.0, %v1216
      %v1218 = vpop.f32.mrb[0].mxu0
      %v1219 = vpop.f32.mrb[0].mxu0
      %v1220 = vadd.f32 0.0, %v1219
      %v1221 = vpop.f32.mrb[0].mxu0
      %1222 = vmatprep.mubr.bf16.mxu0 0
      %1223 = vmatmul.mubr.bf16.gmra.mrb[0].mxu0 %v1180
      %v1224 = vpop.f32.mrb[0].mxu0
      %v1225 = vadd.f32 0.0, %v1224
      %v1226 = vpop.f32.mrb[0].mxu0
      %v1227 = vpop.f32.mrb[0].mxu0
      %v1228 = vadd.f32 0.0, %v1227
      %v1229 = vpop.f32.mrb[0].mxu0
      %1230 = vdwg.mxu0
      %v1231 = vadd.f32 %v1108, %v1217
      %v1232 = vadd.f32 %v1109, %v1220
      %v1233 = vadd.f32 %v1110, %v1225
      %v1234 = vadd.f32 %v1111, %v1228
      %s1235 = scalar_lea.vmem %s1, 16
      %v1236 = vld [vmem:[%s1235] sm:$0x3]
      %v1237 = vld [vmem:[%s867 + $0x3] sm:$0xff]
      %v1238 = vld [vmem:[%s867 + $0xb] sm:$0xff]
      %v1239 = vld [vmem:[%s867 + $0x13] sm:$0xff]
      %v1240 = vld [vmem:[%s867 + $0x1b] sm:$0xf]
      %v1241 = vpack.c.bf16 %v1238, %v1237
      %v1242 = vpack.c.bf16 %v1240, %v1239
      %v1244 = vand.u32 %v1236, %v237
      %1246 = vmatprep.subr.bf16.mxu0 0
      %1247 = vmatpush1.bf16.msra.mxu0 %v1244
      %1248 = vmatprep.subr.bf16.mxu0 0
      %1249 = vmatpush1.bf16.msra.mxu0 0
      %1250 = vmatprep.subr.bf16.mxu0 0
      %1251 = vmatpush1.bf16.msra.mxu0 0
      %1252 = vmatprep.subr.bf16.mxu0 0
      %1253 = vmatpush1.bf16.msra.mxu0 0
      %1254 = vmatprep.subr.bf16.mxu0 0
      %1255 = vmatpush1.bf16.msra.mxu0 0
      %1256 = vmatprep.subr.bf16.mxu0 0
      %1257 = vmatpush1.bf16.msra.mxu0 0
      %1258 = vmatprep.subr.bf16.mxu0 0
      %1259 = vmatpush1.bf16.msra.mxu0 0
      %1260 = vmatprep.subr.bf16.mxu0 0
      %1261 = vmatpush1.bf16.msra.mxu0 0
      %1262 = vmatprep.subr.bf16.mxu0 0
      %1263 = vmatpush1.bf16.msra.mxu0 0
      %1264 = vmatprep.subr.bf16.mxu0 0
      %1265 = vmatpush1.bf16.msra.mxu0 0
      %1266 = vmatprep.subr.bf16.mxu0 0
      %1267 = vmatpush1.bf16.msra.mxu0 0
      %1268 = vmatprep.subr.bf16.mxu0 0
      %1269 = vmatpush1.bf16.msra.mxu0 0
      %1270 = vmatprep.subr.bf16.mxu0 0
      %1271 = vmatpush1.bf16.msra.mxu0 0
      %1272 = vmatprep.subr.bf16.mxu0 0
      %1273 = vmatpush1.bf16.msra.mxu0 0
      %1274 = vmatprep.subr.bf16.mxu0 0
      %1275 = vmatpush1.bf16.msra.mxu0 0
      %1276 = vmatprep.subr.bf16.mxu0 0
      %1277 = vmatpush1.bf16.msra.mxu0 0
      %1278 = vmatprep.mubr.bf16.mxu0 0
      %1279 = vmatmul.mubr.bf16.gmra.mrb[0].mxu0 %v670
      %v1280 = vpop.f32.mrb[0].mxu0
      %v1281 = vadd.f32 0.0, %v1280
      %v1282 = vpop.f32.mrb[0].mxu0
      %v1283 = vpop.f32.mrb[0].mxu0
      %v1284 = vadd.f32 0.0, %v1283
      %v1285 = vpop.f32.mrb[0].mxu0
      %1286 = vmatprep.mubr.bf16.mxu0 0
      %1287 = vmatmul.mubr.bf16.gmra.mrb[0].mxu0 %v673
      %v1288 = vpop.f32.mrb[0].mxu0
      %v1289 = vadd.f32 0.0, %v1288
      %v1290 = vpop.f32.mrb[0].mxu0
      %v1291 = vpop.f32.mrb[0].mxu0
      %v1292 = vadd.f32 0.0, %v1291
      %v1293 = vpop.f32.mrb[0].mxu0
      %1294 = vdwg.mxu0
      %v1295 = vadd.f32 %v1172, %v1281
      %v1296 = vadd.f32 %v1173, %v1284
      %v1297 = vadd.f32 %v1174, %v1289
      %v1298 = vadd.f32 %v1175, %v1292
      %v1300 = vsel %vm227, %v1241, 0
      %v1303 = vsel %vm227, %v1242, 0
      %1305 = vmatprep.subr.bf16.mxu0 0
      %1306 = vmatpush1.bf16.msra.mxu0 %v1244
      %1307 = vmatprep.subr.bf16.mxu0 0
      %1308 = vmatpush1.bf16.msra.mxu0 0
      %1309 = vmatprep.subr.bf16.mxu0 0
      %1310 = vmatpush1.bf16.msra.mxu0 0
      %1311 = vmatprep.subr.bf16.mxu0 0
      %1312 = vmatpush1.bf16.msra.mxu0 0
      %1313 = vmatprep.subr.bf16.mxu0 0
      %1314 = vmatpush1.bf16.msra.mxu0 0
      %1315 = vmatprep.subr.bf16.mxu0 0
      %1316 = vmatpush1.bf16.msra.mxu0 0
      %1317 = vmatprep.subr.bf16.mxu0 0
      %1318 = vmatpush1.bf16.msra.mxu0 0
      %1319 = vmatprep.subr.bf16.mxu0 0
      %1320 = vmatpush1.bf16.msra.mxu0 0
      %1321 = vmatprep.subr.bf16.mxu0 0
      %1322 = vmatpush1.bf16.msra.mxu0 0
      %1323 = vmatprep.subr.bf16.mxu0 0
      %1324 = vmatpush1.bf16.msra.mxu0 0
      %1325 = vmatprep.subr.bf16.mxu0 0
      %1326 = vmatpush1.bf16.msra.mxu0 0
      %1327 = vmatprep.subr.bf16.mxu0 0
      %1328 = vmatpush1.bf16.msra.mxu0 0
      %1329 = vmatprep.subr.bf16.mxu0 0
      %1330 = vmatpush1.bf16.msra.mxu0 0
      %1331 = vmatprep.subr.bf16.mxu0 0
      %1332 = vmatpush1.bf16.msra.mxu0 0
      %1333 = vmatprep.subr.bf16.mxu0 0
      %1334 = vmatpush1.bf16.msra.mxu0 0
      %1335 = vmatprep.subr.bf16.mxu0 0
      %1336 = vmatpush1.bf16.msra.mxu0 0
      %1337 = vmatprep.mubr.bf16.mxu0 0
      %1338 = vmatmul.mubr.bf16.gmra.mrb[0].mxu0 %v1300
      %v1339 = vpop.f32.mrb[0].mxu0
      %v1340 = vadd.f32 0.0, %v1339
      %v1341 = vpop.f32.mrb[0].mxu0
      %v1342 = vpop.f32.mrb[0].mxu0
      %v1343 = vadd.f32 0.0, %v1342
      %v1344 = vpop.f32.mrb[0].mxu0
      %1345 = vmatprep.mubr.bf16.mxu0 0
      %1346 = vmatmul.mubr.bf16.gmra.mrb[0].mxu0 %v1303
      %v1347 = vpop.f32.mrb[0].mxu0
      %v1348 = vadd.f32 0.0, %v1347
      %v1349 = vpop.f32.mrb[0].mxu0
      %v1350 = vpop.f32.mrb[0].mxu0
      %v1351 = vadd.f32 0.0, %v1350
      %v1352 = vpop.f32.mrb[0].mxu0
      %1353 = vdwg.mxu0
      %v1354 = vadd.f32 %v1231, %v1340
      %v1355 = vadd.f32 %v1232, %v1343
      %v1356 = vadd.f32 %v1233, %v1348
      %v1357 = vadd.f32 %v1234, %v1351
      %s1358 = scalar_lea.vmem %s1, 18
      %v1359 = vld [vmem:[%s1358] sm:$0x3]
      %v1360 = vld [vmem:[%s867 + $0x4] sm:$0xff]
      %v1361 = vld [vmem:[%s867 + $0xc] sm:$0xff]
      %v1362 = vld [vmem:[%s867 + $0x14] sm:$0xff]
      %v1363 = vld [vmem:[%s867 + $0x1c] sm:$0xf]
      %v1364 = vpack.c.bf16 %v1361, %v1360
      %v1365 = vpack.c.bf16 %v1363, %v1362
      %v1367 = vand.u32 %v1359, %v237
      %1369 = vmatprep.subr.bf16.mxu0 0
      %1370 = vmatpush1.bf16.msra.mxu0 %v1367
      %1371 = vmatprep.subr.bf16.mxu0 0
      %1372 = vmatpush1.bf16.msra.mxu0 0
      %1373 = vmatprep.subr.bf16.mxu0 0
      %1374 = vmatpush1.bf16.msra.mxu0 0
      %1375 = vmatprep.subr.bf16.mxu0 0
      %1376 = vmatpush1.bf16.msra.mxu0 0
      %1377 = vmatprep.subr.bf16.mxu0 0
      %1378 = vmatpush1.bf16.msra.mxu0 0
      %1379 = vmatprep.subr.bf16.mxu0 0
      %1380 = vmatpush1.bf16.msra.mxu0 0
      %1381 = vmatprep.subr.bf16.mxu0 0
      %1382 = vmatpush1.bf16.msra.mxu0 0
      %1383 = vmatprep.subr.bf16.mxu0 0
      %1384 = vmatpush1.bf16.msra.mxu0 0
      %1385 = vmatprep.subr.bf16.mxu0 0
      %1386 = vmatpush1.bf16.msra.mxu0 0
      %1387 = vmatprep.subr.bf16.mxu0 0
      %1388 = vmatpush1.bf16.msra.mxu0 0
      %1389 = vmatprep.subr.bf16.mxu0 0
      %1390 = vmatpush1.bf16.msra.mxu0 0
      %1391 = vmatprep.subr.bf16.mxu0 0
      %1392 = vmatpush1.bf16.msra.mxu0 0
      %1393 = vmatprep.subr.bf16.mxu0 0
      %1394 = vmatpush1.bf16.msra.mxu0 0
      %1395 = vmatprep.subr.bf16.mxu0 0
      %1396 = vmatpush1.bf16.msra.mxu0 0
      %1397 = vmatprep.subr.bf16.mxu0 0
      %1398 = vmatpush1.bf16.msra.mxu0 0
      %1399 = vmatprep.subr.bf16.mxu0 0
      %1400 = vmatpush1.bf16.msra.mxu0 0
      %1401 = vmatprep.mubr.bf16.mxu0 0
      %1402 = vmatmul.mubr.bf16.gmra.mrb[0].mxu0 %v805
      %v1403 = vpop.f32.mrb[0].mxu0
      %v1404 = vadd.f32 0.0, %v1403
      %v1405 = vpop.f32.mrb[0].mxu0
      %v1406 = vpop.f32.mrb[0].mxu0
      %v1407 = vadd.f32 0.0, %v1406
      %v1408 = vpop.f32.mrb[0].mxu0
      %1409 = vmatprep.mubr.bf16.mxu0 0
      %1410 = vmatmul.mubr.bf16.gmra.mrb[0].mxu0 %v808
      %v1411 = vpop.f32.mrb[0].mxu0
      %v1412 = vadd.f32 0.0, %v1411
      %v1413 = vpop.f32.mrb[0].mxu0
      %v1414 = vpop.f32.mrb[0].mxu0
      %v1415 = vadd.f32 0.0, %v1414
      %v1416 = vpop.f32.mrb[0].mxu0
      %1417 = vdwg.mxu0
      %v1418 = vadd.f32 %v1295, %v1404
      %v1419 = vadd.f32 %v1296, %v1407
      %v1420 = vadd.f32 %v1297, %v1412
      %v1421 = vadd.f32 %v1298, %v1415
      %v1423 = vsel %vm227, %v1364, 0
      %v1426 = vsel %vm227, %v1365, 0
      %1428 = vmatprep.subr.bf16.mxu0 0
      %1429 = vmatpush1.bf16.msra.mxu0 %v1367
      %1430 = vmatprep.subr.bf16.mxu0 0
      %1431 = vmatpush1.bf16.msra.mxu0 0
      %1432 = vmatprep.subr.bf16.mxu0 0
      %1433 = vmatpush1.bf16.msra.mxu0 0
      %1434 = vmatprep.subr.bf16.mxu0 0
      %1435 = vmatpush1.bf16.msra.mxu0 0
      %1436 = vmatprep.subr.bf16.mxu0 0
      %1437 = vmatpush1.bf16.msra.mxu0 0
      %1438 = vmatprep.subr.bf16.mxu0 0
      %1439 = vmatpush1.bf16.msra.mxu0 0
      %1440 = vmatprep.subr.bf16.mxu0 0
      %1441 = vmatpush1.bf16.msra.mxu0 0
      %1442 = vmatprep.subr.bf16.mxu0 0
      %1443 = vmatpush1.bf16.msra.mxu0 0
      %1444 = vmatprep.subr.bf16.mxu0 0
      %1445 = vmatpush1.bf16.msra.mxu0 0
      %1446 = vmatprep.subr.bf16.mxu0 0
      %1447 = vmatpush1.bf16.msra.mxu0 0
      %1448 = vmatprep.subr.bf16.mxu0 0
      %1449 = vmatpush1.bf16.msra.mxu0 0
      %1450 = vmatprep.subr.bf16.mxu0 0
      %1451 = vmatpush1.bf16.msra.mxu0 0
      %1452 = vmatprep.subr.bf16.mxu0 0
      %1453 = vmatpush1.bf16.msra.mxu0 0
      %1454 = vmatprep.subr.bf16.mxu0 0
      %1455 = vmatpush1.bf16.msra.mxu0 0
      %1456 = vmatprep.subr.bf16.mxu0 0
      %1457 = vmatpush1.bf16.msra.mxu0 0
      %1458 = vmatprep.subr.bf16.mxu0 0
      %1459 = vmatpush1.bf16.msra.mxu0 0
      %1460 = vmatprep.mubr.bf16.mxu0 0
      %1461 = vmatmul.mubr.bf16.gmra.mrb[0].mxu0 %v1423
      %v1462 = vpop.f32.mrb[0].mxu0
      %v1463 = vadd.f32 0.0, %v1462
      %v1464 = vpop.f32.mrb[0].mxu0
      %v1465 = vpop.f32.mrb[0].mxu0
      %v1466 = vadd.f32 0.0, %v1465
      %v1467 = vpop.f32.mrb[0].mxu0
      %1468 = vmatprep.mubr.bf16.mxu0 0
      %1469 = vmatmul.mubr.bf16.gmra.mrb[0].mxu0 %v1426
      %v1470 = vpop.f32.mrb[0].mxu0
      %v1471 = vadd.f32 0.0, %v1470
      %v1472 = vpop.f32.mrb[0].mxu0
      %v1473 = vpop.f32.mrb[0].mxu0
      %v1474 = vadd.f32 0.0, %v1473
      %v1475 = vpop.f32.mrb[0].mxu0
      %1476 = vdwg.mxu0
      %v1477 = vadd.f32 %v1354, %v1463
      %v1478 = vadd.f32 %v1355, %v1466
      %v1479 = vadd.f32 %v1356, %v1471
      %v1480 = vadd.f32 %v1357, %v1474
      %s1481 = scalar_lea.vmem %s1, 20
      %v1482 = vld [vmem:[%s1481] sm:$0x3]
      %s1483 = sadd.s32 %s194, 3
      %s1484 = smul.u32 %s1483, 32
      %s1485 = scalar_lea.vmem %s183, %s1484
      %v1486 = vld [vmem:[%s1485] sm:$0xff]
      %v1487 = vld [vmem:[%s1485 + $0x8] sm:$0xff]
      %v1488 = vld [vmem:[%s1485 + $0x10] sm:$0xff]
      %v1489 = vld [vmem:[%s1485 + $0x18] sm:$0xf]
      %v1490 = vpack.c.bf16 %v1487, %v1486
      %v1491 = vpack.c.bf16 %v1489, %v1488
      %v1493 = vand.u32 %v1482, %v237
      %1495 = vmatprep.subr.bf16.mxu0 0
      %1496 = vmatpush1.bf16.msra.mxu0 %v1493
      %1497 = vmatprep.subr.bf16.mxu0 0
      %1498 = vmatpush1.bf16.msra.mxu0 0
      %1499 = vmatprep.subr.bf16.mxu0 0
      %1500 = vmatpush1.bf16.msra.mxu0 0
      %1501 = vmatprep.subr.bf16.mxu0 0
      %1502 = vmatpush1.bf16.msra.mxu0 0
      %1503 = vmatprep.subr.bf16.mxu0 0
      %1504 = vmatpush1.bf16.msra.mxu0 0
      %1505 = vmatprep.subr.bf16.mxu0 0
      %1506 = vmatpush1.bf16.msra.mxu0 0
      %1507 = vmatprep.subr.bf16.mxu0 0
      %1508 = vmatpush1.bf16.msra.mxu0 0
      %1509 = vmatprep.subr.bf16.mxu0 0
      %1510 = vmatpush1.bf16.msra.mxu0 0
      %1511 = vmatprep.subr.bf16.mxu0 0
      %1512 = vmatpush1.bf16.msra.mxu0 0
      %1513 = vmatprep.subr.bf16.mxu0 0
      %1514 = vmatpush1.bf16.msra.mxu0 0
      %1515 = vmatprep.subr.bf16.mxu0 0
      %1516 = vmatpush1.bf16.msra.mxu0 0
      %1517 = vmatprep.subr.bf16.mxu0 0
      %1518 = vmatpush1.bf16.msra.mxu0 0
      %1519 = vmatprep.subr.bf16.mxu0 0
      %1520 = vmatpush1.bf16.msra.mxu0 0
      %1521 = vmatprep.subr.bf16.mxu0 0
      %1522 = vmatpush1.bf16.msra.mxu0 0
      %1523 = vmatprep.subr.bf16.mxu0 0
      %1524 = vmatpush1.bf16.msra.mxu0 0
      %1525 = vmatprep.subr.bf16.mxu0 0
      %1526 = vmatpush1.bf16.msra.mxu0 0
      %1527 = vmatprep.mubr.bf16.mxu0 0
      %1528 = vmatmul.mubr.bf16.gmra.mrb[0].mxu0 %v931
      %v1529 = vpop.f32.mrb[0].mxu0
      %v1530 = vadd.f32 0.0, %v1529
      %v1531 = vpop.f32.mrb[0].mxu0
      %v1532 = vpop.f32.mrb[0].mxu0
      %v1533 = vadd.f32 0.0, %v1532
      %v1534 = vpop.f32.mrb[0].mxu0
      %1535 = vmatprep.mubr.bf16.mxu0 0
      %1536 = vmatmul.mubr.bf16.gmra.mrb[0].mxu0 %v934
      %v1537 = vpop.f32.mrb[0].mxu0
      %v1538 = vadd.f32 0.0, %v1537
      %v1539 = vpop.f32.mrb[0].mxu0
      %v1540 = vpop.f32.mrb[0].mxu0
      %v1541 = vadd.f32 0.0, %v1540
      %v1542 = vpop.f32.mrb[0].mxu0
      %1543 = vdwg.mxu0
      %v1544 = vadd.f32 %v1418, %v1530
      %v1545 = vadd.f32 %v1419, %v1533
      %v1546 = vadd.f32 %v1420, %v1538
      %v1547 = vadd.f32 %v1421, %v1541
      %v1549 = vsel %vm227, %v1490, 0
      %v1552 = vsel %vm227, %v1491, 0
      %1554 = vmatprep.subr.bf16.mxu0 0
      %1555 = vmatpush1.bf16.msra.mxu0 %v1493
      %1556 = vmatprep.subr.bf16.mxu0 0
      %1557 = vmatpush1.bf16.msra.mxu0 0
      %1558 = vmatprep.subr.bf16.mxu0 0
      %1559 = vmatpush1.bf16.msra.mxu0 0
      %1560 = vmatprep.subr.bf16.mxu0 0
      %1561 = vmatpush1.bf16.msra.mxu0 0
      %1562 = vmatprep.subr.bf16.mxu0 0
      %1563 = vmatpush1.bf16.msra.mxu0 0
      %1564 = vmatprep.subr.bf16.mxu0 0
      %1565 = vmatpush1.bf16.msra.mxu0 0
      %1566 = vmatprep.subr.bf16.mxu0 0
      %1567 = vmatpush1.bf16.msra.mxu0 0
      %1568 = vmatprep.subr.bf16.mxu0 0
      %1569 = vmatpush1.bf16.msra.mxu0 0
      %1570 = vmatprep.subr.bf16.mxu0 0
      %1571 = vmatpush1.bf16.msra.mxu0 0
      %1572 = vmatprep.subr.bf16.mxu0 0
      %1573 = vmatpush1.bf16.msra.mxu0 0
      %1574 = vmatprep.subr.bf16.mxu0 0
      %1575 = vmatpush1.bf16.msra.mxu0 0
      %1576 = vmatprep.subr.bf16.mxu0 0
      %1577 = vmatpush1.bf16.msra.mxu0 0
      %1578 = vmatprep.subr.bf16.mxu0 0
      %1579 = vmatpush1.bf16.msra.mxu0 0
      %1580 = vmatprep.subr.bf16.mxu0 0
      %1581 = vmatpush1.bf16.msra.mxu0 0
      %1582 = vmatprep.subr.bf16.mxu0 0
      %1583 = vmatpush1.bf16.msra.mxu0 0
      %1584 = vmatprep.subr.bf16.mxu0 0
      %1585 = vmatpush1.bf16.msra.mxu0 0
      %1586 = vmatprep.mubr.bf16.mxu0 0
      %1587 = vmatmul.mubr.bf16.gmra.mrb[0].mxu0 %v1549
      %v1588 = vpop.f32.mrb[0].mxu0
      %v1589 = vadd.f32 0.0, %v1588
      %v1590 = vpop.f32.mrb[0].mxu0
      %v1591 = vpop.f32.mrb[0].mxu0
      %v1592 = vadd.f32 0.0, %v1591
      %v1593 = vpop.f32.mrb[0].mxu0
      %1594 = vmatprep.mubr.bf16.mxu0 0
      %1595 = vmatmul.mubr.bf16.gmra.mrb[0].mxu0 %v1552
      %v1596 = vpop.f32.mrb[0].mxu0
      %v1597 = vadd.f32 0.0, %v1596
      %v1598 = vpop.f32.mrb[0].mxu0
      %v1599 = vpop.f32.mrb[0].mxu0
      %v1600 = vadd.f32 0.0, %v1599
      %v1601 = vpop.f32.mrb[0].mxu0
      %1602 = vdwg.mxu0
      %v1603 = vadd.f32 %v1477, %v1589
      %v1604 = vadd.f32 %v1478, %v1592
      %v1605 = vadd.f32 %v1479, %v1597
      %v1606 = vadd.f32 %v1480, %v1600
      %s1607 = scalar_lea.vmem %s1, 22
      %v1608 = vld [vmem:[%s1607] sm:$0x3]
      %v1609 = vld [vmem:[%s1485 + $0x1] sm:$0xff]
      %v1610 = vld [vmem:[%s1485 + $0x9] sm:$0xff]
      %v1611 = vld [vmem:[%s1485 + $0x11] sm:$0xff]
      %v1612 = vld [vmem:[%s1485 + $0x19] sm:$0xf]
      %v1613 = vpack.c.bf16 %v1610, %v1609
      %v1614 = vpack.c.bf16 %v1612, %v1611
      %v1616 = vand.u32 %v1608, %v237
      %1618 = vmatprep.subr.bf16.mxu0 0
      %1619 = vmatpush1.bf16.msra.mxu0 %v1616
      %1620 = vmatprep.subr.bf16.mxu0 0
      %1621 = vmatpush1.bf16.msra.mxu0 0
      %1622 = vmatprep.subr.bf16.mxu0 0
      %1623 = vmatpush1.bf16.msra.mxu0 0
      %1624 = vmatprep.subr.bf16.mxu0 0
      %1625 = vmatpush1.bf16.msra.mxu0 0
      %1626 = vmatprep.subr.bf16.mxu0 0
      %1627 = vmatpush1.bf16.msra.mxu0 0
      %1628 = vmatprep.subr.bf16.mxu0 0
      %1629 = vmatpush1.bf16.msra.mxu0 0
      %1630 = vmatprep.subr.bf16.mxu0 0
      %1631 = vmatpush1.bf16.msra.mxu0 0
      %1632 = vmatprep.subr.bf16.mxu0 0
      %1633 = vmatpush1.bf16.msra.mxu0 0
      %1634 = vmatprep.subr.bf16.mxu0 0
      %1635 = vmatpush1.bf16.msra.mxu0 0
      %1636 = vmatprep.subr.bf16.mxu0 0
      %1637 = vmatpush1.bf16.msra.mxu0 0
      %1638 = vmatprep.subr.bf16.mxu0 0
      %1639 = vmatpush1.bf16.msra.mxu0 0
      %1640 = vmatprep.subr.bf16.mxu0 0
      %1641 = vmatpush1.bf16.msra.mxu0 0
      %1642 = vmatprep.subr.bf16.mxu0 0
      %1643 = vmatpush1.bf16.msra.mxu0 0
      %1644 = vmatprep.subr.bf16.mxu0 0
      %1645 = vmatpush1.bf16.msra.mxu0 0
      %1646 = vmatprep.subr.bf16.mxu0 0
      %1647 = vmatpush1.bf16.msra.mxu0 0
      %1648 = vmatprep.subr.bf16.mxu0 0
      %1649 = vmatpush1.bf16.msra.mxu0 0
      %1650 = vmatprep.mubr.bf16.mxu0 0
      %1651 = vmatmul.mubr.bf16.gmra.mrb[0].mxu0 %v1054
      %v1652 = vpop.f32.mrb[0].mxu0
      %v1653 = vadd.f32 0.0, %v1652
      %v1654 = vpop.f32.mrb[0].mxu0
      %v1655 = vpop.f32.mrb[0].mxu0
      %v1656 = vadd.f32 0.0, %v1655
      %v1657 = vpop.f32.mrb[0].mxu0
      %1658 = vmatprep.mubr.bf16.mxu0 0
      %1659 = vmatmul.mubr.bf16.gmra.mrb[0].mxu0 %v1057
      %v1660 = vpop.f32.mrb[0].mxu0
      %v1661 = vadd.f32 0.0, %v1660
      %v1662 = vpop.f32.mrb[0].mxu0
      %v1663 = vpop.f32.mrb[0].mxu0
      %v1664 = vadd.f32 0.0, %v1663
      %v1665 = vpop.f32.mrb[0].mxu0
      %1666 = vdwg.mxu0
      %v1667 = vadd.f32 %v1544, %v1653
      %v1668 = vadd.f32 %v1545, %v1656
      %v1669 = vadd.f32 %v1546, %v1661
      %v1670 = vadd.f32 %v1547, %v1664
      %v1672 = vsel %vm227, %v1613, 0
      %v1675 = vsel %vm227, %v1614, 0
      %1677 = vmatprep.subr.bf16.mxu0 0
      %1678 = vmatpush1.bf16.msra.mxu0 %v1616
      %1679 = vmatprep.subr.bf16.mxu0 0
      %1680 = vmatpush1.bf16.msra.mxu0 0
      %1681 = vmatprep.subr.bf16.mxu0 0
      %1682 = vmatpush1.bf16.msra.mxu0 0
      %1683 = vmatprep.subr.bf16.mxu0 0
      %1684 = vmatpush1.bf16.msra.mxu0 0
      %1685 = vmatprep.subr.bf16.mxu0 0
      %1686 = vmatpush1.bf16.msra.mxu0 0
      %1687 = vmatprep.subr.bf16.mxu0 0
      %1688 = vmatpush1.bf16.msra.mxu0 0
      %1689 = vmatprep.subr.bf16.mxu0 0
      %1690 = vmatpush1.bf16.msra.mxu0 0
      %1691 = vmatprep.subr.bf16.mxu0 0
      %1692 = vmatpush1.bf16.msra.mxu0 0
      %1693 = vmatprep.subr.bf16.mxu0 0
      %1694 = vmatpush1.bf16.msra.mxu0 0
      %1695 = vmatprep.subr.bf16.mxu0 0
      %1696 = vmatpush1.bf16.msra.mxu0 0
      %1697 = vmatprep.subr.bf16.mxu0 0
      %1698 = vmatpush1.bf16.msra.mxu0 0
      %1699 = vmatprep.subr.bf16.mxu0 0
      %1700 = vmatpush1.bf16.msra.mxu0 0
      %1701 = vmatprep.subr.bf16.mxu0 0
      %1702 = vmatpush1.bf16.msra.mxu0 0
      %1703 = vmatprep.subr.bf16.mxu0 0
      %1704 = vmatpush1.bf16.msra.mxu0 0
      %1705 = vmatprep.subr.bf16.mxu0 0
      %1706 = vmatpush1.bf16.msra.mxu0 0
      %1707 = vmatprep.subr.bf16.mxu0 0
      %1708 = vmatpush1.bf16.msra.mxu0 0
      %1709 = vmatprep.mubr.bf16.mxu0 0
      %1710 = vmatmul.mubr.bf16.gmra.mrb[0].mxu0 %v1672
      %v1711 = vpop.f32.mrb[0].mxu0
      %v1712 = vadd.f32 0.0, %v1711
      %v1713 = vpop.f32.mrb[0].mxu0
      %v1714 = vpop.f32.mrb[0].mxu0
      %v1715 = vadd.f32 0.0, %v1714
      %v1716 = vpop.f32.mrb[0].mxu0
      %1717 = vmatprep.mubr.bf16.mxu0 0
      %1718 = vmatmul.mubr.bf16.gmra.mrb[0].mxu0 %v1675
      %v1719 = vpop.f32.mrb[0].mxu0
      %v1720 = vadd.f32 0.0, %v1719
      %v1721 = vpop.f32.mrb[0].mxu0
      %v1722 = vpop.f32.mrb[0].mxu0
      %v1723 = vadd.f32 0.0, %v1722
      %v1724 = vpop.f32.mrb[0].mxu0
      %1725 = vdwg.mxu0
      %v1726 = vadd.f32 %v1603, %v1712
      %v1727 = vadd.f32 %v1604, %v1715
      %v1728 = vadd.f32 %v1605, %v1720
      %v1729 = vadd.f32 %v1606, %v1723
      %s1730 = scalar_lea.vmem %s1, 24
      %v1731 = vld [vmem:[%s1730] sm:$0x3]
      %v1732 = vld [vmem:[%s1485 + $0x2] sm:$0xff]
      %v1733 = vld [vmem:[%s1485 + $0xa] sm:$0xff]
      %v1734 = vld [vmem:[%s1485 + $0x12] sm:$0xff]
      %v1735 = vld [vmem:[%s1485 + $0x1a] sm:$0xf]
      %v1736 = vpack.c.bf16 %v1733, %v1732
      %v1737 = vpack.c.bf16 %v1735, %v1734
      %v1739 = vand.u32 %v1731, %v237
      %1741 = vmatprep.subr.bf16.mxu0 0
      %1742 = vmatpush1.bf16.msra.mxu0 %v1739
      %1743 = vmatprep.subr.bf16.mxu0 0
      %1744 = vmatpush1.bf16.msra.mxu0 0
      %1745 = vmatprep.subr.bf16.mxu0 0
      %1746 = vmatpush1.bf16.msra.mxu0 0
      %1747 = vmatprep.subr.bf16.mxu0 0
      %1748 = vmatpush1.bf16.msra.mxu0 0
      %1749 = vmatprep.subr.bf16.mxu0 0
      %1750 = vmatpush1.bf16.msra.mxu0 0
      %1751 = vmatprep.subr.bf16.mxu0 0
      %1752 = vmatpush1.bf16.msra.mxu0 0
      %1753 = vmatprep.subr.bf16.mxu0 0
      %1754 = vmatpush1.bf16.msra.mxu0 0
      %1755 = vmatprep.subr.bf16.mxu0 0
      %1756 = vmatpush1.bf16.msra.mxu0 0
      %1757 = vmatprep.subr.bf16.mxu0 0
      %1758 = vmatpush1.bf16.msra.mxu0 0
      %1759 = vmatprep.subr.bf16.mxu0 0
      %1760 = vmatpush1.bf16.msra.mxu0 0
      %1761 = vmatprep.subr.bf16.mxu0 0
      %1762 = vmatpush1.bf16.msra.mxu0 0
      %1763 = vmatprep.subr.bf16.mxu0 0
      %1764 = vmatpush1.bf16.msra.mxu0 0
      %1765 = vmatprep.subr.bf16.mxu0 0
      %1766 = vmatpush1.bf16.msra.mxu0 0
      %1767 = vmatprep.subr.bf16.mxu0 0
      %1768 = vmatpush1.bf16.msra.mxu0 0
      %1769 = vmatprep.subr.bf16.mxu0 0
      %1770 = vmatpush1.bf16.msra.mxu0 0
      %1771 = vmatprep.subr.bf16.mxu0 0
      %1772 = vmatpush1.bf16.msra.mxu0 0
      %1773 = vmatprep.mubr.bf16.mxu0 0
      %1774 = vmatmul.mubr.bf16.gmra.mrb[0].mxu0 %v1177
      %v1775 = vpop.f32.mrb[0].mxu0
      %v1776 = vadd.f32 0.0, %v1775
      %v1777 = vpop.f32.mrb[0].mxu0
      %v1778 = vpop.f32.mrb[0].mxu0
      %v1779 = vadd.f32 0.0, %v1778
      %v1780 = vpop.f32.mrb[0].mxu0
      %1781 = vmatprep.mubr.bf16.mxu0 0
      %1782 = vmatmul.mubr.bf16.gmra.mrb[0].mxu0 %v1180
      %v1783 = vpop.f32.mrb[0].mxu0
      %v1784 = vadd.f32 0.0, %v1783
      %v1785 = vpop.f32.mrb[0].mxu0
      %v1786 = vpop.f32.mrb[0].mxu0
      %v1787 = vadd.f32 0.0, %v1786
      %v1788 = vpop.f32.mrb[0].mxu0
      %1789 = vdwg.mxu0
      %v1790 = vadd.f32 %v1667, %v1776
      %v1791 = vadd.f32 %v1668, %v1779
      %v1792 = vadd.f32 %v1669, %v1784
      %v1793 = vadd.f32 %v1670, %v1787
      %v1795 = vsel %vm227, %v1736, 0
      %v1798 = vsel %vm227, %v1737, 0
      %1800 = vmatprep.subr.bf16.mxu0 0
      %1801 = vmatpush1.bf16.msra.mxu0 %v1739
      %1802 = vmatprep.subr.bf16.mxu0 0
      %1803 = vmatpush1.bf16.msra.mxu0 0
      %1804 = vmatprep.subr.bf16.mxu0 0
      %1805 = vmatpush1.bf16.msra.mxu0 0
      %1806 = vmatprep.subr.bf16.mxu0 0
      %1807 = vmatpush1.bf16.msra.mxu0 0
      %1808 = vmatprep.subr.bf16.mxu0 0
      %1809 = vmatpush1.bf16.msra.mxu0 0
      %1810 = vmatprep.subr.bf16.mxu0 0
      %1811 = vmatpush1.bf16.msra.mxu0 0
      %1812 = vmatprep.subr.bf16.mxu0 0
      %1813 = vmatpush1.bf16.msra.mxu0 0
      %1814 = vmatprep.subr.bf16.mxu0 0
      %1815 = vmatpush1.bf16.msra.mxu0 0
      %1816 = vmatprep.subr.bf16.mxu0 0
      %1817 = vmatpush1.bf16.msra.mxu0 0
      %1818 = vmatprep.subr.bf16.mxu0 0
      %1819 = vmatpush1.bf16.msra.mxu0 0
      %1820 = vmatprep.subr.bf16.mxu0 0
      %1821 = vmatpush1.bf16.msra.mxu0 0
      %1822 = vmatprep.subr.bf16.mxu0 0
      %1823 = vmatpush1.bf16.msra.mxu0 0
      %1824 = vmatprep.subr.bf16.mxu0 0
      %1825 = vmatpush1.bf16.msra.mxu0 0
      %1826 = vmatprep.subr.bf16.mxu0 0
      %1827 = vmatpush1.bf16.msra.mxu0 0
      %1828 = vmatprep.subr.bf16.mxu0 0
      %1829 = vmatpush1.bf16.msra.mxu0 0
      %1830 = vmatprep.subr.bf16.mxu0 0
      %1831 = vmatpush1.bf16.msra.mxu0 0
      %1832 = vmatprep.mubr.bf16.mxu0 0
      %1833 = vmatmul.mubr.bf16.gmra.mrb[0].mxu0 %v1795
      %v1834 = vpop.f32.mrb[0].mxu0
      %v1835 = vadd.f32 0.0, %v1834
      %v1836 = vpop.f32.mrb[0].mxu0
      %v1837 = vpop.f32.mrb[0].mxu0
      %v1838 = vadd.f32 0.0, %v1837
      %v1839 = vpop.f32.mrb[0].mxu0
      %1840 = vmatprep.mubr.bf16.mxu0 0
      %1841 = vmatmul.mubr.bf16.gmra.mrb[0].mxu0 %v1798
      %v1842 = vpop.f32.mrb[0].mxu0
      %v1843 = vadd.f32 0.0, %v1842
      %v1844 = vpop.f32.mrb[0].mxu0
      %v1845 = vpop.f32.mrb[0].mxu0
      %v1846 = vadd.f32 0.0, %v1845
      %v1847 = vpop.f32.mrb[0].mxu0
      %1848 = vdwg.mxu0
      %v1849 = vadd.f32 %v1726, %v1835
      %v1850 = vadd.f32 %v1727, %v1838
      %v1851 = vadd.f32 %v1728, %v1843
      %v1852 = vadd.f32 %v1729, %v1846
      %s1853 = scalar_lea.vmem %s1, 26
      %v1854 = vld [vmem:[%s1853] sm:$0x3]
      %v1855 = vld [vmem:[%s1485 + $0x3] sm:$0xff]
      %v1856 = vld [vmem:[%s1485 + $0xb] sm:$0xff]
      %v1857 = vld [vmem:[%s1485 + $0x13] sm:$0xff]
      %v1858 = vld [vmem:[%s1485 + $0x1b] sm:$0xf]
      %v1859 = vpack.c.bf16 %v1856, %v1855
      %v1860 = vpack.c.bf16 %v1858, %v1857
      %v1862 = vand.u32 %v1854, %v237
      %1864 = vmatprep.subr.bf16.mxu0 0
      %1865 = vmatpush1.bf16.msra.mxu0 %v1862
      %1866 = vmatprep.subr.bf16.mxu0 0
      %1867 = vmatpush1.bf16.msra.mxu0 0
      %1868 = vmatprep.subr.bf16.mxu0 0
      %1869 = vmatpush1.bf16.msra.mxu0 0
      %1870 = vmatprep.subr.bf16.mxu0 0
      %1871 = vmatpush1.bf16.msra.mxu0 0
      %1872 = vmatprep.subr.bf16.mxu0 0
      %1873 = vmatpush1.bf16.msra.mxu0 0
      %1874 = vmatprep.subr.bf16.mxu0 0
      %1875 = vmatpush1.bf16.msra.mxu0 0
      %1876 = vmatprep.subr.bf16.mxu0 0
      %1877 = vmatpush1.bf16.msra.mxu0 0
      %1878 = vmatprep.subr.bf16.mxu0 0
      %1879 = vmatpush1.bf16.msra.mxu0 0
      %1880 = vmatprep.subr.bf16.mxu0 0
      %1881 = vmatpush1.bf16.msra.mxu0 0
      %1882 = vmatprep.subr.bf16.mxu0 0
      %1883 = vmatpush1.bf16.msra.mxu0 0
      %1884 = vmatprep.subr.bf16.mxu0 0
      %1885 = vmatpush1.bf16.msra.mxu0 0
      %1886 = vmatprep.subr.bf16.mxu0 0
      %1887 = vmatpush1.bf16.msra.mxu0 0
      %1888 = vmatprep.subr.bf16.mxu0 0
      %1889 = vmatpush1.bf16.msra.mxu0 0
      %1890 = vmatprep.subr.bf16.mxu0 0
      %1891 = vmatpush1.bf16.msra.mxu0 0
      %1892 = vmatprep.subr.bf16.mxu0 0
      %1893 = vmatpush1.bf16.msra.mxu0 0
      %1894 = vmatprep.subr.bf16.mxu0 0
      %1895 = vmatpush1.bf16.msra.mxu0 0
      %1896 = vmatprep.mubr.bf16.mxu0 0
      %1897 = vmatmul.mubr.bf16.gmra.mrb[0].mxu0 %v1300
      %v1898 = vpop.f32.mrb[0].mxu0
      %v1899 = vadd.f32 0.0, %v1898
      %v1900 = vpop.f32.mrb[0].mxu0
      %v1901 = vpop.f32.mrb[0].mxu0
      %v1902 = vadd.f32 0.0, %v1901
      %v1903 = vpop.f32.mrb[0].mxu0
      %1904 = vmatprep.mubr.bf16.mxu0 0
      %1905 = vmatmul.mubr.bf16.gmra.mrb[0].mxu0 %v1303
      %v1906 = vpop.f32.mrb[0].mxu0
      %v1907 = vadd.f32 0.0, %v1906
      %v1908 = vpop.f32.mrb[0].mxu0
      %v1909 = vpop.f32.mrb[0].mxu0
      %v1910 = vadd.f32 0.0, %v1909
      %v1911 = vpop.f32.mrb[0].mxu0
      %1912 = vdwg.mxu0
      %v1913 = vadd.f32 %v1790, %v1899
      %v1914 = vadd.f32 %v1791, %v1902
      %v1915 = vadd.f32 %v1792, %v1907
      %v1916 = vadd.f32 %v1793, %v1910
      %v1918 = vsel %vm227, %v1859, 0
      %v1921 = vsel %vm227, %v1860, 0
      %1923 = vmatprep.subr.bf16.mxu0 0
      %1924 = vmatpush1.bf16.msra.mxu0 %v1862
      %1925 = vmatprep.subr.bf16.mxu0 0
      %1926 = vmatpush1.bf16.msra.mxu0 0
      %1927 = vmatprep.subr.bf16.mxu0 0
      %1928 = vmatpush1.bf16.msra.mxu0 0
      %1929 = vmatprep.subr.bf16.mxu0 0
      %1930 = vmatpush1.bf16.msra.mxu0 0
      %1931 = vmatprep.subr.bf16.mxu0 0
      %1932 = vmatpush1.bf16.msra.mxu0 0
      %1933 = vmatprep.subr.bf16.mxu0 0
      %1934 = vmatpush1.bf16.msra.mxu0 0
      %1935 = vmatprep.subr.bf16.mxu0 0
      %1936 = vmatpush1.bf16.msra.mxu0 0
      %1937 = vmatprep.subr.bf16.mxu0 0
      %1938 = vmatpush1.bf16.msra.mxu0 0
      %1939 = vmatprep.subr.bf16.mxu0 0
      %1940 = vmatpush1.bf16.msra.mxu0 0
      %1941 = vmatprep.subr.bf16.mxu0 0
      %1942 = vmatpush1.bf16.msra.mxu0 0
      %1943 = vmatprep.subr.bf16.mxu0 0
      %1944 = vmatpush1.bf16.msra.mxu0 0
      %1945 = vmatprep.subr.bf16.mxu0 0
      %1946 = vmatpush1.bf16.msra.mxu0 0
      %1947 = vmatprep.subr.bf16.mxu0 0
      %1948 = vmatpush1.bf16.msra.mxu0 0
      %1949 = vmatprep.subr.bf16.mxu0 0
      %1950 = vmatpush1.bf16.msra.mxu0 0
      %1951 = vmatprep.subr.bf16.mxu0 0
      %1952 = vmatpush1.bf16.msra.mxu0 0
      %1953 = vmatprep.subr.bf16.mxu0 0
      %1954 = vmatpush1.bf16.msra.mxu0 0
      %1955 = vmatprep.mubr.bf16.mxu0 0
      %1956 = vmatmul.mubr.bf16.gmra.mrb[0].mxu0 %v1918
      %v1957 = vpop.f32.mrb[0].mxu0
      %v1958 = vadd.f32 0.0, %v1957
      %v1959 = vpop.f32.mrb[0].mxu0
      %v1960 = vpop.f32.mrb[0].mxu0
      %v1961 = vadd.f32 0.0, %v1960
      %v1962 = vpop.f32.mrb[0].mxu0
      %1963 = vmatprep.mubr.bf16.mxu0 0
      %1964 = vmatmul.mubr.bf16.gmra.mrb[0].mxu0 %v1921
      %v1965 = vpop.f32.mrb[0].mxu0
      %v1966 = vadd.f32 0.0, %v1965
      %v1967 = vpop.f32.mrb[0].mxu0
      %v1968 = vpop.f32.mrb[0].mxu0
      %v1969 = vadd.f32 0.0, %v1968
      %v1970 = vpop.f32.mrb[0].mxu0
      %1971 = vdwg.mxu0
      %v1972 = vadd.f32 %v1849, %v1958
      %v1973 = vadd.f32 %v1850, %v1961
      %v1974 = vadd.f32 %v1851, %v1966
      %v1975 = vadd.f32 %v1852, %v1969
      %s1976 = scalar_lea.vmem %s1, 28
      %v1977 = vld [vmem:[%s1976] sm:$0x3]
      %v1978 = vld [vmem:[%s1485 + $0x4] sm:$0xff]
      %v1979 = vld [vmem:[%s1485 + $0xc] sm:$0xff]
      %v1980 = vld [vmem:[%s1485 + $0x14] sm:$0xff]
      %v1981 = vld [vmem:[%s1485 + $0x1c] sm:$0xf]
      %v1982 = vpack.c.bf16 %v1979, %v1978
      %v1983 = vpack.c.bf16 %v1981, %v1980
      %v1985 = vand.u32 %v1977, %v237
      %1987 = vmatprep.subr.bf16.mxu0 0
      %1988 = vmatpush1.bf16.msra.mxu0 %v1985
      %1989 = vmatprep.subr.bf16.mxu0 0
      %1990 = vmatpush1.bf16.msra.mxu0 0
      %1991 = vmatprep.subr.bf16.mxu0 0
      %1992 = vmatpush1.bf16.msra.mxu0 0
      %1993 = vmatprep.subr.bf16.mxu0 0
      %1994 = vmatpush1.bf16.msra.mxu0 0
      %1995 = vmatprep.subr.bf16.mxu0 0
      %1996 = vmatpush1.bf16.msra.mxu0 0
      %1997 = vmatprep.subr.bf16.mxu0 0
      %1998 = vmatpush1.bf16.msra.mxu0 0
      %1999 = vmatprep.subr.bf16.mxu0 0
      %2000 = vmatpush1.bf16.msra.mxu0 0
      %2001 = vmatprep.subr.bf16.mxu0 0
      %2002 = vmatpush1.bf16.msra.mxu0 0
      %2003 = vmatprep.subr.bf16.mxu0 0
      %2004 = vmatpush1.bf16.msra.mxu0 0
      %2005 = vmatprep.subr.bf16.mxu0 0
      %2006 = vmatpush1.bf16.msra.mxu0 0
      %2007 = vmatprep.subr.bf16.mxu0 0
      %2008 = vmatpush1.bf16.msra.mxu0 0
      %2009 = vmatprep.subr.bf16.mxu0 0
      %2010 = vmatpush1.bf16.msra.mxu0 0
      %2011 = vmatprep.subr.bf16.mxu0 0
      %2012 = vmatpush1.bf16.msra.mxu0 0
      %2013 = vmatprep.subr.bf16.mxu0 0
      %2014 = vmatpush1.bf16.msra.mxu0 0
      %2015 = vmatprep.subr.bf16.mxu0 0
      %2016 = vmatpush1.bf16.msra.mxu0 0
      %2017 = vmatprep.subr.bf16.mxu0 0
      %2018 = vmatpush1.bf16.msra.mxu0 0
      %2019 = vmatprep.mubr.bf16.mxu0 0
      %2020 = vmatmul.mubr.bf16.gmra.mrb[0].mxu0 %v1423
      %v2021 = vpop.f32.mrb[0].mxu0
      %v2022 = vadd.f32 0.0, %v2021
      %v2023 = vpop.f32.mrb[0].mxu0
      %v2024 = vpop.f32.mrb[0].mxu0
      %v2025 = vadd.f32 0.0, %v2024
      %v2026 = vpop.f32.mrb[0].mxu0
      %2027 = vmatprep.mubr.bf16.mxu0 0
      %2028 = vmatmul.mubr.bf16.gmra.mrb[0].mxu0 %v1426
      %v2029 = vpop.f32.mrb[0].mxu0
      %v2030 = vadd.f32 0.0, %v2029
      %v2031 = vpop.f32.mrb[0].mxu0
      %v2032 = vpop.f32.mrb[0].mxu0
      %v2033 = vadd.f32 0.0, %v2032
      %v2034 = vpop.f32.mrb[0].mxu0
      %2035 = vdwg.mxu0
      %v2036 = vadd.f32 %v1913, %v2022
      %v2037 = vadd.f32 %v1914, %v2025
      %v2038 = vadd.f32 %v1915, %v2030
      %v2039 = vadd.f32 %v1916, %v2033
      %v2041 = vsel %vm227, %v1982, 0
      %v2044 = vsel %vm227, %v1983, 0
      %2046 = vmatprep.subr.bf16.mxu0 0
      %2047 = vmatpush1.bf16.msra.mxu0 %v1985
      %2048 = vmatprep.subr.bf16.mxu0 0
      %2049 = vmatpush1.bf16.msra.mxu0 0
      %2050 = vmatprep.subr.bf16.mxu0 0
      %2051 = vmatpush1.bf16.msra.mxu0 0
      %2052 = vmatprep.subr.bf16.mxu0 0
      %2053 = vmatpush1.bf16.msra.mxu0 0
      %2054 = vmatprep.subr.bf16.mxu0 0
      %2055 = vmatpush1.bf16.msra.mxu0 0
      %2056 = vmatprep.subr.bf16.mxu0 0
      %2057 = vmatpush1.bf16.msra.mxu0 0
      %2058 = vmatprep.subr.bf16.mxu0 0
      %2059 = vmatpush1.bf16.msra.mxu0 0
      %2060 = vmatprep.subr.bf16.mxu0 0
      %2061 = vmatpush1.bf16.msra.mxu0 0
      %2062 = vmatprep.subr.bf16.mxu0 0
      %2063 = vmatpush1.bf16.msra.mxu0 0
      %2064 = vmatprep.subr.bf16.mxu0 0
      %2065 = vmatpush1.bf16.msra.mxu0 0
      %2066 = vmatprep.subr.bf16.mxu0 0
      %2067 = vmatpush1.bf16.msra.mxu0 0
      %2068 = vmatprep.subr.bf16.mxu0 0
      %2069 = vmatpush1.bf16.msra.mxu0 0
      %2070 = vmatprep.subr.bf16.mxu0 0
      %2071 = vmatpush1.bf16.msra.mxu0 0
      %2072 = vmatprep.subr.bf16.mxu0 0
      %2073 = vmatpush1.bf16.msra.mxu0 0
      %2074 = vmatprep.subr.bf16.mxu0 0
      %2075 = vmatpush1.bf16.msra.mxu0 0
      %2076 = vmatprep.subr.bf16.mxu0 0
      %2077 = vmatpush1.bf16.msra.mxu0 0
      %2078 = vmatprep.mubr.bf16.mxu0 0
      %2079 = vmatmul.mubr.bf16.gmra.mrb[0].mxu0 %v2041
      %v2080 = vpop.f32.mrb[0].mxu0
      %v2081 = vadd.f32 0.0, %v2080
      %v2082 = vpop.f32.mrb[0].mxu0
      %v2083 = vpop.f32.mrb[0].mxu0
      %v2084 = vadd.f32 0.0, %v2083
      %v2085 = vpop.f32.mrb[0].mxu0
      %2086 = vmatprep.mubr.bf16.mxu0 0
      %2087 = vmatmul.mubr.bf16.gmra.mrb[0].mxu0 %v2044
      %v2088 = vpop.f32.mrb[0].mxu0
      %v2089 = vadd.f32 0.0, %v2088
      %v2090 = vpop.f32.mrb[0].mxu0
      %v2091 = vpop.f32.mrb[0].mxu0
      %v2092 = vadd.f32 0.0, %v2091
      %v2093 = vpop.f32.mrb[0].mxu0
      %2094 = vdwg.mxu0
      %v2095 = vadd.f32 %v1972, %v2081
      %v2096 = vadd.f32 %v1973, %v2084
      %v2097 = vadd.f32 %v1974, %v2089
      %v2098 = vadd.f32 %v1975, %v2092
      %s2099 = scalar_lea.vmem %s1, 30
      %v2100 = vld [vmem:[%s2099] sm:$0x3]
      %s2101 = sadd.s32 %s194, 4
      %s2102 = smul.u32 %s2101, 32
      %s2103 = scalar_lea.vmem %s183, %s2102
      %v2104 = vld [vmem:[%s2103] sm:$0xff]
      %v2105 = vld [vmem:[%s2103 + $0x8] sm:$0xff]
      %v2106 = vld [vmem:[%s2103 + $0x10] sm:$0xff]
      %v2107 = vld [vmem:[%s2103 + $0x18] sm:$0xf]
      %v2108 = vpack.c.bf16 %v2105, %v2104
      %v2109 = vpack.c.bf16 %v2107, %v2106
      %v2111 = vand.u32 %v2100, %v237
      %2113 = vmatprep.subr.bf16.mxu0 0
      %2114 = vmatpush1.bf16.msra.mxu0 %v2111
      %2115 = vmatprep.subr.bf16.mxu0 0
      %2116 = vmatpush1.bf16.msra.mxu0 0
      %2117 = vmatprep.subr.bf16.mxu0 0
      %2118 = vmatpush1.bf16.msra.mxu0 0
      %2119 = vmatprep.subr.bf16.mxu0 0
      %2120 = vmatpush1.bf16.msra.mxu0 0
      %2121 = vmatprep.subr.bf16.mxu0 0
      %2122 = vmatpush1.bf16.msra.mxu0 0
      %2123 = vmatprep.subr.bf16.mxu0 0
      %2124 = vmatpush1.bf16.msra.mxu0 0
      %2125 = vmatprep.subr.bf16.mxu0 0
      %2126 = vmatpush1.bf16.msra.mxu0 0
      %2127 = vmatprep.subr.bf16.mxu0 0
      %2128 = vmatpush1.bf16.msra.mxu0 0
      %2129 = vmatprep.subr.bf16.mxu0 0
      %2130 = vmatpush1.bf16.msra.mxu0 0
      %2131 = vmatprep.subr.bf16.mxu0 0
      %2132 = vmatpush1.bf16.msra.mxu0 0
      %2133 = vmatprep.subr.bf16.mxu0 0
      %2134 = vmatpush1.bf16.msra.mxu0 0
      %2135 = vmatprep.subr.bf16.mxu0 0
      %2136 = vmatpush1.bf16.msra.mxu0 0
      %2137 = vmatprep.subr.bf16.mxu0 0
      %2138 = vmatpush1.bf16.msra.mxu0 0
      %2139 = vmatprep.subr.bf16.mxu0 0
      %2140 = vmatpush1.bf16.msra.mxu0 0
      %2141 = vmatprep.subr.bf16.mxu0 0
      %2142 = vmatpush1.bf16.msra.mxu0 0
      %2143 = vmatprep.subr.bf16.mxu0 0
      %2144 = vmatpush1.bf16.msra.mxu0 0
      %2145 = vmatprep.mubr.bf16.mxu0 0
      %2146 = vmatmul.mubr.bf16.gmra.mrb[0].mxu0 %v1549
      %v2147 = vpop.f32.mrb[0].mxu0
      %v2148 = vadd.f32 0.0, %v2147
      %v2149 = vpop.f32.mrb[0].mxu0
      %v2150 = vpop.f32.mrb[0].mxu0
      %v2151 = vadd.f32 0.0, %v2150
      %v2152 = vpop.f32.mrb[0].mxu0
      %2153 = vmatprep.mubr.bf16.mxu0 0
      %2154 = vmatmul.mubr.bf16.gmra.mrb[0].mxu0 %v1552
      %v2155 = vpop.f32.mrb[0].mxu0
      %v2156 = vadd.f32 0.0, %v2155
      %v2157 = vpop.f32.mrb[0].mxu0
      %v2158 = vpop.f32.mrb[0].mxu0
      %v2159 = vadd.f32 0.0, %v2158
      %v2160 = vpop.f32.mrb[0].mxu0
      %2161 = vdwg.mxu0
      %v2162 = vadd.f32 %v2036, %v2148
      %v2163 = vadd.f32 %v2037, %v2151
      %v2164 = vadd.f32 %v2038, %v2156
      %v2165 = vadd.f32 %v2039, %v2159
      %v2167 = vsel %vm227, %v2108, 0
      %v2170 = vsel %vm227, %v2109, 0
      %2172 = vmatprep.subr.bf16.mxu0 0
      %2173 = vmatpush1.bf16.msra.mxu0 %v2111
      %2174 = vmatprep.subr.bf16.mxu0 0
      %2175 = vmatpush1.bf16.msra.mxu0 0
      %2176 = vmatprep.subr.bf16.mxu0 0
      %2177 = vmatpush1.bf16.msra.mxu0 0
      %2178 = vmatprep.subr.bf16.mxu0 0
      %2179 = vmatpush1.bf16.msra.mxu0 0
      %2180 = vmatprep.subr.bf16.mxu0 0
      %2181 = vmatpush1.bf16.msra.mxu0 0
      %2182 = vmatprep.subr.bf16.mxu0 0
      %2183 = vmatpush1.bf16.msra.mxu0 0
      %2184 = vmatprep.subr.bf16.mxu0 0
      %2185 = vmatpush1.bf16.msra.mxu0 0
      %2186 = vmatprep.subr.bf16.mxu0 0
      %2187 = vmatpush1.bf16.msra.mxu0 0
      %2188 = vmatprep.subr.bf16.mxu0 0
      %2189 = vmatpush1.bf16.msra.mxu0 0
      %2190 = vmatprep.subr.bf16.mxu0 0
      %2191 = vmatpush1.bf16.msra.mxu0 0
      %2192 = vmatprep.subr.bf16.mxu0 0
      %2193 = vmatpush1.bf16.msra.mxu0 0
      %2194 = vmatprep.subr.bf16.mxu0 0
      %2195 = vmatpush1.bf16.msra.mxu0 0
      %2196 = vmatprep.subr.bf16.mxu0 0
      %2197 = vmatpush1.bf16.msra.mxu0 0
      %2198 = vmatprep.subr.bf16.mxu0 0
      %2199 = vmatpush1.bf16.msra.mxu0 0
      %2200 = vmatprep.subr.bf16.mxu0 0
      %2201 = vmatpush1.bf16.msra.mxu0 0
      %2202 = vmatprep.subr.bf16.mxu0 0
      %2203 = vmatpush1.bf16.msra.mxu0 0
      %2204 = vmatprep.mubr.bf16.mxu0 0
      %2205 = vmatmul.mubr.bf16.gmra.mrb[0].mxu0 %v2167
      %v2206 = vpop.f32.mrb[0].mxu0
      %v2207 = vadd.f32 0.0, %v2206
      %v2208 = vpop.f32.mrb[0].mxu0
      %v2209 = vpop.f32.mrb[0].mxu0
      %v2210 = vadd.f32 0.0, %v2209
      %v2211 = vpop.f32.mrb[0].mxu0
      %2212 = vmatprep.mubr.bf16.mxu0 0
      %2213 = vmatmul.mubr.bf16.gmra.mrb[0].mxu0 %v2170
      %v2214 = vpop.f32.mrb[0].mxu0
      %v2215 = vadd.f32 0.0, %v2214
      %v2216 = vpop.f32.mrb[0].mxu0
      %v2217 = vpop.f32.mrb[0].mxu0
      %v2218 = vadd.f32 0.0, %v2217
      %v2219 = vpop.f32.mrb[0].mxu0
      %2220 = vdwg.mxu0
      %v2221 = vadd.f32 %v2095, %v2207
      %v2222 = vadd.f32 %v2096, %v2210
      %v2223 = vadd.f32 %v2097, %v2215
      %v2224 = vadd.f32 %v2098, %v2218
      %s2225 = scalar_lea.vmem %s1, 32
      %v2226 = vld [vmem:[%s2225] sm:$0x3]
      %v2227 = vld [vmem:[%s2103 + $0x1] sm:$0xff]
      %v2228 = vld [vmem:[%s2103 + $0x9] sm:$0xff]
      %v2229 = vld [vmem:[%s2103 + $0x11] sm:$0xff]
      %v2230 = vld [vmem:[%s2103 + $0x19] sm:$0xf]
      %v2231 = vpack.c.bf16 %v2228, %v2227
      %v2232 = vpack.c.bf16 %v2230, %v2229
      %v2234 = vand.u32 %v2226, %v237
      %2236 = vmatprep.subr.bf16.mxu0 0
      %2237 = vmatpush1.bf16.msra.mxu0 %v2234
      %2238 = vmatprep.subr.bf16.mxu0 0
      %2239 = vmatpush1.bf16.msra.mxu0 0
      %2240 = vmatprep.subr.bf16.mxu0 0
      %2241 = vmatpush1.bf16.msra.mxu0 0
      %2242 = vmatprep.subr.bf16.mxu0 0
      %2243 = vmatpush1.bf16.msra.mxu0 0
      %2244 = vmatprep.subr.bf16.mxu0 0
      %2245 = vmatpush1.bf16.msra.mxu0 0
      %2246 = vmatprep.subr.bf16.mxu0 0
      %2247 = vmatpush1.bf16.msra.mxu0 0
      %2248 = vmatprep.subr.bf16.mxu0 0
      %2249 = vmatpush1.bf16.msra.mxu0 0
      %2250 = vmatprep.subr.bf16.mxu0 0
      %2251 = vmatpush1.bf16.msra.mxu0 0
      %2252 = vmatprep.subr.bf16.mxu0 0
      %2253 = vmatpush1.bf16.msra.mxu0 0
      %2254 = vmatprep.subr.bf16.mxu0 0
      %2255 = vmatpush1.bf16.msra.mxu0 0
      %2256 = vmatprep.subr.bf16.mxu0 0
      %2257 = vmatpush1.bf16.msra.mxu0 0
      %2258 = vmatprep.subr.bf16.mxu0 0
      %2259 = vmatpush1.bf16.msra.mxu0 0
      %2260 = vmatprep.subr.bf16.mxu0 0
      %2261 = vmatpush1.bf16.msra.mxu0 0
      %2262 = vmatprep.subr.bf16.mxu0 0
      %2263 = vmatpush1.bf16.msra.mxu0 0
      %2264 = vmatprep.subr.bf16.mxu0 0
      %2265 = vmatpush1.bf16.msra.mxu0 0
      %2266 = vmatprep.subr.bf16.mxu0 0
      %2267 = vmatpush1.bf16.msra.mxu0 0
      %2268 = vmatprep.mubr.bf16.mxu0 0
      %2269 = vmatmul.mubr.bf16.gmra.mrb[0].mxu0 %v1672
      %v2270 = vpop.f32.mrb[0].mxu0
      %v2271 = vadd.f32 0.0, %v2270
      %v2272 = vpop.f32.mrb[0].mxu0
      %v2273 = vpop.f32.mrb[0].mxu0
      %v2274 = vadd.f32 0.0, %v2273
      %v2275 = vpop.f32.mrb[0].mxu0
      %2276 = vmatprep.mubr.bf16.mxu0 0
      %2277 = vmatmul.mubr.bf16.gmra.mrb[0].mxu0 %v1675
      %v2278 = vpop.f32.mrb[0].mxu0
      %v2279 = vadd.f32 0.0, %v2278
      %v2280 = vpop.f32.mrb[0].mxu0
      %v2281 = vpop.f32.mrb[0].mxu0
      %v2282 = vadd.f32 0.0, %v2281
      %v2283 = vpop.f32.mrb[0].mxu0
      %2284 = vdwg.mxu0
      %v2285 = vadd.f32 %v2162, %v2271
      %v2286 = vadd.f32 %v2163, %v2274
      %v2287 = vadd.f32 %v2164, %v2279
      %v2288 = vadd.f32 %v2165, %v2282
      %v2290 = vsel %vm227, %v2231, 0
      %v2293 = vsel %vm227, %v2232, 0
      %2295 = vmatprep.subr.bf16.mxu0 0
      %2296 = vmatpush1.bf16.msra.mxu0 %v2234
      %2297 = vmatprep.subr.bf16.mxu0 0
      %2298 = vmatpush1.bf16.msra.mxu0 0
      %2299 = vmatprep.subr.bf16.mxu0 0
      %2300 = vmatpush1.bf16.msra.mxu0 0
      %2301 = vmatprep.subr.bf16.mxu0 0
      %2302 = vmatpush1.bf16.msra.mxu0 0
      %2303 = vmatprep.subr.bf16.mxu0 0
      %2304 = vmatpush1.bf16.msra.mxu0 0
      %2305 = vmatprep.subr.bf16.mxu0 0
      %2306 = vmatpush1.bf16.msra.mxu0 0
      %2307 = vmatprep.subr.bf16.mxu0 0
      %2308 = vmatpush1.bf16.msra.mxu0 0
      %2309 = vmatprep.subr.bf16.mxu0 0
      %2310 = vmatpush1.bf16.msra.mxu0 0
      %2311 = vmatprep.subr.bf16.mxu0 0
      %2312 = vmatpush1.bf16.msra.mxu0 0
      %2313 = vmatprep.subr.bf16.mxu0 0
      %2314 = vmatpush1.bf16.msra.mxu0 0
      %2315 = vmatprep.subr.bf16.mxu0 0
      %2316 = vmatpush1.bf16.msra.mxu0 0
      %2317 = vmatprep.subr.bf16.mxu0 0
      %2318 = vmatpush1.bf16.msra.mxu0 0
      %2319 = vmatprep.subr.bf16.mxu0 0
      %2320 = vmatpush1.bf16.msra.mxu0 0
      %2321 = vmatprep.subr.bf16.mxu0 0
      %2322 = vmatpush1.bf16.msra.mxu0 0
      %2323 = vmatprep.subr.bf16.mxu0 0
      %2324 = vmatpush1.bf16.msra.mxu0 0
      %2325 = vmatprep.subr.bf16.mxu0 0
      %2326 = vmatpush1.bf16.msra.mxu0 0
      %2327 = vmatprep.mubr.bf16.mxu0 0
      %2328 = vmatmul.mubr.bf16.gmra.mrb[0].mxu0 %v2290
      %v2329 = vpop.f32.mrb[0].mxu0
      %v2330 = vadd.f32 0.0, %v2329
      %v2331 = vpop.f32.mrb[0].mxu0
      %v2332 = vpop.f32.mrb[0].mxu0
      %v2333 = vadd.f32 0.0, %v2332
      %v2334 = vpop.f32.mrb[0].mxu0
      %2335 = vmatprep.mubr.bf16.mxu0 0
      %2336 = vmatmul.mubr.bf16.gmra.mrb[0].mxu0 %v2293
      %v2337 = vpop.f32.mrb[0].mxu0
      %v2338 = vadd.f32 0.0, %v2337
      %v2339 = vpop.f32.mrb[0].mxu0
      %v2340 = vpop.f32.mrb[0].mxu0
      %v2341 = vadd.f32 0.0, %v2340
      %v2342 = vpop.f32.mrb[0].mxu0
      %2343 = vdwg.mxu0
      %v2344 = vadd.f32 %v2221, %v2330
      %v2345 = vadd.f32 %v2222, %v2333
      %v2346 = vadd.f32 %v2223, %v2338
      %v2347 = vadd.f32 %v2224, %v2341
      %s2348 = scalar_lea.vmem %s1, 34
      %v2349 = vld [vmem:[%s2348] sm:$0x3]
      %v2350 = vld [vmem:[%s2103 + $0x2] sm:$0xff]
      %v2351 = vld [vmem:[%s2103 + $0xa] sm:$0xff]
      %v2352 = vld [vmem:[%s2103 + $0x12] sm:$0xff]
      %v2353 = vld [vmem:[%s2103 + $0x1a] sm:$0xf]
      %v2354 = vpack.c.bf16 %v2351, %v2350
      %v2355 = vpack.c.bf16 %v2353, %v2352
      %v2357 = vand.u32 %v2349, %v237
      %2359 = vmatprep.subr.bf16.mxu0 0
      %2360 = vmatpush1.bf16.msra.mxu0 %v2357
      %2361 = vmatprep.subr.bf16.mxu0 0
      %2362 = vmatpush1.bf16.msra.mxu0 0
      %2363 = vmatprep.subr.bf16.mxu0 0
      %2364 = vmatpush1.bf16.msra.mxu0 0
      %2365 = vmatprep.subr.bf16.mxu0 0
      %2366 = vmatpush1.bf16.msra.mxu0 0
      %2367 = vmatprep.subr.bf16.mxu0 0
      %2368 = vmatpush1.bf16.msra.mxu0 0
      %2369 = vmatprep.subr.bf16.mxu0 0
      %2370 = vmatpush1.bf16.msra.mxu0 0
      %2371 = vmatprep.subr.bf16.mxu0 0
      %2372 = vmatpush1.bf16.msra.mxu0 0
      %2373 = vmatprep.subr.bf16.mxu0 0
      %2374 = vmatpush1.bf16.msra.mxu0 0
      %2375 = vmatprep.subr.bf16.mxu0 0
      %2376 = vmatpush1.bf16.msra.mxu0 0
      %2377 = vmatprep.subr.bf16.mxu0 0
      %2378 = vmatpush1.bf16.msra.mxu0 0
      %2379 = vmatprep.subr.bf16.mxu0 0
      %2380 = vmatpush1.bf16.msra.mxu0 0
      %2381 = vmatprep.subr.bf16.mxu0 0
      %2382 = vmatpush1.bf16.msra.mxu0 0
      %2383 = vmatprep.subr.bf16.mxu0 0
      %2384 = vmatpush1.bf16.msra.mxu0 0
      %2385 = vmatprep.subr.bf16.mxu0 0
      %2386 = vmatpush1.bf16.msra.mxu0 0
      %2387 = vmatprep.subr.bf16.mxu0 0
      %2388 = vmatpush1.bf16.msra.mxu0 0
      %2389 = vmatprep.subr.bf16.mxu0 0
      %2390 = vmatpush1.bf16.msra.mxu0 0
      %2391 = vmatprep.mubr.bf16.mxu0 0
      %2392 = vmatmul.mubr.bf16.gmra.mrb[0].mxu0 %v1795
      %v2393 = vpop.f32.mrb[0].mxu0
      %v2394 = vadd.f32 0.0, %v2393
      %v2395 = vpop.f32.mrb[0].mxu0
      %v2396 = vpop.f32.mrb[0].mxu0
      %v2397 = vadd.f32 0.0, %v2396
      %v2398 = vpop.f32.mrb[0].mxu0
      %2399 = vmatprep.mubr.bf16.mxu0 0
      %2400 = vmatmul.mubr.bf16.gmra.mrb[0].mxu0 %v1798
      %v2401 = vpop.f32.mrb[0].mxu0
      %v2402 = vadd.f32 0.0, %v2401
      %v2403 = vpop.f32.mrb[0].mxu0
      %v2404 = vpop.f32.mrb[0].mxu0
      %v2405 = vadd.f32 0.0, %v2404
      %v2406 = vpop.f32.mrb[0].mxu0
      %2407 = vdwg.mxu0
      %v2408 = vadd.f32 %v2285, %v2394
      %v2409 = vadd.f32 %v2286, %v2397
      %v2410 = vadd.f32 %v2287, %v2402
      %v2411 = vadd.f32 %v2288, %v2405
      %v2413 = vsel %vm227, %v2354, 0
      %v2416 = vsel %vm227, %v2355, 0
      %2418 = vmatprep.subr.bf16.mxu0 0
      %2419 = vmatpush1.bf16.msra.mxu0 %v2357
      %2420 = vmatprep.subr.bf16.mxu0 0
      %2421 = vmatpush1.bf16.msra.mxu0 0
      %2422 = vmatprep.subr.bf16.mxu0 0
      %2423 = vmatpush1.bf16.msra.mxu0 0
      %2424 = vmatprep.subr.bf16.mxu0 0
      %2425 = vmatpush1.bf16.msra.mxu0 0
      %2426 = vmatprep.subr.bf16.mxu0 0
      %2427 = vmatpush1.bf16.msra.mxu0 0
      %2428 = vmatprep.subr.bf16.mxu0 0
      %2429 = vmatpush1.bf16.msra.mxu0 0
      %2430 = vmatprep.subr.bf16.mxu0 0
      %2431 = vmatpush1.bf16.msra.mxu0 0
      %2432 = vmatprep.subr.bf16.mxu0 0
      %2433 = vmatpush1.bf16.msra.mxu0 0
      %2434 = vmatprep.subr.bf16.mxu0 0
      %2435 = vmatpush1.bf16.msra.mxu0 0
      %2436 = vmatprep.subr.bf16.mxu0 0
      %2437 = vmatpush1.bf16.msra.mxu0 0
      %2438 = vmatprep.subr.bf16.mxu0 0
      %2439 = vmatpush1.bf16.msra.mxu0 0
      %2440 = vmatprep.subr.bf16.mxu0 0
      %2441 = vmatpush1.bf16.msra.mxu0 0
      %2442 = vmatprep.subr.bf16.mxu0 0
      %2443 = vmatpush1.bf16.msra.mxu0 0
      %2444 = vmatprep.subr.bf16.mxu0 0
      %2445 = vmatpush1.bf16.msra.mxu0 0
      %2446 = vmatprep.subr.bf16.mxu0 0
      %2447 = vmatpush1.bf16.msra.mxu0 0
      %2448 = vmatprep.subr.bf16.mxu0 0
      %2449 = vmatpush1.bf16.msra.mxu0 0
      %2450 = vmatprep.mubr.bf16.mxu0 0
      %2451 = vmatmul.mubr.bf16.gmra.mrb[0].mxu0 %v2413
      %v2452 = vpop.f32.mrb[0].mxu0
      %v2453 = vadd.f32 0.0, %v2452
      %v2454 = vpop.f32.mrb[0].mxu0
      %v2455 = vpop.f32.mrb[0].mxu0
      %v2456 = vadd.f32 0.0, %v2455
      %v2457 = vpop.f32.mrb[0].mxu0
      %2458 = vmatprep.mubr.bf16.mxu0 0
      %2459 = vmatmul.mubr.bf16.gmra.mrb[0].mxu0 %v2416
      %v2460 = vpop.f32.mrb[0].mxu0
      %v2461 = vadd.f32 0.0, %v2460
      %v2462 = vpop.f32.mrb[0].mxu0
      %v2463 = vpop.f32.mrb[0].mxu0
      %v2464 = vadd.f32 0.0, %v2463
      %v2465 = vpop.f32.mrb[0].mxu0
      %2466 = vdwg.mxu0
      %v2467 = vadd.f32 %v2344, %v2453
      %v2468 = vadd.f32 %v2345, %v2456
      %v2469 = vadd.f32 %v2346, %v2461
      %v2470 = vadd.f32 %v2347, %v2464
      %s2471 = scalar_lea.vmem %s1, 36
      %v2472 = vld [vmem:[%s2471] sm:$0x3]
      %v2473 = vld [vmem:[%s2103 + $0x3] sm:$0xff]
      %v2474 = vld [vmem:[%s2103 + $0xb] sm:$0xff]
      %v2475 = vld [vmem:[%s2103 + $0x13] sm:$0xff]
      %v2476 = vld [vmem:[%s2103 + $0x1b] sm:$0xf]
      %v2477 = vpack.c.bf16 %v2474, %v2473
      %v2478 = vpack.c.bf16 %v2476, %v2475
      %v2480 = vand.u32 %v2472, %v237
      %2482 = vmatprep.subr.bf16.mxu0 0
      %2483 = vmatpush1.bf16.msra.mxu0 %v2480
      %2484 = vmatprep.subr.bf16.mxu0 0
      %2485 = vmatpush1.bf16.msra.mxu0 0
      %2486 = vmatprep.subr.bf16.mxu0 0
      %2487 = vmatpush1.bf16.msra.mxu0 0
      %2488 = vmatprep.subr.bf16.mxu0 0
      %2489 = vmatpush1.bf16.msra.mxu0 0
      %2490 = vmatprep.subr.bf16.mxu0 0
      %2491 = vmatpush1.bf16.msra.mxu0 0
      %2492 = vmatprep.subr.bf16.mxu0 0
      %2493 = vmatpush1.bf16.msra.mxu0 0
      %2494 = vmatprep.subr.bf16.mxu0 0
      %2495 = vmatpush1.bf16.msra.mxu0 0
      %2496 = vmatprep.subr.bf16.mxu0 0
      %2497 = vmatpush1.bf16.msra.mxu0 0
      %2498 = vmatprep.subr.bf16.mxu0 0
      %2499 = vmatpush1.bf16.msra.mxu0 0
      %2500 = vmatprep.subr.bf16.mxu0 0
      %2501 = vmatpush1.bf16.msra.mxu0 0
      %2502 = vmatprep.subr.bf16.mxu0 0
      %2503 = vmatpush1.bf16.msra.mxu0 0
      %2504 = vmatprep.subr.bf16.mxu0 0
      %2505 = vmatpush1.bf16.msra.mxu0 0
      %2506 = vmatprep.subr.bf16.mxu0 0
      %2507 = vmatpush1.bf16.msra.mxu0 0
      %2508 = vmatprep.subr.bf16.mxu0 0
      %2509 = vmatpush1.bf16.msra.mxu0 0
      %2510 = vmatprep.subr.bf16.mxu0 0
      %2511 = vmatpush1.bf16.msra.mxu0 0
      %2512 = vmatprep.subr.bf16.mxu0 0
      %2513 = vmatpush1.bf16.msra.mxu0 0
      %2514 = vmatprep.mubr.bf16.mxu0 0
      %2515 = vmatmul.mubr.bf16.gmra.mrb[0].mxu0 %v1918
      %v2516 = vpop.f32.mrb[0].mxu0
      %v2517 = vadd.f32 0.0, %v2516
      %v2518 = vpop.f32.mrb[0].mxu0
      %v2519 = vpop.f32.mrb[0].mxu0
      %v2520 = vadd.f32 0.0, %v2519
      %v2521 = vpop.f32.mrb[0].mxu0
      %2522 = vmatprep.mubr.bf16.mxu0 0
      %2523 = vmatmul.mubr.bf16.gmra.mrb[0].mxu0 %v1921
      %v2524 = vpop.f32.mrb[0].mxu0
      %v2525 = vadd.f32 0.0, %v2524
      %v2526 = vpop.f32.mrb[0].mxu0
      %v2527 = vpop.f32.mrb[0].mxu0
      %v2528 = vadd.f32 0.0, %v2527
      %v2529 = vpop.f32.mrb[0].mxu0
      %2530 = vdwg.mxu0
      %v2531 = vadd.f32 %v2408, %v2517
      %v2532 = vadd.f32 %v2409, %v2520
      %v2533 = vadd.f32 %v2410, %v2525
      %v2534 = vadd.f32 %v2411, %v2528
      %v2536 = vsel %vm227, %v2477, 0
      %v2539 = vsel %vm227, %v2478, 0
      %2541 = vmatprep.subr.bf16.mxu0 0
      %2542 = vmatpush1.bf16.msra.mxu0 %v2480
      %2543 = vmatprep.subr.bf16.mxu0 0
      %2544 = vmatpush1.bf16.msra.mxu0 0
      %2545 = vmatprep.subr.bf16.mxu0 0
      %2546 = vmatpush1.bf16.msra.mxu0 0
      %2547 = vmatprep.subr.bf16.mxu0 0
      %2548 = vmatpush1.bf16.msra.mxu0 0
      %2549 = vmatprep.subr.bf16.mxu0 0
      %2550 = vmatpush1.bf16.msra.mxu0 0
      %2551 = vmatprep.subr.bf16.mxu0 0
      %2552 = vmatpush1.bf16.msra.mxu0 0
      %2553 = vmatprep.subr.bf16.mxu0 0
      %2554 = vmatpush1.bf16.msra.mxu0 0
      %2555 = vmatprep.subr.bf16.mxu0 0
      %2556 = vmatpush1.bf16.msra.mxu0 0
      %2557 = vmatprep.subr.bf16.mxu0 0
      %2558 = vmatpush1.bf16.msra.mxu0 0
      %2559 = vmatprep.subr.bf16.mxu0 0
      %2560 = vmatpush1.bf16.msra.mxu0 0
      %2561 = vmatprep.subr.bf16.mxu0 0
      %2562 = vmatpush1.bf16.msra.mxu0 0
      %2563 = vmatprep.subr.bf16.mxu0 0
      %2564 = vmatpush1.bf16.msra.mxu0 0
      %2565 = vmatprep.subr.bf16.mxu0 0
      %2566 = vmatpush1.bf16.msra.mxu0 0
      %2567 = vmatprep.subr.bf16.mxu0 0
      %2568 = vmatpush1.bf16.msra.mxu0 0
      %2569 = vmatprep.subr.bf16.mxu0 0
      %2570 = vmatpush1.bf16.msra.mxu0 0
      %2571 = vmatprep.subr.bf16.mxu0 0
      %2572 = vmatpush1.bf16.msra.mxu0 0
      %2573 = vmatprep.mubr.bf16.mxu0 0
      %2574 = vmatmul.mubr.bf16.gmra.mrb[0].mxu0 %v2536
      %v2575 = vpop.f32.mrb[0].mxu0
      %v2576 = vadd.f32 0.0, %v2575
      %v2577 = vpop.f32.mrb[0].mxu0
      %v2578 = vpop.f32.mrb[0].mxu0
      %v2579 = vadd.f32 0.0, %v2578
      %v2580 = vpop.f32.mrb[0].mxu0
      %2581 = vmatprep.mubr.bf16.mxu0 0
      %2582 = vmatmul.mubr.bf16.gmra.mrb[0].mxu0 %v2539
      %v2583 = vpop.f32.mrb[0].mxu0
      %v2584 = vadd.f32 0.0, %v2583
      %v2585 = vpop.f32.mrb[0].mxu0
      %v2586 = vpop.f32.mrb[0].mxu0
      %v2587 = vadd.f32 0.0, %v2586
      %v2588 = vpop.f32.mrb[0].mxu0
      %2589 = vdwg.mxu0
      %v2590 = vadd.f32 %v2467, %v2576
      %v2591 = vadd.f32 %v2468, %v2579
      %v2592 = vadd.f32 %v2469, %v2584
      %v2593 = vadd.f32 %v2470, %v2587
      %s2594 = scalar_lea.vmem %s1, 38
      %v2595 = vld [vmem:[%s2594] sm:$0x3]
      %v2596 = vld [vmem:[%s2103 + $0x4] sm:$0xff]
      %v2597 = vld [vmem:[%s2103 + $0xc] sm:$0xff]
      %v2598 = vld [vmem:[%s2103 + $0x14] sm:$0xff]
      %v2599 = vld [vmem:[%s2103 + $0x1c] sm:$0xf]
      %v2600 = vpack.c.bf16 %v2597, %v2596
      %v2601 = vpack.c.bf16 %v2599, %v2598
      %v2603 = vand.u32 %v2595, %v237
      %2605 = vmatprep.subr.bf16.mxu0 0
      %2606 = vmatpush1.bf16.msra.mxu0 %v2603
      %2607 = vmatprep.subr.bf16.mxu0 0
      %2608 = vmatpush1.bf16.msra.mxu0 0
      %2609 = vmatprep.subr.bf16.mxu0 0
      %2610 = vmatpush1.bf16.msra.mxu0 0
      %2611 = vmatprep.subr.bf16.mxu0 0
      %2612 = vmatpush1.bf16.msra.mxu0 0
      %2613 = vmatprep.subr.bf16.mxu0 0
      %2614 = vmatpush1.bf16.msra.mxu0 0
      %2615 = vmatprep.subr.bf16.mxu0 0
      %2616 = vmatpush1.bf16.msra.mxu0 0
      %2617 = vmatprep.subr.bf16.mxu0 0
      %2618 = vmatpush1.bf16.msra.mxu0 0
      %2619 = vmatprep.subr.bf16.mxu0 0
      %2620 = vmatpush1.bf16.msra.mxu0 0
      %2621 = vmatprep.subr.bf16.mxu0 0
      %2622 = vmatpush1.bf16.msra.mxu0 0
      %2623 = vmatprep.subr.bf16.mxu0 0
      %2624 = vmatpush1.bf16.msra.mxu0 0
      %2625 = vmatprep.subr.bf16.mxu0 0
      %2626 = vmatpush1.bf16.msra.mxu0 0
      %2627 = vmatprep.subr.bf16.mxu0 0
      %2628 = vmatpush1.bf16.msra.mxu0 0
      %2629 = vmatprep.subr.bf16.mxu0 0
      %2630 = vmatpush1.bf16.msra.mxu0 0
      %2631 = vmatprep.subr.bf16.mxu0 0
      %2632 = vmatpush1.bf16.msra.mxu0 0
      %2633 = vmatprep.subr.bf16.mxu0 0
      %2634 = vmatpush1.bf16.msra.mxu0 0
      %2635 = vmatprep.subr.bf16.mxu0 0
      %2636 = vmatpush1.bf16.msra.mxu0 0
      %2637 = vmatprep.mubr.bf16.mxu0 0
      %2638 = vmatmul.mubr.bf16.gmra.mrb[0].mxu0 %v2041
      %v2639 = vpop.f32.mrb[0].mxu0
      %v2640 = vadd.f32 0.0, %v2639
      %v2641 = vpop.f32.mrb[0].mxu0
      %v2642 = vpop.f32.mrb[0].mxu0
      %v2643 = vadd.f32 0.0, %v2642
      %v2644 = vpop.f32.mrb[0].mxu0
      %2645 = vmatprep.mubr.bf16.mxu0 0
      %2646 = vmatmul.mubr.bf16.gmra.mrb[0].mxu0 %v2044
      %v2647 = vpop.f32.mrb[0].mxu0
      %v2648 = vadd.f32 0.0, %v2647
      %v2649 = vpop.f32.mrb[0].mxu0
      %v2650 = vpop.f32.mrb[0].mxu0
      %v2651 = vadd.f32 0.0, %v2650
      %v2652 = vpop.f32.mrb[0].mxu0
      %2653 = vdwg.mxu0
      %v2654 = vadd.f32 %v2531, %v2640
      %v2655 = vadd.f32 %v2532, %v2643
      %v2656 = vadd.f32 %v2533, %v2648
      %v2657 = vadd.f32 %v2534, %v2651
      %v2659 = vsel %vm227, %v2600, 0
      %v2662 = vsel %vm227, %v2601, 0
      %2664 = vmatprep.subr.bf16.mxu0 0
      %2665 = vmatpush1.bf16.msra.mxu0 %v2603
      %2666 = vmatprep.subr.bf16.mxu0 0
      %2667 = vmatpush1.bf16.msra.mxu0 0
      %2668 = vmatprep.subr.bf16.mxu0 0
      %2669 = vmatpush1.bf16.msra.mxu0 0
      %2670 = vmatprep.subr.bf16.mxu0 0
      %2671 = vmatpush1.bf16.msra.mxu0 0
      %2672 = vmatprep.subr.bf16.mxu0 0
      %2673 = vmatpush1.bf16.msra.mxu0 0
      %2674 = vmatprep.subr.bf16.mxu0 0
      %2675 = vmatpush1.bf16.msra.mxu0 0
      %2676 = vmatprep.subr.bf16.mxu0 0
      %2677 = vmatpush1.bf16.msra.mxu0 0
      %2678 = vmatprep.subr.bf16.mxu0 0
      %2679 = vmatpush1.bf16.msra.mxu0 0
      %2680 = vmatprep.subr.bf16.mxu0 0
      %2681 = vmatpush1.bf16.msra.mxu0 0
      %2682 = vmatprep.subr.bf16.mxu0 0
      %2683 = vmatpush1.bf16.msra.mxu0 0
      %2684 = vmatprep.subr.bf16.mxu0 0
      %2685 = vmatpush1.bf16.msra.mxu0 0
      %2686 = vmatprep.subr.bf16.mxu0 0
      %2687 = vmatpush1.bf16.msra.mxu0 0
      %2688 = vmatprep.subr.bf16.mxu0 0
      %2689 = vmatpush1.bf16.msra.mxu0 0
      %2690 = vmatprep.subr.bf16.mxu0 0
      %2691 = vmatpush1.bf16.msra.mxu0 0
      %2692 = vmatprep.subr.bf16.mxu0 0
      %2693 = vmatpush1.bf16.msra.mxu0 0
      %2694 = vmatprep.subr.bf16.mxu0 0
      %2695 = vmatpush1.bf16.msra.mxu0 0
      %2696 = vmatprep.mubr.bf16.mxu0 0
      %2697 = vmatmul.mubr.bf16.gmra.mrb[0].mxu0 %v2659
      %v2698 = vpop.f32.mrb[0].mxu0
      %v2699 = vadd.f32 0.0, %v2698
      %v2700 = vpop.f32.mrb[0].mxu0
      %v2701 = vpop.f32.mrb[0].mxu0
      %v2702 = vadd.f32 0.0, %v2701
      %v2703 = vpop.f32.mrb[0].mxu0
      %2704 = vmatprep.mubr.bf16.mxu0 0
      %2705 = vmatmul.mubr.bf16.gmra.mrb[0].mxu0 %v2662
      %v2706 = vpop.f32.mrb[0].mxu0
      %v2707 = vadd.f32 0.0, %v2706
      %v2708 = vpop.f32.mrb[0].mxu0
      %v2709 = vpop.f32.mrb[0].mxu0
      %v2710 = vadd.f32 0.0, %v2709
      %v2711 = vpop.f32.mrb[0].mxu0
      %2712 = vdwg.mxu0
      %v2713 = vadd.f32 %v2590, %v2699
      %v2714 = vadd.f32 %v2591, %v2702
      %v2715 = vadd.f32 %v2592, %v2707
      %v2716 = vadd.f32 %v2593, %v2710
      %s2717 = scalar_lea.vmem %s1, 40
      %v2718 = vld [vmem:[%s2717] sm:$0x3]
      %s2719 = sadd.s32 %s194, 5
      %s2720 = smul.u32 %s2719, 32
      %s2721 = scalar_lea.vmem %s183, %s2720
      %v2722 = vld [vmem:[%s2721] sm:$0xff]
      %v2723 = vld [vmem:[%s2721 + $0x8] sm:$0xff]
      %v2724 = vld [vmem:[%s2721 + $0x10] sm:$0xff]
      %v2725 = vld [vmem:[%s2721 + $0x18] sm:$0xf]
      %v2726 = vpack.c.bf16 %v2723, %v2722
      %v2727 = vpack.c.bf16 %v2725, %v2724
      %v2729 = vand.u32 %v2718, %v237
      %2731 = vmatprep.subr.bf16.mxu0 0
      %2732 = vmatpush1.bf16.msra.mxu0 %v2729
      %2733 = vmatprep.subr.bf16.mxu0 0
      %2734 = vmatpush1.bf16.msra.mxu0 0
      %2735 = vmatprep.subr.bf16.mxu0 0
      %2736 = vmatpush1.bf16.msra.mxu0 0
      %2737 = vmatprep.subr.bf16.mxu0 0
      %2738 = vmatpush1.bf16.msra.mxu0 0
      %2739 = vmatprep.subr.bf16.mxu0 0
      %2740 = vmatpush1.bf16.msra.mxu0 0
      %2741 = vmatprep.subr.bf16.mxu0 0
      %2742 = vmatpush1.bf16.msra.mxu0 0
      %2743 = vmatprep.subr.bf16.mxu0 0
      %2744 = vmatpush1.bf16.msra.mxu0 0
      %2745 = vmatprep.subr.bf16.mxu0 0
      %2746 = vmatpush1.bf16.msra.mxu0 0
      %2747 = vmatprep.subr.bf16.mxu0 0
      %2748 = vmatpush1.bf16.msra.mxu0 0
      %2749 = vmatprep.subr.bf16.mxu0 0
      %2750 = vmatpush1.bf16.msra.mxu0 0
      %2751 = vmatprep.subr.bf16.mxu0 0
      %2752 = vmatpush1.bf16.msra.mxu0 0
      %2753 = vmatprep.subr.bf16.mxu0 0
      %2754 = vmatpush1.bf16.msra.mxu0 0
      %2755 = vmatprep.subr.bf16.mxu0 0
      %2756 = vmatpush1.bf16.msra.mxu0 0
      %2757 = vmatprep.subr.bf16.mxu0 0
      %2758 = vmatpush1.bf16.msra.mxu0 0
      %2759 = vmatprep.subr.bf16.mxu0 0
      %2760 = vmatpush1.bf16.msra.mxu0 0
      %2761 = vmatprep.subr.bf16.mxu0 0
      %2762 = vmatpush1.bf16.msra.mxu0 0
      %2763 = vmatprep.mubr.bf16.mxu0 0
      %2764 = vmatmul.mubr.bf16.gmra.mrb[0].mxu0 %v2167
      %v2765 = vpop.f32.mrb[0].mxu0
      %v2766 = vadd.f32 0.0, %v2765
      %v2767 = vpop.f32.mrb[0].mxu0
      %v2768 = vpop.f32.mrb[0].mxu0
      %v2769 = vadd.f32 0.0, %v2768
      %v2770 = vpop.f32.mrb[0].mxu0
      %2771 = vmatprep.mubr.bf16.mxu0 0
      %2772 = vmatmul.mubr.bf16.gmra.mrb[0].mxu0 %v2170
      %v2773 = vpop.f32.mrb[0].mxu0
      %v2774 = vadd.f32 0.0, %v2773
      %v2775 = vpop.f32.mrb[0].mxu0
      %v2776 = vpop.f32.mrb[0].mxu0
      %v2777 = vadd.f32 0.0, %v2776
      %v2778 = vpop.f32.mrb[0].mxu0
      %2779 = vdwg.mxu0
      %v2780 = vadd.f32 %v2654, %v2766
      %v2781 = vadd.f32 %v2655, %v2769
      %v2782 = vadd.f32 %v2656, %v2774
      %v2783 = vadd.f32 %v2657, %v2777
      %v2785 = vsel %vm227, %v2726, 0
      %v2788 = vsel %vm227, %v2727, 0
      %2790 = vmatprep.subr.bf16.mxu0 0
      %2791 = vmatpush1.bf16.msra.mxu0 %v2729
      %2792 = vmatprep.subr.bf16.mxu0 0
      %2793 = vmatpush1.bf16.msra.mxu0 0
      %2794 = vmatprep.subr.bf16.mxu0 0
      %2795 = vmatpush1.bf16.msra.mxu0 0
      %2796 = vmatprep.subr.bf16.mxu0 0
      %2797 = vmatpush1.bf16.msra.mxu0 0
      %2798 = vmatprep.subr.bf16.mxu0 0
      %2799 = vmatpush1.bf16.msra.mxu0 0
      %2800 = vmatprep.subr.bf16.mxu0 0
      %2801 = vmatpush1.bf16.msra.mxu0 0
      %2802 = vmatprep.subr.bf16.mxu0 0
      %2803 = vmatpush1.bf16.msra.mxu0 0
      %2804 = vmatprep.subr.bf16.mxu0 0
      %2805 = vmatpush1.bf16.msra.mxu0 0
      %2806 = vmatprep.subr.bf16.mxu0 0
      %2807 = vmatpush1.bf16.msra.mxu0 0
      %2808 = vmatprep.subr.bf16.mxu0 0
      %2809 = vmatpush1.bf16.msra.mxu0 0
      %2810 = vmatprep.subr.bf16.mxu0 0
      %2811 = vmatpush1.bf16.msra.mxu0 0
      %2812 = vmatprep.subr.bf16.mxu0 0
      %2813 = vmatpush1.bf16.msra.mxu0 0
      %2814 = vmatprep.subr.bf16.mxu0 0
      %2815 = vmatpush1.bf16.msra.mxu0 0
      %2816 = vmatprep.subr.bf16.mxu0 0
      %2817 = vmatpush1.bf16.msra.mxu0 0
      %2818 = vmatprep.subr.bf16.mxu0 0
      %2819 = vmatpush1.bf16.msra.mxu0 0
      %2820 = vmatprep.subr.bf16.mxu0 0
      %2821 = vmatpush1.bf16.msra.mxu0 0
      %2822 = vmatprep.mubr.bf16.mxu0 0
      %2823 = vmatmul.mubr.bf16.gmra.mrb[0].mxu0 %v2785
      %v2824 = vpop.f32.mrb[0].mxu0
      %v2825 = vadd.f32 0.0, %v2824
      %v2826 = vpop.f32.mrb[0].mxu0
      %v2827 = vpop.f32.mrb[0].mxu0
      %v2828 = vadd.f32 0.0, %v2827
      %v2829 = vpop.f32.mrb[0].mxu0
      %2830 = vmatprep.mubr.bf16.mxu0 0
      %2831 = vmatmul.mubr.bf16.gmra.mrb[0].mxu0 %v2788
      %v2832 = vpop.f32.mrb[0].mxu0
      %v2833 = vadd.f32 0.0, %v2832
      %v2834 = vpop.f32.mrb[0].mxu0
      %v2835 = vpop.f32.mrb[0].mxu0
      %v2836 = vadd.f32 0.0, %v2835
      %v2837 = vpop.f32.mrb[0].mxu0
      %2838 = vdwg.mxu0
      %v2839 = vadd.f32 %v2713, %v2825
      %v2840 = vadd.f32 %v2714, %v2828
      %v2841 = vadd.f32 %v2715, %v2833
      %v2842 = vadd.f32 %v2716, %v2836
      %s2843 = scalar_lea.vmem %s1, 42
      %v2844 = vld [vmem:[%s2843] sm:$0x3]
      %v2845 = vld [vmem:[%s2721 + $0x1] sm:$0xff]
      %v2846 = vld [vmem:[%s2721 + $0x9] sm:$0xff]
      %v2847 = vld [vmem:[%s2721 + $0x11] sm:$0xff]
      %v2848 = vld [vmem:[%s2721 + $0x19] sm:$0xf]
      %v2849 = vpack.c.bf16 %v2846, %v2845
      %v2850 = vpack.c.bf16 %v2848, %v2847
      %v2852 = vand.u32 %v2844, %v237
      %2854 = vmatprep.subr.bf16.mxu0 0
      %2855 = vmatpush1.bf16.msra.mxu0 %v2852
      %2856 = vmatprep.subr.bf16.mxu0 0
      %2857 = vmatpush1.bf16.msra.mxu0 0
      %2858 = vmatprep.subr.bf16.mxu0 0
      %2859 = vmatpush1.bf16.msra.mxu0 0
      %2860 = vmatprep.subr.bf16.mxu0 0
      %2861 = vmatpush1.bf16.msra.mxu0 0
      %2862 = vmatprep.subr.bf16.mxu0 0
      %2863 = vmatpush1.bf16.msra.mxu0 0
      %2864 = vmatprep.subr.bf16.mxu0 0
      %2865 = vmatpush1.bf16.msra.mxu0 0
      %2866 = vmatprep.subr.bf16.mxu0 0
      %2867 = vmatpush1.bf16.msra.mxu0 0
      %2868 = vmatprep.subr.bf16.mxu0 0
      %2869 = vmatpush1.bf16.msra.mxu0 0
      %2870 = vmatprep.subr.bf16.mxu0 0
      %2871 = vmatpush1.bf16.msra.mxu0 0
      %2872 = vmatprep.subr.bf16.mxu0 0
      %2873 = vmatpush1.bf16.msra.mxu0 0
      %2874 = vmatprep.subr.bf16.mxu0 0
      %2875 = vmatpush1.bf16.msra.mxu0 0
      %2876 = vmatprep.subr.bf16.mxu0 0
      %2877 = vmatpush1.bf16.msra.mxu0 0
      %2878 = vmatprep.subr.bf16.mxu0 0
      %2879 = vmatpush1.bf16.msra.mxu0 0
      %2880 = vmatprep.subr.bf16.mxu0 0
      %2881 = vmatpush1.bf16.msra.mxu0 0
      %2882 = vmatprep.subr.bf16.mxu0 0
      %2883 = vmatpush1.bf16.msra.mxu0 0
      %2884 = vmatprep.subr.bf16.mxu0 0
      %2885 = vmatpush1.bf16.msra.mxu0 0
      %2886 = vmatprep.mubr.bf16.mxu0 0
      %2887 = vmatmul.mubr.bf16.gmra.mrb[0].mxu0 %v2290
      %v2888 = vpop.f32.mrb[0].mxu0
      %v2889 = vadd.f32 0.0, %v2888
      %v2890 = vpop.f32.mrb[0].mxu0
      %v2891 = vpop.f32.mrb[0].mxu0
      %v2892 = vadd.f32 0.0, %v2891
      %v2893 = vpop.f32.mrb[0].mxu0
      %2894 = vmatprep.mubr.bf16.mxu0 0
      %2895 = vmatmul.mubr.bf16.gmra.mrb[0].mxu0 %v2293
      %v2896 = vpop.f32.mrb[0].mxu0
      %v2897 = vadd.f32 0.0, %v2896
      %v2898 = vpop.f32.mrb[0].mxu0
      %v2899 = vpop.f32.mrb[0].mxu0
      %v2900 = vadd.f32 0.0, %v2899
      %v2901 = vpop.f32.mrb[0].mxu0
      %2902 = vdwg.mxu0
      %v2903 = vadd.f32 %v2780, %v2889
      %v2904 = vadd.f32 %v2781, %v2892
      %v2905 = vadd.f32 %v2782, %v2897
      %v2906 = vadd.f32 %v2783, %v2900
      %v2908 = vsel %vm227, %v2849, 0
      %v2911 = vsel %vm227, %v2850, 0
      %2913 = vmatprep.subr.bf16.mxu0 0
      %2914 = vmatpush1.bf16.msra.mxu0 %v2852
      %2915 = vmatprep.subr.bf16.mxu0 0
      %2916 = vmatpush1.bf16.msra.mxu0 0
      %2917 = vmatprep.subr.bf16.mxu0 0
      %2918 = vmatpush1.bf16.msra.mxu0 0
      %2919 = vmatprep.subr.bf16.mxu0 0
      %2920 = vmatpush1.bf16.msra.mxu0 0
      %2921 = vmatprep.subr.bf16.mxu0 0
      %2922 = vmatpush1.bf16.msra.mxu0 0
      %2923 = vmatprep.subr.bf16.mxu0 0
      %2924 = vmatpush1.bf16.msra.mxu0 0
      %2925 = vmatprep.subr.bf16.mxu0 0
      %2926 = vmatpush1.bf16.msra.mxu0 0
      %2927 = vmatprep.subr.bf16.mxu0 0
      %2928 = vmatpush1.bf16.msra.mxu0 0
      %2929 = vmatprep.subr.bf16.mxu0 0
      %2930 = vmatpush1.bf16.msra.mxu0 0
      %2931 = vmatprep.subr.bf16.mxu0 0
      %2932 = vmatpush1.bf16.msra.mxu0 0
      %2933 = vmatprep.subr.bf16.mxu0 0
      %2934 = vmatpush1.bf16.msra.mxu0 0
      %2935 = vmatprep.subr.bf16.mxu0 0
      %2936 = vmatpush1.bf16.msra.mxu0 0
      %2937 = vmatprep.subr.bf16.mxu0 0
      %2938 = vmatpush1.bf16.msra.mxu0 0
      %2939 = vmatprep.subr.bf16.mxu0 0
      %2940 = vmatpush1.bf16.msra.mxu0 0
      %2941 = vmatprep.subr.bf16.mxu0 0
      %2942 = vmatpush1.bf16.msra.mxu0 0
      %2943 = vmatprep.subr.bf16.mxu0 0
      %2944 = vmatpush1.bf16.msra.mxu0 0
      %2945 = vmatprep.mubr.bf16.mxu0 0
      %2946 = vmatmul.mubr.bf16.gmra.mrb[0].mxu0 %v2908
      %v2947 = vpop.f32.mrb[0].mxu0
      %v2948 = vadd.f32 0.0, %v2947
      %v2949 = vpop.f32.mrb[0].mxu0
      %v2950 = vpop.f32.mrb[0].mxu0
      %v2951 = vadd.f32 0.0, %v2950
      %v2952 = vpop.f32.mrb[0].mxu0
      %2953 = vmatprep.mubr.bf16.mxu0 0
      %2954 = vmatmul.mubr.bf16.gmra.mrb[0].mxu0 %v2911
      %v2955 = vpop.f32.mrb[0].mxu0
      %v2956 = vadd.f32 0.0, %v2955
      %v2957 = vpop.f32.mrb[0].mxu0
      %v2958 = vpop.f32.mrb[0].mxu0
      %v2959 = vadd.f32 0.0, %v2958
      %v2960 = vpop.f32.mrb[0].mxu0
      %2961 = vdwg.mxu0
      %v2962 = vadd.f32 %v2839, %v2948
      %v2963 = vadd.f32 %v2840, %v2951
      %v2964 = vadd.f32 %v2841, %v2956
      %v2965 = vadd.f32 %v2842, %v2959
      %s2966 = scalar_lea.vmem %s1, 44
      %v2967 = vld [vmem:[%s2966] sm:$0x3]
      %v2968 = vld [vmem:[%s2721 + $0x2] sm:$0xff]
      %v2969 = vld [vmem:[%s2721 + $0xa] sm:$0xff]
      %v2970 = vld [vmem:[%s2721 + $0x12] sm:$0xff]
      %v2971 = vld [vmem:[%s2721 + $0x1a] sm:$0xf]
      %v2972 = vpack.c.bf16 %v2969, %v2968
      %v2973 = vpack.c.bf16 %v2971, %v2970
      %v2975 = vand.u32 %v2967, %v237
      %2977 = vmatprep.subr.bf16.mxu0 0
      %2978 = vmatpush1.bf16.msra.mxu0 %v2975
      %2979 = vmatprep.subr.bf16.mxu0 0
      %2980 = vmatpush1.bf16.msra.mxu0 0
      %2981 = vmatprep.subr.bf16.mxu0 0
      %2982 = vmatpush1.bf16.msra.mxu0 0
      %2983 = vmatprep.subr.bf16.mxu0 0
      %2984 = vmatpush1.bf16.msra.mxu0 0
      %2985 = vmatprep.subr.bf16.mxu0 0
      %2986 = vmatpush1.bf16.msra.mxu0 0
      %2987 = vmatprep.subr.bf16.mxu0 0
      %2988 = vmatpush1.bf16.msra.mxu0 0
      %2989 = vmatprep.subr.bf16.mxu0 0
      %2990 = vmatpush1.bf16.msra.mxu0 0
      %2991 = vmatprep.subr.bf16.mxu0 0
      %2992 = vmatpush1.bf16.msra.mxu0 0
      %2993 = vmatprep.subr.bf16.mxu0 0
      %2994 = vmatpush1.bf16.msra.mxu0 0
      %2995 = vmatprep.subr.bf16.mxu0 0
      %2996 = vmatpush1.bf16.msra.mxu0 0
      %2997 = vmatprep.subr.bf16.mxu0 0
      %2998 = vmatpush1.bf16.msra.mxu0 0
      %2999 = vmatprep.subr.bf16.mxu0 0
      %3000 = vmatpush1.bf16.msra.mxu0 0
      %3001 = vmatprep.subr.bf16.mxu0 0
      %3002 = vmatpush1.bf16.msra.mxu0 0
      %3003 = vmatprep.subr.bf16.mxu0 0
      %3004 = vmatpush1.bf16.msra.mxu0 0
      %3005 = vmatprep.subr.bf16.mxu0 0
      %3006 = vmatpush1.bf16.msra.mxu0 0
      %3007 = vmatprep.subr.bf16.mxu0 0
      %3008 = vmatpush1.bf16.msra.mxu0 0
      %3009 = vmatprep.mubr.bf16.mxu0 0
      %3010 = vmatmul.mubr.bf16.gmra.mrb[0].mxu0 %v2413
      %v3011 = vpop.f32.mrb[0].mxu0
      %v3012 = vadd.f32 0.0, %v3011
      %v3013 = vpop.f32.mrb[0].mxu0
      %v3014 = vpop.f32.mrb[0].mxu0
      %v3015 = vadd.f32 0.0, %v3014
      %v3016 = vpop.f32.mrb[0].mxu0
      %3017 = vmatprep.mubr.bf16.mxu0 0
      %3018 = vmatmul.mubr.bf16.gmra.mrb[0].mxu0 %v2416
      %v3019 = vpop.f32.mrb[0].mxu0
      %v3020 = vadd.f32 0.0, %v3019
      %v3021 = vpop.f32.mrb[0].mxu0
      %v3022 = vpop.f32.mrb[0].mxu0
      %v3023 = vadd.f32 0.0, %v3022
      %v3024 = vpop.f32.mrb[0].mxu0
      %3025 = vdwg.mxu0
      %v3026 = vadd.f32 %v2903, %v3012
      %v3027 = vadd.f32 %v2904, %v3015
      %v3028 = vadd.f32 %v2905, %v3020
      %v3029 = vadd.f32 %v2906, %v3023
      %v3031 = vsel %vm227, %v2972, 0
      %v3034 = vsel %vm227, %v2973, 0
      %3036 = vmatprep.subr.bf16.mxu0 0
      %3037 = vmatpush1.bf16.msra.mxu0 %v2975
      %3038 = vmatprep.subr.bf16.mxu0 0
      %3039 = vmatpush1.bf16.msra.mxu0 0
      %3040 = vmatprep.subr.bf16.mxu0 0
      %3041 = vmatpush1.bf16.msra.mxu0 0
      %3042 = vmatprep.subr.bf16.mxu0 0
      %3043 = vmatpush1.bf16.msra.mxu0 0
      %3044 = vmatprep.subr.bf16.mxu0 0
      %3045 = vmatpush1.bf16.msra.mxu0 0
      %3046 = vmatprep.subr.bf16.mxu0 0
      %3047 = vmatpush1.bf16.msra.mxu0 0
      %3048 = vmatprep.subr.bf16.mxu0 0
      %3049 = vmatpush1.bf16.msra.mxu0 0
      %3050 = vmatprep.subr.bf16.mxu0 0
      %3051 = vmatpush1.bf16.msra.mxu0 0
      %3052 = vmatprep.subr.bf16.mxu0 0
      %3053 = vmatpush1.bf16.msra.mxu0 0
      %3054 = vmatprep.subr.bf16.mxu0 0
      %3055 = vmatpush1.bf16.msra.mxu0 0
      %3056 = vmatprep.subr.bf16.mxu0 0
      %3057 = vmatpush1.bf16.msra.mxu0 0
      %3058 = vmatprep.subr.bf16.mxu0 0
      %3059 = vmatpush1.bf16.msra.mxu0 0
      %3060 = vmatprep.subr.bf16.mxu0 0
      %3061 = vmatpush1.bf16.msra.mxu0 0
      %3062 = vmatprep.subr.bf16.mxu0 0
      %3063 = vmatpush1.bf16.msra.mxu0 0
      %3064 = vmatprep.subr.bf16.mxu0 0
      %3065 = vmatpush1.bf16.msra.mxu0 0
      %3066 = vmatprep.subr.bf16.mxu0 0
      %3067 = vmatpush1.bf16.msra.mxu0 0
      %3068 = vmatprep.mubr.bf16.mxu0 0
      %3069 = vmatmul.mubr.bf16.gmra.mrb[0].mxu0 %v3031
      %v3070 = vpop.f32.mrb[0].mxu0
      %v3071 = vadd.f32 0.0, %v3070
      %v3072 = vpop.f32.mrb[0].mxu0
      %v3073 = vpop.f32.mrb[0].mxu0
      %v3074 = vadd.f32 0.0, %v3073
      %v3075 = vpop.f32.mrb[0].mxu0
      %3076 = vmatprep.mubr.bf16.mxu0 0
      %3077 = vmatmul.mubr.bf16.gmra.mrb[0].mxu0 %v3034
      %v3078 = vpop.f32.mrb[0].mxu0
      %v3079 = vadd.f32 0.0, %v3078
      %v3080 = vpop.f32.mrb[0].mxu0
      %v3081 = vpop.f32.mrb[0].mxu0
      %v3082 = vadd.f32 0.0, %v3081
      %v3083 = vpop.f32.mrb[0].mxu0
      %3084 = vdwg.mxu0
      %v3085 = vadd.f32 %v2962, %v3071
      %v3086 = vadd.f32 %v2963, %v3074
      %v3087 = vadd.f32 %v2964, %v3079
      %v3088 = vadd.f32 %v2965, %v3082
      %s3089 = scalar_lea.vmem %s1, 46
      %v3090 = vld [vmem:[%s3089] sm:$0x3]
      %v3091 = vld [vmem:[%s2721 + $0x3] sm:$0xff]
      %v3092 = vld [vmem:[%s2721 + $0xb] sm:$0xff]
      %v3093 = vld [vmem:[%s2721 + $0x13] sm:$0xff]
      %v3094 = vld [vmem:[%s2721 + $0x1b] sm:$0xf]
      %v3095 = vpack.c.bf16 %v3092, %v3091
      %v3096 = vpack.c.bf16 %v3094, %v3093
      %v3098 = vand.u32 %v3090, %v237
      %3100 = vmatprep.subr.bf16.mxu0 0
      %3101 = vmatpush1.bf16.msra.mxu0 %v3098
      %3102 = vmatprep.subr.bf16.mxu0 0
      %3103 = vmatpush1.bf16.msra.mxu0 0
      %3104 = vmatprep.subr.bf16.mxu0 0
      %3105 = vmatpush1.bf16.msra.mxu0 0
      %3106 = vmatprep.subr.bf16.mxu0 0
      %3107 = vmatpush1.bf16.msra.mxu0 0
      %3108 = vmatprep.subr.bf16.mxu0 0
      %3109 = vmatpush1.bf16.msra.mxu0 0
      %3110 = vmatprep.subr.bf16.mxu0 0
      %3111 = vmatpush1.bf16.msra.mxu0 0
      %3112 = vmatprep.subr.bf16.mxu0 0
      %3113 = vmatpush1.bf16.msra.mxu0 0
      %3114 = vmatprep.subr.bf16.mxu0 0
      %3115 = vmatpush1.bf16.msra.mxu0 0
      %3116 = vmatprep.subr.bf16.mxu0 0
      %3117 = vmatpush1.bf16.msra.mxu0 0
      %3118 = vmatprep.subr.bf16.mxu0 0
      %3119 = vmatpush1.bf16.msra.mxu0 0
      %3120 = vmatprep.subr.bf16.mxu0 0
      %3121 = vmatpush1.bf16.msra.mxu0 0
      %3122 = vmatprep.subr.bf16.mxu0 0
      %3123 = vmatpush1.bf16.msra.mxu0 0
      %3124 = vmatprep.subr.bf16.mxu0 0
      %3125 = vmatpush1.bf16.msra.mxu0 0
      %3126 = vmatprep.subr.bf16.mxu0 0
      %3127 = vmatpush1.bf16.msra.mxu0 0
      %3128 = vmatprep.subr.bf16.mxu0 0
      %3129 = vmatpush1.bf16.msra.mxu0 0
      %3130 = vmatprep.subr.bf16.mxu0 0
      %3131 = vmatpush1.bf16.msra.mxu0 0
      %3132 = vmatprep.mubr.bf16.mxu0 0
      %3133 = vmatmul.mubr.bf16.gmra.mrb[0].mxu0 %v2536
      %v3134 = vpop.f32.mrb[0].mxu0
      %v3135 = vadd.f32 0.0, %v3134
      %v3136 = vpop.f32.mrb[0].mxu0
      %v3137 = vpop.f32.mrb[0].mxu0
      %v3138 = vadd.f32 0.0, %v3137
      %v3139 = vpop.f32.mrb[0].mxu0
      %3140 = vmatprep.mubr.bf16.mxu0 0
      %3141 = vmatmul.mubr.bf16.gmra.mrb[0].mxu0 %v2539
      %v3142 = vpop.f32.mrb[0].mxu0
      %v3143 = vadd.f32 0.0, %v3142
      %v3144 = vpop.f32.mrb[0].mxu0
      %v3145 = vpop.f32.mrb[0].mxu0
      %v3146 = vadd.f32 0.0, %v3145
      %v3147 = vpop.f32.mrb[0].mxu0
      %3148 = vdwg.mxu0
      %v3149 = vadd.f32 %v3026, %v3135
      %v3150 = vadd.f32 %v3027, %v3138
      %v3151 = vadd.f32 %v3028, %v3143
      %v3152 = vadd.f32 %v3029, %v3146
      %v3154 = vsel %vm227, %v3095, 0
      %v3157 = vsel %vm227, %v3096, 0
      %3159 = vmatprep.subr.bf16.mxu0 0
      %3160 = vmatpush1.bf16.msra.mxu0 %v3098
      %3161 = vmatprep.subr.bf16.mxu0 0
      %3162 = vmatpush1.bf16.msra.mxu0 0
      %3163 = vmatprep.subr.bf16.mxu0 0
      %3164 = vmatpush1.bf16.msra.mxu0 0
      %3165 = vmatprep.subr.bf16.mxu0 0
      %3166 = vmatpush1.bf16.msra.mxu0 0
      %3167 = vmatprep.subr.bf16.mxu0 0
      %3168 = vmatpush1.bf16.msra.mxu0 0
      %3169 = vmatprep.subr.bf16.mxu0 0
      %3170 = vmatpush1.bf16.msra.mxu0 0
      %3171 = vmatprep.subr.bf16.mxu0 0
      %3172 = vmatpush1.bf16.msra.mxu0 0
      %3173 = vmatprep.subr.bf16.mxu0 0
      %3174 = vmatpush1.bf16.msra.mxu0 0
      %3175 = vmatprep.subr.bf16.mxu0 0
      %3176 = vmatpush1.bf16.msra.mxu0 0
      %3177 = vmatprep.subr.bf16.mxu0 0
      %3178 = vmatpush1.bf16.msra.mxu0 0
      %3179 = vmatprep.subr.bf16.mxu0 0
      %3180 = vmatpush1.bf16.msra.mxu0 0
      %3181 = vmatprep.subr.bf16.mxu0 0
      %3182 = vmatpush1.bf16.msra.mxu0 0
      %3183 = vmatprep.subr.bf16.mxu0 0
      %3184 = vmatpush1.bf16.msra.mxu0 0
      %3185 = vmatprep.subr.bf16.mxu0 0
      %3186 = vmatpush1.bf16.msra.mxu0 0
      %3187 = vmatprep.subr.bf16.mxu0 0
      %3188 = vmatpush1.bf16.msra.mxu0 0
      %3189 = vmatprep.subr.bf16.mxu0 0
      %3190 = vmatpush1.bf16.msra.mxu0 0
      %3191 = vmatprep.mubr.bf16.mxu0 0
      %3192 = vmatmul.mubr.bf16.gmra.mrb[0].mxu0 %v3154
      %v3193 = vpop.f32.mrb[0].mxu0
      %v3194 = vadd.f32 0.0, %v3193
      %v3195 = vpop.f32.mrb[0].mxu0
      %v3196 = vpop.f32.mrb[0].mxu0
      %v3197 = vadd.f32 0.0, %v3196
      %v3198 = vpop.f32.mrb[0].mxu0
      %3199 = vmatprep.mubr.bf16.mxu0 0
      %3200 = vmatmul.mubr.bf16.gmra.mrb[0].mxu0 %v3157
      %v3201 = vpop.f32.mrb[0].mxu0
      %v3202 = vadd.f32 0.0, %v3201
      %v3203 = vpop.f32.mrb[0].mxu0
      %v3204 = vpop.f32.mrb[0].mxu0
      %v3205 = vadd.f32 0.0, %v3204
      %v3206 = vpop.f32.mrb[0].mxu0
      %3207 = vdwg.mxu0
      %v3208 = vadd.f32 %v3085, %v3194
      %v3209 = vadd.f32 %v3086, %v3197
      %v3210 = vadd.f32 %v3087, %v3202
      %v3211 = vadd.f32 %v3088, %v3205
      %s3212 = scalar_lea.vmem %s1, 48
      %v3213 = vld [vmem:[%s3212] sm:$0x3]
      %v3214 = vld [vmem:[%s2721 + $0x4] sm:$0xff]
      %v3215 = vld [vmem:[%s2721 + $0xc] sm:$0xff]
      %v3216 = vld [vmem:[%s2721 + $0x14] sm:$0xff]
      %v3217 = vld [vmem:[%s2721 + $0x1c] sm:$0xf]
      %v3218 = vpack.c.bf16 %v3215, %v3214
      %v3219 = vpack.c.bf16 %v3217, %v3216
      %v3221 = vand.u32 %v3213, %v237
      %3223 = vmatprep.subr.bf16.mxu0 0
      %3224 = vmatpush1.bf16.msra.mxu0 %v3221
      %3225 = vmatprep.subr.bf16.mxu0 0
      %3226 = vmatpush1.bf16.msra.mxu0 0
      %3227 = vmatprep.subr.bf16.mxu0 0
      %3228 = vmatpush1.bf16.msra.mxu0 0
      %3229 = vmatprep.subr.bf16.mxu0 0
      %3230 = vmatpush1.bf16.msra.mxu0 0
      %3231 = vmatprep.subr.bf16.mxu0 0
      %3232 = vmatpush1.bf16.msra.mxu0 0
      %3233 = vmatprep.subr.bf16.mxu0 0
      %3234 = vmatpush1.bf16.msra.mxu0 0
      %3235 = vmatprep.subr.bf16.mxu0 0
      %3236 = vmatpush1.bf16.msra.mxu0 0
      %3237 = vmatprep.subr.bf16.mxu0 0
      %3238 = vmatpush1.bf16.msra.mxu0 0
      %3239 = vmatprep.subr.bf16.mxu0 0
      %3240 = vmatpush1.bf16.msra.mxu0 0
      %3241 = vmatprep.subr.bf16.mxu0 0
      %3242 = vmatpush1.bf16.msra.mxu0 0
      %3243 = vmatprep.subr.bf16.mxu0 0
      %3244 = vmatpush1.bf16.msra.mxu0 0
      %3245 = vmatprep.subr.bf16.mxu0 0
      %3246 = vmatpush1.bf16.msra.mxu0 0
      %3247 = vmatprep.subr.bf16.mxu0 0
      %3248 = vmatpush1.bf16.msra.mxu0 0
      %3249 = vmatprep.subr.bf16.mxu0 0
      %3250 = vmatpush1.bf16.msra.mxu0 0
      %3251 = vmatprep.subr.bf16.mxu0 0
      %3252 = vmatpush1.bf16.msra.mxu0 0
      %3253 = vmatprep.subr.bf16.mxu0 0
      %3254 = vmatpush1.bf16.msra.mxu0 0
      %3255 = vmatprep.mubr.bf16.mxu0 0
      %3256 = vmatmul.mubr.bf16.gmra.mrb[0].mxu0 %v2659
      %v3257 = vpop.f32.mrb[0].mxu0
      %v3258 = vadd.f32 0.0, %v3257
      %v3259 = vpop.f32.mrb[0].mxu0
      %v3260 = vpop.f32.mrb[0].mxu0
      %v3261 = vadd.f32 0.0, %v3260
      %v3262 = vpop.f32.mrb[0].mxu0
      %3263 = vmatprep.mubr.bf16.mxu0 0
      %3264 = vmatmul.mubr.bf16.gmra.mrb[0].mxu0 %v2662
      %v3265 = vpop.f32.mrb[0].mxu0
      %v3266 = vadd.f32 0.0, %v3265
      %v3267 = vpop.f32.mrb[0].mxu0
      %v3268 = vpop.f32.mrb[0].mxu0
      %v3269 = vadd.f32 0.0, %v3268
      %v3270 = vpop.f32.mrb[0].mxu0
      %3271 = vdwg.mxu0
      %v3272 = vadd.f32 %v3149, %v3258
      %v3273 = vadd.f32 %v3150, %v3261
      %v3274 = vadd.f32 %v3151, %v3266
      %v3275 = vadd.f32 %v3152, %v3269
      %v3277 = vsel %vm227, %v3218, 0
      %v3280 = vsel %vm227, %v3219, 0
      %3282 = vmatprep.subr.bf16.mxu0 0
      %3283 = vmatpush1.bf16.msra.mxu0 %v3221
      %3284 = vmatprep.subr.bf16.mxu0 0
      %3285 = vmatpush1.bf16.msra.mxu0 0
      %3286 = vmatprep.subr.bf16.mxu0 0
      %3287 = vmatpush1.bf16.msra.mxu0 0
      %3288 = vmatprep.subr.bf16.mxu0 0
      %3289 = vmatpush1.bf16.msra.mxu0 0
      %3290 = vmatprep.subr.bf16.mxu0 0
      %3291 = vmatpush1.bf16.msra.mxu0 0
      %3292 = vmatprep.subr.bf16.mxu0 0
      %3293 = vmatpush1.bf16.msra.mxu0 0
      %3294 = vmatprep.subr.bf16.mxu0 0
      %3295 = vmatpush1.bf16.msra.mxu0 0
      %3296 = vmatprep.subr.bf16.mxu0 0
      %3297 = vmatpush1.bf16.msra.mxu0 0
      %3298 = vmatprep.subr.bf16.mxu0 0
      %3299 = vmatpush1.bf16.msra.mxu0 0
      %3300 = vmatprep.subr.bf16.mxu0 0
      %3301 = vmatpush1.bf16.msra.mxu0 0
      %3302 = vmatprep.subr.bf16.mxu0 0
      %3303 = vmatpush1.bf16.msra.mxu0 0
      %3304 = vmatprep.subr.bf16.mxu0 0
      %3305 = vmatpush1.bf16.msra.mxu0 0
      %3306 = vmatprep.subr.bf16.mxu0 0
      %3307 = vmatpush1.bf16.msra.mxu0 0
      %3308 = vmatprep.subr.bf16.mxu0 0
      %3309 = vmatpush1.bf16.msra.mxu0 0
      %3310 = vmatprep.subr.bf16.mxu0 0
      %3311 = vmatpush1.bf16.msra.mxu0 0
      %3312 = vmatprep.subr.bf16.mxu0 0
      %3313 = vmatpush1.bf16.msra.mxu0 0
      %3314 = vmatprep.mubr.bf16.mxu0 0
      %3315 = vmatmul.mubr.bf16.gmra.mrb[0].mxu0 %v3277
      %v3316 = vpop.f32.mrb[0].mxu0
      %v3317 = vadd.f32 0.0, %v3316
      %v3318 = vpop.f32.mrb[0].mxu0
      %v3319 = vpop.f32.mrb[0].mxu0
      %v3320 = vadd.f32 0.0, %v3319
      %v3321 = vpop.f32.mrb[0].mxu0
      %3322 = vmatprep.mubr.bf16.mxu0 0
      %3323 = vmatmul.mubr.bf16.gmra.mrb[0].mxu0 %v3280
      %v3324 = vpop.f32.mrb[0].mxu0
      %v3325 = vadd.f32 0.0, %v3324
      %v3326 = vpop.f32.mrb[0].mxu0
      %v3327 = vpop.f32.mrb[0].mxu0
      %v3328 = vadd.f32 0.0, %v3327
      %v3329 = vpop.f32.mrb[0].mxu0
      %3330 = vdwg.mxu0
      %v3331 = vadd.f32 %v3208, %v3317
      %v3332 = vadd.f32 %v3209, %v3320
      %v3333 = vadd.f32 %v3210, %v3325
      %v3334 = vadd.f32 %v3211, %v3328
      %v3335 = vld [vmem:[%s2] sm:$0x1]
      %v3337 = vlaneseq
      %v3338 = vshrl.u32 %v3337, 7
      %v3339 = vsub.s32 0, %v3338
      %v3340 = vrot.slane %v3335, %v3339
      %v3342 = vadd.f32 %v3272, %v3340
      %v3343 = vadd.f32 %v3273, %v3340
      %v3344 = vadd.f32 %v3274, %v3340
      %v3345 = vadd.f32 %v3275, %v3340
      %v3346 = vmax.f32 %v3342, 0.0
      %v3347 = vmax.f32 %v3343, 0.0
      %v3348 = vmax.f32 %v3344, 0.0
      %v3349 = vmax.f32 %v3345, 0.0
      %v3350 = vadd.f32 %v3331, %v3340
      %v3351 = vadd.f32 %v3332, %v3340
      %v3352 = vadd.f32 %v3333, %v3340
      %v3353 = vadd.f32 %v3334, %v3340
      %v3354 = vmax.f32 %v3350, 0.0
      %v3355 = vmax.f32 %v3351, 0.0
      %v3356 = vmax.f32 %v3352, 0.0
      %v3357 = vmax.f32 %v3353, 0.0
      %v3358 = vmax.f32 %v3346, %v3354
      %v3359 = vmax.f32 %v3347, %v3355
      %v3360 = vmax.f32 %v3348, %v3356
      %v3361 = vmax.f32 %v3349, %v3357
      %3362 = vst [vmem:[#allocation2] sm:$0xff] %v3358
      %3363 = vst [vmem:[#allocation2 + $0x8] sm:$0xff] %v3359
      %3364 = vst [vmem:[#allocation2 + $0x10] sm:$0xff] %v3360
      %3365 = vst [vmem:[#allocation2 + $0x18] sm:$0xf] %v3361
      %v3366 = vld [vmem:[#allocation2] ss:$2 sm:$0xff]
      %s3367 = scalar_lea.vmem [#allocation2], 16
      %v3368 = vld [vmem:[%s3367] ss:$2 sm:$0x3f]
      %s3369 = scalar_lea.vmem [#allocation2], 1
      %v3370 = vld [vmem:[%s3369] ss:$2 sm:$0xff]
      %s3371 = scalar_lea.vmem [#allocation2], 17
      %v3372 = vld [vmem:[%s3371] ss:$2 sm:$0x3f]
      %v3373 = vmax.f32 %v3366, %v3370
      %v3374 = vmax.f32 %v3368, %v3372
      %3375 = vst [vmem:[%s192] sm:$0xff] %v3373
      %3376 = vst [vmem:[%s192 + $0x8] sm:$0x3f] %v3374
      %p3377 = scmp.lt.s32.totalorder %s18, 1
      %s3378 = scalar_select %p3377, %s18, 1
      %p3379 = scmp.lt.s32.totalorder %s19, 13
      %s3380 = scalar_select %p3379, %s19, 13
      %s3381 = smul.addr %s3380, 2
      %s3382 = smul.addr %s3378, 28
      %s3383 = sadd.s32 %s3381, %s3382
      %s3384 = smul.addr %s3383, 8
      %s3385 = scalar_lea.vmem %s3, %s3384
      // Predicated region
      $region33: #{cnnet_forward.3} parent=31 // pred_check
        %p3386 = pneg %p114
      $region34: #{cnnet_forward.3} parent=31 // pred_check_branch
        %3388 = sbr.rel (%p3386) target = $region36
      $region35: #{cnnet_forward.3} parent=31 // pred_region
        _
      $region36: #{cnnet_forward.3} parent=31 // pred_fallthru
        _
    $region32: #{cnnet_forward.3} parent=5 // pred_fallthru
      _
    %p3389 = scmp.le.s32.totalorder 2, %s9
    // Predicated region
    $region37: #{cnnet_forward.3} parent=5 // pred_check
      %p3390 = pneg %p3389
    $region38: #{cnnet_forward.3} parent=5 // pred_check_branch
      %3392 = sbr.rel (%p3390) target = $region40
    $region39: #{cnnet_forward.3} parent=5 // pred_region
      %s3393 = ssub.s32 %s9, 2
      // Predicated region
      $region41: #{cnnet_forward.3} parent=39 // pred_check
        %p3394 = pneg %p120
      $region42: #{cnnet_forward.3} parent=39 // pred_check_branch
        %3396 = sbr.rel (%p3394) target = $region44
      $region43: #{cnnet_forward.3} parent=39 // pred_region
        %p3397 = scmp.lt.s32.totalorder %s20, 1
        %s3398 = scalar_select %p3397, %s20, 1
        %p3399 = scmp.lt.s32.totalorder %s21, 13
        %s3400 = scalar_select %p3399, %s21, 13
        %s3401 = smul.addr %s3400, 2
        %s3402 = smul.addr %s3398, 28
        %s3403 = sadd.s32 %s3401, %s3402
        %s3404 = smul.addr %s3403, 8
        %s3405 = scalar_lea.vmem %s3, %s3404
      $region44: #{cnnet_forward.3} parent=39 // pred_fallthru
        _
    $region40: #{cnnet_forward.3} parent=5 // pred_fallthru
      _
  $region6: #{cnnet_forward.3} parent=0 // loop_footer
    %s13 = sadd.s32 1, %s9
  $region7: #{cnnet_forward.3} parent=0 // loop_footer_branch
    %8 = sbr.rel target = $region3
  $region8: #{cnnet_forward.3} parent=0 // loop_exit
    _

// kernel: cnnet_forward.5
$region0: #{cnnet_forward.5}
  #allocation0 [shape = 'u32[]', space=smem, size = 0x4, offset = 0x4, fixed_abs, tag = 'smem constant byte address 0x4 - core index']
  #allocation1 [shape = 'u32[144,128]{1,0:T(1,128)}', space=vmem, size = 0x12000, scoped, tag = 'internal scratch']
  %s0 = inlined_call_operand.vmem [shape: f32[2,4608], index: 0, kind: input, shape index: {}]
  %s1 = inlined_call_operand.vmem [shape: bf16[4608,128], index: 1, kind: input, shape index: {}]
  %s2 = inlined_call_operand.vmem [shape: f32[1,128], index: 2, kind: input, shape index: {}]
  %s3 = inlined_call_operand.vmem [shape: bf16[128,128], index: 3, kind: input, shape index: {}]
  %s4 = inlined_call_operand.vmem [shape: f32[1,128], index: 4, kind: input, shape index: {}]
  %s5 = inlined_call_operand.hbm [shape: f32[2,128], index: 5, kind: output, shape index: {}]
  %s6 = sld [smem:[#allocation0]]
  $region30: #{cnnet_forward.5} parent=0
    _
  %s8 = ssub.s32 1, %s6
  %s9 = scalar_select 0, %s8, %s6
  $region1: #{cnnet_forward.5} parent=0
    #allocation2 [shape = 'u8[1024]{0}', space=vmem, size = 0x400, scoped, tag = 'output window, operand 0, single buffered']
    #allocation3 [shape = 's32[1]{0}', space=sflag, size = 0x4, scoped, tag = 'scoped memory for cnnet_forward.5']
    %10 = vsyncpa [#allocation3], 0
    // Predicated region
    $region2: #{cnnet_forward.5} parent=1 // pred_check
      _
    $region3: #{cnnet_forward.5} parent=1 // pred_check_branch
      %12 = sbr.rel (0) target = $region5
    $region4: #{cnnet_forward.5} parent=1 // pred_region
      _
    $region5: #{cnnet_forward.5} parent=1 // pred_fallthru
      _
    // Predicated region
    $region6: #{cnnet_forward.5} parent=1 // pred_check
      _
    $region7: #{cnnet_forward.5} parent=1 // pred_check_branch
      %14 = sbr.rel (0) target = $region9
    $region8: #{cnnet_forward.5} parent=1 // pred_region
      _
    $region9: #{cnnet_forward.5} parent=1 // pred_fallthru
      _
    // Predicated region
    $region10: #{cnnet_forward.5} parent=1 // pred_check
      _
    $region11: #{cnnet_forward.5} parent=1 // pred_check_branch
      %16 = sbr.rel (0) target = $region13
    $region12: #{cnnet_forward.5} parent=1 // pred_region
      _
    $region13: #{cnnet_forward.5} parent=1 // pred_fallthru
      _
    // Predicated region
    $region14: #{cnnet_forward.5} parent=1 // pred_check
      _
    $region15: #{cnnet_forward.5} parent=1 // pred_check_branch
      %18 = sbr.rel (0) target = $region17
    $region16: #{cnnet_forward.5} parent=1 // pred_region
      _
    $region17: #{cnnet_forward.5} parent=1 // pred_fallthru
      _
    // Predicated region
    $region18: #{cnnet_forward.5} parent=1 // pred_check
      _
    $region19: #{cnnet_forward.5} parent=1 // pred_check_branch
      %20 = sbr.rel (0) target = $region21
    $region20: #{cnnet_forward.5} parent=1 // pred_region
      _
    $region21: #{cnnet_forward.5} parent=1 // pred_fallthru
      _
    %v22 = vld [vmem:[%s0] sm:$0xff]
    %v23 = vld [vmem:[%s0 + $0x8] sm:$0xff]
    %v24 = vld [vmem:[%s0 + $0x10] sm:$0xff]
    %v25 = vld [vmem:[%s0 + $0x18] sm:$0xff]
    %v26 = vld [vmem:[%s0 + $0x20] sm:$0xff]
    %v27 = vld [vmem:[%s0 + $0x28] sm:$0xff]
    %v28 = vld [vmem:[%s0 + $0x30] sm:$0xff]
    %v29 = vld [vmem:[%s0 + $0x38] sm:$0xff]
    %v30 = vld [vmem:[%s0 + $0x40] sm:$0xff]
    %v40 = vcombine.high %v22, %v22
    %v42 = vunpack.c.l.s4 1983009808
    %v43 = vunpack.c.0.s8 %v42
    %v44 = vlaneseq
    %v45 = vshrl.u32 %v44, 7
    %v46 = vsub.s32 %v43, %v45
    %v47 = vrot.slane %v22, %v46
    %v49 = vunpack.c.l.s4 1983009808
    %v50 = vunpack.c.0.s8 %v49
    %v51 = vlaneseq
    %v52 = vshrl.u32 %v51, 7
    %v53 = vsub.s32 %v50, %v52
    %v54 = vrot.slane %v40, %v53
    %v55 = vcombine.high %v47, %v47
    %v56 = vcombine.high %v54, %v54
    %v57 = vcombine.high %v23, %v23
    %v59 = vunpack.c.l.s4 1983009808
    %v60 = vunpack.c.0.s8 %v59
    %v61 = vlaneseq
    %v62 = vshrl.u32 %v61, 7
    %v63 = vsub.s32 %v60, %v62
    %v64 = vrot.slane %v23, %v63
    %v66 = vunpack.c.l.s4 1983009808
    %v67 = vunpack.c.0.s8 %v66
    %v68 = vlaneseq
    %v69 = vshrl.u32 %v68, 7
    %v70 = vsub.s32 %v67, %v69
    %v71 = vrot.slane %v57, %v70
    %v72 = vcombine.high %v64, %v64
    %v73 = vcombine.high %v71, %v71
    %v74 = vcombine.high %v24, %v24
    %v76 = vunpack.c.l.s4 1983009808
    %v77 = vunpack.c.0.s8 %v76
    %v78 = vlaneseq
    %v79 = vshrl.u32 %v78, 7
    %v80 = vsub.s32 %v77, %v79
    %v81 = vrot.slane %v24, %v80
    %v83 = vunpack.c.l.s4 1983009808
    %v84 = vunpack.c.0.s8 %v83
    %v85 = vlaneseq
    %v86 = vshrl.u32 %v85, 7
    %v87 = vsub.s32 %v84, %v86
    %v88 = vrot.slane %v74, %v87
    %v89 = vcombine.high %v81, %v81
    %v90 = vcombine.high %v88, %v88
    %v91 = vcombine.high %v25, %v25
    %v93 = vunpack.c.l.s4 1983009808
    %v94 = vunpack.c.0.s8 %v93
    %v95 = vlaneseq
    %v96 = vshrl.u32 %v95, 7
    %v97 = vsub.s32 %v94, %v96
    %v98 = vrot.slane %v25, %v97
    %v100 = vunpack.c.l.s4 1983009808
    %v101 = vunpack.c.0.s8 %v100
    %v102 = vlaneseq
    %v103 = vshrl.u32 %v102, 7
    %v104 = vsub.s32 %v101, %v103
    %v105 = vrot.slane %v91, %v104
    %v106 = vcombine.high %v98, %v98
    %v107 = vcombine.high %v105, %v105
    %v108 = vcombine.high %v26, %v26
    %v110 = vunpack.c.l.s4 1983009808
    %v111 = vunpack.c.0.s8 %v110
    %v112 = vlaneseq
    %v113 = vshrl.u32 %v112, 7
    %v114 = vsub.s32 %v111, %v113
    %v115 = vrot.slane %v26, %v114
    %v117 = vunpack.c.l.s4 1983009808
    %v118 = vunpack.c.0.s8 %v117
    %v119 = vlaneseq
    %v120 = vshrl.u32 %v119, 7
    %v121 = vsub.s32 %v118, %v120
    %v122 = vrot.slane %v108, %v121
    %v123 = vcombine.high %v115, %v115
    %v124 = vcombine.high %v122, %v122
    %v125 = vcombine.high %v27, %v27
    %v127 = vunpack.c.l.s4 1983009808
    %v128 = vunpack.c.0.s8 %v127
    %v129 = vlaneseq
    %v130 = vshrl.u32 %v129, 7
    %v131 = vsub.s32 %v128, %v130
    %v132 = vrot.slane %v27, %v131
    %v134 = vunpack.c.l.s4 1983009808
    %v135 = vunpack.c.0.s8 %v134
    %v136 = vlaneseq
    %v137 = vshrl.u32 %v136, 7
    %v138 = vsub.s32 %v135, %v137
    %v139 = vrot.slane %v125, %v138
    %v140 = vcombine.high %v132, %v132
    %v141 = vcombine.high %v139, %v139
    %v142 = vcombine.high %v28, %v28
    %v144 = vunpack.c.l.s4 1983009808
    %v145 = vunpack.c.0.s8 %v144
    %v146 = vlaneseq
    %v147 = vshrl.u32 %v146, 7
    %v148 = vsub.s32 %v145, %v147
    %v149 = vrot.slane %v28, %v148
    %v151 = vunpack.c.l.s4 1983009808
    %v152 = vunpack.c.0.s8 %v151
    %v153 = vlaneseq
    %v154 = vshrl.u32 %v153, 7
    %v155 = vsub.s32 %v152, %v154
    %v156 = vrot.slane %v142, %v155
    %v157 = vcombine.high %v149, %v149
    %v158 = vcombine.high %v156, %v156
    %v159 = vcombine.high %v29, %v29
    %v161 = vunpack.c.l.s4 1983009808
    %v162 = vunpack.c.0.s8 %v161
    %v163 = vlaneseq
    %v164 = vshrl.u32 %v163, 7
    %v165 = vsub.s32 %v162, %v164
    %v166 = vrot.slane %v29, %v165
    %v168 = vunpack.c.l.s4 1983009808
    %v169 = vunpack.c.0.s8 %v168
    %v170 = vlaneseq
    %v171 = vshrl.u32 %v170, 7
    %v172 = vsub.s32 %v169, %v171
    %v173 = vrot.slane %v159, %v172
    %v174 = vcombine.high %v166, %v166
    %v175 = vcombine.high %v173, %v173
    %v176 = vcombine.high %v30, %v30
    %v178 = vunpack.c.l.s4 1983009808
    %v179 = vunpack.c.0.s8 %v178
    %v180 = vlaneseq
    %v181 = vshrl.u32 %v180, 7
    %v182 = vsub.s32 %v179, %v181
    %v183 = vrot.slane %v30, %v182
    %v185 = vunpack.c.l.s4 1983009808
    %v186 = vunpack.c.0.s8 %v185
    %v187 = vlaneseq
    %v188 = vshrl.u32 %v187, 7
    %v189 = vsub.s32 %v186, %v188
    %v190 = vrot.slane %v176, %v189
    %v191 = vcombine.high %v183, %v183
    %v192 = vcombine.high %v190, %v190
    %v229 = vpack.c.bf16 %v47, %v47
    %v230 = vpack.c.bf16 %v55, %v55
    %v231 = vpack.c.bf16 %v54, %v54
    %v232 = vpack.c.bf16 %v56, %v56
    %v233 = vpack.c.bf16 %v64, %v64
    %v234 = vpack.c.bf16 %v72, %v72
    %v235 = vpack.c.bf16 %v71, %v71
    %v236 = vpack.c.bf16 %v73, %v73
    %v237 = vpack.c.bf16 %v81, %v81
    %v238 = vpack.c.bf16 %v89, %v89
    %v239 = vpack.c.bf16 %v88, %v88
    %v240 = vpack.c.bf16 %v90, %v90
    %v241 = vpack.c.bf16 %v98, %v98
    %v242 = vpack.c.bf16 %v106, %v106
    %v243 = vpack.c.bf16 %v105, %v105
    %v244 = vpack.c.bf16 %v107, %v107
    %v245 = vpack.c.bf16 %v115, %v115
    %v246 = vpack.c.bf16 %v123, %v123
    %v247 = vpack.c.bf16 %v122, %v122
    %v248 = vpack.c.bf16 %v124, %v124
    %v249 = vpack.c.bf16 %v132, %v132
    %v250 = vpack.c.bf16 %v140, %v140
    %v251 = vpack.c.bf16 %v139, %v139
    %v252 = vpack.c.bf16 %v141, %v141
    %v253 = vpack.c.bf16 %v149, %v149
    %v254 = vpack.c.bf16 %v157, %v157
    %v255 = vpack.c.bf16 %v156, %v156
    %v256 = vpack.c.bf16 %v158, %v158
    %v257 = vpack.c.bf16 %v166, %v166
    %v258 = vpack.c.bf16 %v174, %v174
    %v259 = vpack.c.bf16 %v173, %v173
    %v260 = vpack.c.bf16 %v175, %v175
    %v261 = vpack.c.bf16 %v183, %v183
    %v262 = vpack.c.bf16 %v191, %v191
    %v263 = vpack.c.bf16 %v190, %v190
    %v264 = vpack.c.bf16 %v192, %v192
    %v265 = vld [vmem:[%s1] sm:$0xf]
    %v266 = vld [vmem:[%s1 + $0x4] sm:$0xf]
    %v267 = vld [vmem:[%s1 + $0x8] sm:$0xf]
    %v268 = vld [vmem:[%s1 + $0xc] sm:$0xf]
    %v269 = vld [vmem:[%s1 + $0x10] sm:$0xf]
    %v270 = vld [vmem:[%s1 + $0x14] sm:$0xf]
    %v271 = vld [vmem:[%s1 + $0x18] sm:$0xf]
    %v272 = vld [vmem:[%s1 + $0x1c] sm:$0xf]
    %v273 = vld [vmem:[%s1 + $0x20] sm:$0xf]
    %v274 = vld [vmem:[%s1 + $0x24] sm:$0xf]
    %v275 = vld [vmem:[%s1 + $0x28] sm:$0xf]
    %v276 = vld [vmem:[%s1 + $0x2c] sm:$0xf]
    %v277 = vld [vmem:[%s1 + $0x30] sm:$0xf]
    %v278 = vld [vmem:[%s1 + $0x34] sm:$0xf]
    %v279 = vld [vmem:[%s1 + $0x38] sm:$0xf]
    %v280 = vld [vmem:[%s1 + $0x3c] sm:$0xf]
    %v281 = vld [vmem:[%s1 + $0x40] sm:$0xf]
    %v282 = vld [vmem:[%s1 + $0x44] sm:$0xf]
    %v283 = vld [vmem:[%s1 + $0x48] sm:$0xf]
    %v284 = vld [vmem:[%s1 + $0x4c] sm:$0xf]
    %v285 = vld [vmem:[%s1 + $0x50] sm:$0xf]
    %v286 = vld [vmem:[%s1 + $0x54] sm:$0xf]
    %v287 = vld [vmem:[%s1 + $0x58] sm:$0xf]
    %v288 = vld [vmem:[%s1 + $0x5c] sm:$0xf]
    %v289 = vld [vmem:[%s1 + $0x60] sm:$0xf]
    %v290 = vld [vmem:[%s1 + $0x64] sm:$0xf]
    %v291 = vld [vmem:[%s1 + $0x68] sm:$0xf]
    %v292 = vld [vmem:[%s1 + $0x6c] sm:$0xf]
    %v293 = vld [vmem:[%s1 + $0x70] sm:$0xf]
    %v294 = vld [vmem:[%s1 + $0x74] sm:$0xf]
    %v295 = vld [vmem:[%s1 + $0x78] sm:$0xf]
    %v296 = vld [vmem:[%s1 + $0x7c] sm:$0xf]
    %v297 = vld [vmem:[%s1 + $0x80] sm:$0xf]
    %v298 = vld [vmem:[%s1 + $0x84] sm:$0xf]
    %v299 = vld [vmem:[%s1 + $0x88] sm:$0xf]
    %v300 = vld [vmem:[%s1 + $0x8c] sm:$0xf]
    %v301 = vld [vmem:[%s1 + $0x90] sm:$0xf]
    %v302 = vld [vmem:[%s1 + $0x94] sm:$0xf]
    %v303 = vld [vmem:[%s1 + $0x98] sm:$0xf]
    %v304 = vld [vmem:[%s1 + $0x9c] sm:$0xf]
    %v305 = vld [vmem:[%s1 + $0xa0] sm:$0xf]
    %v306 = vld [vmem:[%s1 + $0xa4] sm:$0xf]
    %v307 = vld [vmem:[%s1 + $0xa8] sm:$0xf]
    %v308 = vld [vmem:[%s1 + $0xac] sm:$0xf]
    %v309 = vld [vmem:[%s1 + $0xb0] sm:$0xf]
    %v310 = vld [vmem:[%s1 + $0xb4] sm:$0xf]
    %v311 = vld [vmem:[%s1 + $0xb8] sm:$0xf]
    %v312 = vld [vmem:[%s1 + $0xbc] sm:$0xf]
    %v313 = vld [vmem:[%s1 + $0xc0] sm:$0xf]
    %v314 = vld [vmem:[%s1 + $0xc4] sm:$0xf]
    %v315 = vld [vmem:[%s1 + $0xc8] sm:$0xf]
    %v316 = vld [vmem:[%s1 + $0xcc] sm:$0xf]
    %v317 = vld [vmem:[%s1 + $0xd0] sm:$0xf]
    %v318 = vld [vmem:[%s1 + $0xd4] sm:$0xf]
    %v319 = vld [vmem:[%s1 + $0xd8] sm:$0xf]
    %v320 = vld [vmem:[%s1 + $0xdc] sm:$0xf]
    %v321 = vld [vmem:[%s1 + $0xe0] sm:$0xf]
    %v322 = vld [vmem:[%s1 + $0xe4] sm:$0xf]
    %v323 = vld [vmem:[%s1 + $0xe8] sm:$0xf]
    %v324 = vld [vmem:[%s1 + $0xec] sm:$0xf]
    %v325 = vld [vmem:[%s1 + $0xf0] sm:$0xf]
    %v326 = vld [vmem:[%s1 + $0xf4] sm:$0xf]
    %v327 = vld [vmem:[%s1 + $0xf8] sm:$0xf]
    %v328 = vld [vmem:[%s1 + $0xfc] sm:$0xf]
    %v329 = vld [vmem:[%s1 + $0x100] sm:$0xf]
    %v330 = vld [vmem:[%s1 + $0x104] sm:$0xf]
    %v331 = vld [vmem:[%s1 + $0x108] sm:$0xf]
    %v332 = vld [vmem:[%s1 + $0x10c] sm:$0xf]
    %v333 = vld [vmem:[%s1 + $0x110] sm:$0xf]
    %v334 = vld [vmem:[%s1 + $0x114] sm:$0xf]
    %v335 = vld [vmem:[%s1 + $0x118] sm:$0xf]
    %v336 = vld [vmem:[%s1 + $0x11c] sm:$0xf]
    %v337 = vld [vmem:[%s1 + $0x120] sm:$0xf]
    %v338 = vld [vmem:[%s1 + $0x124] sm:$0xf]
    %v339 = vld [vmem:[%s1 + $0x128] sm:$0xf]
    %v340 = vld [vmem:[%s1 + $0x12c] sm:$0xf]
    %v341 = vld [vmem:[%s1 + $0x130] sm:$0xf]
    %v342 = vld [vmem:[%s1 + $0x134] sm:$0xf]
    %v343 = vld [vmem:[%s1 + $0x138] sm:$0xf]
    %v344 = vld [vmem:[%s1 + $0x13c] sm:$0xf]
    %v345 = vld [vmem:[%s1 + $0x140] sm:$0xf]
    %v346 = vld [vmem:[%s1 + $0x144] sm:$0xf]
    %v347 = vld [vmem:[%s1 + $0x148] sm:$0xf]
    %v348 = vld [vmem:[%s1 + $0x14c] sm:$0xf]
    %v349 = vld [vmem:[%s1 + $0x150] sm:$0xf]
    %v350 = vld [vmem:[%s1 + $0x154] sm:$0xf]
    %v351 = vld [vmem:[%s1 + $0x158] sm:$0xf]
    %v352 = vld [vmem:[%s1 + $0x15c] sm:$0xf]
    %v353 = vld [vmem:[%s1 + $0x160] sm:$0xf]
    %v354 = vld [vmem:[%s1 + $0x164] sm:$0xf]
    %v355 = vld [vmem:[%s1 + $0x168] sm:$0xf]
    %v356 = vld [vmem:[%s1 + $0x16c] sm:$0xf]
    %v357 = vld [vmem:[%s1 + $0x170] sm:$0xf]
    %v358 = vld [vmem:[%s1 + $0x174] sm:$0xf]
    %v359 = vld [vmem:[%s1 + $0x178] sm:$0xf]
    %v360 = vld [vmem:[%s1 + $0x17c] sm:$0xf]
    %v361 = vld [vmem:[%s1 + $0x180] sm:$0xf]
    %v362 = vld [vmem:[%s1 + $0x184] sm:$0xf]
    %v363 = vld [vmem:[%s1 + $0x188] sm:$0xf]
    %v364 = vld [vmem:[%s1 + $0x18c] sm:$0xf]
    %v365 = vld [vmem:[%s1 + $0x190] sm:$0xf]
    %v366 = vld [vmem:[%s1 + $0x194] sm:$0xf]
    %v367 = vld [vmem:[%s1 + $0x198] sm:$0xf]
    %v368 = vld [vmem:[%s1 + $0x19c] sm:$0xf]
    %v369 = vld [vmem:[%s1 + $0x1a0] sm:$0xf]
    %v370 = vld [vmem:[%s1 + $0x1a4] sm:$0xf]
    %v371 = vld [vmem:[%s1 + $0x1a8] sm:$0xf]
    %v372 = vld [vmem:[%s1 + $0x1ac] sm:$0xf]
    %v373 = vld [vmem:[%s1 + $0x1b0] sm:$0xf]
    %v374 = vld [vmem:[%s1 + $0x1b4] sm:$0xf]
    %v375 = vld [vmem:[%s1 + $0x1b8] sm:$0xf]
    %v376 = vld [vmem:[%s1 + $0x1bc] sm:$0xf]
    %v377 = vld [vmem:[%s1 + $0x1c0] sm:$0xf]
    %v378 = vld [vmem:[%s1 + $0x1c4] sm:$0xf]
    %v379 = vld [vmem:[%s1 + $0x1c8] sm:$0xf]
    %v380 = vld [vmem:[%s1 + $0x1cc] sm:$0xf]
    %v381 = vld [vmem:[%s1 + $0x1d0] sm:$0xf]
    %v382 = vld [vmem:[%s1 + $0x1d4] sm:$0xf]
    %v383 = vld [vmem:[%s1 + $0x1d8] sm:$0xf]
    %v384 = vld [vmem:[%s1 + $0x1dc] sm:$0xf]
    %v385 = vld [vmem:[%s1 + $0x1e0] sm:$0xf]
    %v386 = vld [vmem:[%s1 + $0x1e4] sm:$0xf]
    %v387 = vld [vmem:[%s1 + $0x1e8] sm:$0xf]
    %v388 = vld [vmem:[%s1 + $0x1ec] sm:$0xf]
    %v389 = vld [vmem:[%s1 + $0x1f0] sm:$0xf]
    %v390 = vld [vmem:[%s1 + $0x1f4] sm:$0xf]
    %v391 = vld [vmem:[%s1 + $0x1f8] sm:$0xf]
    %v392 = vld [vmem:[%s1 + $0x1fc] sm:$0xf]
    %v393 = vld [vmem:[%s1 + $0x200] sm:$0xf]
    %v394 = vld [vmem:[%s1 + $0x204] sm:$0xf]
    %v395 = vld [vmem:[%s1 + $0x208] sm:$0xf]
    %v396 = vld [vmem:[%s1 + $0x20c] sm:$0xf]
    %v397 = vld [vmem:[%s1 + $0x210] sm:$0xf]
    %v398 = vld [vmem:[%s1 + $0x214] sm:$0xf]
    %v399 = vld [vmem:[%s1 + $0x218] sm:$0xf]
    %v400 = vld [vmem:[%s1 + $0x21c] sm:$0xf]
    %v401 = vld [vmem:[%s1 + $0x220] sm:$0xf]
    %v402 = vld [vmem:[%s1 + $0x224] sm:$0xf]
    %v403 = vld [vmem:[%s1 + $0x228] sm:$0xf]
    %v404 = vld [vmem:[%s1 + $0x22c] sm:$0xf]
    %v405 = vld [vmem:[%s1 + $0x230] sm:$0xf]
    %v406 = vld [vmem:[%s1 + $0x234] sm:$0xf]
    %v407 = vld [vmem:[%s1 + $0x238] sm:$0xf]
    %v408 = vld [vmem:[%s1 + $0x23c] sm:$0xf]
    %v409 = vld [vmem:[%s1 + $0x240] sm:$0xf]
    %v410 = vld [vmem:[%s1 + $0x244] sm:$0xf]
    %v411 = vld [vmem:[%s1 + $0x248] sm:$0xf]
    %v412 = vld [vmem:[%s1 + $0x24c] sm:$0xf]
    %v413 = vld [vmem:[%s1 + $0x250] sm:$0xf]
    %v414 = vld [vmem:[%s1 + $0x254] sm:$0xf]
    %v415 = vld [vmem:[%s1 + $0x258] sm:$0xf]
    %v416 = vld [vmem:[%s1 + $0x25c] sm:$0xf]
    %v417 = vld [vmem:[%s1 + $0x260] sm:$0xf]
    %v418 = vld [vmem:[%s1 + $0x264] sm:$0xf]
    %v419 = vld [vmem:[%s1 + $0x268] sm:$0xf]
    %v420 = vld [vmem:[%s1 + $0x26c] sm:$0xf]
    %v421 = vld [vmem:[%s1 + $0x270] sm:$0xf]
    %v422 = vld [vmem:[%s1 + $0x274] sm:$0xf]
    %v423 = vld [vmem:[%s1 + $0x278] sm:$0xf]
    %v424 = vld [vmem:[%s1 + $0x27c] sm:$0xf]
    %v425 = vld [vmem:[%s1 + $0x280] sm:$0xf]
    %v426 = vld [vmem:[%s1 + $0x284] sm:$0xf]
    %v427 = vld [vmem:[%s1 + $0x288] sm:$0xf]
    %v428 = vld [vmem:[%s1 + $0x28c] sm:$0xf]
    %v429 = vld [vmem:[%s1 + $0x290] sm:$0xf]
    %v430 = vld [vmem:[%s1 + $0x294] sm:$0xf]
    %v431 = vld [vmem:[%s1 + $0x298] sm:$0xf]
    %v432 = vld [vmem:[%s1 + $0x29c] sm:$0xf]
    %v433 = vld [vmem:[%s1 + $0x2a0] sm:$0xf]
    %v434 = vld [vmem:[%s1 + $0x2a4] sm:$0xf]
    %v435 = vld [vmem:[%s1 + $0x2a8] sm:$0xf]
    %v436 = vld [vmem:[%s1 + $0x2ac] sm:$0xf]
    %v437 = vld [vmem:[%s1 + $0x2b0] sm:$0xf]
    %v438 = vld [vmem:[%s1 + $0x2b4] sm:$0xf]
    %v439 = vld [vmem:[%s1 + $0x2b8] sm:$0xf]
    %v440 = vld [vmem:[%s1 + $0x2bc] sm:$0xf]
    %v441 = vld [vmem:[%s1 + $0x2c0] sm:$0xf]
    %v442 = vld [vmem:[%s1 + $0x2c4] sm:$0xf]
    %v443 = vld [vmem:[%s1 + $0x2c8] sm:$0xf]
    %v444 = vld [vmem:[%s1 + $0x2cc] sm:$0xf]
    %v445 = vld [vmem:[%s1 + $0x2d0] sm:$0xf]
    %v446 = vld [vmem:[%s1 + $0x2d4] sm:$0xf]
    %v447 = vld [vmem:[%s1 + $0x2d8] sm:$0xf]
    %v448 = vld [vmem:[%s1 + $0x2dc] sm:$0xf]
    %v449 = vld [vmem:[%s1 + $0x2e0] sm:$0xf]
    %v450 = vld [vmem:[%s1 + $0x2e4] sm:$0xf]
    %v451 = vld [vmem:[%s1 + $0x2e8] sm:$0xf]
    %v452 = vld [vmem:[%s1 + $0x2ec] sm:$0xf]
    %v453 = vld [vmem:[%s1 + $0x2f0] sm:$0xf]
    %v454 = vld [vmem:[%s1 + $0x2f4] sm:$0xf]
    %v455 = vld [vmem:[%s1 + $0x2f8] sm:$0xf]
    %v456 = vld [vmem:[%s1 + $0x2fc] sm:$0xf]
    %v457 = vld [vmem:[%s1 + $0x300] sm:$0xf]
    %v458 = vld [vmem:[%s1 + $0x304] sm:$0xf]
    %v459 = vld [vmem:[%s1 + $0x308] sm:$0xf]
    %v460 = vld [vmem:[%s1 + $0x30c] sm:$0xf]
    %v461 = vld [vmem:[%s1 + $0x310] sm:$0xf]
    %v462 = vld [vmem:[%s1 + $0x314] sm:$0xf]
    %v463 = vld [vmem:[%s1 + $0x318] sm:$0xf]
    %v464 = vld [vmem:[%s1 + $0x31c] sm:$0xf]
    %v465 = vld [vmem:[%s1 + $0x320] sm:$0xf]
    %v466 = vld [vmem:[%s1 + $0x324] sm:$0xf]
    %v467 = vld [vmem:[%s1 + $0x328] sm:$0xf]
    %v468 = vld [vmem:[%s1 + $0x32c] sm:$0xf]
    %v469 = vld [vmem:[%s1 + $0x330] sm:$0xf]
    %v470 = vld [vmem:[%s1 + $0x334] sm:$0xf]
    %v471 = vld [vmem:[%s1 + $0x338] sm:$0xf]
    %v472 = vld [vmem:[%s1 + $0x33c] sm:$0xf]
    %v473 = vld [vmem:[%s1 + $0x340] sm:$0xf]
    %v474 = vld [vmem:[%s1 + $0x344] sm:$0xf]
    %v475 = vld [vmem:[%s1 + $0x348] sm:$0xf]
    %v476 = vld [vmem:[%s1 + $0x34c] sm:$0xf]
    %v477 = vld [vmem:[%s1 + $0x350] sm:$0xf]
    %v478 = vld [vmem:[%s1 + $0x354] sm:$0xf]
    %v479 = vld [vmem:[%s1 + $0x358] sm:$0xf]
    %v480 = vld [vmem:[%s1 + $0x35c] sm:$0xf]
    %v481 = vld [vmem:[%s1 + $0x360] sm:$0xf]
    %v482 = vld [vmem:[%s1 + $0x364] sm:$0xf]
    %v483 = vld [vmem:[%s1 + $0x368] sm:$0xf]
    %v484 = vld [vmem:[%s1 + $0x36c] sm:$0xf]
    %v485 = vld [vmem:[%s1 + $0x370] sm:$0xf]
    %v486 = vld [vmem:[%s1 + $0x374] sm:$0xf]
    %v487 = vld [vmem:[%s1 + $0x378] sm:$0xf]
    %v488 = vld [vmem:[%s1 + $0x37c] sm:$0xf]
    %v489 = vld [vmem:[%s1 + $0x380] sm:$0xf]
    %v490 = vld [vmem:[%s1 + $0x384] sm:$0xf]
    %v491 = vld [vmem:[%s1 + $0x388] sm:$0xf]
    %v492 = vld [vmem:[%s1 + $0x38c] sm:$0xf]
    %v493 = vld [vmem:[%s1 + $0x390] sm:$0xf]
    %v494 = vld [vmem:[%s1 + $0x394] sm:$0xf]
    %v495 = vld [vmem:[%s1 + $0x398] sm:$0xf]
    %v496 = vld [vmem:[%s1 + $0x39c] sm:$0xf]
    %v497 = vld [vmem:[%s1 + $0x3a0] sm:$0xf]
    %v498 = vld [vmem:[%s1 + $0x3a4] sm:$0xf]
    %v499 = vld [vmem:[%s1 + $0x3a8] sm:$0xf]
    %v500 = vld [vmem:[%s1 + $0x3ac] sm:$0xf]
    %v501 = vld [vmem:[%s1 + $0x3b0] sm:$0xf]
    %v502 = vld [vmem:[%s1 + $0x3b4] sm:$0xf]
    %v503 = vld [vmem:[%s1 + $0x3b8] sm:$0xf]
    %v504 = vld [vmem:[%s1 + $0x3bc] sm:$0xf]
    %v505 = vld [vmem:[%s1 + $0x3c0] sm:$0xf]
    %v506 = vld [vmem:[%s1 + $0x3c4] sm:$0xf]
    %v507 = vld [vmem:[%s1 + $0x3c8] sm:$0xf]
    %v508 = vld [vmem:[%s1 + $0x3cc] sm:$0xf]
    %v509 = vld [vmem:[%s1 + $0x3d0] sm:$0xf]
    %v510 = vld [vmem:[%s1 + $0x3d4] sm:$0xf]
    %v511 = vld [vmem:[%s1 + $0x3d8] sm:$0xf]
    %v512 = vld [vmem:[%s1 + $0x3dc] sm:$0xf]
    %v513 = vld [vmem:[%s1 + $0x3e0] sm:$0xf]
    %v514 = vld [vmem:[%s1 + $0x3e4] sm:$0xf]
    %v515 = vld [vmem:[%s1 + $0x3e8] sm:$0xf]
    %v516 = vld [vmem:[%s1 + $0x3ec] sm:$0xf]
    %v517 = vld [vmem:[%s1 + $0x3f0] sm:$0xf]
    %v518 = vld [vmem:[%s1 + $0x3f4] sm:$0xf]
    %v519 = vld [vmem:[%s1 + $0x3f8] sm:$0xf]
    %v520 = vld [vmem:[%s1 + $0x3fc] sm:$0xf]
    %v521 = vld [vmem:[%s1 + $0x400] sm:$0xf]
    %v522 = vld [vmem:[%s1 + $0x404] sm:$0xf]
    %v523 = vld [vmem:[%s1 + $0x408] sm:$0xf]
    %v524 = vld [vmem:[%s1 + $0x40c] sm:$0xf]
    %v525 = vld [vmem:[%s1 + $0x410] sm:$0xf]
    %v526 = vld [vmem:[%s1 + $0x414] sm:$0xf]
    %v527 = vld [vmem:[%s1 + $0x418] sm:$0xf]
    %v528 = vld [vmem:[%s1 + $0x41c] sm:$0xf]
    %v529 = vld [vmem:[%s1 + $0x420] sm:$0xf]
    %v530 = vld [vmem:[%s1 + $0x424] sm:$0xf]
    %v531 = vld [vmem:[%s1 + $0x428] sm:$0xf]
    %v532 = vld [vmem:[%s1 + $0x42c] sm:$0xf]
    %v533 = vld [vmem:[%s1 + $0x430] sm:$0xf]
    %v534 = vld [vmem:[%s1 + $0x434] sm:$0xf]
    %v535 = vld [vmem:[%s1 + $0x438] sm:$0xf]
    %v536 = vld [vmem:[%s1 + $0x43c] sm:$0xf]
    %v537 = vld [vmem:[%s1 + $0x440] sm:$0xf]
    %v538 = vld [vmem:[%s1 + $0x444] sm:$0xf]
    %v539 = vld [vmem:[%s1 + $0x448] sm:$0xf]
    %v540 = vld [vmem:[%s1 + $0x44c] sm:$0xf]
    %v541 = vld [vmem:[%s1 + $0x450] sm:$0xf]
    %v542 = vld [vmem:[%s1 + $0x454] sm:$0xf]
    %v543 = vld [vmem:[%s1 + $0x458] sm:$0xf]
    %v544 = vld [vmem:[%s1 + $0x45c] sm:$0xf]
    %v545 = vld [vmem:[%s1 + $0x460] sm:$0xf]
    %v546 = vld [vmem:[%s1 + $0x464] sm:$0xf]
    %v547 = vld [vmem:[%s1 + $0x468] sm:$0xf]
    %v548 = vld [vmem:[%s1 + $0x46c] sm:$0xf]
    %v549 = vld [vmem:[%s1 + $0x470] sm:$0xf]
    %v550 = vld [vmem:[%s1 + $0x474] sm:$0xf]
    %v551 = vld [vmem:[%s1 + $0x478] sm:$0xf]
    %v552 = vld [vmem:[%s1 + $0x47c] sm:$0xf]
    %v553 = vld [vmem:[%s1 + $0x480] sm:$0xf]
    %v554 = vld [vmem:[%s1 + $0x484] sm:$0xf]
    %v555 = vld [vmem:[%s1 + $0x488] sm:$0xf]
    %v556 = vld [vmem:[%s1 + $0x48c] sm:$0xf]
    %v557 = vld [vmem:[%s1 + $0x490] sm:$0xf]
    %v558 = vld [vmem:[%s1 + $0x494] sm:$0xf]
    %v559 = vld [vmem:[%s1 + $0x498] sm:$0xf]
    %v560 = vld [vmem:[%s1 + $0x49c] sm:$0xf]
    %v561 = vld [vmem:[%s1 + $0x4a0] sm:$0xf]
    %v562 = vld [vmem:[%s1 + $0x4a4] sm:$0xf]
    %v563 = vld [vmem:[%s1 + $0x4a8] sm:$0xf]
    %v564 = vld [vmem:[%s1 + $0x4ac] sm:$0xf]
    %v565 = vld [vmem:[%s1 + $0x4b0] sm:$0xf]
    %v566 = vld [vmem:[%s1 + $0x4b4] sm:$0xf]
    %v567 = vld [vmem:[%s1 + $0x4b8] sm:$0xf]
    %v568 = vld [vmem:[%s1 + $0x4bc] sm:$0xf]
    %v569 = vld [vmem:[%s1 + $0x4c0] sm:$0xf]
    %v570 = vld [vmem:[%s1 + $0x4c4] sm:$0xf]
    %v571 = vld [vmem:[%s1 + $0x4c8] sm:$0xf]
    %v572 = vld [vmem:[%s1 + $0x4cc] sm:$0xf]
    %v573 = vld [vmem:[%s1 + $0x4d0] sm:$0xf]
    %v574 = vld [vmem:[%s1 + $0x4d4] sm:$0xf]
    %v575 = vld [vmem:[%s1 + $0x4d8] sm:$0xf]
    %v576 = vld [vmem:[%s1 + $0x4dc] sm:$0xf]
    %v577 = vld [vmem:[%s1 + $0x4e0] sm:$0xf]
    %v578 = vld [vmem:[%s1 + $0x4e4] sm:$0xf]
    %v579 = vld [vmem:[%s1 + $0x4e8] sm:$0xf]
    %v580 = vld [vmem:[%s1 + $0x4ec] sm:$0xf]
    %v581 = vld [vmem:[%s1 + $0x4f0] sm:$0xf]
    %v582 = vld [vmem:[%s1 + $0x4f4] sm:$0xf]
    %v583 = vld [vmem:[%s1 + $0x4f8] sm:$0xf]
    %v584 = vld [vmem:[%s1 + $0x4fc] sm:$0xf]
    %v585 = vld [vmem:[%s1 + $0x500] sm:$0xf]
    %v586 = vld [vmem:[%s1 + $0x504] sm:$0xf]
    %v587 = vld [vmem:[%s1 + $0x508] sm:$0xf]
    %v588 = vld [vmem:[%s1 + $0x50c] sm:$0xf]
    %v589 = vld [vmem:[%s1 + $0x510] sm:$0xf]
    %v590 = vld [vmem:[%s1 + $0x514] sm:$0xf]
    %v591 = vld [vmem:[%s1 + $0x518] sm:$0xf]
    %v592 = vld [vmem:[%s1 + $0x51c] sm:$0xf]
    %v593 = vld [vmem:[%s1 + $0x520] sm:$0xf]
    %v594 = vld [vmem:[%s1 + $0x524] sm:$0xf]
    %v595 = vld [vmem:[%s1 + $0x528] sm:$0xf]
    %v596 = vld [vmem:[%s1 + $0x52c] sm:$0xf]
    %v597 = vld [vmem:[%s1 + $0x530] sm:$0xf]
    %v598 = vld [vmem:[%s1 + $0x534] sm:$0xf]
    %v599 = vld [vmem:[%s1 + $0x538] sm:$0xf]
    %v600 = vld [vmem:[%s1 + $0x53c] sm:$0xf]
    %v601 = vld [vmem:[%s1 + $0x540] sm:$0xf]
    %v602 = vld [vmem:[%s1 + $0x544] sm:$0xf]
    %v603 = vld [vmem:[%s1 + $0x548] sm:$0xf]
    %v604 = vld [vmem:[%s1 + $0x54c] sm:$0xf]
    %v605 = vld [vmem:[%s1 + $0x550] sm:$0xf]
    %v606 = vld [vmem:[%s1 + $0x554] sm:$0xf]
    %v607 = vld [vmem:[%s1 + $0x558] sm:$0xf]
    %v608 = vld [vmem:[%s1 + $0x55c] sm:$0xf]
    %v609 = vld [vmem:[%s1 + $0x560] sm:$0xf]
    %v610 = vld [vmem:[%s1 + $0x564] sm:$0xf]
    %v611 = vld [vmem:[%s1 + $0x568] sm:$0xf]
    %v612 = vld [vmem:[%s1 + $0x56c] sm:$0xf]
    %v613 = vld [vmem:[%s1 + $0x570] sm:$0xf]
    %v614 = vld [vmem:[%s1 + $0x574] sm:$0xf]
    %v615 = vld [vmem:[%s1 + $0x578] sm:$0xf]
    %v616 = vld [vmem:[%s1 + $0x57c] sm:$0xf]
    %v617 = vld [vmem:[%s1 + $0x580] sm:$0xf]
    %v618 = vld [vmem:[%s1 + $0x584] sm:$0xf]
    %v619 = vld [vmem:[%s1 + $0x588] sm:$0xf]
    %v620 = vld [vmem:[%s1 + $0x58c] sm:$0xf]
    %v621 = vld [vmem:[%s1 + $0x590] sm:$0xf]
    %v622 = vld [vmem:[%s1 + $0x594] sm:$0xf]
    %v623 = vld [vmem:[%s1 + $0x598] sm:$0xf]
    %v624 = vld [vmem:[%s1 + $0x59c] sm:$0xf]
    %v625 = vld [vmem:[%s1 + $0x5a0] sm:$0xf]
    %v626 = vld [vmem:[%s1 + $0x5a4] sm:$0xf]
    %v627 = vld [vmem:[%s1 + $0x5a8] sm:$0xf]
    %v628 = vld [vmem:[%s1 + $0x5ac] sm:$0xf]
    %v629 = vld [vmem:[%s1 + $0x5b0] sm:$0xf]
    %v630 = vld [vmem:[%s1 + $0x5b4] sm:$0xf]
    %v631 = vld [vmem:[%s1 + $0x5b8] sm:$0xf]
    %v632 = vld [vmem:[%s1 + $0x5bc] sm:$0xf]
    %v633 = vld [vmem:[%s1 + $0x5c0] sm:$0xf]
    %v634 = vld [vmem:[%s1 + $0x5c4] sm:$0xf]
    %v635 = vld [vmem:[%s1 + $0x5c8] sm:$0xf]
    %v636 = vld [vmem:[%s1 + $0x5cc] sm:$0xf]
    %v637 = vld [vmem:[%s1 + $0x5d0] sm:$0xf]
    %v638 = vld [vmem:[%s1 + $0x5d4] sm:$0xf]
    %v639 = vld [vmem:[%s1 + $0x5d8] sm:$0xf]
    %v640 = vld [vmem:[%s1 + $0x5dc] sm:$0xf]
    %v641 = vld [vmem:[%s1 + $0x5e0] sm:$0xf]
    %v642 = vld [vmem:[%s1 + $0x5e4] sm:$0xf]
    %v643 = vld [vmem:[%s1 + $0x5e8] sm:$0xf]
    %v644 = vld [vmem:[%s1 + $0x5ec] sm:$0xf]
    %v645 = vld [vmem:[%s1 + $0x5f0] sm:$0xf]
    %v646 = vld [vmem:[%s1 + $0x5f4] sm:$0xf]
    %v647 = vld [vmem:[%s1 + $0x5f8] sm:$0xf]
    %v648 = vld [vmem:[%s1 + $0x5fc] sm:$0xf]
    %v649 = vld [vmem:[%s1 + $0x600] sm:$0xf]
    %v650 = vld [vmem:[%s1 + $0x604] sm:$0xf]
    %v651 = vld [vmem:[%s1 + $0x608] sm:$0xf]
    %v652 = vld [vmem:[%s1 + $0x60c] sm:$0xf]
    %v653 = vld [vmem:[%s1 + $0x610] sm:$0xf]
    %v654 = vld [vmem:[%s1 + $0x614] sm:$0xf]
    %v655 = vld [vmem:[%s1 + $0x618] sm:$0xf]
    %v656 = vld [vmem:[%s1 + $0x61c] sm:$0xf]
    %v657 = vld [vmem:[%s1 + $0x620] sm:$0xf]
    %v658 = vld [vmem:[%s1 + $0x624] sm:$0xf]
    %v659 = vld [vmem:[%s1 + $0x628] sm:$0xf]
    %v660 = vld [vmem:[%s1 + $0x62c] sm:$0xf]
    %v661 = vld [vmem:[%s1 + $0x630] sm:$0xf]
    %v662 = vld [vmem:[%s1 + $0x634] sm:$0xf]
    %v663 = vld [vmem:[%s1 + $0x638] sm:$0xf]
    %v664 = vld [vmem:[%s1 + $0x63c] sm:$0xf]
    %v665 = vld [vmem:[%s1 + $0x640] sm:$0xf]
    %v666 = vld [vmem:[%s1 + $0x644] sm:$0xf]
    %v667 = vld [vmem:[%s1 + $0x648] sm:$0xf]
    %v668 = vld [vmem:[%s1 + $0x64c] sm:$0xf]
    %v669 = vld [vmem:[%s1 + $0x650] sm:$0xf]
    %v670 = vld [vmem:[%s1 + $0x654] sm:$0xf]
    %v671 = vld [vmem:[%s1 + $0x658] sm:$0xf]
    %v672 = vld [vmem:[%s1 + $0x65c] sm:$0xf]
    %v673 = vld [vmem:[%s1 + $0x660] sm:$0xf]
    %v674 = vld [vmem:[%s1 + $0x664] sm:$0xf]
    %v675 = vld [vmem:[%s1 + $0x668] sm:$0xf]
    %v676 = vld [vmem:[%s1 + $0x66c] sm:$0xf]
    %v677 = vld [vmem:[%s1 + $0x670] sm:$0xf]
    %v678 = vld [vmem:[%s1 + $0x674] sm:$0xf]
    %v679 = vld [vmem:[%s1 + $0x678] sm:$0xf]
    %v680 = vld [vmem:[%s1 + $0x67c] sm:$0xf]
    %v681 = vld [vmem:[%s1 + $0x680] sm:$0xf]
    %v682 = vld [vmem:[%s1 + $0x684] sm:$0xf]
    %v683 = vld [vmem:[%s1 + $0x688] sm:$0xf]
    %v684 = vld [vmem:[%s1 + $0x68c] sm:$0xf]
    %v685 = vld [vmem:[%s1 + $0x690] sm:$0xf]
    %v686 = vld [vmem:[%s1 + $0x694] sm:$0xf]
    %v687 = vld [vmem:[%s1 + $0x698] sm:$0xf]
    %v688 = vld [vmem:[%s1 + $0x69c] sm:$0xf]
    %v689 = vld [vmem:[%s1 + $0x6a0] sm:$0xf]
    %v690 = vld [vmem:[%s1 + $0x6a4] sm:$0xf]
    %v691 = vld [vmem:[%s1 + $0x6a8] sm:$0xf]
    %v692 = vld [vmem:[%s1 + $0x6ac] sm:$0xf]
    %v693 = vld [vmem:[%s1 + $0x6b0] sm:$0xf]
    %v694 = vld [vmem:[%s1 + $0x6b4] sm:$0xf]
    %v695 = vld [vmem:[%s1 + $0x6b8] sm:$0xf]
    %v696 = vld [vmem:[%s1 + $0x6bc] sm:$0xf]
    %v697 = vld [vmem:[%s1 + $0x6c0] sm:$0xf]
    %v698 = vld [vmem:[%s1 + $0x6c4] sm:$0xf]
    %v699 = vld [vmem:[%s1 + $0x6c8] sm:$0xf]
    %v700 = vld [vmem:[%s1 + $0x6cc] sm:$0xf]
    %v701 = vld [vmem:[%s1 + $0x6d0] sm:$0xf]
    %v702 = vld [vmem:[%s1 + $0x6d4] sm:$0xf]
    %v703 = vld [vmem:[%s1 + $0x6d8] sm:$0xf]
    %v704 = vld [vmem:[%s1 + $0x6dc] sm:$0xf]
    %v705 = vld [vmem:[%s1 + $0x6e0] sm:$0xf]
    %v706 = vld [vmem:[%s1 + $0x6e4] sm:$0xf]
    %v707 = vld [vmem:[%s1 + $0x6e8] sm:$0xf]
    %v708 = vld [vmem:[%s1 + $0x6ec] sm:$0xf]
    %v709 = vld [vmem:[%s1 + $0x6f0] sm:$0xf]
    %v710 = vld [vmem:[%s1 + $0x6f4] sm:$0xf]
    %v711 = vld [vmem:[%s1 + $0x6f8] sm:$0xf]
    %v712 = vld [vmem:[%s1 + $0x6fc] sm:$0xf]
    %v713 = vld [vmem:[%s1 + $0x700] sm:$0xf]
    %v714 = vld [vmem:[%s1 + $0x704] sm:$0xf]
    %v715 = vld [vmem:[%s1 + $0x708] sm:$0xf]
    %v716 = vld [vmem:[%s1 + $0x70c] sm:$0xf]
    %v717 = vld [vmem:[%s1 + $0x710] sm:$0xf]
    %v718 = vld [vmem:[%s1 + $0x714] sm:$0xf]
    %v719 = vld [vmem:[%s1 + $0x718] sm:$0xf]
    %v720 = vld [vmem:[%s1 + $0x71c] sm:$0xf]
    %v721 = vld [vmem:[%s1 + $0x720] sm:$0xf]
    %v722 = vld [vmem:[%s1 + $0x724] sm:$0xf]
    %v723 = vld [vmem:[%s1 + $0x728] sm:$0xf]
    %v724 = vld [vmem:[%s1 + $0x72c] sm:$0xf]
    %v725 = vld [vmem:[%s1 + $0x730] sm:$0xf]
    %v726 = vld [vmem:[%s1 + $0x734] sm:$0xf]
    %v727 = vld [vmem:[%s1 + $0x738] sm:$0xf]
    %v728 = vld [vmem:[%s1 + $0x73c] sm:$0xf]
    %v729 = vld [vmem:[%s1 + $0x740] sm:$0xf]
    %v730 = vld [vmem:[%s1 + $0x744] sm:$0xf]
    %v731 = vld [vmem:[%s1 + $0x748] sm:$0xf]
    %v732 = vld [vmem:[%s1 + $0x74c] sm:$0xf]
    %v733 = vld [vmem:[%s1 + $0x750] sm:$0xf]
    %v734 = vld [vmem:[%s1 + $0x754] sm:$0xf]
    %v735 = vld [vmem:[%s1 + $0x758] sm:$0xf]
    %v736 = vld [vmem:[%s1 + $0x75c] sm:$0xf]
    %v737 = vld [vmem:[%s1 + $0x760] sm:$0xf]
    %v738 = vld [vmem:[%s1 + $0x764] sm:$0xf]
    %v739 = vld [vmem:[%s1 + $0x768] sm:$0xf]
    %v740 = vld [vmem:[%s1 + $0x76c] sm:$0xf]
    %v741 = vld [vmem:[%s1 + $0x770] sm:$0xf]
    %v742 = vld [vmem:[%s1 + $0x774] sm:$0xf]
    %v743 = vld [vmem:[%s1 + $0x778] sm:$0xf]
    %v744 = vld [vmem:[%s1 + $0x77c] sm:$0xf]
    %v745 = vld [vmem:[%s1 + $0x780] sm:$0xf]
    %v746 = vld [vmem:[%s1 + $0x784] sm:$0xf]
    %v747 = vld [vmem:[%s1 + $0x788] sm:$0xf]
    %v748 = vld [vmem:[%s1 + $0x78c] sm:$0xf]
    %v749 = vld [vmem:[%s1 + $0x790] sm:$0xf]
    %v750 = vld [vmem:[%s1 + $0x794] sm:$0xf]
    %v751 = vld [vmem:[%s1 + $0x798] sm:$0xf]
    %v752 = vld [vmem:[%s1 + $0x79c] sm:$0xf]
    %v753 = vld [vmem:[%s1 + $0x7a0] sm:$0xf]
    %v754 = vld [vmem:[%s1 + $0x7a4] sm:$0xf]
    %v755 = vld [vmem:[%s1 + $0x7a8] sm:$0xf]
    %v756 = vld [vmem:[%s1 + $0x7ac] sm:$0xf]
    %v757 = vld [vmem:[%s1 + $0x7b0] sm:$0xf]
    %v758 = vld [vmem:[%s1 + $0x7b4] sm:$0xf]
    %v759 = vld [vmem:[%s1 + $0x7b8] sm:$0xf]
    %v760 = vld [vmem:[%s1 + $0x7bc] sm:$0xf]
    %v761 = vld [vmem:[%s1 + $0x7c0] sm:$0xf]
    %v762 = vld [vmem:[%s1 + $0x7c4] sm:$0xf]
    %v763 = vld [vmem:[%s1 + $0x7c8] sm:$0xf]
    %v764 = vld [vmem:[%s1 + $0x7cc] sm:$0xf]
    %v765 = vld [vmem:[%s1 + $0x7d0] sm:$0xf]
    %v766 = vld [vmem:[%s1 + $0x7d4] sm:$0xf]
    %v767 = vld [vmem:[%s1 + $0x7d8] sm:$0xf]
    %v768 = vld [vmem:[%s1 + $0x7dc] sm:$0xf]
    %v769 = vld [vmem:[%s1 + $0x7e0] sm:$0xf]
    %v770 = vld [vmem:[%s1 + $0x7e4] sm:$0xf]
    %v771 = vld [vmem:[%s1 + $0x7e8] sm:$0xf]
    %v772 = vld [vmem:[%s1 + $0x7ec] sm:$0xf]
    %v773 = vld [vmem:[%s1 + $0x7f0] sm:$0xf]
    %v774 = vld [vmem:[%s1 + $0x7f4] sm:$0xf]
    %v775 = vld [vmem:[%s1 + $0x7f8] sm:$0xf]
    %v776 = vld [vmem:[%s1 + $0x7fc] sm:$0xf]
    %v777 = vld [vmem:[%s1 + $0x800] sm:$0xf]
    %v778 = vld [vmem:[%s1 + $0x804] sm:$0xf]
    %v779 = vld [vmem:[%s1 + $0x808] sm:$0xf]
    %v780 = vld [vmem:[%s1 + $0x80c] sm:$0xf]
    %v781 = vld [vmem:[%s1 + $0x810] sm:$0xf]
    %v782 = vld [vmem:[%s1 + $0x814] sm:$0xf]
    %v783 = vld [vmem:[%s1 + $0x818] sm:$0xf]
    %v784 = vld [vmem:[%s1 + $0x81c] sm:$0xf]
    %v785 = vld [vmem:[%s1 + $0x820] sm:$0xf]
    %v786 = vld [vmem:[%s1 + $0x824] sm:$0xf]
    %v787 = vld [vmem:[%s1 + $0x828] sm:$0xf]
    %v788 = vld [vmem:[%s1 + $0x82c] sm:$0xf]
    %v789 = vld [vmem:[%s1 + $0x830] sm:$0xf]
    %v790 = vld [vmem:[%s1 + $0x834] sm:$0xf]
    %v791 = vld [vmem:[%s1 + $0x838] sm:$0xf]
    %v792 = vld [vmem:[%s1 + $0x83c] sm:$0xf]
    %v793 = vld [vmem:[%s1 + $0x840] sm:$0xf]
    %v794 = vld [vmem:[%s1 + $0x844] sm:$0xf]
    %v795 = vld [vmem:[%s1 + $0x848] sm:$0xf]
    %v796 = vld [vmem:[%s1 + $0x84c] sm:$0xf]
    %v797 = vld [vmem:[%s1 + $0x850] sm:$0xf]
    %v798 = vld [vmem:[%s1 + $0x854] sm:$0xf]
    %v799 = vld [vmem:[%s1 + $0x858] sm:$0xf]
    %v800 = vld [vmem:[%s1 + $0x85c] sm:$0xf]
    %v801 = vld [vmem:[%s1 + $0x860] sm:$0xf]
    %v802 = vld [vmem:[%s1 + $0x864] sm:$0xf]
    %v803 = vld [vmem:[%s1 + $0x868] sm:$0xf]
    %v804 = vld [vmem:[%s1 + $0x86c] sm:$0xf]
    %v805 = vld [vmem:[%s1 + $0x870] sm:$0xf]
    %v806 = vld [vmem:[%s1 + $0x874] sm:$0xf]
    %v807 = vld [vmem:[%s1 + $0x878] sm:$0xf]
    %v808 = vld [vmem:[%s1 + $0x87c] sm:$0xf]
    %v809 = vld [vmem:[%s1 + $0x880] sm:$0xf]
    %v810 = vld [vmem:[%s1 + $0x884] sm:$0xf]
    %v811 = vld [vmem:[%s1 + $0x888] sm:$0xf]
    %v812 = vld [vmem:[%s1 + $0x88c] sm:$0xf]
    %v813 = vld [vmem:[%s1 + $0x890] sm:$0xf]
    %v814 = vld [vmem:[%s1 + $0x894] sm:$0xf]
    %v815 = vld [vmem:[%s1 + $0x898] sm:$0xf]
    %v816 = vld [vmem:[%s1 + $0x89c] sm:$0xf]
    %v817 = vld [vmem:[%s1 + $0x8a0] sm:$0xf]
    %v818 = vld [vmem:[%s1 + $0x8a4] sm:$0xf]
    %v819 = vld [vmem:[%s1 + $0x8a8] sm:$0xf]
    %v820 = vld [vmem:[%s1 + $0x8ac] sm:$0xf]
    %v821 = vld [vmem:[%s1 + $0x8b0] sm:$0xf]
    %v822 = vld [vmem:[%s1 + $0x8b4] sm:$0xf]
    %v823 = vld [vmem:[%s1 + $0x8b8] sm:$0xf]
    %v824 = vld [vmem:[%s1 + $0x8bc] sm:$0xf]
    %v825 = vld [vmem:[%s1 + $0x8c0] sm:$0xf]
    %v826 = vld [vmem:[%s1 + $0x8c4] sm:$0xf]
    %v827 = vld [vmem:[%s1 + $0x8c8] sm:$0xf]
    %v828 = vld [vmem:[%s1 + $0x8cc] sm:$0xf]
    %v829 = vld [vmem:[%s1 + $0x8d0] sm:$0xf]
    %v830 = vld [vmem:[%s1 + $0x8d4] sm:$0xf]
    %v831 = vld [vmem:[%s1 + $0x8d8] sm:$0xf]
    %v832 = vld [vmem:[%s1 + $0x8dc] sm:$0xf]
    %v833 = vld [vmem:[%s1 + $0x8e0] sm:$0xf]
    %v834 = vld [vmem:[%s1 + $0x8e4] sm:$0xf]
    %v835 = vld [vmem:[%s1 + $0x8e8] sm:$0xf]
    %v836 = vld [vmem:[%s1 + $0x8ec] sm:$0xf]
    %v837 = vld [vmem:[%s1 + $0x8f0] sm:$0xf]
    %v838 = vld [vmem:[%s1 + $0x8f4] sm:$0xf]
    %v839 = vld [vmem:[%s1 + $0x8f8] sm:$0xf]
    %v840 = vld [vmem:[%s1 + $0x8fc] sm:$0xf]
    %v841 = vld [vmem:[%s2] sm:$0x1]
    %v843 = vlaneseq
    %v844 = vshrl.u32 %v843, 7
    %v845 = vsub.s32 0, %v844
    %v846 = vrot.slane %v841, %v845
    %v1424 = vunpack.c.l.b16 %v265
    %v1425 = vunpack.c.l.b16 %v266
    %v1426 = vunpack.c.l.b16 %v267
    %v1427 = vunpack.c.l.b16 %v268
    %v1428 = vunpack.c.l.b16 %v269
    %v1429 = vunpack.c.l.b16 %v270
    %v1430 = vunpack.c.l.b16 %v271
    %v1431 = vunpack.c.l.b16 %v272
    %v1432 = vunpack.c.l.b16 %v273
    %v1433 = vunpack.c.l.b16 %v274
    %v1434 = vunpack.c.l.b16 %v275
    %v1435 = vunpack.c.l.b16 %v276
    %v1436 = vunpack.c.l.b16 %v277
    %v1437 = vunpack.c.l.b16 %v278
    %v1438 = vunpack.c.l.b16 %v279
    %v1439 = vunpack.c.l.b16 %v280
    %v1440 = vunpack.c.l.b16 %v281
    %v1441 = vunpack.c.l.b16 %v282
    %v1442 = vunpack.c.l.b16 %v283
    %v1443 = vunpack.c.l.b16 %v284
    %v1444 = vunpack.c.l.b16 %v285
    %v1445 = vunpack.c.l.b16 %v286
    %v1446 = vunpack.c.l.b16 %v287
    %v1447 = vunpack.c.l.b16 %v288
    %v1448 = vunpack.c.l.b16 %v289
    %v1449 = vunpack.c.l.b16 %v290
    %v1450 = vunpack.c.l.b16 %v291
    %v1451 = vunpack.c.l.b16 %v292
    %v1452 = vunpack.c.l.b16 %v293
    %v1453 = vunpack.c.l.b16 %v294
    %v1454 = vunpack.c.l.b16 %v295
    %v1455 = vunpack.c.l.b16 %v296
    %v1456 = vunpack.c.l.b16 %v297
    %v1457 = vunpack.c.l.b16 %v298
    %v1458 = vunpack.c.l.b16 %v299
    %v1459 = vunpack.c.l.b16 %v300
    %v1460 = vunpack.c.l.b16 %v301
    %v1461 = vunpack.c.l.b16 %v302
    %v1462 = vunpack.c.l.b16 %v303
    %v1463 = vunpack.c.l.b16 %v304
    %v1464 = vunpack.c.l.b16 %v305
    %v1465 = vunpack.c.l.b16 %v306
    %v1466 = vunpack.c.l.b16 %v307
    %v1467 = vunpack.c.l.b16 %v308
    %v1468 = vunpack.c.l.b16 %v309
    %v1469 = vunpack.c.l.b16 %v310
    %v1470 = vunpack.c.l.b16 %v311
    %v1471 = vunpack.c.l.b16 %v312
    %v1472 = vunpack.c.l.b16 %v313
    %v1473 = vunpack.c.l.b16 %v314
    %v1474 = vunpack.c.l.b16 %v315
    %v1475 = vunpack.c.l.b16 %v316
    %v1476 = vunpack.c.l.b16 %v317
    %v1477 = vunpack.c.l.b16 %v318
    %v1478 = vunpack.c.l.b16 %v319
    %v1479 = vunpack.c.l.b16 %v320
    %v1480 = vunpack.c.l.b16 %v321
    %v1481 = vunpack.c.l.b16 %v322
    %v1482 = vunpack.c.l.b16 %v323
    %v1483 = vunpack.c.l.b16 %v324
    %v1484 = vunpack.c.l.b16 %v325
    %v1485 = vunpack.c.l.b16 %v326
    %v1486 = vunpack.c.l.b16 %v327
    %v1487 = vunpack.c.l.b16 %v328
    %v1488 = vunpack.c.l.b16 %v329
    %v1489 = vunpack.c.l.b16 %v330
    %v1490 = vunpack.c.l.b16 %v331
    %v1491 = vunpack.c.l.b16 %v332
    %v1492 = vunpack.c.l.b16 %v333
    %v1493 = vunpack.c.l.b16 %v334
    %v1494 = vunpack.c.l.b16 %v335
    %v1495 = vunpack.c.l.b16 %v336
    %v1496 = vunpack.c.l.b16 %v337
    %v1497 = vunpack.c.l.b16 %v338
    %v1498 = vunpack.c.l.b16 %v339
    %v1499 = vunpack.c.l.b16 %v340
    %v1500 = vunpack.c.l.b16 %v341
    %v1501 = vunpack.c.l.b16 %v342
    %v1502 = vunpack.c.l.b16 %v343
    %v1503 = vunpack.c.l.b16 %v344
    %v1504 = vunpack.c.l.b16 %v345
    %v1505 = vunpack.c.l.b16 %v346
    %v1506 = vunpack.c.l.b16 %v347
    %v1507 = vunpack.c.l.b16 %v348
    %v1508 = vunpack.c.l.b16 %v349
    %v1509 = vunpack.c.l.b16 %v350
    %v1510 = vunpack.c.l.b16 %v351
    %v1511 = vunpack.c.l.b16 %v352
    %v1512 = vunpack.c.l.b16 %v353
    %v1513 = vunpack.c.l.b16 %v354
    %v1514 = vunpack.c.l.b16 %v355
    %v1515 = vunpack.c.l.b16 %v356
    %v1516 = vunpack.c.l.b16 %v357
    %v1517 = vunpack.c.l.b16 %v358
    %v1518 = vunpack.c.l.b16 %v359
    %v1519 = vunpack.c.l.b16 %v360
    %v1520 = vunpack.c.l.b16 %v361
    %v1521 = vunpack.c.l.b16 %v362
    %v1522 = vunpack.c.l.b16 %v363
    %v1523 = vunpack.c.l.b16 %v364
    %v1524 = vunpack.c.l.b16 %v365
    %v1525 = vunpack.c.l.b16 %v366
    %v1526 = vunpack.c.l.b16 %v367
    %v1527 = vunpack.c.l.b16 %v368
    %v1528 = vunpack.c.l.b16 %v369
    %v1529 = vunpack.c.l.b16 %v370
    %v1530 = vunpack.c.l.b16 %v371
    %v1531 = vunpack.c.l.b16 %v372
    %v1532 = vunpack.c.l.b16 %v373
    %v1533 = vunpack.c.l.b16 %v374
    %v1534 = vunpack.c.l.b16 %v375
    %v1535 = vunpack.c.l.b16 %v376
    %v1536 = vunpack.c.l.b16 %v377
    %v1537 = vunpack.c.l.b16 %v378
    %v1538 = vunpack.c.l.b16 %v379
    %v1539 = vunpack.c.l.b16 %v380
    %v1540 = vunpack.c.l.b16 %v381
    %v1541 = vunpack.c.l.b16 %v382
    %v1542 = vunpack.c.l.b16 %v383
    %v1543 = vunpack.c.l.b16 %v384
    %v1544 = vunpack.c.l.b16 %v385
    %v1545 = vunpack.c.l.b16 %v386
    %v1546 = vunpack.c.l.b16 %v387
    %v1547 = vunpack.c.l.b16 %v388
    %v1548 = vunpack.c.l.b16 %v389
    %v1549 = vunpack.c.l.b16 %v390
    %v1550 = vunpack.c.l.b16 %v391
    %v1551 = vunpack.c.l.b16 %v392
    %v1552 = vunpack.c.l.b16 %v393
    %v1553 = vunpack.c.l.b16 %v394
    %v1554 = vunpack.c.l.b16 %v395
    %v1555 = vunpack.c.l.b16 %v396
    %v1556 = vunpack.c.l.b16 %v397
    %v1557 = vunpack.c.l.b16 %v398
    %v1558 = vunpack.c.l.b16 %v399
    %v1559 = vunpack.c.l.b16 %v400
    %v1560 = vunpack.c.l.b16 %v401
    %v1561 = vunpack.c.l.b16 %v402
    %v1562 = vunpack.c.l.b16 %v403
    %v1563 = vunpack.c.l.b16 %v404
    %v1564 = vunpack.c.l.b16 %v405
    %v1565 = vunpack.c.l.b16 %v406
    %v1566 = vunpack.c.l.b16 %v407
    %v1567 = vunpack.c.l.b16 %v408
    %v1568 = vunpack.c.l.b16 %v409
    %v1569 = vunpack.c.l.b16 %v410
    %v1570 = vunpack.c.l.b16 %v411
    %v1571 = vunpack.c.l.b16 %v412
    %v1572 = vunpack.c.l.b16 %v413
    %v1573 = vunpack.c.l.b16 %v414
    %v1574 = vunpack.c.l.b16 %v415
    %v1575 = vunpack.c.l.b16 %v416
    %v1576 = vunpack.c.l.b16 %v417
    %v1577 = vunpack.c.l.b16 %v418
    %v1578 = vunpack.c.l.b16 %v419
    %v1579 = vunpack.c.l.b16 %v420
    %v1580 = vunpack.c.l.b16 %v421
    %v1581 = vunpack.c.l.b16 %v422
    %v1582 = vunpack.c.l.b16 %v423
    %v1583 = vunpack.c.l.b16 %v424
    %v1584 = vunpack.c.l.b16 %v425
    %v1585 = vunpack.c.l.b16 %v426
    %v1586 = vunpack.c.l.b16 %v427
    %v1587 = vunpack.c.l.b16 %v428
    %v1588 = vunpack.c.l.b16 %v429
    %v1589 = vunpack.c.l.b16 %v430
    %v1590 = vunpack.c.l.b16 %v431
    %v1591 = vunpack.c.l.b16 %v432
    %v1592 = vunpack.c.l.b16 %v433
    %v1593 = vunpack.c.l.b16 %v434
    %v1594 = vunpack.c.l.b16 %v435
    %v1595 = vunpack.c.l.b16 %v436
    %v1596 = vunpack.c.l.b16 %v437
    %v1597 = vunpack.c.l.b16 %v438
    %v1598 = vunpack.c.l.b16 %v439
    %v1599 = vunpack.c.l.b16 %v440
    %v1600 = vunpack.c.l.b16 %v441
    %v1601 = vunpack.c.l.b16 %v442
    %v1602 = vunpack.c.l.b16 %v443
    %v1603 = vunpack.c.l.b16 %v444
    %v1604 = vunpack.c.l.b16 %v445
    %v1605 = vunpack.c.l.b16 %v446
    %v1606 = vunpack.c.l.b16 %v447
    %v1607 = vunpack.c.l.b16 %v448
    %v1608 = vunpack.c.l.b16 %v449
    %v1609 = vunpack.c.l.b16 %v450
    %v1610 = vunpack.c.l.b16 %v451
    %v1611 = vunpack.c.l.b16 %v452
    %v1612 = vunpack.c.l.b16 %v453
    %v1613 = vunpack.c.l.b16 %v454
    %v1614 = vunpack.c.l.b16 %v455
    %v1615 = vunpack.c.l.b16 %v456
    %v1616 = vunpack.c.l.b16 %v457
    %v1617 = vunpack.c.l.b16 %v458
    %v1618 = vunpack.c.l.b16 %v459
    %v1619 = vunpack.c.l.b16 %v460
    %v1620 = vunpack.c.l.b16 %v461
    %v1621 = vunpack.c.l.b16 %v462
    %v1622 = vunpack.c.l.b16 %v463
    %v1623 = vunpack.c.l.b16 %v464
    %v1624 = vunpack.c.l.b16 %v465
    %v1625 = vunpack.c.l.b16 %v466
    %v1626 = vunpack.c.l.b16 %v467
    %v1627 = vunpack.c.l.b16 %v468
    %v1628 = vunpack.c.l.b16 %v469
    %v1629 = vunpack.c.l.b16 %v470
    %v1630 = vunpack.c.l.b16 %v471
    %v1631 = vunpack.c.l.b16 %v472
    %v1632 = vunpack.c.l.b16 %v473
    %v1633 = vunpack.c.l.b16 %v474
    %v1634 = vunpack.c.l.b16 %v475
    %v1635 = vunpack.c.l.b16 %v476
    %v1636 = vunpack.c.l.b16 %v477
    %v1637 = vunpack.c.l.b16 %v478
    %v1638 = vunpack.c.l.b16 %v479
    %v1639 = vunpack.c.l.b16 %v480
    %v1640 = vunpack.c.l.b16 %v481
    %v1641 = vunpack.c.l.b16 %v482
    %v1642 = vunpack.c.l.b16 %v483
    %v1643 = vunpack.c.l.b16 %v484
    %v1644 = vunpack.c.l.b16 %v485
    %v1645 = vunpack.c.l.b16 %v486
    %v1646 = vunpack.c.l.b16 %v487
    %v1647 = vunpack.c.l.b16 %v488
    %v1648 = vunpack.c.l.b16 %v489
    %v1649 = vunpack.c.l.b16 %v490
    %v1650 = vunpack.c.l.b16 %v491
    %v1651 = vunpack.c.l.b16 %v492
    %v1652 = vunpack.c.l.b16 %v493
    %v1653 = vunpack.c.l.b16 %v494
    %v1654 = vunpack.c.l.b16 %v495
    %v1655 = vunpack.c.l.b16 %v496
    %v1656 = vunpack.c.l.b16 %v497
    %v1657 = vunpack.c.l.b16 %v498
    %v1658 = vunpack.c.l.b16 %v499
    %v1659 = vunpack.c.l.b16 %v500
    %v1660 = vunpack.c.l.b16 %v501
    %v1661 = vunpack.c.l.b16 %v502
    %v1662 = vunpack.c.l.b16 %v503
    %v1663 = vunpack.c.l.b16 %v504
    %v1664 = vunpack.c.l.b16 %v505
    %v1665 = vunpack.c.l.b16 %v506
    %v1666 = vunpack.c.l.b16 %v507
    %v1667 = vunpack.c.l.b16 %v508
    %v1668 = vunpack.c.l.b16 %v509
    %v1669 = vunpack.c.l.b16 %v510
    %v1670 = vunpack.c.l.b16 %v511
    %v1671 = vunpack.c.l.b16 %v512
    %v1672 = vunpack.c.l.b16 %v513
    %v1673 = vunpack.c.l.b16 %v514
    %v1674 = vunpack.c.l.b16 %v515
    %v1675 = vunpack.c.l.b16 %v516
    %v1676 = vunpack.c.l.b16 %v517
    %v1677 = vunpack.c.l.b16 %v518
    %v1678 = vunpack.c.l.b16 %v519
    %v1679 = vunpack.c.l.b16 %v520
    %v1680 = vunpack.c.l.b16 %v521
    %v1681 = vunpack.c.l.b16 %v522
    %v1682 = vunpack.c.l.b16 %v523
    %v1683 = vunpack.c.l.b16 %v524
    %v1684 = vunpack.c.l.b16 %v525
    %v1685 = vunpack.c.l.b16 %v526
    %v1686 = vunpack.c.l.b16 %v527
    %v1687 = vunpack.c.l.b16 %v528
    %v1688 = vunpack.c.l.b16 %v529
    %v1689 = vunpack.c.l.b16 %v530
    %v1690 = vunpack.c.l.b16 %v531
    %v1691 = vunpack.c.l.b16 %v532
    %v1692 = vunpack.c.l.b16 %v533
    %v1693 = vunpack.c.l.b16 %v534
    %v1694 = vunpack.c.l.b16 %v535
    %v1695 = vunpack.c.l.b16 %v536
    %v1696 = vunpack.c.l.b16 %v537
    %v1697 = vunpack.c.l.b16 %v538
    %v1698 = vunpack.c.l.b16 %v539
    %v1699 = vunpack.c.l.b16 %v540
    %v1700 = vunpack.c.l.b16 %v541
    %v1701 = vunpack.c.l.b16 %v542
    %v1702 = vunpack.c.l.b16 %v543
    %v1703 = vunpack.c.l.b16 %v544
    %v1704 = vunpack.c.l.b16 %v545
    %v1705 = vunpack.c.l.b16 %v546
    %v1706 = vunpack.c.l.b16 %v547
    %v1707 = vunpack.c.l.b16 %v548
    %v1708 = vunpack.c.l.b16 %v549
    %v1709 = vunpack.c.l.b16 %v550
    %v1710 = vunpack.c.l.b16 %v551
    %v1711 = vunpack.c.l.b16 %v552
    %v1712 = vunpack.c.l.b16 %v553
    %v1713 = vunpack.c.l.b16 %v554
    %v1714 = vunpack.c.l.b16 %v555
    %v1715 = vunpack.c.l.b16 %v556
    %v1716 = vunpack.c.l.b16 %v557
    %v1717 = vunpack.c.l.b16 %v558
    %v1718 = vunpack.c.l.b16 %v559
    %v1719 = vunpack.c.l.b16 %v560
    %v1720 = vunpack.c.l.b16 %v561
    %v1721 = vunpack.c.l.b16 %v562
    %v1722 = vunpack.c.l.b16 %v563
    %v1723 = vunpack.c.l.b16 %v564
    %v1724 = vunpack.c.l.b16 %v565
    %v1725 = vunpack.c.l.b16 %v566
    %v1726 = vunpack.c.l.b16 %v567
    %v1727 = vunpack.c.l.b16 %v568
    %v1728 = vunpack.c.l.b16 %v569
    %v1729 = vunpack.c.l.b16 %v570
    %v1730 = vunpack.c.l.b16 %v571
    %v1731 = vunpack.c.l.b16 %v572
    %v1732 = vunpack.c.l.b16 %v573
    %v1733 = vunpack.c.l.b16 %v574
    %v1734 = vunpack.c.l.b16 %v575
    %v1735 = vunpack.c.l.b16 %v576
    %v1736 = vunpack.c.l.b16 %v577
    %v1737 = vunpack.c.l.b16 %v578
    %v1738 = vunpack.c.l.b16 %v579
    %v1739 = vunpack.c.l.b16 %v580
    %v1740 = vunpack.c.l.b16 %v581
    %v1741 = vunpack.c.l.b16 %v582
    %v1742 = vunpack.c.l.b16 %v583
    %v1743 = vunpack.c.l.b16 %v584
    %v1744 = vunpack.c.l.b16 %v585
    %v1745 = vunpack.c.l.b16 %v586
    %v1746 = vunpack.c.l.b16 %v587
    %v1747 = vunpack.c.l.b16 %v588
    %v1748 = vunpack.c.l.b16 %v589
    %v1749 = vunpack.c.l.b16 %v590
    %v1750 = vunpack.c.l.b16 %v591
    %v1751 = vunpack.c.l.b16 %v592
    %v1752 = vunpack.c.l.b16 %v593
    %v1753 = vunpack.c.l.b16 %v594
    %v1754 = vunpack.c.l.b16 %v595
    %v1755 = vunpack.c.l.b16 %v596
    %v1756 = vunpack.c.l.b16 %v597
    %v1757 = vunpack.c.l.b16 %v598
    %v1758 = vunpack.c.l.b16 %v599
    %v1759 = vunpack.c.l.b16 %v600
    %v1760 = vunpack.c.l.b16 %v601
    %v1761 = vunpack.c.l.b16 %v602
    %v1762 = vunpack.c.l.b16 %v603
    %v1763 = vunpack.c.l.b16 %v604
    %v1764 = vunpack.c.l.b16 %v605
    %v1765 = vunpack.c.l.b16 %v606
    %v1766 = vunpack.c.l.b16 %v607
    %v1767 = vunpack.c.l.b16 %v608
    %v1768 = vunpack.c.l.b16 %v609
    %v1769 = vunpack.c.l.b16 %v610
    %v1770 = vunpack.c.l.b16 %v611
    %v1771 = vunpack.c.l.b16 %v612
    %v1772 = vunpack.c.l.b16 %v613
    %v1773 = vunpack.c.l.b16 %v614
    %v1774 = vunpack.c.l.b16 %v615
    %v1775 = vunpack.c.l.b16 %v616
    %v1776 = vunpack.c.l.b16 %v617
    %v1777 = vunpack.c.l.b16 %v618
    %v1778 = vunpack.c.l.b16 %v619
    %v1779 = vunpack.c.l.b16 %v620
    %v1780 = vunpack.c.l.b16 %v621
    %v1781 = vunpack.c.l.b16 %v622
    %v1782 = vunpack.c.l.b16 %v623
    %v1783 = vunpack.c.l.b16 %v624
    %v1784 = vunpack.c.l.b16 %v625
    %v1785 = vunpack.c.l.b16 %v626
    %v1786 = vunpack.c.l.b16 %v627
    %v1787 = vunpack.c.l.b16 %v628
    %v1788 = vunpack.c.l.b16 %v629
    %v1789 = vunpack.c.l.b16 %v630
    %v1790 = vunpack.c.l.b16 %v631
    %v1791 = vunpack.c.l.b16 %v632
    %v1792 = vunpack.c.l.b16 %v633
    %v1793 = vunpack.c.l.b16 %v634
    %v1794 = vunpack.c.l.b16 %v635
    %v1795 = vunpack.c.l.b16 %v636
    %v1796 = vunpack.c.l.b16 %v637
    %v1797 = vunpack.c.l.b16 %v638
    %v1798 = vunpack.c.l.b16 %v639
    %v1799 = vunpack.c.l.b16 %v640
    %v1800 = vunpack.c.l.b16 %v641
    %v1801 = vunpack.c.l.b16 %v642
    %v1802 = vunpack.c.l.b16 %v643
    %v1803 = vunpack.c.l.b16 %v644
    %v1804 = vunpack.c.l.b16 %v645
    %v1805 = vunpack.c.l.b16 %v646
    %v1806 = vunpack.c.l.b16 %v647
    %v1807 = vunpack.c.l.b16 %v648
    %v1808 = vunpack.c.l.b16 %v649
    %v1809 = vunpack.c.l.b16 %v650
    %v1810 = vunpack.c.l.b16 %v651
    %v1811 = vunpack.c.l.b16 %v652
    %v1812 = vunpack.c.l.b16 %v653
    %v1813 = vunpack.c.l.b16 %v654
    %v1814 = vunpack.c.l.b16 %v655
    %v1815 = vunpack.c.l.b16 %v656
    %v1816 = vunpack.c.l.b16 %v657
    %v1817 = vunpack.c.l.b16 %v658
    %v1818 = vunpack.c.l.b16 %v659
    %v1819 = vunpack.c.l.b16 %v660
    %v1820 = vunpack.c.l.b16 %v661
    %v1821 = vunpack.c.l.b16 %v662
    %v1822 = vunpack.c.l.b16 %v663
    %v1823 = vunpack.c.l.b16 %v664
    %v1824 = vunpack.c.l.b16 %v665
    %v1825 = vunpack.c.l.b16 %v666
    %v1826 = vunpack.c.l.b16 %v667
    %v1827 = vunpack.c.l.b16 %v668
    %v1828 = vunpack.c.l.b16 %v669
    %v1829 = vunpack.c.l.b16 %v670
    %v1830 = vunpack.c.l.b16 %v671
    %v1831 = vunpack.c.l.b16 %v672
    %v1832 = vunpack.c.l.b16 %v673
    %v1833 = vunpack.c.l.b16 %v674
    %v1834 = vunpack.c.l.b16 %v675
    %v1835 = vunpack.c.l.b16 %v676
    %v1836 = vunpack.c.l.b16 %v677
    %v1837 = vunpack.c.l.b16 %v678
    %v1838 = vunpack.c.l.b16 %v679
    %v1839 = vunpack.c.l.b16 %v680
    %v1840 = vunpack.c.l.b16 %v681
    %v1841 = vunpack.c.l.b16 %v682
    %v1842 = vunpack.c.l.b16 %v683
    %v1843 = vunpack.c.l.b16 %v684
    %v1844 = vunpack.c.l.b16 %v685
    %v1845 = vunpack.c.l.b16 %v686
    %v1846 = vunpack.c.l.b16 %v687
    %v1847 = vunpack.c.l.b16 %v688
    %v1848 = vunpack.c.l.b16 %v689
    %v1849 = vunpack.c.l.b16 %v690
    %v1850 = vunpack.c.l.b16 %v691
    %v1851 = vunpack.c.l.b16 %v692
    %v1852 = vunpack.c.l.b16 %v693
    %v1853 = vunpack.c.l.b16 %v694
    %v1854 = vunpack.c.l.b16 %v695
    %v1855 = vunpack.c.l.b16 %v696
    %v1856 = vunpack.c.l.b16 %v697
    %v1857 = vunpack.c.l.b16 %v698
    %v1858 = vunpack.c.l.b16 %v699
    %v1859 = vunpack.c.l.b16 %v700
    %v1860 = vunpack.c.l.b16 %v701
    %v1861 = vunpack.c.l.b16 %v702
    %v1862 = vunpack.c.l.b16 %v703
    %v1863 = vunpack.c.l.b16 %v704
    %v1864 = vunpack.c.l.b16 %v705
    %v1865 = vunpack.c.l.b16 %v706
    %v1866 = vunpack.c.l.b16 %v707
    %v1867 = vunpack.c.l.b16 %v708
    %v1868 = vunpack.c.l.b16 %v709
    %v1869 = vunpack.c.l.b16 %v710
    %v1870 = vunpack.c.l.b16 %v711
    %v1871 = vunpack.c.l.b16 %v712
    %v1872 = vunpack.c.l.b16 %v713
    %v1873 = vunpack.c.l.b16 %v714
    %v1874 = vunpack.c.l.b16 %v715
    %v1875 = vunpack.c.l.b16 %v716
    %v1876 = vunpack.c.l.b16 %v717
    %v1877 = vunpack.c.l.b16 %v718
    %v1878 = vunpack.c.l.b16 %v719
    %v1879 = vunpack.c.l.b16 %v720
    %v1880 = vunpack.c.l.b16 %v721
    %v1881 = vunpack.c.l.b16 %v722
    %v1882 = vunpack.c.l.b16 %v723
    %v1883 = vunpack.c.l.b16 %v724
    %v1884 = vunpack.c.l.b16 %v725
    %v1885 = vunpack.c.l.b16 %v726
    %v1886 = vunpack.c.l.b16 %v727
    %v1887 = vunpack.c.l.b16 %v728
    %v1888 = vunpack.c.l.b16 %v729
    %v1889 = vunpack.c.l.b16 %v730
    %v1890 = vunpack.c.l.b16 %v731
    %v1891 = vunpack.c.l.b16 %v732
    %v1892 = vunpack.c.l.b16 %v733
    %v1893 = vunpack.c.l.b16 %v734
    %v1894 = vunpack.c.l.b16 %v735
    %v1895 = vunpack.c.l.b16 %v736
    %v1896 = vunpack.c.l.b16 %v737
    %v1897 = vunpack.c.l.b16 %v738
    %v1898 = vunpack.c.l.b16 %v739
    %v1899 = vunpack.c.l.b16 %v740
    %v1900 = vunpack.c.l.b16 %v741
    %v1901 = vunpack.c.l.b16 %v742
    %v1902 = vunpack.c.l.b16 %v743
    %v1903 = vunpack.c.l.b16 %v744
    %v1904 = vunpack.c.l.b16 %v745
    %v1905 = vunpack.c.l.b16 %v746
    %v1906 = vunpack.c.l.b16 %v747
    %v1907 = vunpack.c.l.b16 %v748
    %v1908 = vunpack.c.l.b16 %v749
    %v1909 = vunpack.c.l.b16 %v750
    %v1910 = vunpack.c.l.b16 %v751
    %v1911 = vunpack.c.l.b16 %v752
    %v1912 = vunpack.c.l.b16 %v753
    %v1913 = vunpack.c.l.b16 %v754
    %v1914 = vunpack.c.l.b16 %v755
    %v1915 = vunpack.c.l.b16 %v756
    %v1916 = vunpack.c.l.b16 %v757
    %v1917 = vunpack.c.l.b16 %v758
    %v1918 = vunpack.c.l.b16 %v759
    %v1919 = vunpack.c.l.b16 %v760
    %v1920 = vunpack.c.l.b16 %v761
    %v1921 = vunpack.c.l.b16 %v762
    %v1922 = vunpack.c.l.b16 %v763
    %v1923 = vunpack.c.l.b16 %v764
    %v1924 = vunpack.c.l.b16 %v765
    %v1925 = vunpack.c.l.b16 %v766
    %v1926 = vunpack.c.l.b16 %v767
    %v1927 = vunpack.c.l.b16 %v768
    %v1928 = vunpack.c.l.b16 %v769
    %v1929 = vunpack.c.l.b16 %v770
    %v1930 = vunpack.c.l.b16 %v771
    %v1931 = vunpack.c.l.b16 %v772
    %v1932 = vunpack.c.l.b16 %v773
    %v1933 = vunpack.c.l.b16 %v774
    %v1934 = vunpack.c.l.b16 %v775
    %v1935 = vunpack.c.l.b16 %v776
    %v1936 = vunpack.c.l.b16 %v777
    %v1937 = vunpack.c.l.b16 %v778
    %v1938 = vunpack.c.l.b16 %v779
    %v1939 = vunpack.c.l.b16 %v780
    %v1940 = vunpack.c.l.b16 %v781
    %v1941 = vunpack.c.l.b16 %v782
    %v1942 = vunpack.c.l.b16 %v783
    %v1943 = vunpack.c.l.b16 %v784
    %v1944 = vunpack.c.l.b16 %v785
    %v1945 = vunpack.c.l.b16 %v786
    %v1946 = vunpack.c.l.b16 %v787
    %v1947 = vunpack.c.l.b16 %v788
    %v1948 = vunpack.c.l.b16 %v789
    %v1949 = vunpack.c.l.b16 %v790
    %v1950 = vunpack.c.l.b16 %v791
    %v1951 = vunpack.c.l.b16 %v792
    %v1952 = vunpack.c.l.b16 %v793
    %v1953 = vunpack.c.l.b16 %v794
    %v1954 = vunpack.c.l.b16 %v795
    %v1955 = vunpack.c.l.b16 %v796
    %v1956 = vunpack.c.l.b16 %v797
    %v1957 = vunpack.c.l.b16 %v798
    %v1958 = vunpack.c.l.b16 %v799
    %v1959 = vunpack.c.l.b16 %v800
    %v1960 = vunpack.c.l.b16 %v801
    %v1961 = vunpack.c.l.b16 %v802
    %v1962 = vunpack.c.l.b16 %v803
    %v1963 = vunpack.c.l.b16 %v804
    %v1964 = vunpack.c.l.b16 %v805
    %v1965 = vunpack.c.l.b16 %v806
    %v1966 = vunpack.c.l.b16 %v807
    %v1967 = vunpack.c.l.b16 %v808
    %v1968 = vunpack.c.l.b16 %v809
    %v1969 = vunpack.c.l.b16 %v810
    %v1970 = vunpack.c.l.b16 %v811
    %v1971 = vunpack.c.l.b16 %v812
    %v1972 = vunpack.c.l.b16 %v813
    %v1973 = vunpack.c.l.b16 %v814
    %v1974 = vunpack.c.l.b16 %v815
    %v1975 = vunpack.c.l.b16 %v816
    %v1976 = vunpack.c.l.b16 %v817
    %v1977 = vunpack.c.l.b16 %v818
    %v1978 = vunpack.c.l.b16 %v819
    %v1979 = vunpack.c.l.b16 %v820
    %v1980 = vunpack.c.l.b16 %v821
    %v1981 = vunpack.c.l.b16 %v822
    %v1982 = vunpack.c.l.b16 %v823
    %v1983 = vunpack.c.l.b16 %v824
    %v1984 = vunpack.c.l.b16 %v825
    %v1985 = vunpack.c.l.b16 %v826
    %v1986 = vunpack.c.l.b16 %v827
    %v1987 = vunpack.c.l.b16 %v828
    %v1988 = vunpack.c.l.b16 %v829
    %v1989 = vunpack.c.l.b16 %v830
    %v1990 = vunpack.c.l.b16 %v831
    %v1991 = vunpack.c.l.b16 %v832
    %v1992 = vunpack.c.l.b16 %v833
    %v1993 = vunpack.c.l.b16 %v834
    %v1994 = vunpack.c.l.b16 %v835
    %v1995 = vunpack.c.l.b16 %v836
    %v1996 = vunpack.c.l.b16 %v837
    %v1997 = vunpack.c.l.b16 %v838
    %v1998 = vunpack.c.l.b16 %v839
    %v1999 = vunpack.c.l.b16 %v840
    %v2000 = vpack.c.b16 %v1425, %v1424
    %v2001 = vpack.c.b16 %v1427, %v1426
    %v2002 = vpack.c.b16 %v1429, %v1428
    %v2003 = vpack.c.b16 %v1431, %v1430
    %v2004 = vpack.c.b16 %v1433, %v1432
    %v2005 = vpack.c.b16 %v1435, %v1434
    %v2006 = vpack.c.b16 %v1437, %v1436
    %v2007 = vpack.c.b16 %v1439, %v1438
    %v2008 = vpack.c.b16 %v1441, %v1440
    %v2009 = vpack.c.b16 %v1443, %v1442
    %v2010 = vpack.c.b16 %v1445, %v1444
    %v2011 = vpack.c.b16 %v1447, %v1446
    %v2012 = vpack.c.b16 %v1449, %v1448
    %v2013 = vpack.c.b16 %v1451, %v1450
    %v2014 = vpack.c.b16 %v1453, %v1452
    %v2015 = vpack.c.b16 %v1455, %v1454
    %v2016 = vpack.c.b16 %v1457, %v1456
    %v2017 = vpack.c.b16 %v1459, %v1458
    %v2018 = vpack.c.b16 %v1461, %v1460
    %v2019 = vpack.c.b16 %v1463, %v1462
    %v2020 = vpack.c.b16 %v1465, %v1464
    %v2021 = vpack.c.b16 %v1467, %v1466
    %v2022 = vpack.c.b16 %v1469, %v1468
    %v2023 = vpack.c.b16 %v1471, %v1470
    %v2024 = vpack.c.b16 %v1473, %v1472
    %v2025 = vpack.c.b16 %v1475, %v1474
    %v2026 = vpack.c.b16 %v1477, %v1476
    %v2027 = vpack.c.b16 %v1479, %v1478
    %v2028 = vpack.c.b16 %v1481, %v1480
    %v2029 = vpack.c.b16 %v1483, %v1482
    %v2030 = vpack.c.b16 %v1485, %v1484
    %v2031 = vpack.c.b16 %v1487, %v1486
    %v2032 = vpack.c.b16 %v1489, %v1488
    %v2033 = vpack.c.b16 %v1491, %v1490
    %v2034 = vpack.c.b16 %v1493, %v1492
    %v2035 = vpack.c.b16 %v1495, %v1494
    %v2036 = vpack.c.b16 %v1497, %v1496
    %v2037 = vpack.c.b16 %v1499, %v1498
    %v2038 = vpack.c.b16 %v1501, %v1500
    %v2039 = vpack.c.b16 %v1503, %v1502
    %v2040 = vpack.c.b16 %v1505, %v1504
    %v2041 = vpack.c.b16 %v1507, %v1506
    %v2042 = vpack.c.b16 %v1509, %v1508
    %v2043 = vpack.c.b16 %v1511, %v1510
    %v2044 = vpack.c.b16 %v1513, %v1512
    %v2045 = vpack.c.b16 %v1515, %v1514
    %v2046 = vpack.c.b16 %v1517, %v1516
    %v2047 = vpack.c.b16 %v1519, %v1518
    %v2048 = vpack.c.b16 %v1521, %v1520
    %v2049 = vpack.c.b16 %v1523, %v1522
    %v2050 = vpack.c.b16 %v1525, %v1524
    %v2051 = vpack.c.b16 %v1527, %v1526
    %v2052 = vpack.c.b16 %v1529, %v1528
    %v2053 = vpack.c.b16 %v1531, %v1530
    %v2054 = vpack.c.b16 %v1533, %v1532
    %v2055 = vpack.c.b16 %v1535, %v1534
    %v2056 = vpack.c.b16 %v1537, %v1536
    %v2057 = vpack.c.b16 %v1539, %v1538
    %v2058 = vpack.c.b16 %v1541, %v1540
    %v2059 = vpack.c.b16 %v1543, %v1542
    %v2060 = vpack.c.b16 %v1545, %v1544
    %v2061 = vpack.c.b16 %v1547, %v1546
    %v2062 = vpack.c.b16 %v1549, %v1548
    %v2063 = vpack.c.b16 %v1551, %v1550
    %v2064 = vpack.c.b16 %v1553, %v1552
    %v2065 = vpack.c.b16 %v1555, %v1554
    %v2066 = vpack.c.b16 %v1557, %v1556
    %v2067 = vpack.c.b16 %v1559, %v1558
    %v2068 = vpack.c.b16 %v1561, %v1560
    %v2069 = vpack.c.b16 %v1563, %v1562
    %v2070 = vpack.c.b16 %v1565, %v1564
    %v2071 = vpack.c.b16 %v1567, %v1566
    %v2072 = vpack.c.b16 %v1569, %v1568
    %v2073 = vpack.c.b16 %v1571, %v1570
    %v2074 = vpack.c.b16 %v1573, %v1572
    %v2075 = vpack.c.b16 %v1575, %v1574
    %v2076 = vpack.c.b16 %v1577, %v1576
    %v2077 = vpack.c.b16 %v1579, %v1578
    %v2078 = vpack.c.b16 %v1581, %v1580
    %v2079 = vpack.c.b16 %v1583, %v1582
    %v2080 = vpack.c.b16 %v1585, %v1584
    %v2081 = vpack.c.b16 %v1587, %v1586
    %v2082 = vpack.c.b16 %v1589, %v1588
    %v2083 = vpack.c.b16 %v1591, %v1590
    %v2084 = vpack.c.b16 %v1593, %v1592
    %v2085 = vpack.c.b16 %v1595, %v1594
    %v2086 = vpack.c.b16 %v1597, %v1596
    %v2087 = vpack.c.b16 %v1599, %v1598
    %v2088 = vpack.c.b16 %v1601, %v1600
    %v2089 = vpack.c.b16 %v1603, %v1602
    %v2090 = vpack.c.b16 %v1605, %v1604
    %v2091 = vpack.c.b16 %v1607, %v1606
    %v2092 = vpack.c.b16 %v1609, %v1608
    %v2093 = vpack.c.b16 %v1611, %v1610
    %v2094 = vpack.c.b16 %v1613, %v1612
    %v2095 = vpack.c.b16 %v1615, %v1614
    %v2096 = vpack.c.b16 %v1617, %v1616
    %v2097 = vpack.c.b16 %v1619, %v1618
    %v2098 = vpack.c.b16 %v1621, %v1620
    %v2099 = vpack.c.b16 %v1623, %v1622
    %v2100 = vpack.c.b16 %v1625, %v1624
    %v2101 = vpack.c.b16 %v1627, %v1626
    %v2102 = vpack.c.b16 %v1629, %v1628
    %v2103 = vpack.c.b16 %v1631, %v1630
    %v2104 = vpack.c.b16 %v1633, %v1632
    %v2105 = vpack.c.b16 %v1635, %v1634
    %v2106 = vpack.c.b16 %v1637, %v1636
    %v2107 = vpack.c.b16 %v1639, %v1638
    %v2108 = vpack.c.b16 %v1641, %v1640
    %v2109 = vpack.c.b16 %v1643, %v1642
    %v2110 = vpack.c.b16 %v1645, %v1644
    %v2111 = vpack.c.b16 %v1647, %v1646
    %v2112 = vpack.c.b16 %v1649, %v1648
    %v2113 = vpack.c.b16 %v1651, %v1650
    %v2114 = vpack.c.b16 %v1653, %v1652
    %v2115 = vpack.c.b16 %v1655, %v1654
    %v2116 = vpack.c.b16 %v1657, %v1656
    %v2117 = vpack.c.b16 %v1659, %v1658
    %v2118 = vpack.c.b16 %v1661, %v1660
    %v2119 = vpack.c.b16 %v1663, %v1662
    %v2120 = vpack.c.b16 %v1665, %v1664
    %v2121 = vpack.c.b16 %v1667, %v1666
    %v2122 = vpack.c.b16 %v1669, %v1668
    %v2123 = vpack.c.b16 %v1671, %v1670
    %v2124 = vpack.c.b16 %v1673, %v1672
    %v2125 = vpack.c.b16 %v1675, %v1674
    %v2126 = vpack.c.b16 %v1677, %v1676
    %v2127 = vpack.c.b16 %v1679, %v1678
    %v2128 = vpack.c.b16 %v1681, %v1680
    %v2129 = vpack.c.b16 %v1683, %v1682
    %v2130 = vpack.c.b16 %v1685, %v1684
    %v2131 = vpack.c.b16 %v1687, %v1686
    %v2132 = vpack.c.b16 %v1689, %v1688
    %v2133 = vpack.c.b16 %v1691, %v1690
    %v2134 = vpack.c.b16 %v1693, %v1692
    %v2135 = vpack.c.b16 %v1695, %v1694
    %v2136 = vpack.c.b16 %v1697, %v1696
    %v2137 = vpack.c.b16 %v1699, %v1698
    %v2138 = vpack.c.b16 %v1701, %v1700
    %v2139 = vpack.c.b16 %v1703, %v1702
    %v2140 = vpack.c.b16 %v1705, %v1704
    %v2141 = vpack.c.b16 %v1707, %v1706
    %v2142 = vpack.c.b16 %v1709, %v1708
    %v2143 = vpack.c.b16 %v1711, %v1710
    %v2144 = vpack.c.b16 %v1713, %v1712
    %v2145 = vpack.c.b16 %v1715, %v1714
    %v2146 = vpack.c.b16 %v1717, %v1716
    %v2147 = vpack.c.b16 %v1719, %v1718
    %v2148 = vpack.c.b16 %v1721, %v1720
    %v2149 = vpack.c.b16 %v1723, %v1722
    %v2150 = vpack.c.b16 %v1725, %v1724
    %v2151 = vpack.c.b16 %v1727, %v1726
    %v2152 = vpack.c.b16 %v1729, %v1728
    %v2153 = vpack.c.b16 %v1731, %v1730
    %v2154 = vpack.c.b16 %v1733, %v1732
    %v2155 = vpack.c.b16 %v1735, %v1734
    %v2156 = vpack.c.b16 %v1737, %v1736
    %v2157 = vpack.c.b16 %v1739, %v1738
    %v2158 = vpack.c.b16 %v1741, %v1740
    %v2159 = vpack.c.b16 %v1743, %v1742
    %v2160 = vpack.c.b16 %v1745, %v1744
    %v2161 = vpack.c.b16 %v1747, %v1746
    %v2162 = vpack.c.b16 %v1749, %v1748
    %v2163 = vpack.c.b16 %v1751, %v1750
    %v2164 = vpack.c.b16 %v1753, %v1752
    %v2165 = vpack.c.b16 %v1755, %v1754
    %v2166 = vpack.c.b16 %v1757, %v1756
    %v2167 = vpack.c.b16 %v1759, %v1758
    %v2168 = vpack.c.b16 %v1761, %v1760
    %v2169 = vpack.c.b16 %v1763, %v1762
    %v2170 = vpack.c.b16 %v1765, %v1764
    %v2171 = vpack.c.b16 %v1767, %v1766
    %v2172 = vpack.c.b16 %v1769, %v1768
    %v2173 = vpack.c.b16 %v1771, %v1770
    %v2174 = vpack.c.b16 %v1773, %v1772
    %v2175 = vpack.c.b16 %v1775, %v1774
    %v2176 = vpack.c.b16 %v1777, %v1776
    %v2177 = vpack.c.b16 %v1779, %v1778
    %v2178 = vpack.c.b16 %v1781, %v1780
    %v2179 = vpack.c.b16 %v1783, %v1782
    %v2180 = vpack.c.b16 %v1785, %v1784
    %v2181 = vpack.c.b16 %v1787, %v1786
    %v2182 = vpack.c.b16 %v1789, %v1788
    %v2183 = vpack.c.b16 %v1791, %v1790
    %v2184 = vpack.c.b16 %v1793, %v1792
    %v2185 = vpack.c.b16 %v1795, %v1794
    %v2186 = vpack.c.b16 %v1797, %v1796
    %v2187 = vpack.c.b16 %v1799, %v1798
    %v2188 = vpack.c.b16 %v1801, %v1800
    %v2189 = vpack.c.b16 %v1803, %v1802
    %v2190 = vpack.c.b16 %v1805, %v1804
    %v2191 = vpack.c.b16 %v1807, %v1806
    %v2192 = vpack.c.b16 %v1809, %v1808
    %v2193 = vpack.c.b16 %v1811, %v1810
    %v2194 = vpack.c.b16 %v1813, %v1812
    %v2195 = vpack.c.b16 %v1815, %v1814
    %v2196 = vpack.c.b16 %v1817, %v1816
    %v2197 = vpack.c.b16 %v1819, %v1818
    %v2198 = vpack.c.b16 %v1821, %v1820
    %v2199 = vpack.c.b16 %v1823, %v1822
    %v2200 = vpack.c.b16 %v1825, %v1824
    %v2201 = vpack.c.b16 %v1827, %v1826
    %v2202 = vpack.c.b16 %v1829, %v1828
    %v2203 = vpack.c.b16 %v1831, %v1830
    %v2204 = vpack.c.b16 %v1833, %v1832
    %v2205 = vpack.c.b16 %v1835, %v1834
    %v2206 = vpack.c.b16 %v1837, %v1836
    %v2207 = vpack.c.b16 %v1839, %v1838
    %v2208 = vpack.c.b16 %v1841, %v1840
    %v2209 = vpack.c.b16 %v1843, %v1842
    %v2210 = vpack.c.b16 %v1845, %v1844
    %v2211 = vpack.c.b16 %v1847, %v1846
    %v2212 = vpack.c.b16 %v1849, %v1848
    %v2213 = vpack.c.b16 %v1851, %v1850
    %v2214 = vpack.c.b16 %v1853, %v1852
    %v2215 = vpack.c.b16 %v1855, %v1854
    %v2216 = vpack.c.b16 %v1857, %v1856
    %v2217 = vpack.c.b16 %v1859, %v1858
    %v2218 = vpack.c.b16 %v1861, %v1860
    %v2219 = vpack.c.b16 %v1863, %v1862
    %v2220 = vpack.c.b16 %v1865, %v1864
    %v2221 = vpack.c.b16 %v1867, %v1866
    %v2222 = vpack.c.b16 %v1869, %v1868
    %v2223 = vpack.c.b16 %v1871, %v1870
    %v2224 = vpack.c.b16 %v1873, %v1872
    %v2225 = vpack.c.b16 %v1875, %v1874
    %v2226 = vpack.c.b16 %v1877, %v1876
    %v2227 = vpack.c.b16 %v1879, %v1878
    %v2228 = vpack.c.b16 %v1881, %v1880
    %v2229 = vpack.c.b16 %v1883, %v1882
    %v2230 = vpack.c.b16 %v1885, %v1884
    %v2231 = vpack.c.b16 %v1887, %v1886
    %v2232 = vpack.c.b16 %v1889, %v1888
    %v2233 = vpack.c.b16 %v1891, %v1890
    %v2234 = vpack.c.b16 %v1893, %v1892
    %v2235 = vpack.c.b16 %v1895, %v1894
    %v2236 = vpack.c.b16 %v1897, %v1896
    %v2237 = vpack.c.b16 %v1899, %v1898
    %v2238 = vpack.c.b16 %v1901, %v1900
    %v2239 = vpack.c.b16 %v1903, %v1902
    %v2240 = vpack.c.b16 %v1905, %v1904
    %v2241 = vpack.c.b16 %v1907, %v1906
    %v2242 = vpack.c.b16 %v1909, %v1908
    %v2243 = vpack.c.b16 %v1911, %v1910
    %v2244 = vpack.c.b16 %v1913, %v1912
    %v2245 = vpack.c.b16 %v1915, %v1914
    %v2246 = vpack.c.b16 %v1917, %v1916
    %v2247 = vpack.c.b16 %v1919, %v1918
    %v2248 = vpack.c.b16 %v1921, %v1920
    %v2249 = vpack.c.b16 %v1923, %v1922
    %v2250 = vpack.c.b16 %v1925, %v1924
    %v2251 = vpack.c.b16 %v1927, %v1926
    %v2252 = vpack.c.b16 %v1929, %v1928
    %v2253 = vpack.c.b16 %v1931, %v1930
    %v2254 = vpack.c.b16 %v1933, %v1932
    %v2255 = vpack.c.b16 %v1935, %v1934
    %v2256 = vpack.c.b16 %v1937, %v1936
    %v2257 = vpack.c.b16 %v1939, %v1938
    %v2258 = vpack.c.b16 %v1941, %v1940
    %v2259 = vpack.c.b16 %v1943, %v1942
    %v2260 = vpack.c.b16 %v1945, %v1944
    %v2261 = vpack.c.b16 %v1947, %v1946
    %v2262 = vpack.c.b16 %v1949, %v1948
    %v2263 = vpack.c.b16 %v1951, %v1950
    %v2264 = vpack.c.b16 %v1953, %v1952
    %v2265 = vpack.c.b16 %v1955, %v1954
    %v2266 = vpack.c.b16 %v1957, %v1956
    %v2267 = vpack.c.b16 %v1959, %v1958
    %v2268 = vpack.c.b16 %v1961, %v1960
    %v2269 = vpack.c.b16 %v1963, %v1962
    %v2270 = vpack.c.b16 %v1965, %v1964
    %v2271 = vpack.c.b16 %v1967, %v1966
    %v2272 = vpack.c.b16 %v1969, %v1968
    %v2273 = vpack.c.b16 %v1971, %v1970
    %v2274 = vpack.c.b16 %v1973, %v1972
    %v2275 = vpack.c.b16 %v1975, %v1974
    %v2276 = vpack.c.b16 %v1977, %v1976
    %v2277 = vpack.c.b16 %v1979, %v1978
    %v2278 = vpack.c.b16 %v1981, %v1980
    %v2279 = vpack.c.b16 %v1983, %v1982
    %v2280 = vpack.c.b16 %v1985, %v1984
    %v2281 = vpack.c.b16 %v1987, %v1986
    %v2282 = vpack.c.b16 %v1989, %v1988
    %v2283 = vpack.c.b16 %v1991, %v1990
    %v2284 = vpack.c.b16 %v1993, %v1992
    %v2285 = vpack.c.b16 %v1995, %v1994
    %v2286 = vpack.c.b16 %v1997, %v1996
    %v2287 = vpack.c.b16 %v1999, %v1998
    %2576 = vmatprep.subr.bf16.mxu0 0
    %2577 = vmatpush1.bf16.msra.mxu0 %v2000
    %2578 = vmatprep.subr.bf16.mxu0 0
    %2579 = vmatpush1.bf16.msra.mxu0 %v2001
    %2580 = vmatprep.subr.bf16.mxu0 0
    %2581 = vmatpush1.bf16.msra.mxu0 %v2002
    %2582 = vmatprep.subr.bf16.mxu0 0
    %2583 = vmatpush1.bf16.msra.mxu0 %v2003
    %2584 = vmatprep.subr.bf16.mxu0 0
    %2585 = vmatpush1.bf16.msra.mxu0 %v2004
    %2586 = vmatprep.subr.bf16.mxu0 0
    %2587 = vmatpush1.bf16.msra.mxu0 %v2005
    %2588 = vmatprep.subr.bf16.mxu0 0
    %2589 = vmatpush1.bf16.msra.mxu0 %v2006
    %2590 = vmatprep.subr.bf16.mxu0 0
    %2591 = vmatpush1.bf16.msra.mxu0 %v2007
    %2592 = vmatprep.subr.bf16.mxu0 0
    %2593 = vmatpush1.bf16.msra.mxu0 %v2008
    %2594 = vmatprep.subr.bf16.mxu0 0
    %2595 = vmatpush1.bf16.msra.mxu0 %v2009
    %2596 = vmatprep.subr.bf16.mxu0 0
    %2597 = vmatpush1.bf16.msra.mxu0 %v2010
    %2598 = vmatprep.subr.bf16.mxu0 0
    %2599 = vmatpush1.bf16.msra.mxu0 %v2011
    %2600 = vmatprep.subr.bf16.mxu0 0
    %2601 = vmatpush1.bf16.msra.mxu0 %v2012
    %2602 = vmatprep.subr.bf16.mxu0 0
    %2603 = vmatpush1.bf16.msra.mxu0 %v2013
    %2604 = vmatprep.subr.bf16.mxu0 0
    %2605 = vmatpush1.bf16.msra.mxu0 %v2014
    %2606 = vmatprep.subr.bf16.mxu0 0
    %2607 = vmatpush1.bf16.msra.mxu0 %v2015
    %2608 = vmatprep.mubr.bf16.mxu0 %v230
    %2609 = vmatmul.mubr.bf16.gmra.mrb[0].mxu0 %v229
    %v2610 = vpop.f32.mrb[0].mxu0
    %v2611 = vadd.f32 %v846, %v2610
    %v2612 = vpop.f32.mrb[0].mxu0
    %v2613 = vpop.f32.mrb[0].mxu0
    %v2614 = vpop.f32.mrb[0].mxu0
    %2615 = vdwg.mxu0
    %2616 = vmatprep.subr.bf16.mxu0 0
    %2617 = vmatpush1.bf16.msra.mxu0 %v2016
    %2618 = vmatprep.subr.bf16.mxu0 0
    %2619 = vmatpush1.bf16.msra.mxu0 %v2017
    %2620 = vmatprep.subr.bf16.mxu0 0
    %2621 = vmatpush1.bf16.msra.mxu0 %v2018
    %2622 = vmatprep.subr.bf16.mxu0 0
    %2623 = vmatpush1.bf16.msra.mxu0 %v2019
    %2624 = vmatprep.subr.bf16.mxu0 0
    %2625 = vmatpush1.bf16.msra.mxu0 %v2020
    %2626 = vmatprep.subr.bf16.mxu0 0
    %2627 = vmatpush1.bf16.msra.mxu0 %v2021
    %2628 = vmatprep.subr.bf16.mxu0 0
    %2629 = vmatpush1.bf16.msra.mxu0 %v2022
    %2630 = vmatprep.subr.bf16.mxu0 0
    %2631 = vmatpush1.bf16.msra.mxu0 %v2023
    %2632 = vmatprep.subr.bf16.mxu0 0
    %2633 = vmatpush1.bf16.msra.mxu0 %v2024
    %2634 = vmatprep.subr.bf16.mxu0 0
    %2635 = vmatpush1.bf16.msra.mxu0 %v2025
    %2636 = vmatprep.subr.bf16.mxu0 0
    %2637 = vmatpush1.bf16.msra.mxu0 %v2026
    %2638 = vmatprep.subr.bf16.mxu0 0
    %2639 = vmatpush1.bf16.msra.mxu0 %v2027
    %2640 = vmatprep.subr.bf16.mxu0 0
    %2641 = vmatpush1.bf16.msra.mxu0 %v2028
    %2642 = vmatprep.subr.bf16.mxu0 0
    %2643 = vmatpush1.bf16.msra.mxu0 %v2029
    %2644 = vmatprep.subr.bf16.mxu0 0
    %2645 = vmatpush1.bf16.msra.mxu0 %v2030
    %2646 = vmatprep.subr.bf16.mxu0 0
    %2647 = vmatpush1.bf16.msra.mxu0 %v2031
    %2648 = vmatprep.mubr.bf16.mxu0 %v232
    %2649 = vmatmul.mubr.bf16.gmra.mrb[0].mxu0 %v231
    %v2650 = vpop.f32.mrb[0].mxu0
    %v2651 = vadd.f32 %v2611, %v2650
    %v2652 = vpop.f32.mrb[0].mxu0
    %v2653 = vpop.f32.mrb[0].mxu0
    %v2654 = vpop.f32.mrb[0].mxu0
    %2655 = vdwg.mxu0
    %2656 = vmatprep.subr.bf16.mxu0 0
    %2657 = vmatpush1.bf16.msra.mxu0 %v2032
    %2658 = vmatprep.subr.bf16.mxu0 0
    %2659 = vmatpush1.bf16.msra.mxu0 %v2033
    %2660 = vmatprep.subr.bf16.mxu0 0
    %2661 = vmatpush1.bf16.msra.mxu0 %v2034
    %2662 = vmatprep.subr.bf16.mxu0 0
    %2663 = vmatpush1.bf16.msra.mxu0 %v2035
    %2664 = vmatprep.subr.bf16.mxu0 0
    %2665 = vmatpush1.bf16.msra.mxu0 %v2036
    %2666 = vmatprep.subr.bf16.mxu0 0
    %2667 = vmatpush1.bf16.msra.mxu0 %v2037
    %2668 = vmatprep.subr.bf16.mxu0 0
    %2669 = vmatpush1.bf16.msra.mxu0 %v2038
    %2670 = vmatprep.subr.bf16.mxu0 0
    %2671 = vmatpush1.bf16.msra.mxu0 %v2039
    %2672 = vmatprep.subr.bf16.mxu0 0
    %2673 = vmatpush1.bf16.msra.mxu0 %v2040
    %2674 = vmatprep.subr.bf16.mxu0 0
    %2675 = vmatpush1.bf16.msra.mxu0 %v2041
    %2676 = vmatprep.subr.bf16.mxu0 0
    %2677 = vmatpush1.bf16.msra.mxu0 %v2042
    %2678 = vmatprep.subr.bf16.mxu0 0
    %2679 = vmatpush1.bf16.msra.mxu0 %v2043
    %2680 = vmatprep.subr.bf16.mxu0 0
    %2681 = vmatpush1.bf16.msra.mxu0 %v2044
    %2682 = vmatprep.subr.bf16.mxu0 0
    %2683 = vmatpush1.bf16.msra.mxu0 %v2045
    %2684 = vmatprep.subr.bf16.mxu0 0
    %2685 = vmatpush1.bf16.msra.mxu0 %v2046
    %2686 = vmatprep.subr.bf16.mxu0 0
    %2687 = vmatpush1.bf16.msra.mxu0 %v2047
    %2688 = vmatprep.mubr.bf16.mxu0 %v234
    %2689 = vmatmul.mubr.bf16.gmra.mrb[0].mxu0 %v233
    %v2690 = vpop.f32.mrb[0].mxu0
    %v2691 = vadd.f32 %v2651, %v2690
    %v2692 = vpop.f32.mrb[0].mxu0
    %v2693 = vpop.f32.mrb[0].mxu0
    %v2694 = vpop.f32.mrb[0].mxu0
    %2695 = vdwg.mxu0
    %2696 = vmatprep.subr.bf16.mxu0 0
    %2697 = vmatpush1.bf16.msra.mxu0 %v2048
    %2698 = vmatprep.subr.bf16.mxu0 0
    %2699 = vmatpush1.bf16.msra.mxu0 %v2049
    %2700 = vmatprep.subr.bf16.mxu0 0
    %2701 = vmatpush1.bf16.msra.mxu0 %v2050
    %2702 = vmatprep.subr.bf16.mxu0 0
    %2703 = vmatpush1.bf16.msra.mxu0 %v2051
    %2704 = vmatprep.subr.bf16.mxu0 0
    %2705 = vmatpush1.bf16.msra.mxu0 %v2052
    %2706 = vmatprep.subr.bf16.mxu0 0
    %2707 = vmatpush1.bf16.msra.mxu0 %v2053
    %2708 = vmatprep.subr.bf16.mxu0 0
    %2709 = vmatpush1.bf16.msra.mxu0 %v2054
    %2710 = vmatprep.subr.bf16.mxu0 0
    %2711 = vmatpush1.bf16.msra.mxu0 %v2055
    %2712 = vmatprep.subr.bf16.mxu0 0
    %2713 = vmatpush1.bf16.msra.mxu0 %v2056
    %2714 = vmatprep.subr.bf16.mxu0 0
    %2715 = vmatpush1.bf16.msra.mxu0 %v2057
    %2716 = vmatprep.subr.bf16.mxu0 0
    %2717 = vmatpush1.bf16.msra.mxu0 %v2058
    %2718 = vmatprep.subr.bf16.mxu0 0
    %2719 = vmatpush1.bf16.msra.mxu0 %v2059
    %2720 = vmatprep.subr.bf16.mxu0 0
    %2721 = vmatpush1.bf16.msra.mxu0 %v2060
    %2722 = vmatprep.subr.bf16.mxu0 0
    %2723 = vmatpush1.bf16.msra.mxu0 %v2061
    %2724 = vmatprep.subr.bf16.mxu0 0
    %2725 = vmatpush1.bf16.msra.mxu0 %v2062
    %2726 = vmatprep.subr.bf16.mxu0 0
    %2727 = vmatpush1.bf16.msra.mxu0 %v2063
    %2728 = vmatprep.mubr.bf16.mxu0 %v236
    %2729 = vmatmul.mubr.bf16.gmra.mrb[0].mxu0 %v235
    %v2730 = vpop.f32.mrb[0].mxu0
    %v2731 = vadd.f32 %v2691, %v2730
    %v2732 = vpop.f32.mrb[0].mxu0
    %v2733 = vpop.f32.mrb[0].mxu0
    %v2734 = vpop.f32.mrb[0].mxu0
    %2735 = vdwg.mxu0
    %2736 = vmatprep.subr.bf16.mxu0 0
    %2737 = vmatpush1.bf16.msra.mxu0 %v2064
    %2738 = vmatprep.subr.bf16.mxu0 0
    %2739 = vmatpush1.bf16.msra.mxu0 %v2065
    %2740 = vmatprep.subr.bf16.mxu0 0
    %2741 = vmatpush1.bf16.msra.mxu0 %v2066
    %2742 = vmatprep.subr.bf16.mxu0 0
    %2743 = vmatpush1.bf16.msra.mxu0 %v2067
    %2744 = vmatprep.subr.bf16.mxu0 0
    %2745 = vmatpush1.bf16.msra.mxu0 %v2068
    %2746 = vmatprep.subr.bf16.mxu0 0
    %2747 = vmatpush1.bf16.msra.mxu0 %v2069
    %2748 = vmatprep.subr.bf16.mxu0 0
    %2749 = vmatpush1.bf16.msra.mxu0 %v2070
    %2750 = vmatprep.subr.bf16.mxu0 0
    %2751 = vmatpush1.bf16.msra.mxu0 %v2071
    %2752 = vmatprep.subr.bf16.mxu0 0
    %2753 = vmatpush1.bf16.msra.mxu0 %v2072
    %2754 = vmatprep.subr.bf16.mxu0 0
    %2755 = vmatpush1.bf16.msra.mxu0 %v2073
    %2756 = vmatprep.subr.bf16.mxu0 0
    %2757 = vmatpush1.bf16.msra.mxu0 %v2074
    %2758 = vmatprep.subr.bf16.mxu0 0
    %2759 = vmatpush1.bf16.msra.mxu0 %v2075
    %2760 = vmatprep.subr.bf16.mxu0 0
    %2761 = vmatpush1.bf16.msra.mxu0 %v2076
    %2762 = vmatprep.subr.bf16.mxu0 0
    %2763 = vmatpush1.bf16.msra.mxu0 %v2077
    %2764 = vmatprep.subr.bf16.mxu0 0
    %2765 = vmatpush1.bf16.msra.mxu0 %v2078
    %2766 = vmatprep.subr.bf16.mxu0 0
    %2767 = vmatpush1.bf16.msra.mxu0 %v2079
    %2768 = vmatprep.mubr.bf16.mxu0 %v238
    %2769 = vmatmul.mubr.bf16.gmra.mrb[0].mxu0 %v237
    %v2770 = vpop.f32.mrb[0].mxu0
    %v2771 = vadd.f32 %v2731, %v2770
    %v2772 = vpop.f32.mrb[0].mxu0
    %v2773 = vpop.f32.mrb[0].mxu0
    %v2774 = vpop.f32.mrb[0].mxu0
    %2775 = vdwg.mxu0
    %2776 = vmatprep.subr.bf16.mxu0 0
    %2777 = vmatpush1.bf16.msra.mxu0 %v2080
    %2778 = vmatprep.subr.bf16.mxu0 0
    %2779 = vmatpush1.bf16.msra.mxu0 %v2081
    %2780 = vmatprep.subr.bf16.mxu0 0
    %2781 = vmatpush1.bf16.msra.mxu0 %v2082
    %2782 = vmatprep.subr.bf16.mxu0 0
    %2783 = vmatpush1.bf16.msra.mxu0 %v2083
    %2784 = vmatprep.subr.bf16.mxu0 0
    %2785 = vmatpush1.bf16.msra.mxu0 %v2084
    %2786 = vmatprep.subr.bf16.mxu0 0
    %2787 = vmatpush1.bf16.msra.mxu0 %v2085
    %2788 = vmatprep.subr.bf16.mxu0 0
    %2789 = vmatpush1.bf16.msra.mxu0 %v2086
    %2790 = vmatprep.subr.bf16.mxu0 0
    %2791 = vmatpush1.bf16.msra.mxu0 %v2087
    %2792 = vmatprep.subr.bf16.mxu0 0
    %2793 = vmatpush1.bf16.msra.mxu0 %v2088
    %2794 = vmatprep.subr.bf16.mxu0 0
    %2795 = vmatpush1.bf16.msra.mxu0 %v2089
    %2796 = vmatprep.subr.bf16.mxu0 0
    %2797 = vmatpush1.bf16.msra.mxu0 %v2090
    %2798 = vmatprep.subr.bf16.mxu0 0
    %2799 = vmatpush1.bf16.msra.mxu0 %v2091
    %2800 = vmatprep.subr.bf16.mxu0 0
    %2801 = vmatpush1.bf16.msra.mxu0 %v2092
    %2802 = vmatprep.subr.bf16.mxu0 0
    %2803 = vmatpush1.bf16.msra.mxu0 %v2093
    %2804 = vmatprep.subr.bf16.mxu0 0
    %2805 = vmatpush1.bf16.msra.mxu0 %v2094
    %2806 = vmatprep.subr.bf16.mxu0 0
    %2807 = vmatpush1.bf16.msra.mxu0 %v2095
    %2808 = vmatprep.mubr.bf16.mxu0 %v240
    %2809 = vmatmul.mubr.bf16.gmra.mrb[0].mxu0 %v239
    %v2810 = vpop.f32.mrb[0].mxu0
    %v2811 = vadd.f32 %v2771, %v2810
    %v2812 = vpop.f32.mrb[0].mxu0
    %v2813 = vpop.f32.mrb[0].mxu0
    %v2814 = vpop.f32.mrb[0].mxu0
    %2815 = vdwg.mxu0
    %2816 = vmatprep.subr.bf16.mxu0 0
    %2817 = vmatpush1.bf16.msra.mxu0 %v2096
    %2818 = vmatprep.subr.bf16.mxu0 0
    %2819 = vmatpush1.bf16.msra.mxu0 %v2097
    %2820 = vmatprep.subr.bf16.mxu0 0
    %2821 = vmatpush1.bf16.msra.mxu0 %v2098
    %2822 = vmatprep.subr.bf16.mxu0 0
    %2823 = vmatpush1.bf16.msra.mxu0 %v2099
    %2824 = vmatprep.subr.bf16.mxu0 0
    %2825 = vmatpush1.bf16.msra.mxu0 %v2100
    %2826 = vmatprep.subr.bf16.mxu0 0
    %2827 = vmatpush1.bf16.msra.mxu0 %v2101
    %2828 = vmatprep.subr.bf16.mxu0 0
    %2829 = vmatpush1.bf16.msra.mxu0 %v2102
    %2830 = vmatprep.subr.bf16.mxu0 0
    %2831 = vmatpush1.bf16.msra.mxu0 %v2103
    %2832 = vmatprep.subr.bf16.mxu0 0
    %2833 = vmatpush1.bf16.msra.mxu0 %v2104
    %2834 = vmatprep.subr.bf16.mxu0 0
    %2835 = vmatpush1.bf16.msra.mxu0 %v2105
    %2836 = vmatprep.subr.bf16.mxu0 0
    %2837 = vmatpush1.bf16.msra.mxu0 %v2106
    %2838 = vmatprep.subr.bf16.mxu0 0
    %2839 = vmatpush1.bf16.msra.mxu0 %v2107
    %2840 = vmatprep.subr.bf16.mxu0 0
    %2841 = vmatpush1.bf16.msra.mxu0 %v2108
    %2842 = vmatprep.subr.bf16.mxu0 0
    %2843 = vmatpush1.bf16.msra.mxu0 %v2109
    %2844 = vmatprep.subr.bf16.mxu0 0
    %2845 = vmatpush1.bf16.msra.mxu0 %v2110
    %2846 = vmatprep.subr.bf16.mxu0 0
    %2847 = vmatpush1.bf16.msra.mxu0 %v2111
    %2848 = vmatprep.mubr.bf16.mxu0 %v242
    %2849 = vmatmul.mubr.bf16.gmra.mrb[0].mxu0 %v241
    %v2850 = vpop.f32.mrb[0].mxu0
    %v2851 = vadd.f32 %v2811, %v2850
    %v2852 = vpop.f32.mrb[0].mxu0
    %v2853 = vpop.f32.mrb[0].mxu0
    %v2854 = vpop.f32.mrb[0].mxu0
    %2855 = vdwg.mxu0
    %2856 = vmatprep.subr.bf16.mxu0 0
    %2857 = vmatpush1.bf16.msra.mxu0 %v2112
    %2858 = vmatprep.subr.bf16.mxu0 0
    %2859 = vmatpush1.bf16.msra.mxu0 %v2113
    %2860 = vmatprep.subr.bf16.mxu0 0
    %2861 = vmatpush1.bf16.msra.mxu0 %v2114
    %2862 = vmatprep.subr.bf16.mxu0 0
    %2863 = vmatpush1.bf16.msra.mxu0 %v2115
    %2864 = vmatprep.subr.bf16.mxu0 0
    %2865 = vmatpush1.bf16.msra.mxu0 %v2116
    %2866 = vmatprep.subr.bf16.mxu0 0
    %2867 = vmatpush1.bf16.msra.mxu0 %v2117
    %2868 = vmatprep.subr.bf16.mxu0 0
    %2869 = vmatpush1.bf16.msra.mxu0 %v2118
    %2870 = vmatprep.subr.bf16.mxu0 0
    %2871 = vmatpush1.bf16.msra.mxu0 %v2119
    %2872 = vmatprep.subr.bf16.mxu0 0
    %2873 = vmatpush1.bf16.msra.mxu0 %v2120
    %2874 = vmatprep.subr.bf16.mxu0 0
    %2875 = vmatpush1.bf16.msra.mxu0 %v2121
    %2876 = vmatprep.subr.bf16.mxu0 0
    %2877 = vmatpush1.bf16.msra.mxu0 %v2122
    %2878 = vmatprep.subr.bf16.mxu0 0
    %2879 = vmatpush1.bf16.msra.mxu0 %v2123
    %2880 = vmatprep.subr.bf16.mxu0 0
    %2881 = vmatpush1.bf16.msra.mxu0 %v2124
    %2882 = vmatprep.subr.bf16.mxu0 0
    %2883 = vmatpush1.bf16.msra.mxu0 %v2125
    %2884 = vmatprep.subr.bf16.mxu0 0
    %2885 = vmatpush1.bf16.msra.mxu0 %v2126
    %2886 = vmatprep.subr.bf16.mxu0 0
    %2887 = vmatpush1.bf16.msra.mxu0 %v2127
    %2888 = vmatprep.mubr.bf16.mxu0 %v244
    %2889 = vmatmul.mubr.bf16.gmra.mrb[0].mxu0 %v243
    %v2890 = vpop.f32.mrb[0].mxu0
    %v2891 = vadd.f32 %v2851, %v2890
    %v2892 = vpop.f32.mrb[0].mxu0
    %v2893 = vpop.f32.mrb[0].mxu0
    %v2894 = vpop.f32.mrb[0].mxu0
    %2895 = vdwg.mxu0
    %2896 = vmatprep.subr.bf16.mxu0 0
    %2897 = vmatpush1.bf16.msra.mxu0 %v2128
    %2898 = vmatprep.subr.bf16.mxu0 0
    %2899 = vmatpush1.bf16.msra.mxu0 %v2129
    %2900 = vmatprep.subr.bf16.mxu0 0
    %2901 = vmatpush1.bf16.msra.mxu0 %v2130
    %2902 = vmatprep.subr.bf16.mxu0 0
    %2903 = vmatpush1.bf16.msra.mxu0 %v2131
    %2904 = vmatprep.subr.bf16.mxu0 0
    %2905 = vmatpush1.bf16.msra.mxu0 %v2132
    %2906 = vmatprep.subr.bf16.mxu0 0
    %2907 = vmatpush1.bf16.msra.mxu0 %v2133
    %2908 = vmatprep.subr.bf16.mxu0 0
    %2909 = vmatpush1.bf16.msra.mxu0 %v2134
    %2910 = vmatprep.subr.bf16.mxu0 0
    %2911 = vmatpush1.bf16.msra.mxu0 %v2135
    %2912 = vmatprep.subr.bf16.mxu0 0
    %2913 = vmatpush1.bf16.msra.mxu0 %v2136
    %2914 = vmatprep.subr.bf16.mxu0 0
    %2915 = vmatpush1.bf16.msra.mxu0 %v2137
    %2916 = vmatprep.subr.bf16.mxu0 0
    %2917 = vmatpush1.bf16.msra.mxu0 %v2138
    %2918 = vmatprep.subr.bf16.mxu0 0
    %2919 = vmatpush1.bf16.msra.mxu0 %v2139
    %2920 = vmatprep.subr.bf16.mxu0 0
    %2921 = vmatpush1.bf16.msra.mxu0 %v2140
    %2922 = vmatprep.subr.bf16.mxu0 0
    %2923 = vmatpush1.bf16.msra.mxu0 %v2141
    %2924 = vmatprep.subr.bf16.mxu0 0
    %2925 = vmatpush1.bf16.msra.mxu0 %v2142
    %2926 = vmatprep.subr.bf16.mxu0 0
    %2927 = vmatpush1.bf16.msra.mxu0 %v2143
    %2928 = vmatprep.mubr.bf16.mxu0 %v246
    %2929 = vmatmul.mubr.bf16.gmra.mrb[0].mxu0 %v245
    %v2930 = vpop.f32.mrb[0].mxu0
    %v2931 = vadd.f32 %v2891, %v2930
    %v2932 = vpop.f32.mrb[0].mxu0
    %v2933 = vpop.f32.mrb[0].mxu0
    %v2934 = vpop.f32.mrb[0].mxu0
    %2935 = vdwg.mxu0
    %2936 = vmatprep.subr.bf16.mxu0 0
    %2937 = vmatpush1.bf16.msra.mxu0 %v2144
    %2938 = vmatprep.subr.bf16.mxu0 0
    %2939 = vmatpush1.bf16.msra.mxu0 %v2145
    %2940 = vmatprep.subr.bf16.mxu0 0
    %2941 = vmatpush1.bf16.msra.mxu0 %v2146
    %2942 = vmatprep.subr.bf16.mxu0 0
    %2943 = vmatpush1.bf16.msra.mxu0 %v2147
    %2944 = vmatprep.subr.bf16.mxu0 0
    %2945 = vmatpush1.bf16.msra.mxu0 %v2148
    %2946 = vmatprep.subr.bf16.mxu0 0
    %2947 = vmatpush1.bf16.msra.mxu0 %v2149
    %2948 = vmatprep.subr.bf16.mxu0 0
    %2949 = vmatpush1.bf16.msra.mxu0 %v2150
    %2950 = vmatprep.subr.bf16.mxu0 0
    %2951 = vmatpush1.bf16.msra.mxu0 %v2151
    %2952 = vmatprep.subr.bf16.mxu0 0
    %2953 = vmatpush1.bf16.msra.mxu0 %v2152
    %2954 = vmatprep.subr.bf16.mxu0 0
    %2955 = vmatpush1.bf16.msra.mxu0 %v2153
    %2956 = vmatprep.subr.bf16.mxu0 0
    %2957 = vmatpush1.bf16.msra.mxu0 %v2154
    %2958 = vmatprep.subr.bf16.mxu0 0
    %2959 = vmatpush1.bf16.msra.mxu0 %v2155
    %2960 = vmatprep.subr.bf16.mxu0 0
    %2961 = vmatpush1.bf16.msra.mxu0 %v2156
    %2962 = vmatprep.subr.bf16.mxu0 0
    %2963 = vmatpush1.bf16.msra.mxu0 %v2157
    %2964 = vmatprep.subr.bf16.mxu0 0
    %2965 = vmatpush1.bf16.msra.mxu0 %v2158
    %2966 = vmatprep.subr.bf16.mxu0 0
    %2967 = vmatpush1.bf16.msra.mxu0 %v2159
    %2968 = vmatprep.mubr.bf16.mxu0 %v248
    %2969 = vmatmul.mubr.bf16.gmra.mrb[0].mxu0 %v247
    %v2970 = vpop.f32.mrb[0].mxu0
    %v2971 = vadd.f32 %v2931, %v2970
    %v2972 = vpop.f32.mrb[0].mxu0
    %v2973 = vpop.f32.mrb[0].mxu0
    %v2974 = vpop.f32.mrb[0].mxu0
    %2975 = vdwg.mxu0
    %2976 = vmatprep.subr.bf16.mxu0 0
    %2977 = vmatpush1.bf16.msra.mxu0 %v2160
    %2978 = vmatprep.subr.bf16.mxu0 0
    %2979 = vmatpush1.bf16.msra.mxu0 %v2161
    %2980 = vmatprep.subr.bf16.mxu0 0
    %2981 = vmatpush1.bf16.msra.mxu0 %v2162
    %2982 = vmatprep.subr.bf16.mxu0 0
    %2983 = vmatpush1.bf16.msra.mxu0 %v2163
    %2984 = vmatprep.subr.bf16.mxu0 0
    %2985 = vmatpush1.bf16.msra.mxu0 %v2164
    %2986 = vmatprep.subr.bf16.mxu0 0
    %2987 = vmatpush1.bf16.msra.mxu0 %v2165
    %2988 = vmatprep.subr.bf16.mxu0 0
    %2989 = vmatpush1.bf16.msra.mxu0 %v2166
    %2990 = vmatprep.subr.bf16.mxu0 0
    %2991 = vmatpush1.bf16.msra.mxu0 %v2167
    %2992 = vmatprep.subr.bf16.mxu0 0
    %2993 = vmatpush1.bf16.msra.mxu0 %v2168
    %2994 = vmatprep.subr.bf16.mxu0 0
    %2995 = vmatpush1.bf16.msra.mxu0 %v2169
    %2996 = vmatprep.subr.bf16.mxu0 0
    %2997 = vmatpush1.bf16.msra.mxu0 %v2170
    %2998 = vmatprep.subr.bf16.mxu0 0
    %2999 = vmatpush1.bf16.msra.mxu0 %v2171
    %3000 = vmatprep.subr.bf16.mxu0 0
    %3001 = vmatpush1.bf16.msra.mxu0 %v2172
    %3002 = vmatprep.subr.bf16.mxu0 0
    %3003 = vmatpush1.bf16.msra.mxu0 %v2173
    %3004 = vmatprep.subr.bf16.mxu0 0
    %3005 = vmatpush1.bf16.msra.mxu0 %v2174
    %3006 = vmatprep.subr.bf16.mxu0 0
    %3007 = vmatpush1.bf16.msra.mxu0 %v2175
    %3008 = vmatprep.mubr.bf16.mxu0 %v250
    %3009 = vmatmul.mubr.bf16.gmra.mrb[0].mxu0 %v249
    %v3010 = vpop.f32.mrb[0].mxu0
    %v3011 = vadd.f32 %v2971, %v3010
    %v3012 = vpop.f32.mrb[0].mxu0
    %v3013 = vpop.f32.mrb[0].mxu0
    %v3014 = vpop.f32.mrb[0].mxu0
    %3015 = vdwg.mxu0
    %3016 = vmatprep.subr.bf16.mxu0 0
    %3017 = vmatpush1.bf16.msra.mxu0 %v2176
    %3018 = vmatprep.subr.bf16.mxu0 0
    %3019 = vmatpush1.bf16.msra.mxu0 %v2177
    %3020 = vmatprep.subr.bf16.mxu0 0
    %3021 = vmatpush1.bf16.msra.mxu0 %v2178
    %3022 = vmatprep.subr.bf16.mxu0 0
    %3023 = vmatpush1.bf16.msra.mxu0 %v2179
    %3024 = vmatprep.subr.bf16.mxu0 0
    %3025 = vmatpush1.bf16.msra.mxu0 %v2180
    %3026 = vmatprep.subr.bf16.mxu0 0
    %3027 = vmatpush1.bf16.msra.mxu0 %v2181
    %3028 = vmatprep.subr.bf16.mxu0 0
    %3029 = vmatpush1.bf16.msra.mxu0 %v2182
    %3030 = vmatprep.subr.bf16.mxu0 0
    %3031 = vmatpush1.bf16.msra.mxu0 %v2183
    %3032 = vmatprep.subr.bf16.mxu0 0
    %3033 = vmatpush1.bf16.msra.mxu0 %v2184
    %3034 = vmatprep.subr.bf16.mxu0 0
    %3035 = vmatpush1.bf16.msra.mxu0 %v2185
    %3036 = vmatprep.subr.bf16.mxu0 0
    %3037 = vmatpush1.bf16.msra.mxu0 %v2186
    %3038 = vmatprep.subr.bf16.mxu0 0
    %3039 = vmatpush1.bf16.msra.mxu0 %v2187
    %3040 = vmatprep.subr.bf16.mxu0 0
    %3041 = vmatpush1.bf16.msra.mxu0 %v2188
    %3042 = vmatprep.subr.bf16.mxu0 0
    %3043 = vmatpush1.bf16.msra.mxu0 %v2189
    %3044 = vmatprep.subr.bf16.mxu0 0
    %3045 = vmatpush1.bf16.msra.mxu0 %v2190
    %3046 = vmatprep.subr.bf16.mxu0 0
    %3047 = vmatpush1.bf16.msra.mxu0 %v2191
    %3048 = vmatprep.mubr.bf16.mxu0 %v252
    %3049 = vmatmul.mubr.bf16.gmra.mrb[0].mxu0 %v251
    %v3050 = vpop.f32.mrb[0].mxu0
    %v3051 = vadd.f32 %v3011, %v3050
    %v3052 = vpop.f32.mrb[0].mxu0
    %v3053 = vpop.f32.mrb[0].mxu0
    %v3054 = vpop.f32.mrb[0].mxu0
    %3055 = vdwg.mxu0
    %3056 = vmatprep.subr.bf16.mxu0 0
    %3057 = vmatpush1.bf16.msra.mxu0 %v2192
    %3058 = vmatprep.subr.bf16.mxu0 0
    %3059 = vmatpush1.bf16.msra.mxu0 %v2193
    %3060 = vmatprep.subr.bf16.mxu0 0
    %3061 = vmatpush1.bf16.msra.mxu0 %v2194
    %3062 = vmatprep.subr.bf16.mxu0 0
    %3063 = vmatpush1.bf16.msra.mxu0 %v2195
    %3064 = vmatprep.subr.bf16.mxu0 0
    %3065 = vmatpush1.bf16.msra.mxu0 %v2196
    %3066 = vmatprep.subr.bf16.mxu0 0
    %3067 = vmatpush1.bf16.msra.mxu0 %v2197
    %3068 = vmatprep.subr.bf16.mxu0 0
    %3069 = vmatpush1.bf16.msra.mxu0 %v2198
    %3070 = vmatprep.subr.bf16.mxu0 0
    %3071 = vmatpush1.bf16.msra.mxu0 %v2199
    %3072 = vmatprep.subr.bf16.mxu0 0
    %3073 = vmatpush1.bf16.msra.mxu0 %v2200
    %3074 = vmatprep.subr.bf16.mxu0 0
    %3075 = vmatpush1.bf16.msra.mxu0 %v2201
    %3076 = vmatprep.subr.bf16.mxu0 0
    %3077 = vmatpush1.bf16.msra.mxu0 %v2202
    %3078 = vmatprep.subr.bf16.mxu0 0
    %3079 = vmatpush1.bf16.msra.mxu0 %v2203
    %3080 = vmatprep.subr.bf16.mxu0 0
    %3081 = vmatpush1.bf16.msra.mxu0 %v2204
    %3082 = vmatprep.subr.bf16.mxu0 0
    %3083 = vmatpush1.bf16.msra.mxu0 %v2205
    %3084 = vmatprep.subr.bf16.mxu0 0
    %3085 = vmatpush1.bf16.msra.mxu0 %v2206
    %3086 = vmatprep.subr.bf16.mxu0 0
    %3087 = vmatpush1.bf16.msra.mxu0 %v2207
    %3088 = vmatprep.mubr.bf16.mxu0 %v254
    %3089 = vmatmul.mubr.bf16.gmra.mrb[0].mxu0 %v253
    %v3090 = vpop.f32.mrb[0].mxu0
    %v3091 = vadd.f32 %v3051, %v3090
    %v3092 = vpop.f32.mrb[0].mxu0
    %v3093 = vpop.f32.mrb[0].mxu0
    %v3094 = vpop.f32.mrb[0].mxu0
    %3095 = vdwg.mxu0
    %3096 = vmatprep.subr.bf16.mxu0 0
    %3097 = vmatpush1.bf16.msra.mxu0 %v2208
    %3098 = vmatprep.subr.bf16.mxu0 0
    %3099 = vmatpush1.bf16.msra.mxu0 %v2209
    %3100 = vmatprep.subr.bf16.mxu0 0
    %3101 = vmatpush1.bf16.msra.mxu0 %v2210
    %3102 = vmatprep.subr.bf16.mxu0 0
    %3103 = vmatpush1.bf16.msra.mxu0 %v2211
    %3104 = vmatprep.subr.bf16.mxu0 0
    %3105 = vmatpush1.bf16.msra.mxu0 %v2212
    %3106 = vmatprep.subr.bf16.mxu0 0
    %3107 = vmatpush1.bf16.msra.mxu0 %v2213
    %3108 = vmatprep.subr.bf16.mxu0 0
    %3109 = vmatpush1.bf16.msra.mxu0 %v2214
    %3110 = vmatprep.subr.bf16.mxu0 0
    %3111 = vmatpush1.bf16.msra.mxu0 %v2215
    %3112 = vmatprep.subr.bf16.mxu0 0
    %3113 = vmatpush1.bf16.msra.mxu0 %v2216
    %3114 = vmatprep.subr.bf16.mxu0 0
    %3115 = vmatpush1.bf16.msra.mxu0 %v2217
    %3116 = vmatprep.subr.bf16.mxu0 0
    %3117 = vmatpush1.bf16.msra.mxu0 %v2218
    %3118 = vmatprep.subr.bf16.mxu0 0
    %3119 = vmatpush1.bf16.msra.mxu0 %v2219
    %3120 = vmatprep.subr.bf16.mxu0 0
    %3121 = vmatpush1.bf16.msra.mxu0 %v2220
    %3122 = vmatprep.subr.bf16.mxu0 0
    %3123 = vmatpush1.bf16.msra.mxu0 %v2221
    %3124 = vmatprep.subr.bf16.mxu0 0
    %3125 = vmatpush1.bf16.msra.mxu0 %v2222
    %3126 = vmatprep.subr.bf16.mxu0 0
    %3127 = vmatpush1.bf16.msra.mxu0 %v2223
    %3128 = vmatprep.mubr.bf16.mxu0 %v256
    %3129 = vmatmul.mubr.bf16.gmra.mrb[0].mxu0 %v255
    %v3130 = vpop.f32.mrb[0].mxu0
    %v3131 = vadd.f32 %v3091, %v3130
    %v3132 = vpop.f32.mrb[0].mxu0
    %v3133 = vpop.f32.mrb[0].mxu0
    %v3134 = vpop.f32.mrb[0].mxu0
    %3135 = vdwg.mxu0
    %3136 = vmatprep.subr.bf16.mxu0 0
    %3137 = vmatpush1.bf16.msra.mxu0 %v2224
    %3138 = vmatprep.subr.bf16.mxu0 0
    %3139 = vmatpush1.bf16.msra.mxu0 %v2225
    %3140 = vmatprep.subr.bf16.mxu0 0
    %3141 = vmatpush1.bf16.msra.mxu0 %v2226
    %3142 = vmatprep.subr.bf16.mxu0 0
    %3143 = vmatpush1.bf16.msra.mxu0 %v2227
    %3144 = vmatprep.subr.bf16.mxu0 0
    %3145 = vmatpush1.bf16.msra.mxu0 %v2228
    %3146 = vmatprep.subr.bf16.mxu0 0
    %3147 = vmatpush1.bf16.msra.mxu0 %v2229
    %3148 = vmatprep.subr.bf16.mxu0 0
    %3149 = vmatpush1.bf16.msra.mxu0 %v2230
    %3150 = vmatprep.subr.bf16.mxu0 0
    %3151 = vmatpush1.bf16.msra.mxu0 %v2231
    %3152 = vmatprep.subr.bf16.mxu0 0
    %3153 = vmatpush1.bf16.msra.mxu0 %v2232
    %3154 = vmatprep.subr.bf16.mxu0 0
    %3155 = vmatpush1.bf16.msra.mxu0 %v2233
    %3156 = vmatprep.subr.bf16.mxu0 0
    %3157 = vmatpush1.bf16.msra.mxu0 %v2234
    %3158 = vmatprep.subr.bf16.mxu0 0
    %3159 = vmatpush1.bf16.msra.mxu0 %v2235
    %3160 = vmatprep.subr.bf16.mxu0 0
    %3161 = vmatpush1.bf16.msra.mxu0 %v2236
    %3162 = vmatprep.subr.bf16.mxu0 0
    %3163 = vmatpush1.bf16.msra.mxu0 %v2237
    %3164 = vmatprep.subr.bf16.mxu0 0
    %3165 = vmatpush1.bf16.msra.mxu0 %v2238
    %3166 = vmatprep.subr.bf16.mxu0 0
    %3167 = vmatpush1.bf16.msra.mxu0 %v2239
    %3168 = vmatprep.mubr.bf16.mxu0 %v258
    %3169 = vmatmul.mubr.bf16.gmra.mrb[0].mxu0 %v257
    %v3170 = vpop.f32.mrb[0].mxu0
    %v3171 = vadd.f32 %v3131, %v3170
    %v3172 = vpop.f32.mrb[0].mxu0
    %v3173 = vpop.f32.mrb[0].mxu0
    %v3174 = vpop.f32.mrb[0].mxu0
    %3175 = vdwg.mxu0
    %3176 = vmatprep.subr.bf16.mxu0 0
    %3177 = vmatpush1.bf16.msra.mxu0 %v2240
    %3178 = vmatprep.subr.bf16.mxu0 0
    %3179 = vmatpush1.bf16.msra.mxu0 %v2241
    %3180 = vmatprep.subr.bf16.mxu0 0
    %3181 = vmatpush1.bf16.msra.mxu0 %v2242
    %3182 = vmatprep.subr.bf16.mxu0 0
    %3183 = vmatpush1.bf16.msra.mxu0 %v2243
    %3184 = vmatprep.subr.bf16.mxu0 0
    %3185 = vmatpush1.bf16.msra.mxu0 %v2244
    %3186 = vmatprep.subr.bf16.mxu0 0
    %3187 = vmatpush1.bf16.msra.mxu0 %v2245
    %3188 = vmatprep.subr.bf16.mxu0 0
    %3189 = vmatpush1.bf16.msra.mxu0 %v2246
    %3190 = vmatprep.subr.bf16.mxu0 0
    %3191 = vmatpush1.bf16.msra.mxu0 %v2247
    %3192 = vmatprep.subr.bf16.mxu0 0
    %3193 = vmatpush1.bf16.msra.mxu0 %v2248
    %3194 = vmatprep.subr.bf16.mxu0 0
    %3195 = vmatpush1.bf16.msra.mxu0 %v2249
    %3196 = vmatprep.subr.bf16.mxu0 0
    %3197 = vmatpush1.bf16.msra.mxu0 %v2250
    %3198 = vmatprep.subr.bf16.mxu0 0
    %3199 = vmatpush1.bf16.msra.mxu0 %v2251
    %3200 = vmatprep.subr.bf16.mxu0 0
    %3201 = vmatpush1.bf16.msra.mxu0 %v2252
    %3202 = vmatprep.subr.bf16.mxu0 0
    %3203 = vmatpush1.bf16.msra.mxu0 %v2253
    %3204 = vmatprep.subr.bf16.mxu0 0
    %3205 = vmatpush1.bf16.msra.mxu0 %v2254
    %3206 = vmatprep.subr.bf16.mxu0 0
    %3207 = vmatpush1.bf16.msra.mxu0 %v2255
    %3208 = vmatprep.mubr.bf16.mxu0 %v260
    %3209 = vmatmul.mubr.bf16.gmra.mrb[0].mxu0 %v259
    %v3210 = vpop.f32.mrb[0].mxu0
    %v3211 = vadd.f32 %v3171, %v3210
    %v3212 = vpop.f32.mrb[0].mxu0
    %v3213 = vpop.f32.mrb[0].mxu0
    %v3214 = vpop.f32.mrb[0].mxu0
    %3215 = vdwg.mxu0
    %3216 = vmatprep.subr.bf16.mxu0 0
    %3217 = vmatpush1.bf16.msra.mxu0 %v2256
    %3218 = vmatprep.subr.bf16.mxu0 0
    %3219 = vmatpush1.bf16.msra.mxu0 %v2257
    %3220 = vmatprep.subr.bf16.mxu0 0
    %3221 = vmatpush1.bf16.msra.mxu0 %v2258
    %3222 = vmatprep.subr.bf16.mxu0 0
    %3223 = vmatpush1.bf16.msra.mxu0 %v2259
    %3224 = vmatprep.subr.bf16.mxu0 0
    %3225 = vmatpush1.bf16.msra.mxu0 %v2260
    %3226 = vmatprep.subr.bf16.mxu0 0
    %3227 = vmatpush1.bf16.msra.mxu0 %v2261
    %3228 = vmatprep.subr.bf16.mxu0 0
    %3229 = vmatpush1.bf16.msra.mxu0 %v2262
    %3230 = vmatprep.subr.bf16.mxu0 0
    %3231 = vmatpush1.bf16.msra.mxu0 %v2263
    %3232 = vmatprep.subr.bf16.mxu0 0
    %3233 = vmatpush1.bf16.msra.mxu0 %v2264
    %3234 = vmatprep.subr.bf16.mxu0 0
    %3235 = vmatpush1.bf16.msra.mxu0 %v2265
    %3236 = vmatprep.subr.bf16.mxu0 0
    %3237 = vmatpush1.bf16.msra.mxu0 %v2266
    %3238 = vmatprep.subr.bf16.mxu0 0
    %3239 = vmatpush1.bf16.msra.mxu0 %v2267
    %3240 = vmatprep.subr.bf16.mxu0 0
    %3241 = vmatpush1.bf16.msra.mxu0 %v2268
    %3242 = vmatprep.subr.bf16.mxu0 0
    %3243 = vmatpush1.bf16.msra.mxu0 %v2269
    %3244 = vmatprep.subr.bf16.mxu0 0
    %3245 = vmatpush1.bf16.msra.mxu0 %v2270
    %3246 = vmatprep.subr.bf16.mxu0 0
    %3247 = vmatpush1.bf16.msra.mxu0 %v2271
    %3248 = vmatprep.mubr.bf16.mxu0 %v262
    %3249 = vmatmul.mubr.bf16.gmra.mrb[0].mxu0 %v261
    %v3250 = vpop.f32.mrb[0].mxu0
    %v3251 = vadd.f32 %v3211, %v3250
    %v3252 = vpop.f32.mrb[0].mxu0
    %v3253 = vpop.f32.mrb[0].mxu0
    %v3254 = vpop.f32.mrb[0].mxu0
    %3255 = vdwg.mxu0
    %3256 = vmatprep.subr.bf16.mxu0 0
    %3257 = vmatpush1.bf16.msra.mxu0 %v2272
    %3258 = vmatprep.subr.bf16.mxu0 0
    %3259 = vmatpush1.bf16.msra.mxu0 %v2273
    %3260 = vmatprep.subr.bf16.mxu0 0
    %3261 = vmatpush1.bf16.msra.mxu0 %v2274
    %3262 = vmatprep.subr.bf16.mxu0 0
    %3263 = vmatpush1.bf16.msra.mxu0 %v2275
    %3264 = vmatprep.subr.bf16.mxu0 0
    %3265 = vmatpush1.bf16.msra.mxu0 %v2276
    %3266 = vmatprep.subr.bf16.mxu0 0
    %3267 = vmatpush1.bf16.msra.mxu0 %v2277
    %3268 = vmatprep.subr.bf16.mxu0 0
    %3269 = vmatpush1.bf16.msra.mxu0 %v2278
    %3270 = vmatprep.subr.bf16.mxu0 0
    %3271 = vmatpush1.bf16.msra.mxu0 %v2279
    %3272 = vmatprep.subr.bf16.mxu0 0
    %3273 = vmatpush1.bf16.msra.mxu0 %v2280
    %3274 = vmatprep.subr.bf16.mxu0 0
    %3275 = vmatpush1.bf16.msra.mxu0 %v2281
    %3276 = vmatprep.subr.bf16.mxu0 0
    %3277 = vmatpush1.bf16.msra.mxu0 %v2282
    %3278 = vmatprep.subr.bf16.mxu0 0
    %3279 = vmatpush1.bf16.msra.mxu0 %v2283
    %3280 = vmatprep.subr.bf16.mxu0 0
    %3281 = vmatpush1.bf16.msra.mxu0 %v2284
    %3282 = vmatprep.subr.bf16.mxu0 0
    %3283 = vmatpush1.bf16.msra.mxu0 %v2285
    %3284 = vmatprep.subr.bf16.mxu0 0
    %3285 = vmatpush1.bf16.msra.mxu0 %v2286
    %3286 = vmatprep.subr.bf16.mxu0 0
    %3287 = vmatpush1.bf16.msra.mxu0 %v2287
    %3288 = vmatprep.mubr.bf16.mxu0 %v264
    %3289 = vmatmul.mubr.bf16.gmra.mrb[0].mxu0 %v263
    %v3290 = vpop.f32.mrb[0].mxu0
    %v3291 = vadd.f32 %v3251, %v3290
    %v3292 = vpop.f32.mrb[0].mxu0
    %v3293 = vpop.f32.mrb[0].mxu0
    %v3294 = vpop.f32.mrb[0].mxu0
    %3295 = vdwg.mxu0
    %v3296 = vmax.f32 %v3291, 0.0
    %v3297 = vpack.c.bf16 %v3296, %v3296
    %v3298 = vld [vmem:[%s3] sm:$0xf]
    %v3299 = vld [vmem:[%s3 + $0x4] sm:$0xf]
    %v3300 = vld [vmem:[%s3 + $0x8] sm:$0xf]
    %v3301 = vld [vmem:[%s3 + $0xc] sm:$0xf]
    %v3302 = vld [vmem:[%s3 + $0x10] sm:$0xf]
    %v3303 = vld [vmem:[%s3 + $0x14] sm:$0xf]
    %v3304 = vld [vmem:[%s3 + $0x18] sm:$0xf]
    %v3305 = vld [vmem:[%s3 + $0x1c] sm:$0xf]
    %v3306 = vld [vmem:[%s3 + $0x20] sm:$0xf]
    %v3307 = vld [vmem:[%s3 + $0x24] sm:$0xf]
    %v3308 = vld [vmem:[%s3 + $0x28] sm:$0xf]
    %v3309 = vld [vmem:[%s3 + $0x2c] sm:$0xf]
    %v3310 = vld [vmem:[%s3 + $0x30] sm:$0xf]
    %v3311 = vld [vmem:[%s3 + $0x34] sm:$0xf]
    %v3312 = vld [vmem:[%s3 + $0x38] sm:$0xf]
    %v3313 = vld [vmem:[%s3 + $0x3c] sm:$0xf]
    %v3314 = vld [vmem:[%s4] sm:$0x1]
    %v3316 = vlaneseq
    %v3317 = vshrl.u32 %v3316, 7
    %v3318 = vsub.s32 0, %v3317
    %v3319 = vrot.slane %v3314, %v3318
    %v3337 = vunpack.c.l.b16 %v3298
    %v3338 = vunpack.c.l.b16 %v3299
    %v3339 = vunpack.c.l.b16 %v3300
    %v3340 = vunpack.c.l.b16 %v3301
    %v3341 = vunpack.c.l.b16 %v3302
    %v3342 = vunpack.c.l.b16 %v3303
    %v3343 = vunpack.c.l.b16 %v3304
    %v3344 = vunpack.c.l.b16 %v3305
    %v3345 = vunpack.c.l.b16 %v3306
    %v3346 = vunpack.c.l.b16 %v3307
    %v3347 = vunpack.c.l.b16 %v3308
    %v3348 = vunpack.c.l.b16 %v3309
    %v3349 = vunpack.c.l.b16 %v3310
    %v3350 = vunpack.c.l.b16 %v3311
    %v3351 = vunpack.c.l.b16 %v3312
    %v3352 = vunpack.c.l.b16 %v3313
    %v3353 = vpack.c.b16 %v3338, %v3337
    %v3354 = vpack.c.b16 %v3340, %v3339
    %v3355 = vpack.c.b16 %v3342, %v3341
    %v3356 = vpack.c.b16 %v3344, %v3343
    %v3357 = vpack.c.b16 %v3346, %v3345
    %v3358 = vpack.c.b16 %v3348, %v3347
    %v3359 = vpack.c.b16 %v3350, %v3349
    %v3360 = vpack.c.b16 %v3352, %v3351
    %3369 = vmatprep.subr.bf16.mxu0 0
    %3370 = vmatpush1.bf16.msra.mxu0 %v3353
    %3371 = vmatprep.subr.bf16.mxu0 0
    %3372 = vmatpush1.bf16.msra.mxu0 %v3354
    %3373 = vmatprep.subr.bf16.mxu0 0
    %3374 = vmatpush1.bf16.msra.mxu0 %v3355
    %3375 = vmatprep.subr.bf16.mxu0 0
    %3376 = vmatpush1.bf16.msra.mxu0 %v3356
    %3377 = vmatprep.subr.bf16.mxu0 0
    %3378 = vmatpush1.bf16.msra.mxu0 %v3357
    %3379 = vmatprep.subr.bf16.mxu0 0
    %3380 = vmatpush1.bf16.msra.mxu0 %v3358
    %3381 = vmatprep.subr.bf16.mxu0 0
    %3382 = vmatpush1.bf16.msra.mxu0 %v3359
    %3383 = vmatprep.subr.bf16.mxu0 0
    %3384 = vmatpush1.bf16.msra.mxu0 %v3360
    %3385 = vmatprep.subr.bf16.mxu0 0
    %3386 = vmatpush1.bf16.msra.mxu0 0
    %3387 = vmatprep.subr.bf16.mxu0 0
    %3388 = vmatpush1.bf16.msra.mxu0 0
    %3389 = vmatprep.subr.bf16.mxu0 0
    %3390 = vmatpush1.bf16.msra.mxu0 0
    %3391 = vmatprep.subr.bf16.mxu0 0
    %3392 = vmatpush1.bf16.msra.mxu0 0
    %3393 = vmatprep.subr.bf16.mxu0 0
    %3394 = vmatpush1.bf16.msra.mxu0 0
    %3395 = vmatprep.subr.bf16.mxu0 0
    %3396 = vmatpush1.bf16.msra.mxu0 0
    %3397 = vmatprep.subr.bf16.mxu0 0
    %3398 = vmatpush1.bf16.msra.mxu0 0
    %3399 = vmatprep.subr.bf16.mxu0 0
    %3400 = vmatpush1.bf16.msra.mxu0 0
    %3401 = vmatprep.mubr.bf16.mxu0 0
    %3402 = vmatmul.mubr.bf16.gmra.mrb[0].mxu0 %v3297
    %v3403 = vpop.f32.mrb[0].mxu0
    %v3404 = vadd.f32 %v3319, %v3403
    %v3405 = vpop.f32.mrb[0].mxu0
    %v3406 = vpop.f32.mrb[0].mxu0
    %v3407 = vpop.f32.mrb[0].mxu0
    %3408 = vdwg.mxu0
    %v3409 = vmax.f32 %v3404, 0.0
    %3410 = vst [vmem:[#allocation2] sm:$0x3] %v3409
    // Predicated region
    $region22: #{cnnet_forward.5} parent=1 // pred_check
      _
    $region23: #{cnnet_forward.5} parent=1 // pred_check_branch
      %3412 = sbr.rel (0) target = $region25
    $region24: #{cnnet_forward.5} parent=1 // pred_region
      %s3414 = ssub.s32 32, 32
      %3415 = vsyncadd [#allocation3], %s3414
      %s3417 = sshll.u32 [#allocation2], 4
      %s3418 = int_to_ptr.vmem [resolvable:$true] %s3417
      %3420 = dma.vmem_to_hbm [thread:$0]  %s3418, 32, %s5, [#allocation3]
    $region25: #{cnnet_forward.5} parent=1 // pred_fallthru
      _
    // Predicated region
    $region26: #{cnnet_forward.5} parent=1 // pred_check
      _
    $region27: #{cnnet_forward.5} parent=1 // pred_check_branch
      %3422 = sbr.rel (0) target = $region29
    $region28: #{cnnet_forward.5} parent=1 // pred_region
      %3423 = dma.done [#allocation3], 32
    $region29: #{cnnet_forward.5} parent=1 // pred_fallthru
      _
    %3424 = vsyncpa [#allocation3], 1

</llo_original>
